<compile_context>
chip_gen: v6e
topology: v6e:2x2x1
jax: 0.10.0
libtpu: 0.0.40
codegen_flags: <defaults>
</compile_context>

<pallas_src>
import functools

import jax
import jax.numpy as jnp
from jax import lax
from jax.experimental import pallas as pl
from jax.experimental.pallas import tpu as pltpu


# ----------------------------------------------------------------------------
# Kernel
# ----------------------------------------------------------------------------
def awms_kernel(x_ref, wm_ref, bm_ref, wf_ref, bf_ref, ww_ref, bw_ref,
                out_ref, canv_ref, *, H, W):
    """One image per grid step.

    x_ref    : (nf, H*Wc)       f32, "wide" image: each row = [W pixels, 4 zeros].
    wm_ref   : (nf, 25*nf)      merged 5x5 weight (canvas/MXU dtype).
    wf_ref   : (nf, 9*nf)       fuse 3x3 weight.
    ww_ref   : (out_chl, 9*nf)  w_conv 3x3 weight.
    b*_ref   : (Cout, 1)        f32 biases.
    out_ref  : (out_chl, H*Wc)  f32 lane-dense output slab (seam columns are
                                sliced off by the wrapper).
    canv_ref : (nf, (H+5)*Wc)   canvas scratch in MXU dtype (pad 2 + 1 slack
                                row), reused for x, cur and fuse.
    """
    nf = x_ref.shape[0]
    Wc = W + 4                     # padded row stride (pad 2 each side)
    HP = H * Wc                    # width of every "wide" activation slab
    CANV = canv_ref.shape[1]       # (H + 5) * Wc
    OFF = 2 * Wc + 2               # flat offset of the canvas interior (2, 2)
    cdt = canv_ref.dtype

    # ---- Halo-only zeroing + single contiguous image scatter -------------
    # head: rows 0..1 and (row 2, cols 0..1); tail: (row H+2, cols 2..) and
    # rows H+3..H+4.  The wide-x store covers everything in between, including
    # the per-row right-seam zeros and the next row's left halo (via wrap).
    canv_ref[:, 0:OFF] = jnp.zeros((nf, OFF), cdt)
    canv_ref[:, OFF + HP:CANV] = jnp.zeros((nf, CANV - OFF - HP), cdt)
    canv_ref[:, OFF:OFF + HP] = x_ref[...].astype(cdt)

    # ---- Seam-validity mask of the wide slab, generated in-kernel --------
    # valid[j] <=> (j mod Wc) < W, computed with float ops only (robust,
    # always lowers); +0.5 guards the floor against reciprocal rounding.
    colf = lax.broadcasted_iota(jnp.int32, (1, HP), 1).astype(jnp.float32)
    rowf = jnp.floor((colf + 0.5) / Wc)
    valid = (colf - rowf * Wc) < (W - 0.5)          # (1, HP) bool

    def conv_wide(k, w_ref, b_ref, tap_base):
        # Per-tap accumulation: k*k dots of K = nf each, f32 accumulator,
        # bias folded into the accumulator init (stays f32).  No patches
        # temporary, no packed-dtype concat; taps are static lane slices of
        # the bf16 canvas fed straight to the MXU.
        acc = b_ref[...]                            # (Cout, 1) f32
        t = 0
        for kh in range(k):
            for kw in range(k):
                off = tap_base + kh * Wc + kw
                tap = canv_ref[:, off:off + HP]      # (nf, HP) canvas dtype
                w_tap = w_ref[:, t * nf:(t + 1) * nf]
                acc = acc + jnp.dot(w_tap, tap,
                                    preferred_element_type=jnp.float32)
                t += 1
        return acc                                   # (Cout, HP) f32

    # Stage 1: merged (scale_k3*tail_k3 + scale_k5*tail_k5) as one 5x5 conv.
    cur = conv_wide(5, wm_ref, bm_ref, 0)
    # Re-pad in place: masked seam columns carry zeros so the 1-pixel halo the
    # 3x3 convs rely on stays zero; head/tail halo is untouched (still zero).
    canv_ref[:, OFF:OFF + HP] = jnp.where(valid, cur, 0.0).astype(cdt)

    # Stage 2: fuse 3x3 + ReLU.
    fuse = jnp.maximum(conv_wide(3, wf_ref, bf_ref, Wc + 1), 0.0)
    canv_ref[:, OFF:OFF + HP] = jnp.where(valid, fuse, 0.0).astype(cdt)

    # Stage 3: w_conv 3x3 -> lane-dense output slab.  Seam columns carry
    # meaningless conv values by design; the wrapper slices [:, :, :, :W].
    out = conv_wide(3, ww_ref, bw_ref, Wc + 1)
    out_ref[...] = out.astype(out_ref.dtype)


# ----------------------------------------------------------------------------
# Wrapper
# ----------------------------------------------------------------------------
def _flatten_w(w_oihw):
    """OIHW -> (Cout, KH*KW*Cin), tap-major to match the kernel's tap order."""
    co, ci, kh, kw = w_oihw.shape
    return jnp.transpose(w_oihw, (0, 2, 3, 1)).reshape(co, kh * kw * ci)


def _prep_weights(params, mxu_dtype):
    s3, s5 = params["s3"], params["s5"]
    # Merge tail_k3 (zero-padded to 5x5) and tail_k5 with their scales.
    w3p = jnp.pad(params["w3"], ((0, 0), (0, 0), (1, 1), (1, 1)))
    wm = s3 * w3p + s5 * params["w5"]                     # (nf, nf, 5, 5)
    bm = s3 * params["b3"] + s5 * params["b5"]            # (nf,)
    return (_flatten_w(wm).astype(mxu_dtype), bm.reshape(-1, 1).astype(jnp.float32),
            _flatten_w(params["wf"]).astype(mxu_dtype),
            params["bf"].reshape(-1, 1).astype(jnp.float32),
            _flatten_w(params["ww"]).astype(mxu_dtype),
            params["bw"].reshape(-1, 1).astype(jnp.float32))


def awms_forward(x, params, *, mxu_dtype=jnp.bfloat16):
    """x: (N, nf, H, W) float32 (NCHW, like the PyTorch module).

    Returns (N, out_chl, H, W) float32.
    """
    N, nf, H, W = x.shape
    out_chl = params["ww"].shape[0]
    Wc = W + 4
    HP = H * Wc
    CANV = (H + 5) * Wc

    wm, bm, wf, bfm, ww, bw = _prep_weights(params, mxu_dtype)

    # Wide (row-stride Wc) image with the 4 right-seam zeros baked in per row:
    # one cheap XLA pad, which lets the kernel land the whole image plus its
    # interior seam zeros with a single contiguous VMEM store.
    x_wide = jnp.pad(x, ((0, 0), (0, 0), (0, 0), (0, 4))).reshape(N, nf, HP)

    full = lambda a: pl.BlockSpec(a.shape, lambda n: (0,) * a.ndim)
    kernel = functools.partial(awms_kernel, H=H, W=W)

    flops = 2 * N * HP * (25 * nf * nf + 9 * nf * nf + 9 * nf * out_chl)
    bytes_accessed = (N * nf * HP * 4 + N * out_chl * HP * 4 +
                      sum(int(a.size) * a.dtype.itemsize
                          for a in (wm, bm, wf, bfm, ww, bw)))
    cost = pl.CostEstimate(flops=int(flops), transcendentals=0,
                           bytes_accessed=int(bytes_accessed))

    out_wide = pl.pallas_call(
        kernel,
        out_shape=jax.ShapeDtypeStruct((N, out_chl, HP), jnp.float32),
        grid=(N,),
        in_specs=[
            pl.BlockSpec((None, nf, HP), lambda n: (n, 0, 0)),
            full(wm), full(bm), full(wf), full(bfm), full(ww), full(bw),
        ],
        out_specs=pl.BlockSpec((None, out_chl, HP), lambda n: (n, 0, 0)),
        scratch_shapes=[pltpu.VMEM((nf, CANV), mxu_dtype)],
        compiler_params=pltpu.CompilerParams(
            dimension_semantics=("parallel",)),
        cost_estimate=cost,
    )(x_wide, wm, bm, wf, bfm, ww, bw)

    # Drop the seam columns: (N, Co, H*Wc) -> (N, Co, H, W).
    return out_wide.reshape(N, out_chl, H, Wc)[:, :, :, :W]


# ----------------------------------------------------------------------------
# Deterministic parameter construction (mimics wn(nn.Conv2d(...)), OIHW layout)
# ----------------------------------------------------------------------------
def _wn_conv(key, cout, cin, k):
    kv, kg, kb = jax.random.split(key, 3)
    v = jax.random.normal(kv, (cout, cin, k, k), jnp.float32) * 0.1
    g = jax.random.uniform(kg, (cout,), jnp.float32, 0.5, 1.5)
    norm = jnp.sqrt(jnp.sum(v * v, axis=(1, 2, 3)))
    w = (g / norm)[:, None, None, None] * v
    b = jax.random.normal(kb, (cout,), jnp.float32) * 0.05
    return w, b


def make_params(key, nf, out_chl):
    k3, k5, kf, kw = jax.random.split(key, 4)
    w3, b3 = _wn_conv(k3, nf, nf, 3)
    w5, b5 = _wn_conv(k5, nf, nf, 5)
    wf, bf = _wn_conv(kf, nf, nf, 3)
    ww, bw = _wn_conv(kw, out_chl, nf, 3)
    return dict(w3=w3, b3=b3, w5=w5, b5=b5, wf=wf, bf=bf, ww=ww, bw=bw,
                s3=jnp.array(0.5, jnp.float32),   # Scale(0.5)
                s5=jnp.array(0.5, jnp.float32))   # Scale(0.5)


# ----------------------------------------------------------------------------
# Pure-JAX reference (faithful module structure, f32, XLA convs)
# ----------------------------------------------------------------------------
def _conv_ref(x, w_oihw, b, pad):
    out = lax.conv_general_dilated(
        x, w_oihw, window_strides=(1, 1),
        padding=[(pad, pad), (pad, pad)],
        dimension_numbers=("NCHW", "OIHW", "NCHW"),
        precision=lax.Precision.HIGHEST)
    return out + b.reshape(1, -1, 1, 1)


def awms_reference(x, p):
    x0 = p["s3"] * _conv_ref(x, p["w3"], p["b3"], 1)
    x1 = p["s5"] * _conv_ref(x, p["w5"], p["b5"], 2)
    fuse = jnp.maximum(_conv_ref(x0 + x1, p["wf"], p["bf"], 1), 0.0)
    return _conv_ref(fuse, p["ww"], p["bw"], 1)


if __name__ == "__main__":
    key = jax.random.PRNGKey(0)
    k_x, k_p = jax.random.split(key)

    N, nf, out_chl, H, W = 2, 8, 3, 16, 16
    x = jax.random.normal(k_x, (N, nf, H, W), jnp.float32)
    params = make_params(k_p, nf, out_chl)

    ref = awms_reference(x, params)

    # Exact-path check: f32 canvas + f32 MXU operands validate the wide-x
    # scatter / halo zeroing / merge / per-tap accumulation logic.
    out_f32 = jax.block_until_ready(awms_forward(x, params, mxu_dtype=jnp.float32))
    assert out_f32.shape == (N, out_chl, H, W), out_f32.shape
    assert jnp.allclose(out_f32, ref, atol=5e-4, rtol=5e-4), (
        float(jnp.max(jnp.abs(out_f32 - ref))))

    # Fast path: bf16 canvas + bf16 MXU operands with f32 accumulation;
    # tolerance sized for bf16 operand rounding through three conv stages.
    out_bf16 = jax.block_until_ready(awms_forward(x, params, mxu_dtype=jnp.bfloat16))
    assert out_bf16.shape == (N, out_chl, H, W), out_bf16.shape
    assert jnp.allclose(out_bf16, ref, atol=5e-2, rtol=5e-2), (
        float(jnp.max(jnp.abs(out_bf16 - ref))))

    print("KERNEL_OK")
</pallas_src>

<mosaic_0001>
module attributes {stable_mosaic.version = 11 : i64} {
  func.func @awms_kernel(%arg0: i32, %arg1: memref<1x8x320xf32, #tpu.memory_space<vmem>>, %arg2: memref<8x200xf32, #tpu.memory_space<vmem>>, %arg3: memref<8x1xf32, #tpu.memory_space<vmem>>, %arg4: memref<8x72xf32, #tpu.memory_space<vmem>>, %arg5: memref<8x1xf32, #tpu.memory_space<vmem>>, %arg6: memref<3x72xf32, #tpu.memory_space<vmem>>, %arg7: memref<3x1xf32, #tpu.memory_space<vmem>>, %arg8: memref<1x3x320xf32, #tpu.memory_space<vmem>>, %arg9: memref<8x420xf32, #tpu.memory_space<vmem>>) attributes {dimension_semantics = [#tpu.dimension_semantics<parallel>], iteration_bounds = array<i64: 2>, scalar_prefetch = 0 : i64, scratch_operands = 1 : i64, tpu.core_type = #tpu.core_type<tc>, window_params = [{transform_indices = @transform_0, window_bounds = array<i64: 1, 8, 320>}, {pipeline_mode = #tpu.pipeline_mode<synchronous>, transform_indices = @transform_1, window_bounds = array<i64: 8, 200>}, {pipeline_mode = #tpu.pipeline_mode<synchronous>, transform_indices = @transform_2, window_bounds = array<i64: 8, 1>}, {pipeline_mode = #tpu.pipeline_mode<synchronous>, transform_indices = @transform_3, window_bounds = array<i64: 8, 72>}, {pipeline_mode = #tpu.pipeline_mode<synchronous>, transform_indices = @transform_4, window_bounds = array<i64: 8, 1>}, {pipeline_mode = #tpu.pipeline_mode<synchronous>, transform_indices = @transform_5, window_bounds = array<i64: 3, 72>}, {pipeline_mode = #tpu.pipeline_mode<synchronous>, transform_indices = @transform_6, window_bounds = array<i64: 3, 1>}, {transform_indices = @transform_7, window_bounds = array<i64: 1, 3, 320>}]} {
    %cst = arith.constant 0.000000e+00 : f32
    %0 = vector.broadcast %cst : f32 to vector<8x42xf32>
    %c0 = arith.constant 0 : index
    %c0_0 = arith.constant 0 : index
    %1 = vector.load %arg9[%c0, %c0_0] : memref<8x420xf32, #tpu.memory_space<vmem>>, vector<8x42xf32>
    tpu.vector_store %arg9[%c0, %c0_0], %0 {strides = array<i32>} : memref<8x420xf32, #tpu.memory_space<vmem>>, vector<8x42xf32>,
    %cst_1 = arith.constant 0.000000e+00 : f32
    %2 = vector.broadcast %cst_1 : f32 to vector<8x58xf32>
    %c0_2 = arith.constant 0 : index
    %c362 = arith.constant 362 : index
    %3 = vector.load %arg9[%c0_2, %c362] : memref<8x420xf32, #tpu.memory_space<vmem>>, vector<8x58xf32>
    tpu.vector_store %arg9[%c0_2, %c362], %2 {strides = array<i32>} : memref<8x420xf32, #tpu.memory_space<vmem>>, vector<8x58xf32>,
    %c0_3 = arith.constant 0 : index
    %c0_4 = arith.constant 0 : index
    %c0_5 = arith.constant 0 : index
    %4 = vector.load %arg1[%c0_3, %c0_4, %c0_5] : memref<1x8x320xf32, #tpu.memory_space<vmem>>, vector<1x8x320xf32>
    %5 = vector.shape_cast %4 : vector<1x8x320xf32> to vector<8x320xf32>
    %c0_6 = arith.constant 0 : index
    %c42 = arith.constant 42 : index
    %6 = vector.load %arg9[%c0_6, %c42] : memref<8x420xf32, #tpu.memory_space<vmem>>, vector<8x320xf32>
    tpu.vector_store %arg9[%c0_6, %c42], %5 {strides = array<i32>} : memref<8x420xf32, #tpu.memory_space<vmem>>, vector<8x320xf32>,
    %7 = tpu.iota {dimensions = array<i32: 1>} : vector<1x320xi32>
    %8 = arith.sitofp %7 : vector<1x320xi32> to vector<1x320xf32>
    %cst_7 = arith.constant 5.000000e-01 : f32
    %9 = vector.broadcast %cst_7 : f32 to vector<1x320xf32>
    %10 = arith.addf %8, %9 : vector<1x320xf32>
    %cst_8 = arith.constant 2.000000e+01 : f32
    %11 = vector.broadcast %cst_8 : f32 to vector<1x320xf32>
    %12 = arith.divf %10, %11 : vector<1x320xf32>
    %13 = math.floor %12 : vector<1x320xf32>
    %cst_9 = arith.constant 2.000000e+01 : f32
    %14 = vector.broadcast %cst_9 : f32 to vector<1x320xf32>
    %15 = arith.mulf %13, %14 : vector<1x320xf32>
    %16 = arith.subf %8, %15 : vector<1x320xf32>
    %cst_10 = arith.constant 1.550000e+01 : f32
    %17 = vector.broadcast %cst_10 : f32 to vector<1x320xf32>
    %18 = arith.cmpf olt, %16, %17 : vector<1x320xf32>
    %c0_11 = arith.constant 0 : index
    %c0_12 = arith.constant 0 : index
    %19 = vector.load %arg3[%c0_11, %c0_12] : memref<8x1xf32, #tpu.memory_space<vmem>>, vector<8x1xf32>
    %c0_13 = arith.constant 0 : index
    %c0_14 = arith.constant 0 : index
    %20 = vector.load %arg9[%c0_13, %c0_14] : memref<8x420xf32, #tpu.memory_space<vmem>>, vector<8x320xf32>
    %c0_15 = arith.constant 0 : index
    %c0_16 = arith.constant 0 : index
    %21 = vector.load %arg2[%c0_15, %c0_16] : memref<8x200xf32, #tpu.memory_space<vmem>>, vector<8x8xf32>
    %cst_17 = arith.constant dense<0.000000e+00> : vector<8x320xf32>
    %22 = tpu.matmul %21, %20, %cst_17 {dimension_numbers = #tpu.dot_dimension_numbers<[1], [0], [0], [1], [0, 0, 1, 1], [], []>} : vector<8x8xf32>, vector<8x320xf32>, vector<8x320xf32> -> vector<8x320xf32>
    %23 = vector.broadcast %19 : vector<8x1xf32> to vector<8x320xf32>
    %24 = arith.addf %23, %22 : vector<8x320xf32>
    %c0_18 = arith.constant 0 : index
    %c1 = arith.constant 1 : index
    %25 = vector.load %arg9[%c0_18, %c1] : memref<8x420xf32, #tpu.memory_space<vmem>>, vector<8x320xf32>
    %c0_19 = arith.constant 0 : index
    %c8 = arith.constant 8 : index
    %26 = vector.load %arg2[%c0_19, %c8] : memref<8x200xf32, #tpu.memory_space<vmem>>, vector<8x8xf32>
    %cst_20 = arith.constant dense<0.000000e+00> : vector<8x320xf32>
    %27 = tpu.matmul %26, %25, %cst_20 {dimension_numbers = #tpu.dot_dimension_numbers<[1], [0], [0], [1], [0, 0, 1, 1], [], []>} : vector<8x8xf32>, vector<8x320xf32>, vector<8x320xf32> -> vector<8x320xf32>
    %28 = arith.addf %24, %27 : vector<8x320xf32>
    %c0_21 = arith.constant 0 : index
    %c2 = arith.constant 2 : index
    %29 = vector.load %arg9[%c0_21, %c2] : memref<8x420xf32, #tpu.memory_space<vmem>>, vector<8x320xf32>
    %c0_22 = arith.constant 0 : index
    %c16 = arith.constant 16 : index
    %30 = vector.load %arg2[%c0_22, %c16] : memref<8x200xf32, #tpu.memory_space<vmem>>, vector<8x8xf32>
    %cst_23 = arith.constant dense<0.000000e+00> : vector<8x320xf32>
    %31 = tpu.matmul %30, %29, %cst_23 {dimension_numbers = #tpu.dot_dimension_numbers<[1], [0], [0], [1], [0, 0, 1, 1], [], []>} : vector<8x8xf32>, vector<8x320xf32>, vector<8x320xf32> -> vector<8x320xf32>
    %32 = arith.addf %28, %31 : vector<8x320xf32>
    %c0_24 = arith.constant 0 : index
    %c3 = arith.constant 3 : index
    %33 = vector.load %arg9[%c0_24, %c3] : memref<8x420xf32, #tpu.memory_space<vmem>>, vector<8x320xf32>
    %c0_25 = arith.constant 0 : index
    %c24 = arith.constant 24 : index
    %34 = vector.load %arg2[%c0_25, %c24] : memref<8x200xf32, #tpu.memory_space<vmem>>, vector<8x8xf32>
    %cst_26 = arith.constant dense<0.000000e+00> : vector<8x320xf32>
    %35 = tpu.matmul %34, %33, %cst_26 {dimension_numbers = #tpu.dot_dimension_numbers<[1], [0], [0], [1], [0, 0, 1, 1], [], []>} : vector<8x8xf32>, vector<8x320xf32>, vector<8x320xf32> -> vector<8x320xf32>
    %36 = arith.addf %32, %35 : vector<8x320xf32>
    %c0_27 = arith.constant 0 : index
    %c4 = arith.constant 4 : index
    %37 = vector.load %arg9[%c0_27, %c4] : memref<8x420xf32, #tpu.memory_space<vmem>>, vector<8x320xf32>
    %c0_28 = arith.constant 0 : index
    %c32 = arith.constant 32 : index
    %38 = vector.load %arg2[%c0_28, %c32] : memref<8x200xf32, #tpu.memory_space<vmem>>, vector<8x8xf32>
    %cst_29 = arith.constant dense<0.000000e+00> : vector<8x320xf32>
    %39 = tpu.matmul %38, %37, %cst_29 {dimension_numbers = #tpu.dot_dimension_numbers<[1], [0], [0], [1], [0, 0, 1, 1], [], []>} : vector<8x8xf32>, vector<8x320xf32>, vector<8x320xf32> -> vector<8x320xf32>
    %40 = arith.addf %36, %39 : vector<8x320xf32>
    %c0_30 = arith.constant 0 : index
    %c20 = arith.constant 20 : index
    %41 = vector.load %arg9[%c0_30, %c20] : memref<8x420xf32, #tpu.memory_space<vmem>>, vector<8x320xf32>
    %c0_31 = arith.constant 0 : index
    %c40 = arith.constant 40 : index
    %42 = vector.load %arg2[%c0_31, %c40] : memref<8x200xf32, #tpu.memory_space<vmem>>, vector<8x8xf32>
    %cst_32 = arith.constant dense<0.000000e+00> : vector<8x320xf32>
    %43 = tpu.matmul %42, %41, %cst_32 {dimension_numbers = #tpu.dot_dimension_numbers<[1], [0], [0], [1], [0, 0, 1, 1], [], []>} : vector<8x8xf32>, vector<8x320xf32>, vector<8x320xf32> -> vector<8x320xf32>
    %44 = arith.addf %40, %43 : vector<8x320xf32>
    %c0_33 = arith.constant 0 : index
    %c21 = arith.constant 21 : index
    %45 = vector.load %arg9[%c0_33, %c21] : memref<8x420xf32, #tpu.memory_space<vmem>>, vector<8x320xf32>
    %c0_34 = arith.constant 0 : index
    %c48 = arith.constant 48 : index
    %46 = vector.load %arg2[%c0_34, %c48] : memref<8x200xf32, #tpu.memory_space<vmem>>, vector<8x8xf32>
    %cst_35 = arith.constant dense<0.000000e+00> : vector<8x320xf32>
    %47 = tpu.matmul %46, %45, %cst_35 {dimension_numbers = #tpu.dot_dimension_numbers<[1], [0], [0], [1], [0, 0, 1, 1], [], []>} : vector<8x8xf32>, vector<8x320xf32>, vector<8x320xf32> -> vector<8x320xf32>
    %48 = arith.addf %44, %47 : vector<8x320xf32>
    %c0_36 = arith.constant 0 : index
    %c22 = arith.constant 22 : index
    %49 = vector.load %arg9[%c0_36, %c22] : memref<8x420xf32, #tpu.memory_space<vmem>>, vector<8x320xf32>
    %c0_37 = arith.constant 0 : index
    %c56 = arith.constant 56 : index
    %50 = vector.load %arg2[%c0_37, %c56] : memref<8x200xf32, #tpu.memory_space<vmem>>, vector<8x8xf32>
    %cst_38 = arith.constant dense<0.000000e+00> : vector<8x320xf32>
    %51 = tpu.matmul %50, %49, %cst_38 {dimension_numbers = #tpu.dot_dimension_numbers<[1], [0], [0], [1], [0, 0, 1, 1], [], []>} : vector<8x8xf32>, vector<8x320xf32>, vector<8x320xf32> -> vector<8x320xf32>
    %52 = arith.addf %48, %51 : vector<8x320xf32>
    %c0_39 = arith.constant 0 : index
    %c23 = arith.constant 23 : index
    %53 = vector.load %arg9[%c0_39, %c23] : memref<8x420xf32, #tpu.memory_space<vmem>>, vector<8x320xf32>
    %c0_40 = arith.constant 0 : index
    %c64 = arith.constant 64 : index
    %54 = vector.load %arg2[%c0_40, %c64] : memref<8x200xf32, #tpu.memory_space<vmem>>, vector<8x8xf32>
    %cst_41 = arith.constant dense<0.000000e+00> : vector<8x320xf32>
    %55 = tpu.matmul %54, %53, %cst_41 {dimension_numbers = #tpu.dot_dimension_numbers<[1], [0], [0], [1], [0, 0, 1, 1], [], []>} : vector<8x8xf32>, vector<8x320xf32>, vector<8x320xf32> -> vector<8x320xf32>
    %56 = arith.addf %52, %55 : vector<8x320xf32>
    %c0_42 = arith.constant 0 : index
    %c24_43 = arith.constant 24 : index
    %57 = vector.load %arg9[%c0_42, %c24_43] : memref<8x420xf32, #tpu.memory_space<vmem>>, vector<8x320xf32>
    %c0_44 = arith.constant 0 : index
    %c72 = arith.constant 72 : index
    %58 = vector.load %arg2[%c0_44, %c72] : memref<8x200xf32, #tpu.memory_space<vmem>>, vector<8x8xf32>
    %cst_45 = arith.constant dense<0.000000e+00> : vector<8x320xf32>
    %59 = tpu.matmul %58, %57, %cst_45 {dimension_numbers = #tpu.dot_dimension_numbers<[1], [0], [0], [1], [0, 0, 1, 1], [], []>} : vector<8x8xf32>, vector<8x320xf32>, vector<8x320xf32> -> vector<8x320xf32>
    %60 = arith.addf %56, %59 : vector<8x320xf32>
    %c0_46 = arith.constant 0 : index
    %c40_47 = arith.constant 40 : index
    %61 = vector.load %arg9[%c0_46, %c40_47] : memref<8x420xf32, #tpu.memory_space<vmem>>, vector<8x320xf32>
    %c0_48 = arith.constant 0 : index
    %c80 = arith.constant 80 : index
    %62 = vector.load %arg2[%c0_48, %c80] : memref<8x200xf32, #tpu.memory_space<vmem>>, vector<8x8xf32>
    %cst_49 = arith.constant dense<0.000000e+00> : vector<8x320xf32>
    %63 = tpu.matmul %62, %61, %cst_49 {dimension_numbers = #tpu.dot_dimension_numbers<[1], [0], [0], [1], [0, 0, 1, 1], [], []>} : vector<8x8xf32>, vector<8x320xf32>, vector<8x320xf32> -> vector<8x320xf32>
    %64 = arith.addf %60, %63 : vector<8x320xf32>
    %c0_50 = arith.constant 0 : index
    %c41 = arith.constant 41 : index
    %65 = vector.load %arg9[%c0_50, %c41] : memref<8x420xf32, #tpu.memory_space<vmem>>, vector<8x320xf32>
    %c0_51 = arith.constant 0 : index
    %c88 = arith.constant 88 : index
    %66 = vector.load %arg2[%c0_51, %c88] : memref<8x200xf32, #tpu.memory_space<vmem>>, vector<8x8xf32>
    %cst_52 = arith.constant dense<0.000000e+00> : vector<8x320xf32>
    %67 = tpu.matmul %66, %65, %cst_52 {dimension_numbers = #tpu.dot_dimension_numbers<[1], [0], [0], [1], [0, 0, 1, 1], [], []>} : vector<8x8xf32>, vector<8x320xf32>, vector<8x320xf32> -> vector<8x320xf32>
    %68 = arith.addf %64, %67 : vector<8x320xf32>
    %c0_53 = arith.constant 0 : index
    %c42_54 = arith.constant 42 : index
    %69 = vector.load %arg9[%c0_53, %c42_54] : memref<8x420xf32, #tpu.memory_space<vmem>>, vector<8x320xf32>
    %c0_55 = arith.constant 0 : index
    %c96 = arith.constant 96 : index
    %70 = vector.load %arg2[%c0_55, %c96] : memref<8x200xf32, #tpu.memory_space<vmem>>, vector<8x8xf32>
    %cst_56 = arith.constant dense<0.000000e+00> : vector<8x320xf32>
    %71 = tpu.matmul %70, %69, %cst_56 {dimension_numbers = #tpu.dot_dimension_numbers<[1], [0], [0], [1], [0, 0, 1, 1], [], []>} : vector<8x8xf32>, vector<8x320xf32>, vector<8x320xf32> -> vector<8x320xf32>
    %72 = arith.addf %68, %71 : vector<8x320xf32>
    %c0_57 = arith.constant 0 : index
    %c43 = arith.constant 43 : index
    %73 = vector.load %arg9[%c0_57, %c43] : memref<8x420xf32, #tpu.memory_space<vmem>>, vector<8x320xf32>
    %c0_58 = arith.constant 0 : index
    %c104 = arith.constant 104 : index
    %74 = vector.load %arg2[%c0_58, %c104] : memref<8x200xf32, #tpu.memory_space<vmem>>, vector<8x8xf32>
    %cst_59 = arith.constant dense<0.000000e+00> : vector<8x320xf32>
    %75 = tpu.matmul %74, %73, %cst_59 {dimension_numbers = #tpu.dot_dimension_numbers<[1], [0], [0], [1], [0, 0, 1, 1], [], []>} : vector<8x8xf32>, vector<8x320xf32>, vector<8x320xf32> -> vector<8x320xf32>
    %76 = arith.addf %72, %75 : vector<8x320xf32>
    %c0_60 = arith.constant 0 : index
    %c44 = arith.constant 44 : index
    %77 = vector.load %arg9[%c0_60, %c44] : memref<8x420xf32, #tpu.memory_space<vmem>>, vector<8x320xf32>
    %c0_61 = arith.constant 0 : index
    %c112 = arith.constant 112 : index
    %78 = vector.load %arg2[%c0_61, %c112] : memref<8x200xf32, #tpu.memory_space<vmem>>, vector<8x8xf32>
    %cst_62 = arith.constant dense<0.000000e+00> : vector<8x320xf32>
    %79 = tpu.matmul %78, %77, %cst_62 {dimension_numbers = #tpu.dot_dimension_numbers<[1], [0], [0], [1], [0, 0, 1, 1], [], []>} : vector<8x8xf32>, vector<8x320xf32>, vector<8x320xf32> -> vector<8x320xf32>
    %80 = arith.addf %76, %79 : vector<8x320xf32>
    %c0_63 = arith.constant 0 : index
    %c60 = arith.constant 60 : index
    %81 = vector.load %arg9[%c0_63, %c60] : memref<8x420xf32, #tpu.memory_space<vmem>>, vector<8x320xf32>
    %c0_64 = arith.constant 0 : index
    %c120 = arith.constant 120 : index
    %82 = vector.load %arg2[%c0_64, %c120] : memref<8x200xf32, #tpu.memory_space<vmem>>, vector<8x8xf32>
    %cst_65 = arith.constant dense<0.000000e+00> : vector<8x320xf32>
    %83 = tpu.matmul %82, %81, %cst_65 {dimension_numbers = #tpu.dot_dimension_numbers<[1], [0], [0], [1], [0, 0, 1, 1], [], []>} : vector<8x8xf32>, vector<8x320xf32>, vector<8x320xf32> -> vector<8x320xf32>
    %84 = arith.addf %80, %83 : vector<8x320xf32>
    %c0_66 = arith.constant 0 : index
    %c61 = arith.constant 61 : index
    %85 = vector.load %arg9[%c0_66, %c61] : memref<8x420xf32, #tpu.memory_space<vmem>>, vector<8x320xf32>
    %c0_67 = arith.constant 0 : index
    %c128 = arith.constant 128 : index
    %86 = vector.load %arg2[%c0_67, %c128] : memref<8x200xf32, #tpu.memory_space<vmem>>, vector<8x8xf32>
    %cst_68 = arith.constant dense<0.000000e+00> : vector<8x320xf32>
    %87 = tpu.matmul %86, %85, %cst_68 {dimension_numbers = #tpu.dot_dimension_numbers<[1], [0], [0], [1], [0, 0, 1, 1], [], []>} : vector<8x8xf32>, vector<8x320xf32>, vector<8x320xf32> -> vector<8x320xf32>
    %88 = arith.addf %84, %87 : vector<8x320xf32>
    %c0_69 = arith.constant 0 : index
    %c62 = arith.constant 62 : index
    %89 = vector.load %arg9[%c0_69, %c62] : memref<8x420xf32, #tpu.memory_space<vmem>>, vector<8x320xf32>
    %c0_70 = arith.constant 0 : index
    %c136 = arith.constant 136 : index
    %90 = vector.load %arg2[%c0_70, %c136] : memref<8x200xf32, #tpu.memory_space<vmem>>, vector<8x8xf32>
    %cst_71 = arith.constant dense<0.000000e+00> : vector<8x320xf32>
    %91 = tpu.matmul %90, %89, %cst_71 {dimension_numbers = #tpu.dot_dimension_numbers<[1], [0], [0], [1], [0, 0, 1, 1], [], []>} : vector<8x8xf32>, vector<8x320xf32>, vector<8x320xf32> -> vector<8x320xf32>
    %92 = arith.addf %88, %91 : vector<8x320xf32>
    %c0_72 = arith.constant 0 : index
    %c63 = arith.constant 63 : index
    %93 = vector.load %arg9[%c0_72, %c63] : memref<8x420xf32, #tpu.memory_space<vmem>>, vector<8x320xf32>
    %c0_73 = arith.constant 0 : index
    %c144 = arith.constant 144 : index
    %94 = vector.load %arg2[%c0_73, %c144] : memref<8x200xf32, #tpu.memory_space<vmem>>, vector<8x8xf32>
    %cst_74 = arith.constant dense<0.000000e+00> : vector<8x320xf32>
    %95 = tpu.matmul %94, %93, %cst_74 {dimension_numbers = #tpu.dot_dimension_numbers<[1], [0], [0], [1], [0, 0, 1, 1], [], []>} : vector<8x8xf32>, vector<8x320xf32>, vector<8x320xf32> -> vector<8x320xf32>
    %96 = arith.addf %92, %95 : vector<8x320xf32>
    %c0_75 = arith.constant 0 : index
    %c64_76 = arith.constant 64 : index
    %97 = vector.load %arg9[%c0_75, %c64_76] : memref<8x420xf32, #tpu.memory_space<vmem>>, vector<8x320xf32>
    %c0_77 = arith.constant 0 : index
    %c152 = arith.constant 152 : index
    %98 = vector.load %arg2[%c0_77, %c152] : memref<8x200xf32, #tpu.memory_space<vmem>>, vector<8x8xf32>
    %cst_78 = arith.constant dense<0.000000e+00> : vector<8x320xf32>
    %99 = tpu.matmul %98, %97, %cst_78 {dimension_numbers = #tpu.dot_dimension_numbers<[1], [0], [0], [1], [0, 0, 1, 1], [], []>} : vector<8x8xf32>, vector<8x320xf32>, vector<8x320xf32> -> vector<8x320xf32>
    %100 = arith.addf %96, %99 : vector<8x320xf32>
    %c0_79 = arith.constant 0 : index
    %c80_80 = arith.constant 80 : index
    %101 = vector.load %arg9[%c0_79, %c80_80] : memref<8x420xf32, #tpu.memory_space<vmem>>, vector<8x320xf32>
    %c0_81 = arith.constant 0 : index
    %c160 = arith.constant 160 : index
    %102 = vector.load %arg2[%c0_81, %c160] : memref<8x200xf32, #tpu.memory_space<vmem>>, vector<8x8xf32>
    %cst_82 = arith.constant dense<0.000000e+00> : vector<8x320xf32>
    %103 = tpu.matmul %102, %101, %cst_82 {dimension_numbers = #tpu.dot_dimension_numbers<[1], [0], [0], [1], [0, 0, 1, 1], [], []>} : vector<8x8xf32>, vector<8x320xf32>, vector<8x320xf32> -> vector<8x320xf32>
    %104 = arith.addf %100, %103 : vector<8x320xf32>
    %c0_83 = arith.constant 0 : index
    %c81 = arith.constant 81 : index
    %105 = vector.load %arg9[%c0_83, %c81] : memref<8x420xf32, #tpu.memory_space<vmem>>, vector<8x320xf32>
    %c0_84 = arith.constant 0 : index
    %c168 = arith.constant 168 : index
    %106 = vector.load %arg2[%c0_84, %c168] : memref<8x200xf32, #tpu.memory_space<vmem>>, vector<8x8xf32>
    %cst_85 = arith.constant dense<0.000000e+00> : vector<8x320xf32>
    %107 = tpu.matmul %106, %105, %cst_85 {dimension_numbers = #tpu.dot_dimension_numbers<[1], [0], [0], [1], [0, 0, 1, 1], [], []>} : vector<8x8xf32>, vector<8x320xf32>, vector<8x320xf32> -> vector<8x320xf32>
    %108 = arith.addf %104, %107 : vector<8x320xf32>
    %c0_86 = arith.constant 0 : index
    %c82 = arith.constant 82 : index
    %109 = vector.load %arg9[%c0_86, %c82] : memref<8x420xf32, #tpu.memory_space<vmem>>, vector<8x320xf32>
    %c0_87 = arith.constant 0 : index
    %c176 = arith.constant 176 : index
    %110 = vector.load %arg2[%c0_87, %c176] : memref<8x200xf32, #tpu.memory_space<vmem>>, vector<8x8xf32>
    %cst_88 = arith.constant dense<0.000000e+00> : vector<8x320xf32>
    %111 = tpu.matmul %110, %109, %cst_88 {dimension_numbers = #tpu.dot_dimension_numbers<[1], [0], [0], [1], [0, 0, 1, 1], [], []>} : vector<8x8xf32>, vector<8x320xf32>, vector<8x320xf32> -> vector<8x320xf32>
    %112 = arith.addf %108, %111 : vector<8x320xf32>
    %c0_89 = arith.constant 0 : index
    %c83 = arith.constant 83 : index
    %113 = vector.load %arg9[%c0_89, %c83] : memref<8x420xf32, #tpu.memory_space<vmem>>, vector<8x320xf32>
    %c0_90 = arith.constant 0 : index
    %c184 = arith.constant 184 : index
    %114 = vector.load %arg2[%c0_90, %c184] : memref<8x200xf32, #tpu.memory_space<vmem>>, vector<8x8xf32>
    %cst_91 = arith.constant dense<0.000000e+00> : vector<8x320xf32>
    %115 = tpu.matmul %114, %113, %cst_91 {dimension_numbers = #tpu.dot_dimension_numbers<[1], [0], [0], [1], [0, 0, 1, 1], [], []>} : vector<8x8xf32>, vector<8x320xf32>, vector<8x320xf32> -> vector<8x320xf32>
    %116 = arith.addf %112, %115 : vector<8x320xf32>
    %c0_92 = arith.constant 0 : index
    %c84 = arith.constant 84 : index
    %117 = vector.load %arg9[%c0_92, %c84] : memref<8x420xf32, #tpu.memory_space<vmem>>, vector<8x320xf32>
    %c0_93 = arith.constant 0 : index
    %c192 = arith.constant 192 : index
    %118 = vector.load %arg2[%c0_93, %c192] : memref<8x200xf32, #tpu.memory_space<vmem>>, vector<8x8xf32>
    %cst_94 = arith.constant dense<0.000000e+00> : vector<8x320xf32>
    %119 = tpu.matmul %118, %117, %cst_94 {dimension_numbers = #tpu.dot_dimension_numbers<[1], [0], [0], [1], [0, 0, 1, 1], [], []>} : vector<8x8xf32>, vector<8x320xf32>, vector<8x320xf32> -> vector<8x320xf32>
    %120 = arith.addf %116, %119 : vector<8x320xf32>
    %cst_95 = arith.constant 0.000000e+00 : f32
    %121 = vector.shape_cast %18 : vector<1x320xi1> to vector<1x320xi1>
    %122 = vector.broadcast %121 : vector<1x320xi1> to vector<8x320xi1>
    %123 = vector.broadcast %cst_95 : f32 to vector<8x320xf32>
    %124 = arith.select %122, %120, %123 : vector<8x320xi1>, vector<8x320xf32>
    %c0_96 = arith.constant 0 : index
    %c42_97 = arith.constant 42 : index
    %125 = vector.load %arg9[%c0_96, %c42_97] : memref<8x420xf32, #tpu.memory_space<vmem>>, vector<8x320xf32>
    tpu.vector_store %arg9[%c0_96, %c42_97], %124 {strides = array<i32>} : memref<8x420xf32, #tpu.memory_space<vmem>>, vector<8x320xf32>,
    %c0_98 = arith.constant 0 : index
    %c0_99 = arith.constant 0 : index
    %126 = vector.load %arg5[%c0_98, %c0_99] : memref<8x1xf32, #tpu.memory_space<vmem>>, vector<8x1xf32>
    %c0_100 = arith.constant 0 : index
    %c21_101 = arith.constant 21 : index
    %127 = vector.load %arg9[%c0_100, %c21_101] : memref<8x420xf32, #tpu.memory_space<vmem>>, vector<8x320xf32>
    %c0_102 = arith.constant 0 : index
    %c0_103 = arith.constant 0 : index
    %128 = vector.load %arg4[%c0_102, %c0_103] : memref<8x72xf32, #tpu.memory_space<vmem>>, vector<8x8xf32>
    %cst_104 = arith.constant dense<0.000000e+00> : vector<8x320xf32>
    %129 = tpu.matmul %128, %127, %cst_104 {dimension_numbers = #tpu.dot_dimension_numbers<[1], [0], [0], [1], [0, 0, 1, 1], [], []>} : vector<8x8xf32>, vector<8x320xf32>, vector<8x320xf32> -> vector<8x320xf32>
    %130 = vector.broadcast %126 : vector<8x1xf32> to vector<8x320xf32>
    %131 = arith.addf %130, %129 : vector<8x320xf32>
    %c0_105 = arith.constant 0 : index
    %c22_106 = arith.constant 22 : index
    %132 = vector.load %arg9[%c0_105, %c22_106] : memref<8x420xf32, #tpu.memory_space<vmem>>, vector<8x320xf32>
    %c0_107 = arith.constant 0 : index
    %c8_108 = arith.constant 8 : index
    %133 = vector.load %arg4[%c0_107, %c8_108] : memref<8x72xf32, #tpu.memory_space<vmem>>, vector<8x8xf32>
    %cst_109 = arith.constant dense<0.000000e+00> : vector<8x320xf32>
    %134 = tpu.matmul %133, %132, %cst_109 {dimension_numbers = #tpu.dot_dimension_numbers<[1], [0], [0], [1], [0, 0, 1, 1], [], []>} : vector<8x8xf32>, vector<8x320xf32>, vector<8x320xf32> -> vector<8x320xf32>
    %135 = arith.addf %131, %134 : vector<8x320xf32>
    %c0_110 = arith.constant 0 : index
    %c23_111 = arith.constant 23 : index
    %136 = vector.load %arg9[%c0_110, %c23_111] : memref<8x420xf32, #tpu.memory_space<vmem>>, vector<8x320xf32>
    %c0_112 = arith.constant 0 : index
    %c16_113 = arith.constant 16 : index
    %137 = vector.load %arg4[%c0_112, %c16_113] : memref<8x72xf32, #tpu.memory_space<vmem>>, vector<8x8xf32>
    %cst_114 = arith.constant dense<0.000000e+00> : vector<8x320xf32>
    %138 = tpu.matmul %137, %136, %cst_114 {dimension_numbers = #tpu.dot_dimension_numbers<[1], [0], [0], [1], [0, 0, 1, 1], [], []>} : vector<8x8xf32>, vector<8x320xf32>, vector<8x320xf32> -> vector<8x320xf32>
    %139 = arith.addf %135, %138 : vector<8x320xf32>
    %c0_115 = arith.constant 0 : index
    %c41_116 = arith.constant 41 : index
    %140 = vector.load %arg9[%c0_115, %c41_116] : memref<8x420xf32, #tpu.memory_space<vmem>>, vector<8x320xf32>
    %c0_117 = arith.constant 0 : index
    %c24_118 = arith.constant 24 : index
    %141 = vector.load %arg4[%c0_117, %c24_118] : memref<8x72xf32, #tpu.memory_space<vmem>>, vector<8x8xf32>
    %cst_119 = arith.constant dense<0.000000e+00> : vector<8x320xf32>
    %142 = tpu.matmul %141, %140, %cst_119 {dimension_numbers = #tpu.dot_dimension_numbers<[1], [0], [0], [1], [0, 0, 1, 1], [], []>} : vector<8x8xf32>, vector<8x320xf32>, vector<8x320xf32> -> vector<8x320xf32>
    %143 = arith.addf %139, %142 : vector<8x320xf32>
    %c0_120 = arith.constant 0 : index
    %c42_121 = arith.constant 42 : index
    %144 = vector.load %arg9[%c0_120, %c42_121] : memref<8x420xf32, #tpu.memory_space<vmem>>, vector<8x320xf32>
    %c0_122 = arith.constant 0 : index
    %c32_123 = arith.constant 32 : index
    %145 = vector.load %arg4[%c0_122, %c32_123] : memref<8x72xf32, #tpu.memory_space<vmem>>, vector<8x8xf32>
    %cst_124 = arith.constant dense<0.000000e+00> : vector<8x320xf32>
    %146 = tpu.matmul %145, %144, %cst_124 {dimension_numbers = #tpu.dot_dimension_numbers<[1], [0], [0], [1], [0, 0, 1, 1], [], []>} : vector<8x8xf32>, vector<8x320xf32>, vector<8x320xf32> -> vector<8x320xf32>
    %147 = arith.addf %143, %146 : vector<8x320xf32>
    %c0_125 = arith.constant 0 : index
    %c43_126 = arith.constant 43 : index
    %148 = vector.load %arg9[%c0_125, %c43_126] : memref<8x420xf32, #tpu.memory_space<vmem>>, vector<8x320xf32>
    %c0_127 = arith.constant 0 : index
    %c40_128 = arith.constant 40 : index
    %149 = vector.load %arg4[%c0_127, %c40_128] : memref<8x72xf32, #tpu.memory_space<vmem>>, vector<8x8xf32>
    %cst_129 = arith.constant dense<0.000000e+00> : vector<8x320xf32>
    %150 = tpu.matmul %149, %148, %cst_129 {dimension_numbers = #tpu.dot_dimension_numbers<[1], [0], [0], [1], [0, 0, 1, 1], [], []>} : vector<8x8xf32>, vector<8x320xf32>, vector<8x320xf32> -> vector<8x320xf32>
    %151 = arith.addf %147, %150 : vector<8x320xf32>
    %c0_130 = arith.constant 0 : index
    %c61_131 = arith.constant 61 : index
    %152 = vector.load %arg9[%c0_130, %c61_131] : memref<8x420xf32, #tpu.memory_space<vmem>>, vector<8x320xf32>
    %c0_132 = arith.constant 0 : index
    %c48_133 = arith.constant 48 : index
    %153 = vector.load %arg4[%c0_132, %c48_133] : memref<8x72xf32, #tpu.memory_space<vmem>>, vector<8x8xf32>
    %cst_134 = arith.constant dense<0.000000e+00> : vector<8x320xf32>
    %154 = tpu.matmul %153, %152, %cst_134 {dimension_numbers = #tpu.dot_dimension_numbers<[1], [0], [0], [1], [0, 0, 1, 1], [], []>} : vector<8x8xf32>, vector<8x320xf32>, vector<8x320xf32> -> vector<8x320xf32>
    %155 = arith.addf %151, %154 : vector<8x320xf32>
    %c0_135 = arith.constant 0 : index
    %c62_136 = arith.constant 62 : index
    %156 = vector.load %arg9[%c0_135, %c62_136] : memref<8x420xf32, #tpu.memory_space<vmem>>, vector<8x320xf32>
    %c0_137 = arith.constant 0 : index
    %c56_138 = arith.constant 56 : index
    %157 = vector.load %arg4[%c0_137, %c56_138] : memref<8x72xf32, #tpu.memory_space<vmem>>, vector<8x8xf32>
    %cst_139 = arith.constant dense<0.000000e+00> : vector<8x320xf32>
    %158 = tpu.matmul %157, %156, %cst_139 {dimension_numbers = #tpu.dot_dimension_numbers<[1], [0], [0], [1], [0, 0, 1, 1], [], []>} : vector<8x8xf32>, vector<8x320xf32>, vector<8x320xf32> -> vector<8x320xf32>
    %159 = arith.addf %155, %158 : vector<8x320xf32>
    %c0_140 = arith.constant 0 : index
    %c63_141 = arith.constant 63 : index
    %160 = vector.load %arg9[%c0_140, %c63_141] : memref<8x420xf32, #tpu.memory_space<vmem>>, vector<8x320xf32>
    %c0_142 = arith.constant 0 : index
    %c64_143 = arith.constant 64 : index
    %161 = vector.load %arg4[%c0_142, %c64_143] : memref<8x72xf32, #tpu.memory_space<vmem>>, vector<8x8xf32>
    %cst_144 = arith.constant dense<0.000000e+00> : vector<8x320xf32>
    %162 = tpu.matmul %161, %160, %cst_144 {dimension_numbers = #tpu.dot_dimension_numbers<[1], [0], [0], [1], [0, 0, 1, 1], [], []>} : vector<8x8xf32>, vector<8x320xf32>, vector<8x320xf32> -> vector<8x320xf32>
    %163 = arith.addf %159, %162 : vector<8x320xf32>
    %cst_145 = arith.constant 0.000000e+00 : f32
    %164 = vector.broadcast %cst_145 : f32 to vector<8x320xf32>
    %165 = arith.maximumf %163, %164 : vector<8x320xf32>
    %cst_146 = arith.constant 0.000000e+00 : f32
    %166 = vector.shape_cast %18 : vector<1x320xi1> to vector<1x320xi1>
    %167 = vector.broadcast %166 : vector<1x320xi1> to vector<8x320xi1>
    %168 = vector.broadcast %cst_146 : f32 to vector<8x320xf32>
    %169 = arith.select %167, %165, %168 : vector<8x320xi1>, vector<8x320xf32>
    %c0_147 = arith.constant 0 : index
    %c42_148 = arith.constant 42 : index
    %170 = vector.load %arg9[%c0_147, %c42_148] : memref<8x420xf32, #tpu.memory_space<vmem>>, vector<8x320xf32>
    tpu.vector_store %arg9[%c0_147, %c42_148], %169 {strides = array<i32>} : memref<8x420xf32, #tpu.memory_space<vmem>>, vector<8x320xf32>,
    %c0_149 = arith.constant 0 : index
    %c0_150 = arith.constant 0 : index
    %171 = vector.load %arg7[%c0_149, %c0_150] : memref<3x1xf32, #tpu.memory_space<vmem>>, vector<3x1xf32>
    %c0_151 = arith.constant 0 : index
    %c21_152 = arith.constant 21 : index
    %172 = vector.load %arg9[%c0_151, %c21_152] : memref<8x420xf32, #tpu.memory_space<vmem>>, vector<8x320xf32>
    %c0_153 = arith.constant 0 : index
    %c0_154 = arith.constant 0 : index
    %173 = vector.load %arg6[%c0_153, %c0_154] : memref<3x72xf32, #tpu.memory_space<vmem>>, vector<3x8xf32>
    %cst_155 = arith.constant dense<0.000000e+00> : vector<3x320xf32>
    %174 = tpu.matmul %173, %172, %cst_155 {dimension_numbers = #tpu.dot_dimension_numbers<[1], [0], [0], [1], [0, 0, 1, 1], [], []>} : vector<3x8xf32>, vector<8x320xf32>, vector<3x320xf32> -> vector<3x320xf32>
    %175 = vector.broadcast %171 : vector<3x1xf32> to vector<3x320xf32>
    %176 = arith.addf %175, %174 : vector<3x320xf32>
    %c0_156 = arith.constant 0 : index
    %c22_157 = arith.constant 22 : index
    %177 = vector.load %arg9[%c0_156, %c22_157] : memref<8x420xf32, #tpu.memory_space<vmem>>, vector<8x320xf32>
    %c0_158 = arith.constant 0 : index
    %c8_159 = arith.constant 8 : index
    %178 = vector.load %arg6[%c0_158, %c8_159] : memref<3x72xf32, #tpu.memory_space<vmem>>, vector<3x8xf32>
    %cst_160 = arith.constant dense<0.000000e+00> : vector<3x320xf32>
    %179 = tpu.matmul %178, %177, %cst_160 {dimension_numbers = #tpu.dot_dimension_numbers<[1], [0], [0], [1], [0, 0, 1, 1], [], []>} : vector<3x8xf32>, vector<8x320xf32>, vector<3x320xf32> -> vector<3x320xf32>
    %180 = arith.addf %176, %179 : vector<3x320xf32>
    %c0_161 = arith.constant 0 : index
    %c23_162 = arith.constant 23 : index
    %181 = vector.load %arg9[%c0_161, %c23_162] : memref<8x420xf32, #tpu.memory_space<vmem>>, vector<8x320xf32>
    %c0_163 = arith.constant 0 : index
    %c16_164 = arith.constant 16 : index
    %182 = vector.load %arg6[%c0_163, %c16_164] : memref<3x72xf32, #tpu.memory_space<vmem>>, vector<3x8xf32>
    %cst_165 = arith.constant dense<0.000000e+00> : vector<3x320xf32>
    %183 = tpu.matmul %182, %181, %cst_165 {dimension_numbers = #tpu.dot_dimension_numbers<[1], [0], [0], [1], [0, 0, 1, 1], [], []>} : vector<3x8xf32>, vector<8x320xf32>, vector<3x320xf32> -> vector<3x320xf32>
    %184 = arith.addf %180, %183 : vector<3x320xf32>
    %c0_166 = arith.constant 0 : index
    %c41_167 = arith.constant 41 : index
    %185 = vector.load %arg9[%c0_166, %c41_167] : memref<8x420xf32, #tpu.memory_space<vmem>>, vector<8x320xf32>
    %c0_168 = arith.constant 0 : index
    %c24_169 = arith.constant 24 : index
    %186 = vector.load %arg6[%c0_168, %c24_169] : memref<3x72xf32, #tpu.memory_space<vmem>>, vector<3x8xf32>
    %cst_170 = arith.constant dense<0.000000e+00> : vector<3x320xf32>
    %187 = tpu.matmul %186, %185, %cst_170 {dimension_numbers = #tpu.dot_dimension_numbers<[1], [0], [0], [1], [0, 0, 1, 1], [], []>} : vector<3x8xf32>, vector<8x320xf32>, vector<3x320xf32> -> vector<3x320xf32>
    %188 = arith.addf %184, %187 : vector<3x320xf32>
    %c0_171 = arith.constant 0 : index
    %c42_172 = arith.constant 42 : index
    %189 = vector.load %arg9[%c0_171, %c42_172] : memref<8x420xf32, #tpu.memory_space<vmem>>, vector<8x320xf32>
    %c0_173 = arith.constant 0 : index
    %c32_174 = arith.constant 32 : index
    %190 = vector.load %arg6[%c0_173, %c32_174] : memref<3x72xf32, #tpu.memory_space<vmem>>, vector<3x8xf32>
    %cst_175 = arith.constant dense<0.000000e+00> : vector<3x320xf32>
    %191 = tpu.matmul %190, %189, %cst_175 {dimension_numbers = #tpu.dot_dimension_numbers<[1], [0], [0], [1], [0, 0, 1, 1], [], []>} : vector<3x8xf32>, vector<8x320xf32>, vector<3x320xf32> -> vector<3x320xf32>
    %192 = arith.addf %188, %191 : vector<3x320xf32>
    %c0_176 = arith.constant 0 : index
    %c43_177 = arith.constant 43 : index
    %193 = vector.load %arg9[%c0_176, %c43_177] : memref<8x420xf32, #tpu.memory_space<vmem>>, vector<8x320xf32>
    %c0_178 = arith.constant 0 : index
    %c40_179 = arith.constant 40 : index
    %194 = vector.load %arg6[%c0_178, %c40_179] : memref<3x72xf32, #tpu.memory_space<vmem>>, vector<3x8xf32>
    %cst_180 = arith.constant dense<0.000000e+00> : vector<3x320xf32>
    %195 = tpu.matmul %194, %193, %cst_180 {dimension_numbers = #tpu.dot_dimension_numbers<[1], [0], [0], [1], [0, 0, 1, 1], [], []>} : vector<3x8xf32>, vector<8x320xf32>, vector<3x320xf32> -> vector<3x320xf32>
    %196 = arith.addf %192, %195 : vector<3x320xf32>
    %c0_181 = arith.constant 0 : index
    %c61_182 = arith.constant 61 : index
    %197 = vector.load %arg9[%c0_181, %c61_182] : memref<8x420xf32, #tpu.memory_space<vmem>>, vector<8x320xf32>
    %c0_183 = arith.constant 0 : index
    %c48_184 = arith.constant 48 : index
    %198 = vector.load %arg6[%c0_183, %c48_184] : memref<3x72xf32, #tpu.memory_space<vmem>>, vector<3x8xf32>
    %cst_185 = arith.constant dense<0.000000e+00> : vector<3x320xf32>
    %199 = tpu.matmul %198, %197, %cst_185 {dimension_numbers = #tpu.dot_dimension_numbers<[1], [0], [0], [1], [0, 0, 1, 1], [], []>} : vector<3x8xf32>, vector<8x320xf32>, vector<3x320xf32> -> vector<3x320xf32>
    %200 = arith.addf %196, %199 : vector<3x320xf32>
    %c0_186 = arith.constant 0 : index
    %c62_187 = arith.constant 62 : index
    %201 = vector.load %arg9[%c0_186, %c62_187] : memref<8x420xf32, #tpu.memory_space<vmem>>, vector<8x320xf32>
    %c0_188 = arith.constant 0 : index
    %c56_189 = arith.constant 56 : index
    %202 = vector.load %arg6[%c0_188, %c56_189] : memref<3x72xf32, #tpu.memory_space<vmem>>, vector<3x8xf32>
    %cst_190 = arith.constant dense<0.000000e+00> : vector<3x320xf32>
    %203 = tpu.matmul %202, %201, %cst_190 {dimension_numbers = #tpu.dot_dimension_numbers<[1], [0], [0], [1], [0, 0, 1, 1], [], []>} : vector<3x8xf32>, vector<8x320xf32>, vector<3x320xf32> -> vector<3x320xf32>
    %204 = arith.addf %200, %203 : vector<3x320xf32>
    %c0_191 = arith.constant 0 : index
    %c63_192 = arith.constant 63 : index
    %205 = vector.load %arg9[%c0_191, %c63_192] : memref<8x420xf32, #tpu.memory_space<vmem>>, vector<8x320xf32>
    %c0_193 = arith.constant 0 : index
    %c64_194 = arith.constant 64 : index
    %206 = vector.load %arg6[%c0_193, %c64_194] : memref<3x72xf32, #tpu.memory_space<vmem>>, vector<3x8xf32>
    %cst_195 = arith.constant dense<0.000000e+00> : vector<3x320xf32>
    %207 = tpu.matmul %206, %205, %cst_195 {dimension_numbers = #tpu.dot_dimension_numbers<[1], [0], [0], [1], [0, 0, 1, 1], [], []>} : vector<3x8xf32>, vector<8x320xf32>, vector<3x320xf32> -> vector<3x320xf32>
    %208 = arith.addf %204, %207 : vector<3x320xf32>
    %c0_196 = arith.constant 0 : index
    %c0_197 = arith.constant 0 : index
    %c0_198 = arith.constant 0 : index
    %209 = vector.load %arg8[%c0_196, %c0_197, %c0_198] : memref<1x3x320xf32, #tpu.memory_space<vmem>>, vector<1x3x320xf32>
    %210 = vector.shape_cast %209 : vector<1x3x320xf32> to vector<3x320xf32>
    %211 = vector.shape_cast %208 : vector<3x320xf32> to vector<1x3x320xf32>
    tpu.vector_store %arg8[%c0_196, %c0_197, %c0_198], %211 {strides = array<i32>} : memref<1x3x320xf32, #tpu.memory_space<vmem>>, vector<1x3x320xf32>,
    return
  }
  func.func @transform_0(%arg0: i32) -> (i32, i32, i32) {
    %c0_i32 = arith.constant 0 : i32
    %c0_i32_0 = arith.constant 0 : i32
    %c0_i32_1 = arith.constant 0 : i32
    return %arg0, %c0_i32, %c0_i32_0 : i32, i32, i32
  }
  func.func @transform_1(%arg0: i32) -> (i32, i32) {
    %c0_i32 = arith.constant 0 : i32
    %c0_i32_0 = arith.constant 0 : i32
    %c0_i32_1 = arith.constant 0 : i32
    return %c0_i32, %c0_i32_0 : i32, i32
  }
  func.func @transform_2(%arg0: i32) -> (i32, i32) {
    %c0_i32 = arith.constant 0 : i32
    %c0_i32_0 = arith.constant 0 : i32
    %c0_i32_1 = arith.constant 0 : i32
    return %c0_i32, %c0_i32_0 : i32, i32
  }
  func.func @transform_3(%arg0: i32) -> (i32, i32) {
    %c0_i32 = arith.constant 0 : i32
    %c0_i32_0 = arith.constant 0 : i32
    %c0_i32_1 = arith.constant 0 : i32
    return %c0_i32, %c0_i32_0 : i32, i32
  }
  func.func @transform_4(%arg0: i32) -> (i32, i32) {
    %c0_i32 = arith.constant 0 : i32
    %c0_i32_0 = arith.constant 0 : i32
    %c0_i32_1 = arith.constant 0 : i32
    return %c0_i32, %c0_i32_0 : i32, i32
  }
  func.func @transform_5(%arg0: i32) -> (i32, i32) {
    %c0_i32 = arith.constant 0 : i32
    %c0_i32_0 = arith.constant 0 : i32
    %c0_i32_1 = arith.constant 0 : i32
    return %c0_i32, %c0_i32_0 : i32, i32
  }
  func.func @transform_6(%arg0: i32) -> (i32, i32) {
    %c0_i32 = arith.constant 0 : i32
    %c0_i32_0 = arith.constant 0 : i32
    %c0_i32_1 = arith.constant 0 : i32
    return %c0_i32, %c0_i32_0 : i32, i32
  }
  func.func @transform_7(%arg0: i32) -> (i32, i32, i32) {
    %c0_i32 = arith.constant 0 : i32
    %c0_i32_0 = arith.constant 0 : i32
    %c0_i32_1 = arith.constant 0 : i32
    return %arg0, %c0_i32, %c0_i32_0 : i32, i32, i32
  }
}

</mosaic_0001>

<llo_original>
// kernel: tpu_custom_call.1
$region0: #{tpu_custom_call.1}
  #allocation0 [shape = 'u32[]', space=smem, size = 0x4, offset = 0x4, fixed_abs, tag = 'smem constant byte address 0x4 - core index']
  #allocation1 [shape = 'u32[144,128]{1,0:T(1,128)}', space=vmem, size = 0x12000, scoped, tag = 'internal scratch']
  #allocation2 [shape = 'f32[8,420]{1,0:T(8,128)}', space=vmem, size = 0x4000, scoped, tag = 'scratch operand']
  %s0 = inlined_call_operand.hbm [shape: f32[2,8,320], index: 0, kind: input, shape index: {}]
  %s1 = inlined_call_operand.vmem [shape: f32[8,200], index: 1, kind: input, shape index: {}]
  %s2 = inlined_call_operand.vmem [shape: f32[8,1], index: 2, kind: input, shape index: {}]
  %s3 = inlined_call_operand.vmem [shape: f32[8,72], index: 3, kind: input, shape index: {}]
  %s4 = inlined_call_operand.vmem [shape: f32[8,1], index: 4, kind: input, shape index: {}]
  %s5 = inlined_call_operand.vmem [shape: f32[3,72], index: 5, kind: input, shape index: {}]
  %s6 = inlined_call_operand.vmem [shape: f32[3,1], index: 6, kind: input, shape index: {}]
  %s7 = inlined_call_operand.vmem [shape: f32[2,3,320], index: 7, kind: output, shape index: {}]
  %s8 = sld [smem:[#allocation0]]
  $region65: #{tpu_custom_call.1} parent=0
    _
  %s10 = ssub.s32 1, %s8
  %s11 = scalar_select 0, %s10, %s8
  $region1: #{tpu_custom_call.1} parent=0
    #allocation3 [shape = 'u8[24576]{0}', space=vmem, size = 0x6000, scoped, tag = 'input window, operand 0']
    #allocation4 [shape = 's32[2]{0}', space=sflag, size = 0x8, scoped, tag = 'scoped memory for tpu_custom_call.1']
    %12 = vsyncpa [#allocation4], 0
    %s13 = scalar_lea.sflag [#allocation4], 1
    %14 = vsyncpa %s13, 0
    loop: start=0, step=1, limit=4
    $region2: #{tpu_custom_call.1} parent=1 // loop_pre_header
      _
    $region3: #{tpu_custom_call.1} parent=1 // loop_header
      %s16 = sphi 0, %s20
      %p17 = scmp.ge.s32.totalorder %s16, 4
      %s26 = sphi 0, %s28
      %s29 = sphi 0, %s26
      %s30 = sphi 0, %s29
      %s46 = sphi 0, %s30
      %s50 = sphi 0, %s50
      %s52 = sphi 0, %s50
      %s53 = sphi 0, %s52
      %s67 = sphi 0, %s53
      %s71 = sphi 0, %s71
      %s73 = sphi 0, %s71
      %s74 = sphi 0, %s73
      %s88 = sphi 0, %s74
      %s92 = sphi 0, %s92
      %s94 = sphi 0, %s92
      %s95 = sphi 0, %s94
      %s109 = sphi 0, %s95
      %s113 = sphi 0, %s113
      %s115 = sphi 0, %s113
      %s116 = sphi 0, %s115
      %s130 = sphi 0, %s116
      %s134 = sphi 0, %s134
      %s136 = sphi 0, %s134
      %s137 = sphi 0, %s136
      %s151 = sphi 0, %s137
      %s155 = sphi 0, %s155
      %s157 = sphi 0, %s155
      %s158 = sphi 0, %s157
      %s172 = sphi 0, %s158
      %s178 = sphi 0, %s180
      %s181 = sphi 0, %s178
      %s182 = sphi 0, %s181
      %s198 = sphi 0, %s182
    $region4: #{tpu_custom_call.1} parent=1 // loop_header_branch
      %19 = sbr.rel (%p17) target = $region8
    $region5: #{tpu_custom_call.1} parent=1 // loop_body
      %s21 = ssub.s32 %s16, 1
      %s22 = ssub.s32 %s16, 2
      %s23 = sadd.s32 %s16, 1
      %s24 = ssub.s32 %s16, %s23
      %p25 = scmp.eq.s32.totalorder %s24, 0
      %s27 = sadd.s32 %s26, 1
      %s28 = scalar_select %p25, %s26, %s27
      %p31 = pneg %p25
      %p32 = scmp.eq.s32.totalorder %s16, 1
      %p33 = por %p31, %p32
      %p34 = scmp.ne.s32.totalorder %s26, %s29
      %p35 = scmp.eq.s32.totalorder %s16, 0
      %p36 = por %p34, %p35
      %p37 = scmp.ne.s32.totalorder %s26, %s29
      %p38 = scmp.eq.s32.totalorder %s21, 1
      %p39 = por %p37, %p38
      %p40 = scmp.ne.s32.totalorder %s29, %s30
      %p41 = scmp.eq.s32.totalorder %s21, 0
      %p42 = por %p40, %p41
      %p43 = scmp.ne.s32.totalorder %s29, %s30
      %p44 = scmp.eq.s32.totalorder %s22, 1
      %p45 = por %p43, %p44
      %p47 = scmp.ne.s32.totalorder %s30, %s46
      %p48 = scmp.eq.s32.totalorder %s22, 0
      %p49 = por %p47, %p48
      %s51 = sadd.s32 %s50, 1
      %p54 = scmp.eq.s32.totalorder %s16, 1
      %p55 = scmp.ne.s32.totalorder %s50, %s52
      %p56 = scmp.eq.s32.totalorder %s16, 0
      %p57 = por %p55, %p56
      %p58 = scmp.ne.s32.totalorder %s50, %s52
      %p59 = scmp.eq.s32.totalorder %s21, 1
      %p60 = por %p58, %p59
      %p61 = scmp.ne.s32.totalorder %s52, %s53
      %p62 = scmp.eq.s32.totalorder %s21, 0
      %p63 = por %p61, %p62
      %p64 = scmp.ne.s32.totalorder %s52, %s53
      %p65 = scmp.eq.s32.totalorder %s22, 1
      %p66 = por %p64, %p65
      %p68 = scmp.ne.s32.totalorder %s53, %s67
      %p69 = scmp.eq.s32.totalorder %s22, 0
      %p70 = por %p68, %p69
      %s72 = sadd.s32 %s71, 1
      %p75 = scmp.eq.s32.totalorder %s16, 1
      %p76 = scmp.ne.s32.totalorder %s71, %s73
      %p77 = scmp.eq.s32.totalorder %s16, 0
      %p78 = por %p76, %p77
      %p79 = scmp.ne.s32.totalorder %s71, %s73
      %p80 = scmp.eq.s32.totalorder %s21, 1
      %p81 = por %p79, %p80
      %p82 = scmp.ne.s32.totalorder %s73, %s74
      %p83 = scmp.eq.s32.totalorder %s21, 0
      %p84 = por %p82, %p83
      %p85 = scmp.ne.s32.totalorder %s73, %s74
      %p86 = scmp.eq.s32.totalorder %s22, 1
      %p87 = por %p85, %p86
      %p89 = scmp.ne.s32.totalorder %s74, %s88
      %p90 = scmp.eq.s32.totalorder %s22, 0
      %p91 = por %p89, %p90
      %s93 = sadd.s32 %s92, 1
      %p96 = scmp.eq.s32.totalorder %s16, 1
      %p97 = scmp.ne.s32.totalorder %s92, %s94
      %p98 = scmp.eq.s32.totalorder %s16, 0
      %p99 = por %p97, %p98
      %p100 = scmp.ne.s32.totalorder %s92, %s94
      %p101 = scmp.eq.s32.totalorder %s21, 1
      %p102 = por %p100, %p101
      %p103 = scmp.ne.s32.totalorder %s94, %s95
      %p104 = scmp.eq.s32.totalorder %s21, 0
      %p105 = por %p103, %p104
      %p106 = scmp.ne.s32.totalorder %s94, %s95
      %p107 = scmp.eq.s32.totalorder %s22, 1
      %p108 = por %p106, %p107
      %p110 = scmp.ne.s32.totalorder %s95, %s109
      %p111 = scmp.eq.s32.totalorder %s22, 0
      %p112 = por %p110, %p111
      %s114 = sadd.s32 %s113, 1
      %p117 = scmp.eq.s32.totalorder %s16, 1
      %p118 = scmp.ne.s32.totalorder %s113, %s115
      %p119 = scmp.eq.s32.totalorder %s16, 0
      %p120 = por %p118, %p119
      %p121 = scmp.ne.s32.totalorder %s113, %s115
      %p122 = scmp.eq.s32.totalorder %s21, 1
      %p123 = por %p121, %p122
      %p124 = scmp.ne.s32.totalorder %s115, %s116
      %p125 = scmp.eq.s32.totalorder %s21, 0
      %p126 = por %p124, %p125
      %p127 = scmp.ne.s32.totalorder %s115, %s116
      %p128 = scmp.eq.s32.totalorder %s22, 1
      %p129 = por %p127, %p128
      %p131 = scmp.ne.s32.totalorder %s116, %s130
      %p132 = scmp.eq.s32.totalorder %s22, 0
      %p133 = por %p131, %p132
      %s135 = sadd.s32 %s134, 1
      %p138 = scmp.eq.s32.totalorder %s16, 1
      %p139 = scmp.ne.s32.totalorder %s134, %s136
      %p140 = scmp.eq.s32.totalorder %s16, 0
      %p141 = por %p139, %p140
      %p142 = scmp.ne.s32.totalorder %s134, %s136
      %p143 = scmp.eq.s32.totalorder %s21, 1
      %p144 = por %p142, %p143
      %p145 = scmp.ne.s32.totalorder %s136, %s137
      %p146 = scmp.eq.s32.totalorder %s21, 0
      %p147 = por %p145, %p146
      %p148 = scmp.ne.s32.totalorder %s136, %s137
      %p149 = scmp.eq.s32.totalorder %s22, 1
      %p150 = por %p148, %p149
      %p152 = scmp.ne.s32.totalorder %s137, %s151
      %p153 = scmp.eq.s32.totalorder %s22, 0
      %p154 = por %p152, %p153
      %s156 = sadd.s32 %s155, 1
      %p159 = scmp.eq.s32.totalorder %s16, 1
      %p160 = scmp.ne.s32.totalorder %s155, %s157
      %p161 = scmp.eq.s32.totalorder %s16, 0
      %p162 = por %p160, %p161
      %p163 = scmp.ne.s32.totalorder %s155, %s157
      %p164 = scmp.eq.s32.totalorder %s21, 1
      %p165 = por %p163, %p164
      %p166 = scmp.ne.s32.totalorder %s157, %s158
      %p167 = scmp.eq.s32.totalorder %s21, 0
      %p168 = por %p166, %p167
      %p169 = scmp.ne.s32.totalorder %s157, %s158
      %p170 = scmp.eq.s32.totalorder %s22, 1
      %p171 = por %p169, %p170
      %p173 = scmp.ne.s32.totalorder %s158, %s172
      %p174 = scmp.eq.s32.totalorder %s22, 0
      %p175 = por %p173, %p174
      %s176 = ssub.s32 %s16, %s23
      %p177 = scmp.eq.s32.totalorder %s176, 0
      %s179 = sadd.s32 %s178, 1
      %s180 = scalar_select %p177, %s178, %s179
      %p183 = pneg %p177
      %p184 = scmp.eq.s32.totalorder %s16, 1
      %p185 = por %p183, %p184
      %p186 = scmp.ne.s32.totalorder %s178, %s181
      %p187 = scmp.eq.s32.totalorder %s16, 0
      %p188 = por %p186, %p187
      %p189 = scmp.ne.s32.totalorder %s178, %s181
      %p190 = scmp.eq.s32.totalorder %s21, 1
      %p191 = por %p189, %p190
      %p192 = scmp.ne.s32.totalorder %s181, %s182
      %p193 = scmp.eq.s32.totalorder %s21, 0
      %p194 = por %p192, %p193
      %p195 = scmp.ne.s32.totalorder %s181, %s182
      %p196 = scmp.eq.s32.totalorder %s22, 1
      %p197 = por %p195, %p196
      %p199 = scmp.ne.s32.totalorder %s182, %s198
      %p200 = scmp.eq.s32.totalorder %s22, 0
      %p201 = por %p199, %p200
      %p202 = scmp.le.s32.totalorder 1, %s16
      %p203 = scmp.lt.s32.totalorder %s16, 3
      %p204 = pnand %p202, %p203
      %p205 = pneg %p204
      // Predicated region
      $region9: #{tpu_custom_call.1} parent=5 // pred_check
        _
      $region10: #{tpu_custom_call.1} parent=5 // pred_check_branch
        %207 = sbr.rel (%p204) target = $region12
      $region11: #{tpu_custom_call.1} parent=5 // pred_region
        %s208 = ssub.s32 %s16, 1
        // Predicated region
        $region13: #{tpu_custom_call.1} parent=11 // pred_check
          %p209 = pneg %p63
        $region14: #{tpu_custom_call.1} parent=11 // pred_check_branch
          %211 = sbr.rel (%p209) target = $region16
        $region15: #{tpu_custom_call.1} parent=11 // pred_region
          _
        $region16: #{tpu_custom_call.1} parent=11 // pred_fallthru
          _
        // Predicated region
        $region17: #{tpu_custom_call.1} parent=11 // pred_check
          %p212 = pneg %p84
        $region18: #{tpu_custom_call.1} parent=11 // pred_check_branch
          %214 = sbr.rel (%p212) target = $region20
        $region19: #{tpu_custom_call.1} parent=11 // pred_region
          _
        $region20: #{tpu_custom_call.1} parent=11 // pred_fallthru
          _
        // Predicated region
        $region21: #{tpu_custom_call.1} parent=11 // pred_check
          %p215 = pneg %p105
        $region22: #{tpu_custom_call.1} parent=11 // pred_check_branch
          %217 = sbr.rel (%p215) target = $region24
        $region23: #{tpu_custom_call.1} parent=11 // pred_region
          _
        $region24: #{tpu_custom_call.1} parent=11 // pred_fallthru
          _
        // Predicated region
        $region25: #{tpu_custom_call.1} parent=11 // pred_check
          %p218 = pneg %p126
        $region26: #{tpu_custom_call.1} parent=11 // pred_check_branch
          %220 = sbr.rel (%p218) target = $region28
        $region27: #{tpu_custom_call.1} parent=11 // pred_region
          _
        $region28: #{tpu_custom_call.1} parent=11 // pred_fallthru
          _
        // Predicated region
        $region29: #{tpu_custom_call.1} parent=11 // pred_check
          %p221 = pneg %p147
        $region30: #{tpu_custom_call.1} parent=11 // pred_check_branch
          %223 = sbr.rel (%p221) target = $region32
        $region31: #{tpu_custom_call.1} parent=11 // pred_region
          _
        $region32: #{tpu_custom_call.1} parent=11 // pred_fallthru
          _
        // Predicated region
        $region33: #{tpu_custom_call.1} parent=11 // pred_check
          %p224 = pneg %p168
        $region34: #{tpu_custom_call.1} parent=11 // pred_check_branch
          %226 = sbr.rel (%p224) target = $region36
        $region35: #{tpu_custom_call.1} parent=11 // pred_region
          _
        $region36: #{tpu_custom_call.1} parent=11 // pred_fallthru
          _
      $region12: #{tpu_custom_call.1} parent=5 // pred_fallthru
        _
      %p227 = scmp.lt.s32.totalorder %s16, 2
      // Predicated region
      $region37: #{tpu_custom_call.1} parent=5 // pred_check
        %p228 = pneg %p227
      $region38: #{tpu_custom_call.1} parent=5 // pred_check_branch
        %230 = sbr.rel (%p228) target = $region40
      $region39: #{tpu_custom_call.1} parent=5 // pred_region
        // Predicated region
        $region41: #{tpu_custom_call.1} parent=39 // pred_check
          %p231 = pneg %p36
        $region42: #{tpu_custom_call.1} parent=39 // pred_check_branch
          %233 = sbr.rel (%p231) target = $region44
        $region43: #{tpu_custom_call.1} parent=39 // pred_region
          %s234 = sand.u32 %s26, 1
          %s235 = scalar_lea.sflag [#allocation4], %s234
          %s236 = sand.u32 %s26, 1
          %s237 = smul.addr %s236, 24
          %s238 = scalar_lea.vmem [#allocation3], %s237
          %s240 = ssub.s32 384, 384
          %241 = vsyncadd %s235, %s240
          %s242 = smul.addr %s16, 3
          %s243 = smul.addr %s242, 128
          %s244 = scalar_lea.hbm %s0, %s243
          %s246 = sshll.u32 %s238, 4
          %s247 = int_to_ptr.vmem [resolvable:$true] %s246
          %249 = dma.hbm_to_vmem [thread:$0]  %s244, 384, %s247, %s235
        $region44: #{tpu_custom_call.1} parent=39 // pred_fallthru
          _
      $region40: #{tpu_custom_call.1} parent=5 // pred_fallthru
        _
      %p250 = scmp.le.s32.totalorder 1, %s16
      %p251 = scmp.lt.s32.totalorder %s16, 3
      %p252 = pnand %p250, %p251
      %p253 = pneg %p252
      // Predicated region
      $region45: #{tpu_custom_call.1} parent=5 // pred_check
        _
      $region46: #{tpu_custom_call.1} parent=5 // pred_check_branch
        %255 = sbr.rel (%p252) target = $region48
      $region47: #{tpu_custom_call.1} parent=5 // pred_region
        %s256 = ssub.s32 %s16, 1
        %s257 = sand.u32 %s29, 1
        %s258 = scalar_lea.sflag [#allocation4], %s257
        %s259 = sand.u32 %s29, 1
        %s260 = smul.addr %s259, 24
        %s261 = scalar_lea.vmem [#allocation3], %s260
        // Predicated region
        $region49: #{tpu_custom_call.1} parent=47 // pred_check
          %p262 = pneg %p42
        $region50: #{tpu_custom_call.1} parent=47 // pred_check_branch
          %264 = sbr.rel (%p262) target = $region52
        $region51: #{tpu_custom_call.1} parent=47 // pred_region
          %265 = dma.done %s258, 384
        $region52: #{tpu_custom_call.1} parent=47 // pred_fallthru
          _
        %s266 = sand.u32 %s29, 1
        %s267 = scalar_lea.sflag [#allocation4], %s266
        %s268 = sand.u32 %s29, 1
        %s269 = smul.addr %s268, 24
        %s270 = scalar_lea.vmem [#allocation3], %s269
        %p271 = pneg %p42
        %p272 = pneg %p39
        %p273 = pneg %p63
        %p274 = pneg %p60
        %p275 = pneg %p84
        %p276 = pneg %p81
        %p277 = pneg %p105
        %p278 = pneg %p102
        %p279 = pneg %p126
        %p280 = pneg %p123
        %p281 = pneg %p147
        %p282 = pneg %p144
        %p283 = pneg %p168
        %p284 = pneg %p165
        %p285 = pneg %p194
        %p286 = pneg %p191
        %p287 = scmp.lt.s32.totalorder %s21, 1
        %s288 = scalar_select %p287, %s21, 1
        %s289 = smul.addr %s288, 3
        %s290 = smul.addr %s289, 4
        %s291 = scalar_lea.vmem %s7, %s290
        %p292 = scmp.lt.s32.totalorder %s21, 1
        %s293 = scalar_select %p292, %s21, 1
        %s294 = smul.addr %s293, 3
        %s295 = smul.addr %s294, 4
        %s296 = scalar_lea.vmem %s7, %s295
        %vm297 = vcmask 343040
        %298 = vst.msk [vmem:[#allocation2] sm:$0xff] %vm297, 0.0
        %vm299 = vcmask 1048400
        %300 = vst.msk [vmem:[#allocation2 + $0x10] sm:$0xff] %vm299, 0.0
        %vm301 = vcmask 293888
        %302 = vst.msk [vmem:[#allocation2 + $0x18] sm:$0xff] %vm301, 0.0
        %v303 = vld [vmem:[%s261] sm:$0xff]
        %v304 = vld [vmem:[%s261 + $0x8] sm:$0xff]
        %v305 = vld [vmem:[%s261 + $0x10] sm:$0xff]
        %309 = vrot.lane.b32.xlu0 %v303, 42
        %v310 = vpop.permute.xlu0 %309
        %311 = vrot.lane.b32.xlu0 %v304, 42
        %v312 = vpop.permute.xlu0 %311
        %313 = vrot.lane.b32.xlu0 %v305, 42
        %v314 = vpop.permute.xlu0 %313
        %v315 = vsel %vm297, %v310, %v312
        %v316 = vsel %vm297, %v312, %v314
        %vm320 = vcmask 1047888
        %321 = vst.msk [vmem:[#allocation2] sm:$0xff] %vm320, %v310
        %322 = vst [vmem:[#allocation2 + $0x8] sm:$0xff] %v315
        %vm323 = vcmask 867328
        %324 = vst.msk [vmem:[#allocation2 + $0x10] sm:$0xff] %vm323, %v316
        %v325 = vlaneseq
        %v326 = vand.u32 %v325, 127
        %v327 = vadd.s32 %v326, 128
        %v328 = vadd.s32 %v326, 256
        %v329 = vcvt.s32.f32 %v326
        %v330 = vcvt.s32.f32 %v327
        %v331 = vcvt.s32.f32 %v328
        %v332 = vadd.f32 %v329, 0.5
        %v333 = vadd.f32 %v330, 0.5
        %v334 = vadd.f32 %v331, 0.5
        %v335 = vrcp.pop 20.0
        %v336 = vmul.f32 %v332, %v335
        %v337 = vmul.f32 %v333, %v335
        %v338 = vmul.f32 %v334, %v335
        %v339 = vfloor.f32 %v336
        %v340 = vfloor.f32 %v337
        %v341 = vfloor.f32 %v338
        %v342 = vmul.f32 %v339, 20.0
        %v343 = vmul.f32 %v340, 20.0
        %v344 = vmul.f32 %v341, 20.0
        %v345 = vsub.f32 %v329, %v342
        %v346 = vsub.f32 %v330, %v343
        %v347 = vsub.f32 %v331, %v344
        %vm348 = vcmp.lt.f32.partialorder %v345, 15.5
        %vm349 = vcmp.lt.f32.partialorder %v346, 15.5
        %vm350 = vcmp.lt.f32.partialorder %v347, 15.5
        %v351 = vld [vmem:[%s2] sm:$0xff]
        %v352 = vld [vmem:[#allocation2] sm:$0xff]
        %v353 = vld [vmem:[#allocation2 + $0x8] sm:$0xff]
        %v354 = vld [vmem:[#allocation2 + $0x10] sm:$0xff]
        %v355 = vld [vmem:[%s1] sm:$0xff]
        %vm356 = vcmask 64512
        %v358 = vsel %vm356, %v355, 0
        %360 = vmatprep.subr.mxu0 0.0
        %361 = vmatpush1.msra.mxu0 0.0
        %362 = vmatprep.subr.mxu0 0.0
        %363 = vmatpush1.msra.mxu0 0.0
        %364 = vmatprep.subr.mxu0 0.0
        %365 = vmatpush1.msra.mxu0 0.0
        %366 = vmatprep.subr.mxu0 0.0
        %367 = vmatpush1.msra.mxu0 0.0
        %368 = vmatprep.subr.mxu0 0.0
        %369 = vmatpush1.msra.mxu0 0.0
        %370 = vmatprep.subr.mxu0 0.0
        %371 = vmatpush1.msra.mxu0 0.0
        %372 = vmatprep.subr.mxu0 0.0
        %373 = vmatpush1.msra.mxu0 0.0
        %374 = vmatprep.subr.mxu0 0.0
        %375 = vmatpush1.msra.mxu0 0.0
        %376 = vmatprep.subr.mxu0 0.0
        %377 = vmatpush1.msra.mxu0 0.0
        %378 = vmatprep.subr.mxu0 0.0
        %379 = vmatpush1.msra.mxu0 0.0
        %380 = vmatprep.subr.mxu0 0.0
        %381 = vmatpush1.msra.mxu0 0.0
        %382 = vmatprep.subr.mxu0 0.0
        %383 = vmatpush1.msra.mxu0 0.0
        %384 = vmatprep.subr.mxu0 0.0
        %385 = vmatpush1.msra.mxu0 0.0
        %386 = vmatprep.subr.mxu0 0.0
        %387 = vmatpush1.msra.mxu0 0.0
        %388 = vmatprep.subr.mxu0 0.0
        %389 = vmatpush1.msra.mxu0 0.0
        %390 = vmatprep.subr.mxu0 %v353
        %391 = vmatpush1.msra.mxu0 %v352
        %392 = vmatprep.subr.mxu0 0.0
        %393 = vmatpush2.msra.mxu0 0.0
        %394 = vmatprep.subr.mxu0 0.0
        %395 = vmatpush2.msra.mxu0 0.0
        %396 = vmatprep.subr.mxu0 0.0
        %397 = vmatpush2.msra.mxu0 0.0
        %398 = vmatprep.subr.mxu0 0.0
        %399 = vmatpush2.msra.mxu0 0.0
        %400 = vmatprep.subr.mxu0 0.0
        %401 = vmatpush2.msra.mxu0 0.0
        %402 = vmatprep.subr.mxu0 0.0
        %403 = vmatpush2.msra.mxu0 0.0
        %404 = vmatprep.subr.mxu0 0.0
        %405 = vmatpush2.msra.mxu0 0.0
        %406 = vmatprep.subr.mxu0 0.0
        %407 = vmatpush2.msra.mxu0 0.0
        %408 = vmatprep.subr.mxu0 0.0
        %409 = vmatpush2.msra.mxu0 0.0
        %410 = vmatprep.subr.mxu0 0.0
        %411 = vmatpush2.msra.mxu0 0.0
        %412 = vmatprep.subr.mxu0 0.0
        %413 = vmatpush2.msra.mxu0 0.0
        %414 = vmatprep.subr.mxu0 0.0
        %415 = vmatpush2.msra.mxu0 0.0
        %416 = vmatprep.subr.mxu0 0.0
        %417 = vmatpush2.msra.mxu0 0.0
        %418 = vmatprep.subr.mxu0 0.0
        %419 = vmatpush2.msra.mxu0 0.0
        %420 = vmatprep.subr.mxu0 0.0
        %421 = vmatpush2.msra.mxu0 0.0
        %422 = vmatprep.subr.mxu0 0.0
        %423 = vmatpush2.msra.mxu0 0.0
        %424 = vmatprep.mubr.f32.mxu0 0.0
        %425 = vmatmul.mubr.f32.gmra.mxu0 %v358
        %v426 = vpop.f32.mrf.mxu0
        %v427 = vadd.f32 0.0, %v426
        %v428 = vpop.f32.mrf.mxu0
        %v429 = vadd.f32 0.0, %v428
        %430 = vdwg.mxu0
        %431 = vmatprep.subr.mxu0 0.0
        %432 = vmatpush1.msra.mxu0 0.0
        %433 = vmatprep.subr.mxu0 0.0
        %434 = vmatpush1.msra.mxu0 0.0
        %435 = vmatprep.subr.mxu0 0.0
        %436 = vmatpush1.msra.mxu0 0.0
        %437 = vmatprep.subr.mxu0 0.0
        %438 = vmatpush1.msra.mxu0 0.0
        %439 = vmatprep.subr.mxu0 0.0
        %440 = vmatpush1.msra.mxu0 0.0
        %441 = vmatprep.subr.mxu0 0.0
        %442 = vmatpush1.msra.mxu0 0.0
        %443 = vmatprep.subr.mxu0 0.0
        %444 = vmatpush1.msra.mxu0 0.0
        %445 = vmatprep.subr.mxu0 0.0
        %446 = vmatpush1.msra.mxu0 0.0
        %447 = vmatprep.subr.mxu0 0.0
        %448 = vmatpush1.msra.mxu0 0.0
        %449 = vmatprep.subr.mxu0 0.0
        %450 = vmatpush1.msra.mxu0 0.0
        %451 = vmatprep.subr.mxu0 0.0
        %452 = vmatpush1.msra.mxu0 0.0
        %453 = vmatprep.subr.mxu0 0.0
        %454 = vmatpush1.msra.mxu0 0.0
        %455 = vmatprep.subr.mxu0 0.0
        %456 = vmatpush1.msra.mxu0 0.0
        %457 = vmatprep.subr.mxu0 0.0
        %458 = vmatpush1.msra.mxu0 0.0
        %459 = vmatprep.subr.mxu0 0.0
        %460 = vmatpush1.msra.mxu0 0.0
        %461 = vmatprep.subr.mxu0 0.0
        %462 = vmatpush1.msra.mxu0 %v354
        %463 = vmatprep.subr.mxu0 0.0
        %464 = vmatpush2.msra.mxu0 0.0
        %465 = vmatprep.subr.mxu0 0.0
        %466 = vmatpush2.msra.mxu0 0.0
        %467 = vmatprep.subr.mxu0 0.0
        %468 = vmatpush2.msra.mxu0 0.0
        %469 = vmatprep.subr.mxu0 0.0
        %470 = vmatpush2.msra.mxu0 0.0
        %471 = vmatprep.subr.mxu0 0.0
        %472 = vmatpush2.msra.mxu0 0.0
        %473 = vmatprep.subr.mxu0 0.0
        %474 = vmatpush2.msra.mxu0 0.0
        %475 = vmatprep.subr.mxu0 0.0
        %476 = vmatpush2.msra.mxu0 0.0
        %477 = vmatprep.subr.mxu0 0.0
        %478 = vmatpush2.msra.mxu0 0.0
        %479 = vmatprep.subr.mxu0 0.0
        %480 = vmatpush2.msra.mxu0 0.0
        %481 = vmatprep.subr.mxu0 0.0
        %482 = vmatpush2.msra.mxu0 0.0
        %483 = vmatprep.subr.mxu0 0.0
        %484 = vmatpush2.msra.mxu0 0.0
        %485 = vmatprep.subr.mxu0 0.0
        %486 = vmatpush2.msra.mxu0 0.0
        %487 = vmatprep.subr.mxu0 0.0
        %488 = vmatpush2.msra.mxu0 0.0
        %489 = vmatprep.subr.mxu0 0.0
        %490 = vmatpush2.msra.mxu0 0.0
        %491 = vmatprep.subr.mxu0 0.0
        %492 = vmatpush2.msra.mxu0 0.0
        %493 = vmatprep.subr.mxu0 0.0
        %494 = vmatpush2.msra.mxu0 0.0
        %495 = vmatprep.mubr.f32.mxu0 0.0
        %496 = vmatmul.mubr.f32.gmra.mxu0 %v358
        %v497 = vpop.f32.mrf.mxu0
        %v498 = vadd.f32 0.0, %v497
        %v499 = vpop.f32.mrf.mxu0
        %500 = vdwg.mxu0
        %502 = vset.pattern.permute.xlu0 0
        %503 = vperm.xlu0 %502, %v351
        %v504 = vpop.permute.xlu0 %503
        %v506 = vadd.f32 %v504, %v427
        %v507 = vadd.f32 %v504, %v429
        %v508 = vadd.f32 %v504, %v498
        %509 = vrot.lane.b32.xlu0 %v355, 120
        %v510 = vpop.permute.xlu0 %509
        %514 = vrot.lane.b32.xlu0 %v352, 127
        %v515 = vpop.permute.xlu0 %514
        %516 = vrot.lane.b32.xlu0 %v353, 127
        %v517 = vpop.permute.xlu0 %516
        %518 = vrot.lane.b32.xlu0 %v354, 127
        %v519 = vpop.permute.xlu0 %518
        %vm520 = vcmask 1039360
        %v521 = vsel %vm520, %v515, %v517
        %v522 = vsel %vm520, %v517, %v519
        %v526 = vsel %vm356, %v510, 0
        %528 = vmatprep.subr.mxu0 0.0
        %529 = vmatpush1.msra.mxu0 0.0
        %530 = vmatprep.subr.mxu0 0.0
        %531 = vmatpush1.msra.mxu0 0.0
        %532 = vmatprep.subr.mxu0 0.0
        %533 = vmatpush1.msra.mxu0 0.0
        %534 = vmatprep.subr.mxu0 0.0
        %535 = vmatpush1.msra.mxu0 0.0
        %536 = vmatprep.subr.mxu0 0.0
        %537 = vmatpush1.msra.mxu0 0.0
        %538 = vmatprep.subr.mxu0 0.0
        %539 = vmatpush1.msra.mxu0 0.0
        %540 = vmatprep.subr.mxu0 0.0
        %541 = vmatpush1.msra.mxu0 0.0
        %542 = vmatprep.subr.mxu0 0.0
        %543 = vmatpush1.msra.mxu0 0.0
        %544 = vmatprep.subr.mxu0 0.0
        %545 = vmatpush1.msra.mxu0 0.0
        %546 = vmatprep.subr.mxu0 0.0
        %547 = vmatpush1.msra.mxu0 0.0
        %548 = vmatprep.subr.mxu0 0.0
        %549 = vmatpush1.msra.mxu0 0.0
        %550 = vmatprep.subr.mxu0 0.0
        %551 = vmatpush1.msra.mxu0 0.0
        %552 = vmatprep.subr.mxu0 0.0
        %553 = vmatpush1.msra.mxu0 0.0
        %554 = vmatprep.subr.mxu0 0.0
        %555 = vmatpush1.msra.mxu0 0.0
        %556 = vmatprep.subr.mxu0 0.0
        %557 = vmatpush1.msra.mxu0 0.0
        %558 = vmatprep.subr.mxu0 %v522
        %559 = vmatpush1.msra.mxu0 %v521
        %560 = vmatprep.subr.mxu0 0.0
        %561 = vmatpush2.msra.mxu0 0.0
        %562 = vmatprep.subr.mxu0 0.0
        %563 = vmatpush2.msra.mxu0 0.0
        %564 = vmatprep.subr.mxu0 0.0
        %565 = vmatpush2.msra.mxu0 0.0
        %566 = vmatprep.subr.mxu0 0.0
        %567 = vmatpush2.msra.mxu0 0.0
        %568 = vmatprep.subr.mxu0 0.0
        %569 = vmatpush2.msra.mxu0 0.0
        %570 = vmatprep.subr.mxu0 0.0
        %571 = vmatpush2.msra.mxu0 0.0
        %572 = vmatprep.subr.mxu0 0.0
        %573 = vmatpush2.msra.mxu0 0.0
        %574 = vmatprep.subr.mxu0 0.0
        %575 = vmatpush2.msra.mxu0 0.0
        %576 = vmatprep.subr.mxu0 0.0
        %577 = vmatpush2.msra.mxu0 0.0
        %578 = vmatprep.subr.mxu0 0.0
        %579 = vmatpush2.msra.mxu0 0.0
        %580 = vmatprep.subr.mxu0 0.0
        %581 = vmatpush2.msra.mxu0 0.0
        %582 = vmatprep.subr.mxu0 0.0
        %583 = vmatpush2.msra.mxu0 0.0
        %584 = vmatprep.subr.mxu0 0.0
        %585 = vmatpush2.msra.mxu0 0.0
        %586 = vmatprep.subr.mxu0 0.0
        %587 = vmatpush2.msra.mxu0 0.0
        %588 = vmatprep.subr.mxu0 0.0
        %589 = vmatpush2.msra.mxu0 0.0
        %590 = vmatprep.subr.mxu0 0.0
        %591 = vmatpush2.msra.mxu0 0.0
        %592 = vmatprep.mubr.f32.mxu0 0.0
        %593 = vmatmul.mubr.f32.gmra.mxu0 %v526
        %v594 = vpop.f32.mrf.mxu0
        %v595 = vadd.f32 0.0, %v594
        %v596 = vpop.f32.mrf.mxu0
        %v597 = vadd.f32 0.0, %v596
        %598 = vdwg.mxu0
        %599 = vmatprep.subr.mxu0 0.0
        %600 = vmatpush1.msra.mxu0 0.0
        %601 = vmatprep.subr.mxu0 0.0
        %602 = vmatpush1.msra.mxu0 0.0
        %603 = vmatprep.subr.mxu0 0.0
        %604 = vmatpush1.msra.mxu0 0.0
        %605 = vmatprep.subr.mxu0 0.0
        %606 = vmatpush1.msra.mxu0 0.0
        %607 = vmatprep.subr.mxu0 0.0
        %608 = vmatpush1.msra.mxu0 0.0
        %609 = vmatprep.subr.mxu0 0.0
        %610 = vmatpush1.msra.mxu0 0.0
        %611 = vmatprep.subr.mxu0 0.0
        %612 = vmatpush1.msra.mxu0 0.0
        %613 = vmatprep.subr.mxu0 0.0
        %614 = vmatpush1.msra.mxu0 0.0
        %615 = vmatprep.subr.mxu0 0.0
        %616 = vmatpush1.msra.mxu0 0.0
        %617 = vmatprep.subr.mxu0 0.0
        %618 = vmatpush1.msra.mxu0 0.0
        %619 = vmatprep.subr.mxu0 0.0
        %620 = vmatpush1.msra.mxu0 0.0
        %621 = vmatprep.subr.mxu0 0.0
        %622 = vmatpush1.msra.mxu0 0.0
        %623 = vmatprep.subr.mxu0 0.0
        %624 = vmatpush1.msra.mxu0 0.0
        %625 = vmatprep.subr.mxu0 0.0
        %626 = vmatpush1.msra.mxu0 0.0
        %627 = vmatprep.subr.mxu0 0.0
        %628 = vmatpush1.msra.mxu0 0.0
        %629 = vmatprep.subr.mxu0 0.0
        %630 = vmatpush1.msra.mxu0 %v519
        %631 = vmatprep.subr.mxu0 0.0
        %632 = vmatpush2.msra.mxu0 0.0
        %633 = vmatprep.subr.mxu0 0.0
        %634 = vmatpush2.msra.mxu0 0.0
        %635 = vmatprep.subr.mxu0 0.0
        %636 = vmatpush2.msra.mxu0 0.0
        %637 = vmatprep.subr.mxu0 0.0
        %638 = vmatpush2.msra.mxu0 0.0
        %639 = vmatprep.subr.mxu0 0.0
        %640 = vmatpush2.msra.mxu0 0.0
        %641 = vmatprep.subr.mxu0 0.0
        %642 = vmatpush2.msra.mxu0 0.0
        %643 = vmatprep.subr.mxu0 0.0
        %644 = vmatpush2.msra.mxu0 0.0
        %645 = vmatprep.subr.mxu0 0.0
        %646 = vmatpush2.msra.mxu0 0.0
        %647 = vmatprep.subr.mxu0 0.0
        %648 = vmatpush2.msra.mxu0 0.0
        %649 = vmatprep.subr.mxu0 0.0
        %650 = vmatpush2.msra.mxu0 0.0
        %651 = vmatprep.subr.mxu0 0.0
        %652 = vmatpush2.msra.mxu0 0.0
        %653 = vmatprep.subr.mxu0 0.0
        %654 = vmatpush2.msra.mxu0 0.0
        %655 = vmatprep.subr.mxu0 0.0
        %656 = vmatpush2.msra.mxu0 0.0
        %657 = vmatprep.subr.mxu0 0.0
        %658 = vmatpush2.msra.mxu0 0.0
        %659 = vmatprep.subr.mxu0 0.0
        %660 = vmatpush2.msra.mxu0 0.0
        %661 = vmatprep.subr.mxu0 0.0
        %662 = vmatpush2.msra.mxu0 0.0
        %663 = vmatprep.mubr.f32.mxu0 0.0
        %664 = vmatmul.mubr.f32.gmra.mxu0 %v526
        %v665 = vpop.f32.mrf.mxu0
        %v666 = vadd.f32 0.0, %v665
        %v667 = vpop.f32.mrf.mxu0
        %668 = vdwg.mxu0
        %v669 = vadd.f32 %v506, %v595
        %v670 = vadd.f32 %v507, %v597
        %v671 = vadd.f32 %v508, %v666
        %672 = vrot.lane.b32.xlu0 %v355, 112
        %v673 = vpop.permute.xlu0 %672
        %674 = vrot.lane.b32.xlu0 %v352, 126
        %v675 = vpop.permute.xlu0 %674
        %676 = vrot.lane.b32.xlu0 %v353, 126
        %v677 = vpop.permute.xlu0 %676
        %678 = vrot.lane.b32.xlu0 %v354, 126
        %v679 = vpop.permute.xlu0 %678
        %vm680 = vcmask 1031168
        %v681 = vsel %vm680, %v675, %v677
        %v682 = vsel %vm680, %v677, %v679
        %v686 = vsel %vm356, %v673, 0
        %688 = vmatprep.subr.mxu0 0.0
        %689 = vmatpush1.msra.mxu0 0.0
        %690 = vmatprep.subr.mxu0 0.0
        %691 = vmatpush1.msra.mxu0 0.0
        %692 = vmatprep.subr.mxu0 0.0
        %693 = vmatpush1.msra.mxu0 0.0
        %694 = vmatprep.subr.mxu0 0.0
        %695 = vmatpush1.msra.mxu0 0.0
        %696 = vmatprep.subr.mxu0 0.0
        %697 = vmatpush1.msra.mxu0 0.0
        %698 = vmatprep.subr.mxu0 0.0
        %699 = vmatpush1.msra.mxu0 0.0
        %700 = vmatprep.subr.mxu0 0.0
        %701 = vmatpush1.msra.mxu0 0.0
        %702 = vmatprep.subr.mxu0 0.0
        %703 = vmatpush1.msra.mxu0 0.0
        %704 = vmatprep.subr.mxu0 0.0
        %705 = vmatpush1.msra.mxu0 0.0
        %706 = vmatprep.subr.mxu0 0.0
        %707 = vmatpush1.msra.mxu0 0.0
        %708 = vmatprep.subr.mxu0 0.0
        %709 = vmatpush1.msra.mxu0 0.0
        %710 = vmatprep.subr.mxu0 0.0
        %711 = vmatpush1.msra.mxu0 0.0
        %712 = vmatprep.subr.mxu0 0.0
        %713 = vmatpush1.msra.mxu0 0.0
        %714 = vmatprep.subr.mxu0 0.0
        %715 = vmatpush1.msra.mxu0 0.0
        %716 = vmatprep.subr.mxu0 0.0
        %717 = vmatpush1.msra.mxu0 0.0
        %718 = vmatprep.subr.mxu0 %v682
        %719 = vmatpush1.msra.mxu0 %v681
        %720 = vmatprep.subr.mxu0 0.0
        %721 = vmatpush2.msra.mxu0 0.0
        %722 = vmatprep.subr.mxu0 0.0
        %723 = vmatpush2.msra.mxu0 0.0
        %724 = vmatprep.subr.mxu0 0.0
        %725 = vmatpush2.msra.mxu0 0.0
        %726 = vmatprep.subr.mxu0 0.0
        %727 = vmatpush2.msra.mxu0 0.0
        %728 = vmatprep.subr.mxu0 0.0
        %729 = vmatpush2.msra.mxu0 0.0
        %730 = vmatprep.subr.mxu0 0.0
        %731 = vmatpush2.msra.mxu0 0.0
        %732 = vmatprep.subr.mxu0 0.0
        %733 = vmatpush2.msra.mxu0 0.0
        %734 = vmatprep.subr.mxu0 0.0
        %735 = vmatpush2.msra.mxu0 0.0
        %736 = vmatprep.subr.mxu0 0.0
        %737 = vmatpush2.msra.mxu0 0.0
        %738 = vmatprep.subr.mxu0 0.0
        %739 = vmatpush2.msra.mxu0 0.0
        %740 = vmatprep.subr.mxu0 0.0
        %741 = vmatpush2.msra.mxu0 0.0
        %742 = vmatprep.subr.mxu0 0.0
        %743 = vmatpush2.msra.mxu0 0.0
        %744 = vmatprep.subr.mxu0 0.0
        %745 = vmatpush2.msra.mxu0 0.0
        %746 = vmatprep.subr.mxu0 0.0
        %747 = vmatpush2.msra.mxu0 0.0
        %748 = vmatprep.subr.mxu0 0.0
        %749 = vmatpush2.msra.mxu0 0.0
        %750 = vmatprep.subr.mxu0 0.0
        %751 = vmatpush2.msra.mxu0 0.0
        %752 = vmatprep.mubr.f32.mxu0 0.0
        %753 = vmatmul.mubr.f32.gmra.mxu0 %v686
        %v754 = vpop.f32.mrf.mxu0
        %v755 = vadd.f32 0.0, %v754
        %v756 = vpop.f32.mrf.mxu0
        %v757 = vadd.f32 0.0, %v756
        %758 = vdwg.mxu0
        %759 = vmatprep.subr.mxu0 0.0
        %760 = vmatpush1.msra.mxu0 0.0
        %761 = vmatprep.subr.mxu0 0.0
        %762 = vmatpush1.msra.mxu0 0.0
        %763 = vmatprep.subr.mxu0 0.0
        %764 = vmatpush1.msra.mxu0 0.0
        %765 = vmatprep.subr.mxu0 0.0
        %766 = vmatpush1.msra.mxu0 0.0
        %767 = vmatprep.subr.mxu0 0.0
        %768 = vmatpush1.msra.mxu0 0.0
        %769 = vmatprep.subr.mxu0 0.0
        %770 = vmatpush1.msra.mxu0 0.0
        %771 = vmatprep.subr.mxu0 0.0
        %772 = vmatpush1.msra.mxu0 0.0
        %773 = vmatprep.subr.mxu0 0.0
        %774 = vmatpush1.msra.mxu0 0.0
        %775 = vmatprep.subr.mxu0 0.0
        %776 = vmatpush1.msra.mxu0 0.0
        %777 = vmatprep.subr.mxu0 0.0
        %778 = vmatpush1.msra.mxu0 0.0
        %779 = vmatprep.subr.mxu0 0.0
        %780 = vmatpush1.msra.mxu0 0.0
        %781 = vmatprep.subr.mxu0 0.0
        %782 = vmatpush1.msra.mxu0 0.0
        %783 = vmatprep.subr.mxu0 0.0
        %784 = vmatpush1.msra.mxu0 0.0
        %785 = vmatprep.subr.mxu0 0.0
        %786 = vmatpush1.msra.mxu0 0.0
        %787 = vmatprep.subr.mxu0 0.0
        %788 = vmatpush1.msra.mxu0 0.0
        %789 = vmatprep.subr.mxu0 0.0
        %790 = vmatpush1.msra.mxu0 %v679
        %791 = vmatprep.subr.mxu0 0.0
        %792 = vmatpush2.msra.mxu0 0.0
        %793 = vmatprep.subr.mxu0 0.0
        %794 = vmatpush2.msra.mxu0 0.0
        %795 = vmatprep.subr.mxu0 0.0
        %796 = vmatpush2.msra.mxu0 0.0
        %797 = vmatprep.subr.mxu0 0.0
        %798 = vmatpush2.msra.mxu0 0.0
        %799 = vmatprep.subr.mxu0 0.0
        %800 = vmatpush2.msra.mxu0 0.0
        %801 = vmatprep.subr.mxu0 0.0
        %802 = vmatpush2.msra.mxu0 0.0
        %803 = vmatprep.subr.mxu0 0.0
        %804 = vmatpush2.msra.mxu0 0.0
        %805 = vmatprep.subr.mxu0 0.0
        %806 = vmatpush2.msra.mxu0 0.0
        %807 = vmatprep.subr.mxu0 0.0
        %808 = vmatpush2.msra.mxu0 0.0
        %809 = vmatprep.subr.mxu0 0.0
        %810 = vmatpush2.msra.mxu0 0.0
        %811 = vmatprep.subr.mxu0 0.0
        %812 = vmatpush2.msra.mxu0 0.0
        %813 = vmatprep.subr.mxu0 0.0
        %814 = vmatpush2.msra.mxu0 0.0
        %815 = vmatprep.subr.mxu0 0.0
        %816 = vmatpush2.msra.mxu0 0.0
        %817 = vmatprep.subr.mxu0 0.0
        %818 = vmatpush2.msra.mxu0 0.0
        %819 = vmatprep.subr.mxu0 0.0
        %820 = vmatpush2.msra.mxu0 0.0
        %821 = vmatprep.subr.mxu0 0.0
        %822 = vmatpush2.msra.mxu0 0.0
        %823 = vmatprep.mubr.f32.mxu0 0.0
        %824 = vmatmul.mubr.f32.gmra.mxu0 %v686
        %v825 = vpop.f32.mrf.mxu0
        %v826 = vadd.f32 0.0, %v825
        %v827 = vpop.f32.mrf.mxu0
        %828 = vdwg.mxu0
        %v829 = vadd.f32 %v669, %v755
        %v830 = vadd.f32 %v670, %v757
        %v831 = vadd.f32 %v671, %v826
        %832 = vrot.lane.b32.xlu0 %v355, 104
        %v833 = vpop.permute.xlu0 %832
        %834 = vrot.lane.b32.xlu0 %v352, 125
        %v835 = vpop.permute.xlu0 %834
        %836 = vrot.lane.b32.xlu0 %v353, 125
        %v837 = vpop.permute.xlu0 %836
        %838 = vrot.lane.b32.xlu0 %v354, 125
        %v839 = vpop.permute.xlu0 %838
        %vm840 = vcmask 1022976
        %v841 = vsel %vm840, %v835, %v837
        %v842 = vsel %vm840, %v837, %v839
        %v846 = vsel %vm356, %v833, 0
        %848 = vmatprep.subr.mxu0 0.0
        %849 = vmatpush1.msra.mxu0 0.0
        %850 = vmatprep.subr.mxu0 0.0
        %851 = vmatpush1.msra.mxu0 0.0
        %852 = vmatprep.subr.mxu0 0.0
        %853 = vmatpush1.msra.mxu0 0.0
        %854 = vmatprep.subr.mxu0 0.0
        %855 = vmatpush1.msra.mxu0 0.0
        %856 = vmatprep.subr.mxu0 0.0
        %857 = vmatpush1.msra.mxu0 0.0
        %858 = vmatprep.subr.mxu0 0.0
        %859 = vmatpush1.msra.mxu0 0.0
        %860 = vmatprep.subr.mxu0 0.0
        %861 = vmatpush1.msra.mxu0 0.0
        %862 = vmatprep.subr.mxu0 0.0
        %863 = vmatpush1.msra.mxu0 0.0
        %864 = vmatprep.subr.mxu0 0.0
        %865 = vmatpush1.msra.mxu0 0.0
        %866 = vmatprep.subr.mxu0 0.0
        %867 = vmatpush1.msra.mxu0 0.0
        %868 = vmatprep.subr.mxu0 0.0
        %869 = vmatpush1.msra.mxu0 0.0
        %870 = vmatprep.subr.mxu0 0.0
        %871 = vmatpush1.msra.mxu0 0.0
        %872 = vmatprep.subr.mxu0 0.0
        %873 = vmatpush1.msra.mxu0 0.0
        %874 = vmatprep.subr.mxu0 0.0
        %875 = vmatpush1.msra.mxu0 0.0
        %876 = vmatprep.subr.mxu0 0.0
        %877 = vmatpush1.msra.mxu0 0.0
        %878 = vmatprep.subr.mxu0 %v842
        %879 = vmatpush1.msra.mxu0 %v841
        %880 = vmatprep.subr.mxu0 0.0
        %881 = vmatpush2.msra.mxu0 0.0
        %882 = vmatprep.subr.mxu0 0.0
        %883 = vmatpush2.msra.mxu0 0.0
        %884 = vmatprep.subr.mxu0 0.0
        %885 = vmatpush2.msra.mxu0 0.0
        %886 = vmatprep.subr.mxu0 0.0
        %887 = vmatpush2.msra.mxu0 0.0
        %888 = vmatprep.subr.mxu0 0.0
        %889 = vmatpush2.msra.mxu0 0.0
        %890 = vmatprep.subr.mxu0 0.0
        %891 = vmatpush2.msra.mxu0 0.0
        %892 = vmatprep.subr.mxu0 0.0
        %893 = vmatpush2.msra.mxu0 0.0
        %894 = vmatprep.subr.mxu0 0.0
        %895 = vmatpush2.msra.mxu0 0.0
        %896 = vmatprep.subr.mxu0 0.0
        %897 = vmatpush2.msra.mxu0 0.0
        %898 = vmatprep.subr.mxu0 0.0
        %899 = vmatpush2.msra.mxu0 0.0
        %900 = vmatprep.subr.mxu0 0.0
        %901 = vmatpush2.msra.mxu0 0.0
        %902 = vmatprep.subr.mxu0 0.0
        %903 = vmatpush2.msra.mxu0 0.0
        %904 = vmatprep.subr.mxu0 0.0
        %905 = vmatpush2.msra.mxu0 0.0
        %906 = vmatprep.subr.mxu0 0.0
        %907 = vmatpush2.msra.mxu0 0.0
        %908 = vmatprep.subr.mxu0 0.0
        %909 = vmatpush2.msra.mxu0 0.0
        %910 = vmatprep.subr.mxu0 0.0
        %911 = vmatpush2.msra.mxu0 0.0
        %912 = vmatprep.mubr.f32.mxu0 0.0
        %913 = vmatmul.mubr.f32.gmra.mxu0 %v846
        %v914 = vpop.f32.mrf.mxu0
        %v915 = vadd.f32 0.0, %v914
        %v916 = vpop.f32.mrf.mxu0
        %v917 = vadd.f32 0.0, %v916
        %918 = vdwg.mxu0
        %919 = vmatprep.subr.mxu0 0.0
        %920 = vmatpush1.msra.mxu0 0.0
        %921 = vmatprep.subr.mxu0 0.0
        %922 = vmatpush1.msra.mxu0 0.0
        %923 = vmatprep.subr.mxu0 0.0
        %924 = vmatpush1.msra.mxu0 0.0
        %925 = vmatprep.subr.mxu0 0.0
        %926 = vmatpush1.msra.mxu0 0.0
        %927 = vmatprep.subr.mxu0 0.0
        %928 = vmatpush1.msra.mxu0 0.0
        %929 = vmatprep.subr.mxu0 0.0
        %930 = vmatpush1.msra.mxu0 0.0
        %931 = vmatprep.subr.mxu0 0.0
        %932 = vmatpush1.msra.mxu0 0.0
        %933 = vmatprep.subr.mxu0 0.0
        %934 = vmatpush1.msra.mxu0 0.0
        %935 = vmatprep.subr.mxu0 0.0
        %936 = vmatpush1.msra.mxu0 0.0
        %937 = vmatprep.subr.mxu0 0.0
        %938 = vmatpush1.msra.mxu0 0.0
        %939 = vmatprep.subr.mxu0 0.0
        %940 = vmatpush1.msra.mxu0 0.0
        %941 = vmatprep.subr.mxu0 0.0
        %942 = vmatpush1.msra.mxu0 0.0
        %943 = vmatprep.subr.mxu0 0.0
        %944 = vmatpush1.msra.mxu0 0.0
        %945 = vmatprep.subr.mxu0 0.0
        %946 = vmatpush1.msra.mxu0 0.0
        %947 = vmatprep.subr.mxu0 0.0
        %948 = vmatpush1.msra.mxu0 0.0
        %949 = vmatprep.subr.mxu0 0.0
        %950 = vmatpush1.msra.mxu0 %v839
        %951 = vmatprep.subr.mxu0 0.0
        %952 = vmatpush2.msra.mxu0 0.0
        %953 = vmatprep.subr.mxu0 0.0
        %954 = vmatpush2.msra.mxu0 0.0
        %955 = vmatprep.subr.mxu0 0.0
        %956 = vmatpush2.msra.mxu0 0.0
        %957 = vmatprep.subr.mxu0 0.0
        %958 = vmatpush2.msra.mxu0 0.0
        %959 = vmatprep.subr.mxu0 0.0
        %960 = vmatpush2.msra.mxu0 0.0
        %961 = vmatprep.subr.mxu0 0.0
        %962 = vmatpush2.msra.mxu0 0.0
        %963 = vmatprep.subr.mxu0 0.0
        %964 = vmatpush2.msra.mxu0 0.0
        %965 = vmatprep.subr.mxu0 0.0
        %966 = vmatpush2.msra.mxu0 0.0
        %967 = vmatprep.subr.mxu0 0.0
        %968 = vmatpush2.msra.mxu0 0.0
        %969 = vmatprep.subr.mxu0 0.0
        %970 = vmatpush2.msra.mxu0 0.0
        %971 = vmatprep.subr.mxu0 0.0
        %972 = vmatpush2.msra.mxu0 0.0
        %973 = vmatprep.subr.mxu0 0.0
        %974 = vmatpush2.msra.mxu0 0.0
        %975 = vmatprep.subr.mxu0 0.0
        %976 = vmatpush2.msra.mxu0 0.0
        %977 = vmatprep.subr.mxu0 0.0
        %978 = vmatpush2.msra.mxu0 0.0
        %979 = vmatprep.subr.mxu0 0.0
        %980 = vmatpush2.msra.mxu0 0.0
        %981 = vmatprep.subr.mxu0 0.0
        %982 = vmatpush2.msra.mxu0 0.0
        %983 = vmatprep.mubr.f32.mxu0 0.0
        %984 = vmatmul.mubr.f32.gmra.mxu0 %v846
        %v985 = vpop.f32.mrf.mxu0
        %v986 = vadd.f32 0.0, %v985
        %v987 = vpop.f32.mrf.mxu0
        %988 = vdwg.mxu0
        %v989 = vadd.f32 %v829, %v915
        %v990 = vadd.f32 %v830, %v917
        %v991 = vadd.f32 %v831, %v986
        %992 = vrot.lane.b32.xlu0 %v355, 96
        %v993 = vpop.permute.xlu0 %992
        %994 = vrot.lane.b32.xlu0 %v352, 124
        %v995 = vpop.permute.xlu0 %994
        %996 = vrot.lane.b32.xlu0 %v353, 124
        %v997 = vpop.permute.xlu0 %996
        %998 = vrot.lane.b32.xlu0 %v354, 124
        %v999 = vpop.permute.xlu0 %998
        %vm1000 = vcmask 1014784
        %v1001 = vsel %vm1000, %v995, %v997
        %v1002 = vsel %vm1000, %v997, %v999
        %v1006 = vsel %vm356, %v993, 0
        %1008 = vmatprep.subr.mxu0 0.0
        %1009 = vmatpush1.msra.mxu0 0.0
        %1010 = vmatprep.subr.mxu0 0.0
        %1011 = vmatpush1.msra.mxu0 0.0
        %1012 = vmatprep.subr.mxu0 0.0
        %1013 = vmatpush1.msra.mxu0 0.0
        %1014 = vmatprep.subr.mxu0 0.0
        %1015 = vmatpush1.msra.mxu0 0.0
        %1016 = vmatprep.subr.mxu0 0.0
        %1017 = vmatpush1.msra.mxu0 0.0
        %1018 = vmatprep.subr.mxu0 0.0
        %1019 = vmatpush1.msra.mxu0 0.0
        %1020 = vmatprep.subr.mxu0 0.0
        %1021 = vmatpush1.msra.mxu0 0.0
        %1022 = vmatprep.subr.mxu0 0.0
        %1023 = vmatpush1.msra.mxu0 0.0
        %1024 = vmatprep.subr.mxu0 0.0
        %1025 = vmatpush1.msra.mxu0 0.0
        %1026 = vmatprep.subr.mxu0 0.0
        %1027 = vmatpush1.msra.mxu0 0.0
        %1028 = vmatprep.subr.mxu0 0.0
        %1029 = vmatpush1.msra.mxu0 0.0
        %1030 = vmatprep.subr.mxu0 0.0
        %1031 = vmatpush1.msra.mxu0 0.0
        %1032 = vmatprep.subr.mxu0 0.0
        %1033 = vmatpush1.msra.mxu0 0.0
        %1034 = vmatprep.subr.mxu0 0.0
        %1035 = vmatpush1.msra.mxu0 0.0
        %1036 = vmatprep.subr.mxu0 0.0
        %1037 = vmatpush1.msra.mxu0 0.0
        %1038 = vmatprep.subr.mxu0 %v1002
        %1039 = vmatpush1.msra.mxu0 %v1001
        %1040 = vmatprep.subr.mxu0 0.0
        %1041 = vmatpush2.msra.mxu0 0.0
        %1042 = vmatprep.subr.mxu0 0.0
        %1043 = vmatpush2.msra.mxu0 0.0
        %1044 = vmatprep.subr.mxu0 0.0
        %1045 = vmatpush2.msra.mxu0 0.0
        %1046 = vmatprep.subr.mxu0 0.0
        %1047 = vmatpush2.msra.mxu0 0.0
        %1048 = vmatprep.subr.mxu0 0.0
        %1049 = vmatpush2.msra.mxu0 0.0
        %1050 = vmatprep.subr.mxu0 0.0
        %1051 = vmatpush2.msra.mxu0 0.0
        %1052 = vmatprep.subr.mxu0 0.0
        %1053 = vmatpush2.msra.mxu0 0.0
        %1054 = vmatprep.subr.mxu0 0.0
        %1055 = vmatpush2.msra.mxu0 0.0
        %1056 = vmatprep.subr.mxu0 0.0
        %1057 = vmatpush2.msra.mxu0 0.0
        %1058 = vmatprep.subr.mxu0 0.0
        %1059 = vmatpush2.msra.mxu0 0.0
        %1060 = vmatprep.subr.mxu0 0.0
        %1061 = vmatpush2.msra.mxu0 0.0
        %1062 = vmatprep.subr.mxu0 0.0
        %1063 = vmatpush2.msra.mxu0 0.0
        %1064 = vmatprep.subr.mxu0 0.0
        %1065 = vmatpush2.msra.mxu0 0.0
        %1066 = vmatprep.subr.mxu0 0.0
        %1067 = vmatpush2.msra.mxu0 0.0
        %1068 = vmatprep.subr.mxu0 0.0
        %1069 = vmatpush2.msra.mxu0 0.0
        %1070 = vmatprep.subr.mxu0 0.0
        %1071 = vmatpush2.msra.mxu0 0.0
        %1072 = vmatprep.mubr.f32.mxu0 0.0
        %1073 = vmatmul.mubr.f32.gmra.mxu0 %v1006
        %v1074 = vpop.f32.mrf.mxu0
        %v1075 = vadd.f32 0.0, %v1074
        %v1076 = vpop.f32.mrf.mxu0
        %v1077 = vadd.f32 0.0, %v1076
        %1078 = vdwg.mxu0
        %1079 = vmatprep.subr.mxu0 0.0
        %1080 = vmatpush1.msra.mxu0 0.0
        %1081 = vmatprep.subr.mxu0 0.0
        %1082 = vmatpush1.msra.mxu0 0.0
        %1083 = vmatprep.subr.mxu0 0.0
        %1084 = vmatpush1.msra.mxu0 0.0
        %1085 = vmatprep.subr.mxu0 0.0
        %1086 = vmatpush1.msra.mxu0 0.0
        %1087 = vmatprep.subr.mxu0 0.0
        %1088 = vmatpush1.msra.mxu0 0.0
        %1089 = vmatprep.subr.mxu0 0.0
        %1090 = vmatpush1.msra.mxu0 0.0
        %1091 = vmatprep.subr.mxu0 0.0
        %1092 = vmatpush1.msra.mxu0 0.0
        %1093 = vmatprep.subr.mxu0 0.0
        %1094 = vmatpush1.msra.mxu0 0.0
        %1095 = vmatprep.subr.mxu0 0.0
        %1096 = vmatpush1.msra.mxu0 0.0
        %1097 = vmatprep.subr.mxu0 0.0
        %1098 = vmatpush1.msra.mxu0 0.0
        %1099 = vmatprep.subr.mxu0 0.0
        %1100 = vmatpush1.msra.mxu0 0.0
        %1101 = vmatprep.subr.mxu0 0.0
        %1102 = vmatpush1.msra.mxu0 0.0
        %1103 = vmatprep.subr.mxu0 0.0
        %1104 = vmatpush1.msra.mxu0 0.0
        %1105 = vmatprep.subr.mxu0 0.0
        %1106 = vmatpush1.msra.mxu0 0.0
        %1107 = vmatprep.subr.mxu0 0.0
        %1108 = vmatpush1.msra.mxu0 0.0
        %1109 = vmatprep.subr.mxu0 0.0
        %1110 = vmatpush1.msra.mxu0 %v999
        %1111 = vmatprep.subr.mxu0 0.0
        %1112 = vmatpush2.msra.mxu0 0.0
        %1113 = vmatprep.subr.mxu0 0.0
        %1114 = vmatpush2.msra.mxu0 0.0
        %1115 = vmatprep.subr.mxu0 0.0
        %1116 = vmatpush2.msra.mxu0 0.0
        %1117 = vmatprep.subr.mxu0 0.0
        %1118 = vmatpush2.msra.mxu0 0.0
        %1119 = vmatprep.subr.mxu0 0.0
        %1120 = vmatpush2.msra.mxu0 0.0
        %1121 = vmatprep.subr.mxu0 0.0
        %1122 = vmatpush2.msra.mxu0 0.0
        %1123 = vmatprep.subr.mxu0 0.0
        %1124 = vmatpush2.msra.mxu0 0.0
        %1125 = vmatprep.subr.mxu0 0.0
        %1126 = vmatpush2.msra.mxu0 0.0
        %1127 = vmatprep.subr.mxu0 0.0
        %1128 = vmatpush2.msra.mxu0 0.0
        %1129 = vmatprep.subr.mxu0 0.0
        %1130 = vmatpush2.msra.mxu0 0.0
        %1131 = vmatprep.subr.mxu0 0.0
        %1132 = vmatpush2.msra.mxu0 0.0
        %1133 = vmatprep.subr.mxu0 0.0
        %1134 = vmatpush2.msra.mxu0 0.0
        %1135 = vmatprep.subr.mxu0 0.0
        %1136 = vmatpush2.msra.mxu0 0.0
        %1137 = vmatprep.subr.mxu0 0.0
        %1138 = vmatpush2.msra.mxu0 0.0
        %1139 = vmatprep.subr.mxu0 0.0
        %1140 = vmatpush2.msra.mxu0 0.0
        %1141 = vmatprep.subr.mxu0 0.0
        %1142 = vmatpush2.msra.mxu0 0.0
        %1143 = vmatprep.mubr.f32.mxu0 0.0
        %1144 = vmatmul.mubr.f32.gmra.mxu0 %v1006
        %v1145 = vpop.f32.mrf.mxu0
        %v1146 = vadd.f32 0.0, %v1145
        %v1147 = vpop.f32.mrf.mxu0
        %1148 = vdwg.mxu0
        %v1149 = vadd.f32 %v989, %v1075
        %v1150 = vadd.f32 %v990, %v1077
        %v1151 = vadd.f32 %v991, %v1146
        %1152 = vrot.lane.b32.xlu0 %v355, 88
        %v1153 = vpop.permute.xlu0 %1152
        %1154 = vrot.lane.b32.xlu0 %v352, 108
        %v1155 = vpop.permute.xlu0 %1154
        %1156 = vrot.lane.b32.xlu0 %v353, 108
        %v1157 = vpop.permute.xlu0 %1156
        %1158 = vrot.lane.b32.xlu0 %v354, 108
        %v1159 = vpop.permute.xlu0 %1158
        %vm1160 = vcmask 883712
        %v1161 = vsel %vm1160, %v1155, %v1157
        %v1162 = vsel %vm1160, %v1157, %v1159
        %v1166 = vsel %vm356, %v1153, 0
        %1168 = vmatprep.subr.mxu0 0.0
        %1169 = vmatpush1.msra.mxu0 0.0
        %1170 = vmatprep.subr.mxu0 0.0
        %1171 = vmatpush1.msra.mxu0 0.0
        %1172 = vmatprep.subr.mxu0 0.0
        %1173 = vmatpush1.msra.mxu0 0.0
        %1174 = vmatprep.subr.mxu0 0.0
        %1175 = vmatpush1.msra.mxu0 0.0
        %1176 = vmatprep.subr.mxu0 0.0
        %1177 = vmatpush1.msra.mxu0 0.0
        %1178 = vmatprep.subr.mxu0 0.0
        %1179 = vmatpush1.msra.mxu0 0.0
        %1180 = vmatprep.subr.mxu0 0.0
        %1181 = vmatpush1.msra.mxu0 0.0
        %1182 = vmatprep.subr.mxu0 0.0
        %1183 = vmatpush1.msra.mxu0 0.0
        %1184 = vmatprep.subr.mxu0 0.0
        %1185 = vmatpush1.msra.mxu0 0.0
        %1186 = vmatprep.subr.mxu0 0.0
        %1187 = vmatpush1.msra.mxu0 0.0
        %1188 = vmatprep.subr.mxu0 0.0
        %1189 = vmatpush1.msra.mxu0 0.0
        %1190 = vmatprep.subr.mxu0 0.0
        %1191 = vmatpush1.msra.mxu0 0.0
        %1192 = vmatprep.subr.mxu0 0.0
        %1193 = vmatpush1.msra.mxu0 0.0
        %1194 = vmatprep.subr.mxu0 0.0
        %1195 = vmatpush1.msra.mxu0 0.0
        %1196 = vmatprep.subr.mxu0 0.0
        %1197 = vmatpush1.msra.mxu0 0.0
        %1198 = vmatprep.subr.mxu0 %v1162
        %1199 = vmatpush1.msra.mxu0 %v1161
        %1200 = vmatprep.subr.mxu0 0.0
        %1201 = vmatpush2.msra.mxu0 0.0
        %1202 = vmatprep.subr.mxu0 0.0
        %1203 = vmatpush2.msra.mxu0 0.0
        %1204 = vmatprep.subr.mxu0 0.0
        %1205 = vmatpush2.msra.mxu0 0.0
        %1206 = vmatprep.subr.mxu0 0.0
        %1207 = vmatpush2.msra.mxu0 0.0
        %1208 = vmatprep.subr.mxu0 0.0
        %1209 = vmatpush2.msra.mxu0 0.0
        %1210 = vmatprep.subr.mxu0 0.0
        %1211 = vmatpush2.msra.mxu0 0.0
        %1212 = vmatprep.subr.mxu0 0.0
        %1213 = vmatpush2.msra.mxu0 0.0
        %1214 = vmatprep.subr.mxu0 0.0
        %1215 = vmatpush2.msra.mxu0 0.0
        %1216 = vmatprep.subr.mxu0 0.0
        %1217 = vmatpush2.msra.mxu0 0.0
        %1218 = vmatprep.subr.mxu0 0.0
        %1219 = vmatpush2.msra.mxu0 0.0
        %1220 = vmatprep.subr.mxu0 0.0
        %1221 = vmatpush2.msra.mxu0 0.0
        %1222 = vmatprep.subr.mxu0 0.0
        %1223 = vmatpush2.msra.mxu0 0.0
        %1224 = vmatprep.subr.mxu0 0.0
        %1225 = vmatpush2.msra.mxu0 0.0
        %1226 = vmatprep.subr.mxu0 0.0
        %1227 = vmatpush2.msra.mxu0 0.0
        %1228 = vmatprep.subr.mxu0 0.0
        %1229 = vmatpush2.msra.mxu0 0.0
        %1230 = vmatprep.subr.mxu0 0.0
        %1231 = vmatpush2.msra.mxu0 0.0
        %1232 = vmatprep.mubr.f32.mxu0 0.0
        %1233 = vmatmul.mubr.f32.gmra.mxu0 %v1166
        %v1234 = vpop.f32.mrf.mxu0
        %v1235 = vadd.f32 0.0, %v1234
        %v1236 = vpop.f32.mrf.mxu0
        %v1237 = vadd.f32 0.0, %v1236
        %1238 = vdwg.mxu0
        %1239 = vmatprep.subr.mxu0 0.0
        %1240 = vmatpush1.msra.mxu0 0.0
        %1241 = vmatprep.subr.mxu0 0.0
        %1242 = vmatpush1.msra.mxu0 0.0
        %1243 = vmatprep.subr.mxu0 0.0
        %1244 = vmatpush1.msra.mxu0 0.0
        %1245 = vmatprep.subr.mxu0 0.0
        %1246 = vmatpush1.msra.mxu0 0.0
        %1247 = vmatprep.subr.mxu0 0.0
        %1248 = vmatpush1.msra.mxu0 0.0
        %1249 = vmatprep.subr.mxu0 0.0
        %1250 = vmatpush1.msra.mxu0 0.0
        %1251 = vmatprep.subr.mxu0 0.0
        %1252 = vmatpush1.msra.mxu0 0.0
        %1253 = vmatprep.subr.mxu0 0.0
        %1254 = vmatpush1.msra.mxu0 0.0
        %1255 = vmatprep.subr.mxu0 0.0
        %1256 = vmatpush1.msra.mxu0 0.0
        %1257 = vmatprep.subr.mxu0 0.0
        %1258 = vmatpush1.msra.mxu0 0.0
        %1259 = vmatprep.subr.mxu0 0.0
        %1260 = vmatpush1.msra.mxu0 0.0
        %1261 = vmatprep.subr.mxu0 0.0
        %1262 = vmatpush1.msra.mxu0 0.0
        %1263 = vmatprep.subr.mxu0 0.0
        %1264 = vmatpush1.msra.mxu0 0.0
        %1265 = vmatprep.subr.mxu0 0.0
        %1266 = vmatpush1.msra.mxu0 0.0
        %1267 = vmatprep.subr.mxu0 0.0
        %1268 = vmatpush1.msra.mxu0 0.0
        %1269 = vmatprep.subr.mxu0 0.0
        %1270 = vmatpush1.msra.mxu0 %v1159
        %1271 = vmatprep.subr.mxu0 0.0
        %1272 = vmatpush2.msra.mxu0 0.0
        %1273 = vmatprep.subr.mxu0 0.0
        %1274 = vmatpush2.msra.mxu0 0.0
        %1275 = vmatprep.subr.mxu0 0.0
        %1276 = vmatpush2.msra.mxu0 0.0
        %1277 = vmatprep.subr.mxu0 0.0
        %1278 = vmatpush2.msra.mxu0 0.0
        %1279 = vmatprep.subr.mxu0 0.0
        %1280 = vmatpush2.msra.mxu0 0.0
        %1281 = vmatprep.subr.mxu0 0.0
        %1282 = vmatpush2.msra.mxu0 0.0
        %1283 = vmatprep.subr.mxu0 0.0
        %1284 = vmatpush2.msra.mxu0 0.0
        %1285 = vmatprep.subr.mxu0 0.0
        %1286 = vmatpush2.msra.mxu0 0.0
        %1287 = vmatprep.subr.mxu0 0.0
        %1288 = vmatpush2.msra.mxu0 0.0
        %1289 = vmatprep.subr.mxu0 0.0
        %1290 = vmatpush2.msra.mxu0 0.0
        %1291 = vmatprep.subr.mxu0 0.0
        %1292 = vmatpush2.msra.mxu0 0.0
        %1293 = vmatprep.subr.mxu0 0.0
        %1294 = vmatpush2.msra.mxu0 0.0
        %1295 = vmatprep.subr.mxu0 0.0
        %1296 = vmatpush2.msra.mxu0 0.0
        %1297 = vmatprep.subr.mxu0 0.0
        %1298 = vmatpush2.msra.mxu0 0.0
        %1299 = vmatprep.subr.mxu0 0.0
        %1300 = vmatpush2.msra.mxu0 0.0
        %1301 = vmatprep.subr.mxu0 0.0
        %1302 = vmatpush2.msra.mxu0 0.0
        %1303 = vmatprep.mubr.f32.mxu0 0.0
        %1304 = vmatmul.mubr.f32.gmra.mxu0 %v1166
        %v1305 = vpop.f32.mrf.mxu0
        %v1306 = vadd.f32 0.0, %v1305
        %v1307 = vpop.f32.mrf.mxu0
        %1308 = vdwg.mxu0
        %v1309 = vadd.f32 %v1149, %v1235
        %v1310 = vadd.f32 %v1150, %v1237
        %v1311 = vadd.f32 %v1151, %v1306
        %1312 = vrot.lane.b32.xlu0 %v355, 80
        %v1313 = vpop.permute.xlu0 %1312
        %1314 = vrot.lane.b32.xlu0 %v352, 107
        %v1315 = vpop.permute.xlu0 %1314
        %1316 = vrot.lane.b32.xlu0 %v353, 107
        %v1317 = vpop.permute.xlu0 %1316
        %1318 = vrot.lane.b32.xlu0 %v354, 107
        %v1319 = vpop.permute.xlu0 %1318
        %vm1320 = vcmask 875520
        %v1321 = vsel %vm1320, %v1315, %v1317
        %v1322 = vsel %vm1320, %v1317, %v1319
        %v1326 = vsel %vm356, %v1313, 0
        %1328 = vmatprep.subr.mxu0 0.0
        %1329 = vmatpush1.msra.mxu0 0.0
        %1330 = vmatprep.subr.mxu0 0.0
        %1331 = vmatpush1.msra.mxu0 0.0
        %1332 = vmatprep.subr.mxu0 0.0
        %1333 = vmatpush1.msra.mxu0 0.0
        %1334 = vmatprep.subr.mxu0 0.0
        %1335 = vmatpush1.msra.mxu0 0.0
        %1336 = vmatprep.subr.mxu0 0.0
        %1337 = vmatpush1.msra.mxu0 0.0
        %1338 = vmatprep.subr.mxu0 0.0
        %1339 = vmatpush1.msra.mxu0 0.0
        %1340 = vmatprep.subr.mxu0 0.0
        %1341 = vmatpush1.msra.mxu0 0.0
        %1342 = vmatprep.subr.mxu0 0.0
        %1343 = vmatpush1.msra.mxu0 0.0
        %1344 = vmatprep.subr.mxu0 0.0
        %1345 = vmatpush1.msra.mxu0 0.0
        %1346 = vmatprep.subr.mxu0 0.0
        %1347 = vmatpush1.msra.mxu0 0.0
        %1348 = vmatprep.subr.mxu0 0.0
        %1349 = vmatpush1.msra.mxu0 0.0
        %1350 = vmatprep.subr.mxu0 0.0
        %1351 = vmatpush1.msra.mxu0 0.0
        %1352 = vmatprep.subr.mxu0 0.0
        %1353 = vmatpush1.msra.mxu0 0.0
        %1354 = vmatprep.subr.mxu0 0.0
        %1355 = vmatpush1.msra.mxu0 0.0
        %1356 = vmatprep.subr.mxu0 0.0
        %1357 = vmatpush1.msra.mxu0 0.0
        %1358 = vmatprep.subr.mxu0 %v1322
        %1359 = vmatpush1.msra.mxu0 %v1321
        %1360 = vmatprep.subr.mxu0 0.0
        %1361 = vmatpush2.msra.mxu0 0.0
        %1362 = vmatprep.subr.mxu0 0.0
        %1363 = vmatpush2.msra.mxu0 0.0
        %1364 = vmatprep.subr.mxu0 0.0
        %1365 = vmatpush2.msra.mxu0 0.0
        %1366 = vmatprep.subr.mxu0 0.0
        %1367 = vmatpush2.msra.mxu0 0.0
        %1368 = vmatprep.subr.mxu0 0.0
        %1369 = vmatpush2.msra.mxu0 0.0
        %1370 = vmatprep.subr.mxu0 0.0
        %1371 = vmatpush2.msra.mxu0 0.0
        %1372 = vmatprep.subr.mxu0 0.0
        %1373 = vmatpush2.msra.mxu0 0.0
        %1374 = vmatprep.subr.mxu0 0.0
        %1375 = vmatpush2.msra.mxu0 0.0
        %1376 = vmatprep.subr.mxu0 0.0
        %1377 = vmatpush2.msra.mxu0 0.0
        %1378 = vmatprep.subr.mxu0 0.0
        %1379 = vmatpush2.msra.mxu0 0.0
        %1380 = vmatprep.subr.mxu0 0.0
        %1381 = vmatpush2.msra.mxu0 0.0
        %1382 = vmatprep.subr.mxu0 0.0
        %1383 = vmatpush2.msra.mxu0 0.0
        %1384 = vmatprep.subr.mxu0 0.0
        %1385 = vmatpush2.msra.mxu0 0.0
        %1386 = vmatprep.subr.mxu0 0.0
        %1387 = vmatpush2.msra.mxu0 0.0
        %1388 = vmatprep.subr.mxu0 0.0
        %1389 = vmatpush2.msra.mxu0 0.0
        %1390 = vmatprep.subr.mxu0 0.0
        %1391 = vmatpush2.msra.mxu0 0.0
        %1392 = vmatprep.mubr.f32.mxu0 0.0
        %1393 = vmatmul.mubr.f32.gmra.mxu0 %v1326
        %v1394 = vpop.f32.mrf.mxu0
        %v1395 = vadd.f32 0.0, %v1394
        %v1396 = vpop.f32.mrf.mxu0
        %v1397 = vadd.f32 0.0, %v1396
        %1398 = vdwg.mxu0
        %1399 = vmatprep.subr.mxu0 0.0
        %1400 = vmatpush1.msra.mxu0 0.0
        %1401 = vmatprep.subr.mxu0 0.0
        %1402 = vmatpush1.msra.mxu0 0.0
        %1403 = vmatprep.subr.mxu0 0.0
        %1404 = vmatpush1.msra.mxu0 0.0
        %1405 = vmatprep.subr.mxu0 0.0
        %1406 = vmatpush1.msra.mxu0 0.0
        %1407 = vmatprep.subr.mxu0 0.0
        %1408 = vmatpush1.msra.mxu0 0.0
        %1409 = vmatprep.subr.mxu0 0.0
        %1410 = vmatpush1.msra.mxu0 0.0
        %1411 = vmatprep.subr.mxu0 0.0
        %1412 = vmatpush1.msra.mxu0 0.0
        %1413 = vmatprep.subr.mxu0 0.0
        %1414 = vmatpush1.msra.mxu0 0.0
        %1415 = vmatprep.subr.mxu0 0.0
        %1416 = vmatpush1.msra.mxu0 0.0
        %1417 = vmatprep.subr.mxu0 0.0
        %1418 = vmatpush1.msra.mxu0 0.0
        %1419 = vmatprep.subr.mxu0 0.0
        %1420 = vmatpush1.msra.mxu0 0.0
        %1421 = vmatprep.subr.mxu0 0.0
        %1422 = vmatpush1.msra.mxu0 0.0
        %1423 = vmatprep.subr.mxu0 0.0
        %1424 = vmatpush1.msra.mxu0 0.0
        %1425 = vmatprep.subr.mxu0 0.0
        %1426 = vmatpush1.msra.mxu0 0.0
        %1427 = vmatprep.subr.mxu0 0.0
        %1428 = vmatpush1.msra.mxu0 0.0
        %1429 = vmatprep.subr.mxu0 0.0
        %1430 = vmatpush1.msra.mxu0 %v1319
        %1431 = vmatprep.subr.mxu0 0.0
        %1432 = vmatpush2.msra.mxu0 0.0
        %1433 = vmatprep.subr.mxu0 0.0
        %1434 = vmatpush2.msra.mxu0 0.0
        %1435 = vmatprep.subr.mxu0 0.0
        %1436 = vmatpush2.msra.mxu0 0.0
        %1437 = vmatprep.subr.mxu0 0.0
        %1438 = vmatpush2.msra.mxu0 0.0
        %1439 = vmatprep.subr.mxu0 0.0
        %1440 = vmatpush2.msra.mxu0 0.0
        %1441 = vmatprep.subr.mxu0 0.0
        %1442 = vmatpush2.msra.mxu0 0.0
        %1443 = vmatprep.subr.mxu0 0.0
        %1444 = vmatpush2.msra.mxu0 0.0
        %1445 = vmatprep.subr.mxu0 0.0
        %1446 = vmatpush2.msra.mxu0 0.0
        %1447 = vmatprep.subr.mxu0 0.0
        %1448 = vmatpush2.msra.mxu0 0.0
        %1449 = vmatprep.subr.mxu0 0.0
        %1450 = vmatpush2.msra.mxu0 0.0
        %1451 = vmatprep.subr.mxu0 0.0
        %1452 = vmatpush2.msra.mxu0 0.0
        %1453 = vmatprep.subr.mxu0 0.0
        %1454 = vmatpush2.msra.mxu0 0.0
        %1455 = vmatprep.subr.mxu0 0.0
        %1456 = vmatpush2.msra.mxu0 0.0
        %1457 = vmatprep.subr.mxu0 0.0
        %1458 = vmatpush2.msra.mxu0 0.0
        %1459 = vmatprep.subr.mxu0 0.0
        %1460 = vmatpush2.msra.mxu0 0.0
        %1461 = vmatprep.subr.mxu0 0.0
        %1462 = vmatpush2.msra.mxu0 0.0
        %1463 = vmatprep.mubr.f32.mxu0 0.0
        %1464 = vmatmul.mubr.f32.gmra.mxu0 %v1326
        %v1465 = vpop.f32.mrf.mxu0
        %v1466 = vadd.f32 0.0, %v1465
        %v1467 = vpop.f32.mrf.mxu0
        %1468 = vdwg.mxu0
        %v1469 = vadd.f32 %v1309, %v1395
        %v1470 = vadd.f32 %v1310, %v1397
        %v1471 = vadd.f32 %v1311, %v1466
        %1472 = vrot.lane.b32.xlu0 %v355, 72
        %v1473 = vpop.permute.xlu0 %1472
        %1474 = vrot.lane.b32.xlu0 %v352, 106
        %v1475 = vpop.permute.xlu0 %1474
        %1476 = vrot.lane.b32.xlu0 %v353, 106
        %v1477 = vpop.permute.xlu0 %1476
        %1478 = vrot.lane.b32.xlu0 %v354, 106
        %v1479 = vpop.permute.xlu0 %1478
        %v1480 = vsel %vm323, %v1475, %v1477
        %v1481 = vsel %vm323, %v1477, %v1479
        %v1485 = vsel %vm356, %v1473, 0
        %1487 = vmatprep.subr.mxu0 0.0
        %1488 = vmatpush1.msra.mxu0 0.0
        %1489 = vmatprep.subr.mxu0 0.0
        %1490 = vmatpush1.msra.mxu0 0.0
        %1491 = vmatprep.subr.mxu0 0.0
        %1492 = vmatpush1.msra.mxu0 0.0
        %1493 = vmatprep.subr.mxu0 0.0
        %1494 = vmatpush1.msra.mxu0 0.0
        %1495 = vmatprep.subr.mxu0 0.0
        %1496 = vmatpush1.msra.mxu0 0.0
        %1497 = vmatprep.subr.mxu0 0.0
        %1498 = vmatpush1.msra.mxu0 0.0
        %1499 = vmatprep.subr.mxu0 0.0
        %1500 = vmatpush1.msra.mxu0 0.0
        %1501 = vmatprep.subr.mxu0 0.0
        %1502 = vmatpush1.msra.mxu0 0.0
        %1503 = vmatprep.subr.mxu0 0.0
        %1504 = vmatpush1.msra.mxu0 0.0
        %1505 = vmatprep.subr.mxu0 0.0
        %1506 = vmatpush1.msra.mxu0 0.0
        %1507 = vmatprep.subr.mxu0 0.0
        %1508 = vmatpush1.msra.mxu0 0.0
        %1509 = vmatprep.subr.mxu0 0.0
        %1510 = vmatpush1.msra.mxu0 0.0
        %1511 = vmatprep.subr.mxu0 0.0
        %1512 = vmatpush1.msra.mxu0 0.0
        %1513 = vmatprep.subr.mxu0 0.0
        %1514 = vmatpush1.msra.mxu0 0.0
        %1515 = vmatprep.subr.mxu0 0.0
        %1516 = vmatpush1.msra.mxu0 0.0
        %1517 = vmatprep.subr.mxu0 %v1481
        %1518 = vmatpush1.msra.mxu0 %v1480
        %1519 = vmatprep.subr.mxu0 0.0
        %1520 = vmatpush2.msra.mxu0 0.0
        %1521 = vmatprep.subr.mxu0 0.0
        %1522 = vmatpush2.msra.mxu0 0.0
        %1523 = vmatprep.subr.mxu0 0.0
        %1524 = vmatpush2.msra.mxu0 0.0
        %1525 = vmatprep.subr.mxu0 0.0
        %1526 = vmatpush2.msra.mxu0 0.0
        %1527 = vmatprep.subr.mxu0 0.0
        %1528 = vmatpush2.msra.mxu0 0.0
        %1529 = vmatprep.subr.mxu0 0.0
        %1530 = vmatpush2.msra.mxu0 0.0
        %1531 = vmatprep.subr.mxu0 0.0
        %1532 = vmatpush2.msra.mxu0 0.0
        %1533 = vmatprep.subr.mxu0 0.0
        %1534 = vmatpush2.msra.mxu0 0.0
        %1535 = vmatprep.subr.mxu0 0.0
        %1536 = vmatpush2.msra.mxu0 0.0
        %1537 = vmatprep.subr.mxu0 0.0
        %1538 = vmatpush2.msra.mxu0 0.0
        %1539 = vmatprep.subr.mxu0 0.0
        %1540 = vmatpush2.msra.mxu0 0.0
        %1541 = vmatprep.subr.mxu0 0.0
        %1542 = vmatpush2.msra.mxu0 0.0
        %1543 = vmatprep.subr.mxu0 0.0
        %1544 = vmatpush2.msra.mxu0 0.0
        %1545 = vmatprep.subr.mxu0 0.0
        %1546 = vmatpush2.msra.mxu0 0.0
        %1547 = vmatprep.subr.mxu0 0.0
        %1548 = vmatpush2.msra.mxu0 0.0
        %1549 = vmatprep.subr.mxu0 0.0
        %1550 = vmatpush2.msra.mxu0 0.0
        %1551 = vmatprep.mubr.f32.mxu0 0.0
        %1552 = vmatmul.mubr.f32.gmra.mxu0 %v1485
        %v1553 = vpop.f32.mrf.mxu0
        %v1554 = vadd.f32 0.0, %v1553
        %v1555 = vpop.f32.mrf.mxu0
        %v1556 = vadd.f32 0.0, %v1555
        %1557 = vdwg.mxu0
        %1558 = vmatprep.subr.mxu0 0.0
        %1559 = vmatpush1.msra.mxu0 0.0
        %1560 = vmatprep.subr.mxu0 0.0
        %1561 = vmatpush1.msra.mxu0 0.0
        %1562 = vmatprep.subr.mxu0 0.0
        %1563 = vmatpush1.msra.mxu0 0.0
        %1564 = vmatprep.subr.mxu0 0.0
        %1565 = vmatpush1.msra.mxu0 0.0
        %1566 = vmatprep.subr.mxu0 0.0
        %1567 = vmatpush1.msra.mxu0 0.0
        %1568 = vmatprep.subr.mxu0 0.0
        %1569 = vmatpush1.msra.mxu0 0.0
        %1570 = vmatprep.subr.mxu0 0.0
        %1571 = vmatpush1.msra.mxu0 0.0
        %1572 = vmatprep.subr.mxu0 0.0
        %1573 = vmatpush1.msra.mxu0 0.0
        %1574 = vmatprep.subr.mxu0 0.0
        %1575 = vmatpush1.msra.mxu0 0.0
        %1576 = vmatprep.subr.mxu0 0.0
        %1577 = vmatpush1.msra.mxu0 0.0
        %1578 = vmatprep.subr.mxu0 0.0
        %1579 = vmatpush1.msra.mxu0 0.0
        %1580 = vmatprep.subr.mxu0 0.0
        %1581 = vmatpush1.msra.mxu0 0.0
        %1582 = vmatprep.subr.mxu0 0.0
        %1583 = vmatpush1.msra.mxu0 0.0
        %1584 = vmatprep.subr.mxu0 0.0
        %1585 = vmatpush1.msra.mxu0 0.0
        %1586 = vmatprep.subr.mxu0 0.0
        %1587 = vmatpush1.msra.mxu0 0.0
        %1588 = vmatprep.subr.mxu0 0.0
        %1589 = vmatpush1.msra.mxu0 %v1479
        %1590 = vmatprep.subr.mxu0 0.0
        %1591 = vmatpush2.msra.mxu0 0.0
        %1592 = vmatprep.subr.mxu0 0.0
        %1593 = vmatpush2.msra.mxu0 0.0
        %1594 = vmatprep.subr.mxu0 0.0
        %1595 = vmatpush2.msra.mxu0 0.0
        %1596 = vmatprep.subr.mxu0 0.0
        %1597 = vmatpush2.msra.mxu0 0.0
        %1598 = vmatprep.subr.mxu0 0.0
        %1599 = vmatpush2.msra.mxu0 0.0
        %1600 = vmatprep.subr.mxu0 0.0
        %1601 = vmatpush2.msra.mxu0 0.0
        %1602 = vmatprep.subr.mxu0 0.0
        %1603 = vmatpush2.msra.mxu0 0.0
        %1604 = vmatprep.subr.mxu0 0.0
        %1605 = vmatpush2.msra.mxu0 0.0
        %1606 = vmatprep.subr.mxu0 0.0
        %1607 = vmatpush2.msra.mxu0 0.0
        %1608 = vmatprep.subr.mxu0 0.0
        %1609 = vmatpush2.msra.mxu0 0.0
        %1610 = vmatprep.subr.mxu0 0.0
        %1611 = vmatpush2.msra.mxu0 0.0
        %1612 = vmatprep.subr.mxu0 0.0
        %1613 = vmatpush2.msra.mxu0 0.0
        %1614 = vmatprep.subr.mxu0 0.0
        %1615 = vmatpush2.msra.mxu0 0.0
        %1616 = vmatprep.subr.mxu0 0.0
        %1617 = vmatpush2.msra.mxu0 0.0
        %1618 = vmatprep.subr.mxu0 0.0
        %1619 = vmatpush2.msra.mxu0 0.0
        %1620 = vmatprep.subr.mxu0 0.0
        %1621 = vmatpush2.msra.mxu0 0.0
        %1622 = vmatprep.mubr.f32.mxu0 0.0
        %1623 = vmatmul.mubr.f32.gmra.mxu0 %v1485
        %v1624 = vpop.f32.mrf.mxu0
        %v1625 = vadd.f32 0.0, %v1624
        %v1626 = vpop.f32.mrf.mxu0
        %1627 = vdwg.mxu0
        %v1628 = vadd.f32 %v1469, %v1554
        %v1629 = vadd.f32 %v1470, %v1556
        %v1630 = vadd.f32 %v1471, %v1625
        %1631 = vrot.lane.b32.xlu0 %v355, 64
        %v1632 = vpop.permute.xlu0 %1631
        %1633 = vrot.lane.b32.xlu0 %v352, 105
        %v1634 = vpop.permute.xlu0 %1633
        %1635 = vrot.lane.b32.xlu0 %v353, 105
        %v1636 = vpop.permute.xlu0 %1635
        %1637 = vrot.lane.b32.xlu0 %v354, 105
        %v1638 = vpop.permute.xlu0 %1637
        %vm1639 = vcmask 859136
        %v1640 = vsel %vm1639, %v1634, %v1636
        %v1641 = vsel %vm1639, %v1636, %v1638
        %v1645 = vsel %vm356, %v1632, 0
        %1647 = vmatprep.subr.mxu0 0.0
        %1648 = vmatpush1.msra.mxu0 0.0
        %1649 = vmatprep.subr.mxu0 0.0
        %1650 = vmatpush1.msra.mxu0 0.0
        %1651 = vmatprep.subr.mxu0 0.0
        %1652 = vmatpush1.msra.mxu0 0.0
        %1653 = vmatprep.subr.mxu0 0.0
        %1654 = vmatpush1.msra.mxu0 0.0
        %1655 = vmatprep.subr.mxu0 0.0
        %1656 = vmatpush1.msra.mxu0 0.0
        %1657 = vmatprep.subr.mxu0 0.0
        %1658 = vmatpush1.msra.mxu0 0.0
        %1659 = vmatprep.subr.mxu0 0.0
        %1660 = vmatpush1.msra.mxu0 0.0
        %1661 = vmatprep.subr.mxu0 0.0
        %1662 = vmatpush1.msra.mxu0 0.0
        %1663 = vmatprep.subr.mxu0 0.0
        %1664 = vmatpush1.msra.mxu0 0.0
        %1665 = vmatprep.subr.mxu0 0.0
        %1666 = vmatpush1.msra.mxu0 0.0
        %1667 = vmatprep.subr.mxu0 0.0
        %1668 = vmatpush1.msra.mxu0 0.0
        %1669 = vmatprep.subr.mxu0 0.0
        %1670 = vmatpush1.msra.mxu0 0.0
        %1671 = vmatprep.subr.mxu0 0.0
        %1672 = vmatpush1.msra.mxu0 0.0
        %1673 = vmatprep.subr.mxu0 0.0
        %1674 = vmatpush1.msra.mxu0 0.0
        %1675 = vmatprep.subr.mxu0 0.0
        %1676 = vmatpush1.msra.mxu0 0.0
        %1677 = vmatprep.subr.mxu0 %v1641
        %1678 = vmatpush1.msra.mxu0 %v1640
        %1679 = vmatprep.subr.mxu0 0.0
        %1680 = vmatpush2.msra.mxu0 0.0
        %1681 = vmatprep.subr.mxu0 0.0
        %1682 = vmatpush2.msra.mxu0 0.0
        %1683 = vmatprep.subr.mxu0 0.0
        %1684 = vmatpush2.msra.mxu0 0.0
        %1685 = vmatprep.subr.mxu0 0.0
        %1686 = vmatpush2.msra.mxu0 0.0
        %1687 = vmatprep.subr.mxu0 0.0
        %1688 = vmatpush2.msra.mxu0 0.0
        %1689 = vmatprep.subr.mxu0 0.0
        %1690 = vmatpush2.msra.mxu0 0.0
        %1691 = vmatprep.subr.mxu0 0.0
        %1692 = vmatpush2.msra.mxu0 0.0
        %1693 = vmatprep.subr.mxu0 0.0
        %1694 = vmatpush2.msra.mxu0 0.0
        %1695 = vmatprep.subr.mxu0 0.0
        %1696 = vmatpush2.msra.mxu0 0.0
        %1697 = vmatprep.subr.mxu0 0.0
        %1698 = vmatpush2.msra.mxu0 0.0
        %1699 = vmatprep.subr.mxu0 0.0
        %1700 = vmatpush2.msra.mxu0 0.0
        %1701 = vmatprep.subr.mxu0 0.0
        %1702 = vmatpush2.msra.mxu0 0.0
        %1703 = vmatprep.subr.mxu0 0.0
        %1704 = vmatpush2.msra.mxu0 0.0
        %1705 = vmatprep.subr.mxu0 0.0
        %1706 = vmatpush2.msra.mxu0 0.0
        %1707 = vmatprep.subr.mxu0 0.0
        %1708 = vmatpush2.msra.mxu0 0.0
        %1709 = vmatprep.subr.mxu0 0.0
        %1710 = vmatpush2.msra.mxu0 0.0
        %1711 = vmatprep.mubr.f32.mxu0 0.0
        %1712 = vmatmul.mubr.f32.gmra.mxu0 %v1645
        %v1713 = vpop.f32.mrf.mxu0
        %v1714 = vadd.f32 0.0, %v1713
        %v1715 = vpop.f32.mrf.mxu0
        %v1716 = vadd.f32 0.0, %v1715
        %1717 = vdwg.mxu0
        %1718 = vmatprep.subr.mxu0 0.0
        %1719 = vmatpush1.msra.mxu0 0.0
        %1720 = vmatprep.subr.mxu0 0.0
        %1721 = vmatpush1.msra.mxu0 0.0
        %1722 = vmatprep.subr.mxu0 0.0
        %1723 = vmatpush1.msra.mxu0 0.0
        %1724 = vmatprep.subr.mxu0 0.0
        %1725 = vmatpush1.msra.mxu0 0.0
        %1726 = vmatprep.subr.mxu0 0.0
        %1727 = vmatpush1.msra.mxu0 0.0
        %1728 = vmatprep.subr.mxu0 0.0
        %1729 = vmatpush1.msra.mxu0 0.0
        %1730 = vmatprep.subr.mxu0 0.0
        %1731 = vmatpush1.msra.mxu0 0.0
        %1732 = vmatprep.subr.mxu0 0.0
        %1733 = vmatpush1.msra.mxu0 0.0
        %1734 = vmatprep.subr.mxu0 0.0
        %1735 = vmatpush1.msra.mxu0 0.0
        %1736 = vmatprep.subr.mxu0 0.0
        %1737 = vmatpush1.msra.mxu0 0.0
        %1738 = vmatprep.subr.mxu0 0.0
        %1739 = vmatpush1.msra.mxu0 0.0
        %1740 = vmatprep.subr.mxu0 0.0
        %1741 = vmatpush1.msra.mxu0 0.0
        %1742 = vmatprep.subr.mxu0 0.0
        %1743 = vmatpush1.msra.mxu0 0.0
        %1744 = vmatprep.subr.mxu0 0.0
        %1745 = vmatpush1.msra.mxu0 0.0
        %1746 = vmatprep.subr.mxu0 0.0
        %1747 = vmatpush1.msra.mxu0 0.0
        %1748 = vmatprep.subr.mxu0 0.0
        %1749 = vmatpush1.msra.mxu0 %v1638
        %1750 = vmatprep.subr.mxu0 0.0
        %1751 = vmatpush2.msra.mxu0 0.0
        %1752 = vmatprep.subr.mxu0 0.0
        %1753 = vmatpush2.msra.mxu0 0.0
        %1754 = vmatprep.subr.mxu0 0.0
        %1755 = vmatpush2.msra.mxu0 0.0
        %1756 = vmatprep.subr.mxu0 0.0
        %1757 = vmatpush2.msra.mxu0 0.0
        %1758 = vmatprep.subr.mxu0 0.0
        %1759 = vmatpush2.msra.mxu0 0.0
        %1760 = vmatprep.subr.mxu0 0.0
        %1761 = vmatpush2.msra.mxu0 0.0
        %1762 = vmatprep.subr.mxu0 0.0
        %1763 = vmatpush2.msra.mxu0 0.0
        %1764 = vmatprep.subr.mxu0 0.0
        %1765 = vmatpush2.msra.mxu0 0.0
        %1766 = vmatprep.subr.mxu0 0.0
        %1767 = vmatpush2.msra.mxu0 0.0
        %1768 = vmatprep.subr.mxu0 0.0
        %1769 = vmatpush2.msra.mxu0 0.0
        %1770 = vmatprep.subr.mxu0 0.0
        %1771 = vmatpush2.msra.mxu0 0.0
        %1772 = vmatprep.subr.mxu0 0.0
        %1773 = vmatpush2.msra.mxu0 0.0
        %1774 = vmatprep.subr.mxu0 0.0
        %1775 = vmatpush2.msra.mxu0 0.0
        %1776 = vmatprep.subr.mxu0 0.0
        %1777 = vmatpush2.msra.mxu0 0.0
        %1778 = vmatprep.subr.mxu0 0.0
        %1779 = vmatpush2.msra.mxu0 0.0
        %1780 = vmatprep.subr.mxu0 0.0
        %1781 = vmatpush2.msra.mxu0 0.0
        %1782 = vmatprep.mubr.f32.mxu0 0.0
        %1783 = vmatmul.mubr.f32.gmra.mxu0 %v1645
        %v1784 = vpop.f32.mrf.mxu0
        %v1785 = vadd.f32 0.0, %v1784
        %v1786 = vpop.f32.mrf.mxu0
        %1787 = vdwg.mxu0
        %v1788 = vadd.f32 %v1628, %v1714
        %v1789 = vadd.f32 %v1629, %v1716
        %v1790 = vadd.f32 %v1630, %v1785
        %1791 = vrot.lane.b32.xlu0 %v355, 56
        %v1792 = vpop.permute.xlu0 %1791
        %1793 = vrot.lane.b32.xlu0 %v352, 104
        %v1794 = vpop.permute.xlu0 %1793
        %1795 = vrot.lane.b32.xlu0 %v353, 104
        %v1796 = vpop.permute.xlu0 %1795
        %1797 = vrot.lane.b32.xlu0 %v354, 104
        %v1798 = vpop.permute.xlu0 %1797
        %vm1799 = vcmask 850944
        %v1800 = vsel %vm1799, %v1794, %v1796
        %v1801 = vsel %vm1799, %v1796, %v1798
        %v1805 = vsel %vm356, %v1792, 0
        %1807 = vmatprep.subr.mxu0 0.0
        %1808 = vmatpush1.msra.mxu0 0.0
        %1809 = vmatprep.subr.mxu0 0.0
        %1810 = vmatpush1.msra.mxu0 0.0
        %1811 = vmatprep.subr.mxu0 0.0
        %1812 = vmatpush1.msra.mxu0 0.0
        %1813 = vmatprep.subr.mxu0 0.0
        %1814 = vmatpush1.msra.mxu0 0.0
        %1815 = vmatprep.subr.mxu0 0.0
        %1816 = vmatpush1.msra.mxu0 0.0
        %1817 = vmatprep.subr.mxu0 0.0
        %1818 = vmatpush1.msra.mxu0 0.0
        %1819 = vmatprep.subr.mxu0 0.0
        %1820 = vmatpush1.msra.mxu0 0.0
        %1821 = vmatprep.subr.mxu0 0.0
        %1822 = vmatpush1.msra.mxu0 0.0
        %1823 = vmatprep.subr.mxu0 0.0
        %1824 = vmatpush1.msra.mxu0 0.0
        %1825 = vmatprep.subr.mxu0 0.0
        %1826 = vmatpush1.msra.mxu0 0.0
        %1827 = vmatprep.subr.mxu0 0.0
        %1828 = vmatpush1.msra.mxu0 0.0
        %1829 = vmatprep.subr.mxu0 0.0
        %1830 = vmatpush1.msra.mxu0 0.0
        %1831 = vmatprep.subr.mxu0 0.0
        %1832 = vmatpush1.msra.mxu0 0.0
        %1833 = vmatprep.subr.mxu0 0.0
        %1834 = vmatpush1.msra.mxu0 0.0
        %1835 = vmatprep.subr.mxu0 0.0
        %1836 = vmatpush1.msra.mxu0 0.0
        %1837 = vmatprep.subr.mxu0 %v1801
        %1838 = vmatpush1.msra.mxu0 %v1800
        %1839 = vmatprep.subr.mxu0 0.0
        %1840 = vmatpush2.msra.mxu0 0.0
        %1841 = vmatprep.subr.mxu0 0.0
        %1842 = vmatpush2.msra.mxu0 0.0
        %1843 = vmatprep.subr.mxu0 0.0
        %1844 = vmatpush2.msra.mxu0 0.0
        %1845 = vmatprep.subr.mxu0 0.0
        %1846 = vmatpush2.msra.mxu0 0.0
        %1847 = vmatprep.subr.mxu0 0.0
        %1848 = vmatpush2.msra.mxu0 0.0
        %1849 = vmatprep.subr.mxu0 0.0
        %1850 = vmatpush2.msra.mxu0 0.0
        %1851 = vmatprep.subr.mxu0 0.0
        %1852 = vmatpush2.msra.mxu0 0.0
        %1853 = vmatprep.subr.mxu0 0.0
        %1854 = vmatpush2.msra.mxu0 0.0
        %1855 = vmatprep.subr.mxu0 0.0
        %1856 = vmatpush2.msra.mxu0 0.0
        %1857 = vmatprep.subr.mxu0 0.0
        %1858 = vmatpush2.msra.mxu0 0.0
        %1859 = vmatprep.subr.mxu0 0.0
        %1860 = vmatpush2.msra.mxu0 0.0
        %1861 = vmatprep.subr.mxu0 0.0
        %1862 = vmatpush2.msra.mxu0 0.0
        %1863 = vmatprep.subr.mxu0 0.0
        %1864 = vmatpush2.msra.mxu0 0.0
        %1865 = vmatprep.subr.mxu0 0.0
        %1866 = vmatpush2.msra.mxu0 0.0
        %1867 = vmatprep.subr.mxu0 0.0
        %1868 = vmatpush2.msra.mxu0 0.0
        %1869 = vmatprep.subr.mxu0 0.0
        %1870 = vmatpush2.msra.mxu0 0.0
        %1871 = vmatprep.mubr.f32.mxu0 0.0
        %1872 = vmatmul.mubr.f32.gmra.mxu0 %v1805
        %v1873 = vpop.f32.mrf.mxu0
        %v1874 = vadd.f32 0.0, %v1873
        %v1875 = vpop.f32.mrf.mxu0
        %v1876 = vadd.f32 0.0, %v1875
        %1877 = vdwg.mxu0
        %1878 = vmatprep.subr.mxu0 0.0
        %1879 = vmatpush1.msra.mxu0 0.0
        %1880 = vmatprep.subr.mxu0 0.0
        %1881 = vmatpush1.msra.mxu0 0.0
        %1882 = vmatprep.subr.mxu0 0.0
        %1883 = vmatpush1.msra.mxu0 0.0
        %1884 = vmatprep.subr.mxu0 0.0
        %1885 = vmatpush1.msra.mxu0 0.0
        %1886 = vmatprep.subr.mxu0 0.0
        %1887 = vmatpush1.msra.mxu0 0.0
        %1888 = vmatprep.subr.mxu0 0.0
        %1889 = vmatpush1.msra.mxu0 0.0
        %1890 = vmatprep.subr.mxu0 0.0
        %1891 = vmatpush1.msra.mxu0 0.0
        %1892 = vmatprep.subr.mxu0 0.0
        %1893 = vmatpush1.msra.mxu0 0.0
        %1894 = vmatprep.subr.mxu0 0.0
        %1895 = vmatpush1.msra.mxu0 0.0
        %1896 = vmatprep.subr.mxu0 0.0
        %1897 = vmatpush1.msra.mxu0 0.0
        %1898 = vmatprep.subr.mxu0 0.0
        %1899 = vmatpush1.msra.mxu0 0.0
        %1900 = vmatprep.subr.mxu0 0.0
        %1901 = vmatpush1.msra.mxu0 0.0
        %1902 = vmatprep.subr.mxu0 0.0
        %1903 = vmatpush1.msra.mxu0 0.0
        %1904 = vmatprep.subr.mxu0 0.0
        %1905 = vmatpush1.msra.mxu0 0.0
        %1906 = vmatprep.subr.mxu0 0.0
        %1907 = vmatpush1.msra.mxu0 0.0
        %1908 = vmatprep.subr.mxu0 0.0
        %1909 = vmatpush1.msra.mxu0 %v1798
        %1910 = vmatprep.subr.mxu0 0.0
        %1911 = vmatpush2.msra.mxu0 0.0
        %1912 = vmatprep.subr.mxu0 0.0
        %1913 = vmatpush2.msra.mxu0 0.0
        %1914 = vmatprep.subr.mxu0 0.0
        %1915 = vmatpush2.msra.mxu0 0.0
        %1916 = vmatprep.subr.mxu0 0.0
        %1917 = vmatpush2.msra.mxu0 0.0
        %1918 = vmatprep.subr.mxu0 0.0
        %1919 = vmatpush2.msra.mxu0 0.0
        %1920 = vmatprep.subr.mxu0 0.0
        %1921 = vmatpush2.msra.mxu0 0.0
        %1922 = vmatprep.subr.mxu0 0.0
        %1923 = vmatpush2.msra.mxu0 0.0
        %1924 = vmatprep.subr.mxu0 0.0
        %1925 = vmatpush2.msra.mxu0 0.0
        %1926 = vmatprep.subr.mxu0 0.0
        %1927 = vmatpush2.msra.mxu0 0.0
        %1928 = vmatprep.subr.mxu0 0.0
        %1929 = vmatpush2.msra.mxu0 0.0
        %1930 = vmatprep.subr.mxu0 0.0
        %1931 = vmatpush2.msra.mxu0 0.0
        %1932 = vmatprep.subr.mxu0 0.0
        %1933 = vmatpush2.msra.mxu0 0.0
        %1934 = vmatprep.subr.mxu0 0.0
        %1935 = vmatpush2.msra.mxu0 0.0
        %1936 = vmatprep.subr.mxu0 0.0
        %1937 = vmatpush2.msra.mxu0 0.0
        %1938 = vmatprep.subr.mxu0 0.0
        %1939 = vmatpush2.msra.mxu0 0.0
        %1940 = vmatprep.subr.mxu0 0.0
        %1941 = vmatpush2.msra.mxu0 0.0
        %1942 = vmatprep.mubr.f32.mxu0 0.0
        %1943 = vmatmul.mubr.f32.gmra.mxu0 %v1805
        %v1944 = vpop.f32.mrf.mxu0
        %v1945 = vadd.f32 0.0, %v1944
        %v1946 = vpop.f32.mrf.mxu0
        %1947 = vdwg.mxu0
        %v1948 = vadd.f32 %v1788, %v1874
        %v1949 = vadd.f32 %v1789, %v1876
        %v1950 = vadd.f32 %v1790, %v1945
        %1951 = vrot.lane.b32.xlu0 %v355, 48
        %v1952 = vpop.permute.xlu0 %1951
        %1953 = vrot.lane.b32.xlu0 %v352, 88
        %v1954 = vpop.permute.xlu0 %1953
        %1955 = vrot.lane.b32.xlu0 %v353, 88
        %v1956 = vpop.permute.xlu0 %1955
        %1957 = vrot.lane.b32.xlu0 %v354, 88
        %v1958 = vpop.permute.xlu0 %1957
        %vm1959 = vcmask 719872
        %v1960 = vsel %vm1959, %v1954, %v1956
        %v1961 = vsel %vm1959, %v1956, %v1958
        %v1965 = vsel %vm356, %v1952, 0
        %1967 = vmatprep.subr.mxu0 0.0
        %1968 = vmatpush1.msra.mxu0 0.0
        %1969 = vmatprep.subr.mxu0 0.0
        %1970 = vmatpush1.msra.mxu0 0.0
        %1971 = vmatprep.subr.mxu0 0.0
        %1972 = vmatpush1.msra.mxu0 0.0
        %1973 = vmatprep.subr.mxu0 0.0
        %1974 = vmatpush1.msra.mxu0 0.0
        %1975 = vmatprep.subr.mxu0 0.0
        %1976 = vmatpush1.msra.mxu0 0.0
        %1977 = vmatprep.subr.mxu0 0.0
        %1978 = vmatpush1.msra.mxu0 0.0
        %1979 = vmatprep.subr.mxu0 0.0
        %1980 = vmatpush1.msra.mxu0 0.0
        %1981 = vmatprep.subr.mxu0 0.0
        %1982 = vmatpush1.msra.mxu0 0.0
        %1983 = vmatprep.subr.mxu0 0.0
        %1984 = vmatpush1.msra.mxu0 0.0
        %1985 = vmatprep.subr.mxu0 0.0
        %1986 = vmatpush1.msra.mxu0 0.0
        %1987 = vmatprep.subr.mxu0 0.0
        %1988 = vmatpush1.msra.mxu0 0.0
        %1989 = vmatprep.subr.mxu0 0.0
        %1990 = vmatpush1.msra.mxu0 0.0
        %1991 = vmatprep.subr.mxu0 0.0
        %1992 = vmatpush1.msra.mxu0 0.0
        %1993 = vmatprep.subr.mxu0 0.0
        %1994 = vmatpush1.msra.mxu0 0.0
        %1995 = vmatprep.subr.mxu0 0.0
        %1996 = vmatpush1.msra.mxu0 0.0
        %1997 = vmatprep.subr.mxu0 %v1961
        %1998 = vmatpush1.msra.mxu0 %v1960
        %1999 = vmatprep.subr.mxu0 0.0
        %2000 = vmatpush2.msra.mxu0 0.0
        %2001 = vmatprep.subr.mxu0 0.0
        %2002 = vmatpush2.msra.mxu0 0.0
        %2003 = vmatprep.subr.mxu0 0.0
        %2004 = vmatpush2.msra.mxu0 0.0
        %2005 = vmatprep.subr.mxu0 0.0
        %2006 = vmatpush2.msra.mxu0 0.0
        %2007 = vmatprep.subr.mxu0 0.0
        %2008 = vmatpush2.msra.mxu0 0.0
        %2009 = vmatprep.subr.mxu0 0.0
        %2010 = vmatpush2.msra.mxu0 0.0
        %2011 = vmatprep.subr.mxu0 0.0
        %2012 = vmatpush2.msra.mxu0 0.0
        %2013 = vmatprep.subr.mxu0 0.0
        %2014 = vmatpush2.msra.mxu0 0.0
        %2015 = vmatprep.subr.mxu0 0.0
        %2016 = vmatpush2.msra.mxu0 0.0
        %2017 = vmatprep.subr.mxu0 0.0
        %2018 = vmatpush2.msra.mxu0 0.0
        %2019 = vmatprep.subr.mxu0 0.0
        %2020 = vmatpush2.msra.mxu0 0.0
        %2021 = vmatprep.subr.mxu0 0.0
        %2022 = vmatpush2.msra.mxu0 0.0
        %2023 = vmatprep.subr.mxu0 0.0
        %2024 = vmatpush2.msra.mxu0 0.0
        %2025 = vmatprep.subr.mxu0 0.0
        %2026 = vmatpush2.msra.mxu0 0.0
        %2027 = vmatprep.subr.mxu0 0.0
        %2028 = vmatpush2.msra.mxu0 0.0
        %2029 = vmatprep.subr.mxu0 0.0
        %2030 = vmatpush2.msra.mxu0 0.0
        %2031 = vmatprep.mubr.f32.mxu0 0.0
        %2032 = vmatmul.mubr.f32.gmra.mxu0 %v1965
        %v2033 = vpop.f32.mrf.mxu0
        %v2034 = vadd.f32 0.0, %v2033
        %v2035 = vpop.f32.mrf.mxu0
        %v2036 = vadd.f32 0.0, %v2035
        %2037 = vdwg.mxu0
        %2038 = vmatprep.subr.mxu0 0.0
        %2039 = vmatpush1.msra.mxu0 0.0
        %2040 = vmatprep.subr.mxu0 0.0
        %2041 = vmatpush1.msra.mxu0 0.0
        %2042 = vmatprep.subr.mxu0 0.0
        %2043 = vmatpush1.msra.mxu0 0.0
        %2044 = vmatprep.subr.mxu0 0.0
        %2045 = vmatpush1.msra.mxu0 0.0
        %2046 = vmatprep.subr.mxu0 0.0
        %2047 = vmatpush1.msra.mxu0 0.0
        %2048 = vmatprep.subr.mxu0 0.0
        %2049 = vmatpush1.msra.mxu0 0.0
        %2050 = vmatprep.subr.mxu0 0.0
        %2051 = vmatpush1.msra.mxu0 0.0
        %2052 = vmatprep.subr.mxu0 0.0
        %2053 = vmatpush1.msra.mxu0 0.0
        %2054 = vmatprep.subr.mxu0 0.0
        %2055 = vmatpush1.msra.mxu0 0.0
        %2056 = vmatprep.subr.mxu0 0.0
        %2057 = vmatpush1.msra.mxu0 0.0
        %2058 = vmatprep.subr.mxu0 0.0
        %2059 = vmatpush1.msra.mxu0 0.0
        %2060 = vmatprep.subr.mxu0 0.0
        %2061 = vmatpush1.msra.mxu0 0.0
        %2062 = vmatprep.subr.mxu0 0.0
        %2063 = vmatpush1.msra.mxu0 0.0
        %2064 = vmatprep.subr.mxu0 0.0
        %2065 = vmatpush1.msra.mxu0 0.0
        %2066 = vmatprep.subr.mxu0 0.0
        %2067 = vmatpush1.msra.mxu0 0.0
        %2068 = vmatprep.subr.mxu0 0.0
        %2069 = vmatpush1.msra.mxu0 %v1958
        %2070 = vmatprep.subr.mxu0 0.0
        %2071 = vmatpush2.msra.mxu0 0.0
        %2072 = vmatprep.subr.mxu0 0.0
        %2073 = vmatpush2.msra.mxu0 0.0
        %2074 = vmatprep.subr.mxu0 0.0
        %2075 = vmatpush2.msra.mxu0 0.0
        %2076 = vmatprep.subr.mxu0 0.0
        %2077 = vmatpush2.msra.mxu0 0.0
        %2078 = vmatprep.subr.mxu0 0.0
        %2079 = vmatpush2.msra.mxu0 0.0
        %2080 = vmatprep.subr.mxu0 0.0
        %2081 = vmatpush2.msra.mxu0 0.0
        %2082 = vmatprep.subr.mxu0 0.0
        %2083 = vmatpush2.msra.mxu0 0.0
        %2084 = vmatprep.subr.mxu0 0.0
        %2085 = vmatpush2.msra.mxu0 0.0
        %2086 = vmatprep.subr.mxu0 0.0
        %2087 = vmatpush2.msra.mxu0 0.0
        %2088 = vmatprep.subr.mxu0 0.0
        %2089 = vmatpush2.msra.mxu0 0.0
        %2090 = vmatprep.subr.mxu0 0.0
        %2091 = vmatpush2.msra.mxu0 0.0
        %2092 = vmatprep.subr.mxu0 0.0
        %2093 = vmatpush2.msra.mxu0 0.0
        %2094 = vmatprep.subr.mxu0 0.0
        %2095 = vmatpush2.msra.mxu0 0.0
        %2096 = vmatprep.subr.mxu0 0.0
        %2097 = vmatpush2.msra.mxu0 0.0
        %2098 = vmatprep.subr.mxu0 0.0
        %2099 = vmatpush2.msra.mxu0 0.0
        %2100 = vmatprep.subr.mxu0 0.0
        %2101 = vmatpush2.msra.mxu0 0.0
        %2102 = vmatprep.mubr.f32.mxu0 0.0
        %2103 = vmatmul.mubr.f32.gmra.mxu0 %v1965
        %v2104 = vpop.f32.mrf.mxu0
        %v2105 = vadd.f32 0.0, %v2104
        %v2106 = vpop.f32.mrf.mxu0
        %2107 = vdwg.mxu0
        %v2108 = vadd.f32 %v1948, %v2034
        %v2109 = vadd.f32 %v1949, %v2036
        %v2110 = vadd.f32 %v1950, %v2105
        %2111 = vrot.lane.b32.xlu0 %v355, 40
        %v2112 = vpop.permute.xlu0 %2111
        %2113 = vrot.lane.b32.xlu0 %v352, 87
        %v2114 = vpop.permute.xlu0 %2113
        %2115 = vrot.lane.b32.xlu0 %v353, 87
        %v2116 = vpop.permute.xlu0 %2115
        %2117 = vrot.lane.b32.xlu0 %v354, 87
        %v2118 = vpop.permute.xlu0 %2117
        %vm2119 = vcmask 711680
        %v2120 = vsel %vm2119, %v2114, %v2116
        %v2121 = vsel %vm2119, %v2116, %v2118
        %v2125 = vsel %vm356, %v2112, 0
        %2127 = vmatprep.subr.mxu0 0.0
        %2128 = vmatpush1.msra.mxu0 0.0
        %2129 = vmatprep.subr.mxu0 0.0
        %2130 = vmatpush1.msra.mxu0 0.0
        %2131 = vmatprep.subr.mxu0 0.0
        %2132 = vmatpush1.msra.mxu0 0.0
        %2133 = vmatprep.subr.mxu0 0.0
        %2134 = vmatpush1.msra.mxu0 0.0
        %2135 = vmatprep.subr.mxu0 0.0
        %2136 = vmatpush1.msra.mxu0 0.0
        %2137 = vmatprep.subr.mxu0 0.0
        %2138 = vmatpush1.msra.mxu0 0.0
        %2139 = vmatprep.subr.mxu0 0.0
        %2140 = vmatpush1.msra.mxu0 0.0
        %2141 = vmatprep.subr.mxu0 0.0
        %2142 = vmatpush1.msra.mxu0 0.0
        %2143 = vmatprep.subr.mxu0 0.0
        %2144 = vmatpush1.msra.mxu0 0.0
        %2145 = vmatprep.subr.mxu0 0.0
        %2146 = vmatpush1.msra.mxu0 0.0
        %2147 = vmatprep.subr.mxu0 0.0
        %2148 = vmatpush1.msra.mxu0 0.0
        %2149 = vmatprep.subr.mxu0 0.0
        %2150 = vmatpush1.msra.mxu0 0.0
        %2151 = vmatprep.subr.mxu0 0.0
        %2152 = vmatpush1.msra.mxu0 0.0
        %2153 = vmatprep.subr.mxu0 0.0
        %2154 = vmatpush1.msra.mxu0 0.0
        %2155 = vmatprep.subr.mxu0 0.0
        %2156 = vmatpush1.msra.mxu0 0.0
        %2157 = vmatprep.subr.mxu0 %v2121
        %2158 = vmatpush1.msra.mxu0 %v2120
        %2159 = vmatprep.subr.mxu0 0.0
        %2160 = vmatpush2.msra.mxu0 0.0
        %2161 = vmatprep.subr.mxu0 0.0
        %2162 = vmatpush2.msra.mxu0 0.0
        %2163 = vmatprep.subr.mxu0 0.0
        %2164 = vmatpush2.msra.mxu0 0.0
        %2165 = vmatprep.subr.mxu0 0.0
        %2166 = vmatpush2.msra.mxu0 0.0
        %2167 = vmatprep.subr.mxu0 0.0
        %2168 = vmatpush2.msra.mxu0 0.0
        %2169 = vmatprep.subr.mxu0 0.0
        %2170 = vmatpush2.msra.mxu0 0.0
        %2171 = vmatprep.subr.mxu0 0.0
        %2172 = vmatpush2.msra.mxu0 0.0
        %2173 = vmatprep.subr.mxu0 0.0
        %2174 = vmatpush2.msra.mxu0 0.0
        %2175 = vmatprep.subr.mxu0 0.0
        %2176 = vmatpush2.msra.mxu0 0.0
        %2177 = vmatprep.subr.mxu0 0.0
        %2178 = vmatpush2.msra.mxu0 0.0
        %2179 = vmatprep.subr.mxu0 0.0
        %2180 = vmatpush2.msra.mxu0 0.0
        %2181 = vmatprep.subr.mxu0 0.0
        %2182 = vmatpush2.msra.mxu0 0.0
        %2183 = vmatprep.subr.mxu0 0.0
        %2184 = vmatpush2.msra.mxu0 0.0
        %2185 = vmatprep.subr.mxu0 0.0
        %2186 = vmatpush2.msra.mxu0 0.0
        %2187 = vmatprep.subr.mxu0 0.0
        %2188 = vmatpush2.msra.mxu0 0.0
        %2189 = vmatprep.subr.mxu0 0.0
        %2190 = vmatpush2.msra.mxu0 0.0
        %2191 = vmatprep.mubr.f32.mxu0 0.0
        %2192 = vmatmul.mubr.f32.gmra.mxu0 %v2125
        %v2193 = vpop.f32.mrf.mxu0
        %v2194 = vadd.f32 0.0, %v2193
        %v2195 = vpop.f32.mrf.mxu0
        %v2196 = vadd.f32 0.0, %v2195
        %2197 = vdwg.mxu0
        %2198 = vmatprep.subr.mxu0 0.0
        %2199 = vmatpush1.msra.mxu0 0.0
        %2200 = vmatprep.subr.mxu0 0.0
        %2201 = vmatpush1.msra.mxu0 0.0
        %2202 = vmatprep.subr.mxu0 0.0
        %2203 = vmatpush1.msra.mxu0 0.0
        %2204 = vmatprep.subr.mxu0 0.0
        %2205 = vmatpush1.msra.mxu0 0.0
        %2206 = vmatprep.subr.mxu0 0.0
        %2207 = vmatpush1.msra.mxu0 0.0
        %2208 = vmatprep.subr.mxu0 0.0
        %2209 = vmatpush1.msra.mxu0 0.0
        %2210 = vmatprep.subr.mxu0 0.0
        %2211 = vmatpush1.msra.mxu0 0.0
        %2212 = vmatprep.subr.mxu0 0.0
        %2213 = vmatpush1.msra.mxu0 0.0
        %2214 = vmatprep.subr.mxu0 0.0
        %2215 = vmatpush1.msra.mxu0 0.0
        %2216 = vmatprep.subr.mxu0 0.0
        %2217 = vmatpush1.msra.mxu0 0.0
        %2218 = vmatprep.subr.mxu0 0.0
        %2219 = vmatpush1.msra.mxu0 0.0
        %2220 = vmatprep.subr.mxu0 0.0
        %2221 = vmatpush1.msra.mxu0 0.0
        %2222 = vmatprep.subr.mxu0 0.0
        %2223 = vmatpush1.msra.mxu0 0.0
        %2224 = vmatprep.subr.mxu0 0.0
        %2225 = vmatpush1.msra.mxu0 0.0
        %2226 = vmatprep.subr.mxu0 0.0
        %2227 = vmatpush1.msra.mxu0 0.0
        %2228 = vmatprep.subr.mxu0 0.0
        %2229 = vmatpush1.msra.mxu0 %v2118
        %2230 = vmatprep.subr.mxu0 0.0
        %2231 = vmatpush2.msra.mxu0 0.0
        %2232 = vmatprep.subr.mxu0 0.0
        %2233 = vmatpush2.msra.mxu0 0.0
        %2234 = vmatprep.subr.mxu0 0.0
        %2235 = vmatpush2.msra.mxu0 0.0
        %2236 = vmatprep.subr.mxu0 0.0
        %2237 = vmatpush2.msra.mxu0 0.0
        %2238 = vmatprep.subr.mxu0 0.0
        %2239 = vmatpush2.msra.mxu0 0.0
        %2240 = vmatprep.subr.mxu0 0.0
        %2241 = vmatpush2.msra.mxu0 0.0
        %2242 = vmatprep.subr.mxu0 0.0
        %2243 = vmatpush2.msra.mxu0 0.0
        %2244 = vmatprep.subr.mxu0 0.0
        %2245 = vmatpush2.msra.mxu0 0.0
        %2246 = vmatprep.subr.mxu0 0.0
        %2247 = vmatpush2.msra.mxu0 0.0
        %2248 = vmatprep.subr.mxu0 0.0
        %2249 = vmatpush2.msra.mxu0 0.0
        %2250 = vmatprep.subr.mxu0 0.0
        %2251 = vmatpush2.msra.mxu0 0.0
        %2252 = vmatprep.subr.mxu0 0.0
        %2253 = vmatpush2.msra.mxu0 0.0
        %2254 = vmatprep.subr.mxu0 0.0
        %2255 = vmatpush2.msra.mxu0 0.0
        %2256 = vmatprep.subr.mxu0 0.0
        %2257 = vmatpush2.msra.mxu0 0.0
        %2258 = vmatprep.subr.mxu0 0.0
        %2259 = vmatpush2.msra.mxu0 0.0
        %2260 = vmatprep.subr.mxu0 0.0
        %2261 = vmatpush2.msra.mxu0 0.0
        %2262 = vmatprep.mubr.f32.mxu0 0.0
        %2263 = vmatmul.mubr.f32.gmra.mxu0 %v2125
        %v2264 = vpop.f32.mrf.mxu0
        %v2265 = vadd.f32 0.0, %v2264
        %v2266 = vpop.f32.mrf.mxu0
        %2267 = vdwg.mxu0
        %v2268 = vadd.f32 %v2108, %v2194
        %v2269 = vadd.f32 %v2109, %v2196
        %v2270 = vadd.f32 %v2110, %v2265
        %2271 = vrot.lane.b32.xlu0 %v355, 32
        %v2272 = vpop.permute.xlu0 %2271
        %2273 = vrot.lane.b32.xlu0 %v352, 86
        %v2274 = vpop.permute.xlu0 %2273
        %2275 = vrot.lane.b32.xlu0 %v353, 86
        %v2276 = vpop.permute.xlu0 %2275
        %2277 = vrot.lane.b32.xlu0 %v354, 86
        %v2278 = vpop.permute.xlu0 %2277
        %vm2279 = vcmask 703488
        %v2280 = vsel %vm2279, %v2274, %v2276
        %v2281 = vsel %vm2279, %v2276, %v2278
        %v2285 = vsel %vm356, %v2272, 0
        %2287 = vmatprep.subr.mxu0 0.0
        %2288 = vmatpush1.msra.mxu0 0.0
        %2289 = vmatprep.subr.mxu0 0.0
        %2290 = vmatpush1.msra.mxu0 0.0
        %2291 = vmatprep.subr.mxu0 0.0
        %2292 = vmatpush1.msra.mxu0 0.0
        %2293 = vmatprep.subr.mxu0 0.0
        %2294 = vmatpush1.msra.mxu0 0.0
        %2295 = vmatprep.subr.mxu0 0.0
        %2296 = vmatpush1.msra.mxu0 0.0
        %2297 = vmatprep.subr.mxu0 0.0
        %2298 = vmatpush1.msra.mxu0 0.0
        %2299 = vmatprep.subr.mxu0 0.0
        %2300 = vmatpush1.msra.mxu0 0.0
        %2301 = vmatprep.subr.mxu0 0.0
        %2302 = vmatpush1.msra.mxu0 0.0
        %2303 = vmatprep.subr.mxu0 0.0
        %2304 = vmatpush1.msra.mxu0 0.0
        %2305 = vmatprep.subr.mxu0 0.0
        %2306 = vmatpush1.msra.mxu0 0.0
        %2307 = vmatprep.subr.mxu0 0.0
        %2308 = vmatpush1.msra.mxu0 0.0
        %2309 = vmatprep.subr.mxu0 0.0
        %2310 = vmatpush1.msra.mxu0 0.0
        %2311 = vmatprep.subr.mxu0 0.0
        %2312 = vmatpush1.msra.mxu0 0.0
        %2313 = vmatprep.subr.mxu0 0.0
        %2314 = vmatpush1.msra.mxu0 0.0
        %2315 = vmatprep.subr.mxu0 0.0
        %2316 = vmatpush1.msra.mxu0 0.0
        %2317 = vmatprep.subr.mxu0 %v2281
        %2318 = vmatpush1.msra.mxu0 %v2280
        %2319 = vmatprep.subr.mxu0 0.0
        %2320 = vmatpush2.msra.mxu0 0.0
        %2321 = vmatprep.subr.mxu0 0.0
        %2322 = vmatpush2.msra.mxu0 0.0
        %2323 = vmatprep.subr.mxu0 0.0
        %2324 = vmatpush2.msra.mxu0 0.0
        %2325 = vmatprep.subr.mxu0 0.0
        %2326 = vmatpush2.msra.mxu0 0.0
        %2327 = vmatprep.subr.mxu0 0.0
        %2328 = vmatpush2.msra.mxu0 0.0
        %2329 = vmatprep.subr.mxu0 0.0
        %2330 = vmatpush2.msra.mxu0 0.0
        %2331 = vmatprep.subr.mxu0 0.0
        %2332 = vmatpush2.msra.mxu0 0.0
        %2333 = vmatprep.subr.mxu0 0.0
        %2334 = vmatpush2.msra.mxu0 0.0
        %2335 = vmatprep.subr.mxu0 0.0
        %2336 = vmatpush2.msra.mxu0 0.0
        %2337 = vmatprep.subr.mxu0 0.0
        %2338 = vmatpush2.msra.mxu0 0.0
        %2339 = vmatprep.subr.mxu0 0.0
        %2340 = vmatpush2.msra.mxu0 0.0
        %2341 = vmatprep.subr.mxu0 0.0
        %2342 = vmatpush2.msra.mxu0 0.0
        %2343 = vmatprep.subr.mxu0 0.0
        %2344 = vmatpush2.msra.mxu0 0.0
        %2345 = vmatprep.subr.mxu0 0.0
        %2346 = vmatpush2.msra.mxu0 0.0
        %2347 = vmatprep.subr.mxu0 0.0
        %2348 = vmatpush2.msra.mxu0 0.0
        %2349 = vmatprep.subr.mxu0 0.0
        %2350 = vmatpush2.msra.mxu0 0.0
        %2351 = vmatprep.mubr.f32.mxu0 0.0
        %2352 = vmatmul.mubr.f32.gmra.mxu0 %v2285
        %v2353 = vpop.f32.mrf.mxu0
        %v2354 = vadd.f32 0.0, %v2353
        %v2355 = vpop.f32.mrf.mxu0
        %v2356 = vadd.f32 0.0, %v2355
        %2357 = vdwg.mxu0
        %2358 = vmatprep.subr.mxu0 0.0
        %2359 = vmatpush1.msra.mxu0 0.0
        %2360 = vmatprep.subr.mxu0 0.0
        %2361 = vmatpush1.msra.mxu0 0.0
        %2362 = vmatprep.subr.mxu0 0.0
        %2363 = vmatpush1.msra.mxu0 0.0
        %2364 = vmatprep.subr.mxu0 0.0
        %2365 = vmatpush1.msra.mxu0 0.0
        %2366 = vmatprep.subr.mxu0 0.0
        %2367 = vmatpush1.msra.mxu0 0.0
        %2368 = vmatprep.subr.mxu0 0.0
        %2369 = vmatpush1.msra.mxu0 0.0
        %2370 = vmatprep.subr.mxu0 0.0
        %2371 = vmatpush1.msra.mxu0 0.0
        %2372 = vmatprep.subr.mxu0 0.0
        %2373 = vmatpush1.msra.mxu0 0.0
        %2374 = vmatprep.subr.mxu0 0.0
        %2375 = vmatpush1.msra.mxu0 0.0
        %2376 = vmatprep.subr.mxu0 0.0
        %2377 = vmatpush1.msra.mxu0 0.0
        %2378 = vmatprep.subr.mxu0 0.0
        %2379 = vmatpush1.msra.mxu0 0.0
        %2380 = vmatprep.subr.mxu0 0.0
        %2381 = vmatpush1.msra.mxu0 0.0
        %2382 = vmatprep.subr.mxu0 0.0
        %2383 = vmatpush1.msra.mxu0 0.0
        %2384 = vmatprep.subr.mxu0 0.0
        %2385 = vmatpush1.msra.mxu0 0.0
        %2386 = vmatprep.subr.mxu0 0.0
        %2387 = vmatpush1.msra.mxu0 0.0
        %2388 = vmatprep.subr.mxu0 0.0
        %2389 = vmatpush1.msra.mxu0 %v2278
        %2390 = vmatprep.subr.mxu0 0.0
        %2391 = vmatpush2.msra.mxu0 0.0
        %2392 = vmatprep.subr.mxu0 0.0
        %2393 = vmatpush2.msra.mxu0 0.0
        %2394 = vmatprep.subr.mxu0 0.0
        %2395 = vmatpush2.msra.mxu0 0.0
        %2396 = vmatprep.subr.mxu0 0.0
        %2397 = vmatpush2.msra.mxu0 0.0
        %2398 = vmatprep.subr.mxu0 0.0
        %2399 = vmatpush2.msra.mxu0 0.0
        %2400 = vmatprep.subr.mxu0 0.0
        %2401 = vmatpush2.msra.mxu0 0.0
        %2402 = vmatprep.subr.mxu0 0.0
        %2403 = vmatpush2.msra.mxu0 0.0
        %2404 = vmatprep.subr.mxu0 0.0
        %2405 = vmatpush2.msra.mxu0 0.0
        %2406 = vmatprep.subr.mxu0 0.0
        %2407 = vmatpush2.msra.mxu0 0.0
        %2408 = vmatprep.subr.mxu0 0.0
        %2409 = vmatpush2.msra.mxu0 0.0
        %2410 = vmatprep.subr.mxu0 0.0
        %2411 = vmatpush2.msra.mxu0 0.0
        %2412 = vmatprep.subr.mxu0 0.0
        %2413 = vmatpush2.msra.mxu0 0.0
        %2414 = vmatprep.subr.mxu0 0.0
        %2415 = vmatpush2.msra.mxu0 0.0
        %2416 = vmatprep.subr.mxu0 0.0
        %2417 = vmatpush2.msra.mxu0 0.0
        %2418 = vmatprep.subr.mxu0 0.0
        %2419 = vmatpush2.msra.mxu0 0.0
        %2420 = vmatprep.subr.mxu0 0.0
        %2421 = vmatpush2.msra.mxu0 0.0
        %2422 = vmatprep.mubr.f32.mxu0 0.0
        %2423 = vmatmul.mubr.f32.gmra.mxu0 %v2285
        %v2424 = vpop.f32.mrf.mxu0
        %v2425 = vadd.f32 0.0, %v2424
        %v2426 = vpop.f32.mrf.mxu0
        %2427 = vdwg.mxu0
        %v2428 = vadd.f32 %v2268, %v2354
        %v2429 = vadd.f32 %v2269, %v2356
        %v2430 = vadd.f32 %v2270, %v2425
        %2431 = vrot.lane.b32.xlu0 %v355, 24
        %v2432 = vpop.permute.xlu0 %2431
        %2433 = vrot.lane.b32.xlu0 %v352, 85
        %v2434 = vpop.permute.xlu0 %2433
        %2435 = vrot.lane.b32.xlu0 %v353, 85
        %v2436 = vpop.permute.xlu0 %2435
        %2437 = vrot.lane.b32.xlu0 %v354, 85
        %v2438 = vpop.permute.xlu0 %2437
        %vm2439 = vcmask 695296
        %v2440 = vsel %vm2439, %v2434, %v2436
        %v2441 = vsel %vm2439, %v2436, %v2438
        %v2445 = vsel %vm356, %v2432, 0
        %2447 = vmatprep.subr.mxu0 0.0
        %2448 = vmatpush1.msra.mxu0 0.0
        %2449 = vmatprep.subr.mxu0 0.0
        %2450 = vmatpush1.msra.mxu0 0.0
        %2451 = vmatprep.subr.mxu0 0.0
        %2452 = vmatpush1.msra.mxu0 0.0
        %2453 = vmatprep.subr.mxu0 0.0
        %2454 = vmatpush1.msra.mxu0 0.0
        %2455 = vmatprep.subr.mxu0 0.0
        %2456 = vmatpush1.msra.mxu0 0.0
        %2457 = vmatprep.subr.mxu0 0.0
        %2458 = vmatpush1.msra.mxu0 0.0
        %2459 = vmatprep.subr.mxu0 0.0
        %2460 = vmatpush1.msra.mxu0 0.0
        %2461 = vmatprep.subr.mxu0 0.0
        %2462 = vmatpush1.msra.mxu0 0.0
        %2463 = vmatprep.subr.mxu0 0.0
        %2464 = vmatpush1.msra.mxu0 0.0
        %2465 = vmatprep.subr.mxu0 0.0
        %2466 = vmatpush1.msra.mxu0 0.0
        %2467 = vmatprep.subr.mxu0 0.0
        %2468 = vmatpush1.msra.mxu0 0.0
        %2469 = vmatprep.subr.mxu0 0.0
        %2470 = vmatpush1.msra.mxu0 0.0
        %2471 = vmatprep.subr.mxu0 0.0
        %2472 = vmatpush1.msra.mxu0 0.0
        %2473 = vmatprep.subr.mxu0 0.0
        %2474 = vmatpush1.msra.mxu0 0.0
        %2475 = vmatprep.subr.mxu0 0.0
        %2476 = vmatpush1.msra.mxu0 0.0
        %2477 = vmatprep.subr.mxu0 %v2441
        %2478 = vmatpush1.msra.mxu0 %v2440
        %2479 = vmatprep.subr.mxu0 0.0
        %2480 = vmatpush2.msra.mxu0 0.0
        %2481 = vmatprep.subr.mxu0 0.0
        %2482 = vmatpush2.msra.mxu0 0.0
        %2483 = vmatprep.subr.mxu0 0.0
        %2484 = vmatpush2.msra.mxu0 0.0
        %2485 = vmatprep.subr.mxu0 0.0
        %2486 = vmatpush2.msra.mxu0 0.0
        %2487 = vmatprep.subr.mxu0 0.0
        %2488 = vmatpush2.msra.mxu0 0.0
        %2489 = vmatprep.subr.mxu0 0.0
        %2490 = vmatpush2.msra.mxu0 0.0
        %2491 = vmatprep.subr.mxu0 0.0
        %2492 = vmatpush2.msra.mxu0 0.0
        %2493 = vmatprep.subr.mxu0 0.0
        %2494 = vmatpush2.msra.mxu0 0.0
        %2495 = vmatprep.subr.mxu0 0.0
        %2496 = vmatpush2.msra.mxu0 0.0
        %2497 = vmatprep.subr.mxu0 0.0
        %2498 = vmatpush2.msra.mxu0 0.0
        %2499 = vmatprep.subr.mxu0 0.0
        %2500 = vmatpush2.msra.mxu0 0.0
        %2501 = vmatprep.subr.mxu0 0.0
        %2502 = vmatpush2.msra.mxu0 0.0
        %2503 = vmatprep.subr.mxu0 0.0
        %2504 = vmatpush2.msra.mxu0 0.0
        %2505 = vmatprep.subr.mxu0 0.0
        %2506 = vmatpush2.msra.mxu0 0.0
        %2507 = vmatprep.subr.mxu0 0.0
        %2508 = vmatpush2.msra.mxu0 0.0
        %2509 = vmatprep.subr.mxu0 0.0
        %2510 = vmatpush2.msra.mxu0 0.0
        %2511 = vmatprep.mubr.f32.mxu0 0.0
        %2512 = vmatmul.mubr.f32.gmra.mxu0 %v2445
        %v2513 = vpop.f32.mrf.mxu0
        %v2514 = vadd.f32 0.0, %v2513
        %v2515 = vpop.f32.mrf.mxu0
        %v2516 = vadd.f32 0.0, %v2515
        %2517 = vdwg.mxu0
        %2518 = vmatprep.subr.mxu0 0.0
        %2519 = vmatpush1.msra.mxu0 0.0
        %2520 = vmatprep.subr.mxu0 0.0
        %2521 = vmatpush1.msra.mxu0 0.0
        %2522 = vmatprep.subr.mxu0 0.0
        %2523 = vmatpush1.msra.mxu0 0.0
        %2524 = vmatprep.subr.mxu0 0.0
        %2525 = vmatpush1.msra.mxu0 0.0
        %2526 = vmatprep.subr.mxu0 0.0
        %2527 = vmatpush1.msra.mxu0 0.0
        %2528 = vmatprep.subr.mxu0 0.0
        %2529 = vmatpush1.msra.mxu0 0.0
        %2530 = vmatprep.subr.mxu0 0.0
        %2531 = vmatpush1.msra.mxu0 0.0
        %2532 = vmatprep.subr.mxu0 0.0
        %2533 = vmatpush1.msra.mxu0 0.0
        %2534 = vmatprep.subr.mxu0 0.0
        %2535 = vmatpush1.msra.mxu0 0.0
        %2536 = vmatprep.subr.mxu0 0.0
        %2537 = vmatpush1.msra.mxu0 0.0
        %2538 = vmatprep.subr.mxu0 0.0
        %2539 = vmatpush1.msra.mxu0 0.0
        %2540 = vmatprep.subr.mxu0 0.0
        %2541 = vmatpush1.msra.mxu0 0.0
        %2542 = vmatprep.subr.mxu0 0.0
        %2543 = vmatpush1.msra.mxu0 0.0
        %2544 = vmatprep.subr.mxu0 0.0
        %2545 = vmatpush1.msra.mxu0 0.0
        %2546 = vmatprep.subr.mxu0 0.0
        %2547 = vmatpush1.msra.mxu0 0.0
        %2548 = vmatprep.subr.mxu0 0.0
        %2549 = vmatpush1.msra.mxu0 %v2438
        %2550 = vmatprep.subr.mxu0 0.0
        %2551 = vmatpush2.msra.mxu0 0.0
        %2552 = vmatprep.subr.mxu0 0.0
        %2553 = vmatpush2.msra.mxu0 0.0
        %2554 = vmatprep.subr.mxu0 0.0
        %2555 = vmatpush2.msra.mxu0 0.0
        %2556 = vmatprep.subr.mxu0 0.0
        %2557 = vmatpush2.msra.mxu0 0.0
        %2558 = vmatprep.subr.mxu0 0.0
        %2559 = vmatpush2.msra.mxu0 0.0
        %2560 = vmatprep.subr.mxu0 0.0
        %2561 = vmatpush2.msra.mxu0 0.0
        %2562 = vmatprep.subr.mxu0 0.0
        %2563 = vmatpush2.msra.mxu0 0.0
        %2564 = vmatprep.subr.mxu0 0.0
        %2565 = vmatpush2.msra.mxu0 0.0
        %2566 = vmatprep.subr.mxu0 0.0
        %2567 = vmatpush2.msra.mxu0 0.0
        %2568 = vmatprep.subr.mxu0 0.0
        %2569 = vmatpush2.msra.mxu0 0.0
        %2570 = vmatprep.subr.mxu0 0.0
        %2571 = vmatpush2.msra.mxu0 0.0
        %2572 = vmatprep.subr.mxu0 0.0
        %2573 = vmatpush2.msra.mxu0 0.0
        %2574 = vmatprep.subr.mxu0 0.0
        %2575 = vmatpush2.msra.mxu0 0.0
        %2576 = vmatprep.subr.mxu0 0.0
        %2577 = vmatpush2.msra.mxu0 0.0
        %2578 = vmatprep.subr.mxu0 0.0
        %2579 = vmatpush2.msra.mxu0 0.0
        %2580 = vmatprep.subr.mxu0 0.0
        %2581 = vmatpush2.msra.mxu0 0.0
        %2582 = vmatprep.mubr.f32.mxu0 0.0
        %2583 = vmatmul.mubr.f32.gmra.mxu0 %v2445
        %v2584 = vpop.f32.mrf.mxu0
        %v2585 = vadd.f32 0.0, %v2584
        %v2586 = vpop.f32.mrf.mxu0
        %2587 = vdwg.mxu0
        %v2588 = vadd.f32 %v2428, %v2514
        %v2589 = vadd.f32 %v2429, %v2516
        %v2590 = vadd.f32 %v2430, %v2585
        %2591 = vrot.lane.b32.xlu0 %v355, 16
        %v2592 = vpop.permute.xlu0 %2591
        %2593 = vrot.lane.b32.xlu0 %v352, 84
        %v2594 = vpop.permute.xlu0 %2593
        %2595 = vrot.lane.b32.xlu0 %v353, 84
        %v2596 = vpop.permute.xlu0 %2595
        %2597 = vrot.lane.b32.xlu0 %v354, 84
        %v2598 = vpop.permute.xlu0 %2597
        %vm2599 = vcmask 687104
        %v2600 = vsel %vm2599, %v2594, %v2596
        %v2601 = vsel %vm2599, %v2596, %v2598
        %v2605 = vsel %vm356, %v2592, 0
        %2607 = vmatprep.subr.mxu0 0.0
        %2608 = vmatpush1.msra.mxu0 0.0
        %2609 = vmatprep.subr.mxu0 0.0
        %2610 = vmatpush1.msra.mxu0 0.0
        %2611 = vmatprep.subr.mxu0 0.0
        %2612 = vmatpush1.msra.mxu0 0.0
        %2613 = vmatprep.subr.mxu0 0.0
        %2614 = vmatpush1.msra.mxu0 0.0
        %2615 = vmatprep.subr.mxu0 0.0
        %2616 = vmatpush1.msra.mxu0 0.0
        %2617 = vmatprep.subr.mxu0 0.0
        %2618 = vmatpush1.msra.mxu0 0.0
        %2619 = vmatprep.subr.mxu0 0.0
        %2620 = vmatpush1.msra.mxu0 0.0
        %2621 = vmatprep.subr.mxu0 0.0
        %2622 = vmatpush1.msra.mxu0 0.0
        %2623 = vmatprep.subr.mxu0 0.0
        %2624 = vmatpush1.msra.mxu0 0.0
        %2625 = vmatprep.subr.mxu0 0.0
        %2626 = vmatpush1.msra.mxu0 0.0
        %2627 = vmatprep.subr.mxu0 0.0
        %2628 = vmatpush1.msra.mxu0 0.0
        %2629 = vmatprep.subr.mxu0 0.0
        %2630 = vmatpush1.msra.mxu0 0.0
        %2631 = vmatprep.subr.mxu0 0.0
        %2632 = vmatpush1.msra.mxu0 0.0
        %2633 = vmatprep.subr.mxu0 0.0
        %2634 = vmatpush1.msra.mxu0 0.0
        %2635 = vmatprep.subr.mxu0 0.0
        %2636 = vmatpush1.msra.mxu0 0.0
        %2637 = vmatprep.subr.mxu0 %v2601
        %2638 = vmatpush1.msra.mxu0 %v2600
        %2639 = vmatprep.subr.mxu0 0.0
        %2640 = vmatpush2.msra.mxu0 0.0
        %2641 = vmatprep.subr.mxu0 0.0
        %2642 = vmatpush2.msra.mxu0 0.0
        %2643 = vmatprep.subr.mxu0 0.0
        %2644 = vmatpush2.msra.mxu0 0.0
        %2645 = vmatprep.subr.mxu0 0.0
        %2646 = vmatpush2.msra.mxu0 0.0
        %2647 = vmatprep.subr.mxu0 0.0
        %2648 = vmatpush2.msra.mxu0 0.0
        %2649 = vmatprep.subr.mxu0 0.0
        %2650 = vmatpush2.msra.mxu0 0.0
        %2651 = vmatprep.subr.mxu0 0.0
        %2652 = vmatpush2.msra.mxu0 0.0
        %2653 = vmatprep.subr.mxu0 0.0
        %2654 = vmatpush2.msra.mxu0 0.0
        %2655 = vmatprep.subr.mxu0 0.0
        %2656 = vmatpush2.msra.mxu0 0.0
        %2657 = vmatprep.subr.mxu0 0.0
        %2658 = vmatpush2.msra.mxu0 0.0
        %2659 = vmatprep.subr.mxu0 0.0
        %2660 = vmatpush2.msra.mxu0 0.0
        %2661 = vmatprep.subr.mxu0 0.0
        %2662 = vmatpush2.msra.mxu0 0.0
        %2663 = vmatprep.subr.mxu0 0.0
        %2664 = vmatpush2.msra.mxu0 0.0
        %2665 = vmatprep.subr.mxu0 0.0
        %2666 = vmatpush2.msra.mxu0 0.0
        %2667 = vmatprep.subr.mxu0 0.0
        %2668 = vmatpush2.msra.mxu0 0.0
        %2669 = vmatprep.subr.mxu0 0.0
        %2670 = vmatpush2.msra.mxu0 0.0
        %2671 = vmatprep.mubr.f32.mxu0 0.0
        %2672 = vmatmul.mubr.f32.gmra.mxu0 %v2605
        %v2673 = vpop.f32.mrf.mxu0
        %v2674 = vadd.f32 0.0, %v2673
        %v2675 = vpop.f32.mrf.mxu0
        %v2676 = vadd.f32 0.0, %v2675
        %2677 = vdwg.mxu0
        %2678 = vmatprep.subr.mxu0 0.0
        %2679 = vmatpush1.msra.mxu0 0.0
        %2680 = vmatprep.subr.mxu0 0.0
        %2681 = vmatpush1.msra.mxu0 0.0
        %2682 = vmatprep.subr.mxu0 0.0
        %2683 = vmatpush1.msra.mxu0 0.0
        %2684 = vmatprep.subr.mxu0 0.0
        %2685 = vmatpush1.msra.mxu0 0.0
        %2686 = vmatprep.subr.mxu0 0.0
        %2687 = vmatpush1.msra.mxu0 0.0
        %2688 = vmatprep.subr.mxu0 0.0
        %2689 = vmatpush1.msra.mxu0 0.0
        %2690 = vmatprep.subr.mxu0 0.0
        %2691 = vmatpush1.msra.mxu0 0.0
        %2692 = vmatprep.subr.mxu0 0.0
        %2693 = vmatpush1.msra.mxu0 0.0
        %2694 = vmatprep.subr.mxu0 0.0
        %2695 = vmatpush1.msra.mxu0 0.0
        %2696 = vmatprep.subr.mxu0 0.0
        %2697 = vmatpush1.msra.mxu0 0.0
        %2698 = vmatprep.subr.mxu0 0.0
        %2699 = vmatpush1.msra.mxu0 0.0
        %2700 = vmatprep.subr.mxu0 0.0
        %2701 = vmatpush1.msra.mxu0 0.0
        %2702 = vmatprep.subr.mxu0 0.0
        %2703 = vmatpush1.msra.mxu0 0.0
        %2704 = vmatprep.subr.mxu0 0.0
        %2705 = vmatpush1.msra.mxu0 0.0
        %2706 = vmatprep.subr.mxu0 0.0
        %2707 = vmatpush1.msra.mxu0 0.0
        %2708 = vmatprep.subr.mxu0 0.0
        %2709 = vmatpush1.msra.mxu0 %v2598
        %2710 = vmatprep.subr.mxu0 0.0
        %2711 = vmatpush2.msra.mxu0 0.0
        %2712 = vmatprep.subr.mxu0 0.0
        %2713 = vmatpush2.msra.mxu0 0.0
        %2714 = vmatprep.subr.mxu0 0.0
        %2715 = vmatpush2.msra.mxu0 0.0
        %2716 = vmatprep.subr.mxu0 0.0
        %2717 = vmatpush2.msra.mxu0 0.0
        %2718 = vmatprep.subr.mxu0 0.0
        %2719 = vmatpush2.msra.mxu0 0.0
        %2720 = vmatprep.subr.mxu0 0.0
        %2721 = vmatpush2.msra.mxu0 0.0
        %2722 = vmatprep.subr.mxu0 0.0
        %2723 = vmatpush2.msra.mxu0 0.0
        %2724 = vmatprep.subr.mxu0 0.0
        %2725 = vmatpush2.msra.mxu0 0.0
        %2726 = vmatprep.subr.mxu0 0.0
        %2727 = vmatpush2.msra.mxu0 0.0
        %2728 = vmatprep.subr.mxu0 0.0
        %2729 = vmatpush2.msra.mxu0 0.0
        %2730 = vmatprep.subr.mxu0 0.0
        %2731 = vmatpush2.msra.mxu0 0.0
        %2732 = vmatprep.subr.mxu0 0.0
        %2733 = vmatpush2.msra.mxu0 0.0
        %2734 = vmatprep.subr.mxu0 0.0
        %2735 = vmatpush2.msra.mxu0 0.0
        %2736 = vmatprep.subr.mxu0 0.0
        %2737 = vmatpush2.msra.mxu0 0.0
        %2738 = vmatprep.subr.mxu0 0.0
        %2739 = vmatpush2.msra.mxu0 0.0
        %2740 = vmatprep.subr.mxu0 0.0
        %2741 = vmatpush2.msra.mxu0 0.0
        %2742 = vmatprep.mubr.f32.mxu0 0.0
        %2743 = vmatmul.mubr.f32.gmra.mxu0 %v2605
        %v2744 = vpop.f32.mrf.mxu0
        %v2745 = vadd.f32 0.0, %v2744
        %v2746 = vpop.f32.mrf.mxu0
        %2747 = vdwg.mxu0
        %v2748 = vadd.f32 %v2588, %v2674
        %v2749 = vadd.f32 %v2589, %v2676
        %v2750 = vadd.f32 %v2590, %v2745
        %2751 = vrot.lane.b32.xlu0 %v355, 8
        %v2752 = vpop.permute.xlu0 %2751
        %2753 = vrot.lane.b32.xlu0 %v352, 68
        %v2754 = vpop.permute.xlu0 %2753
        %2755 = vrot.lane.b32.xlu0 %v353, 68
        %v2756 = vpop.permute.xlu0 %2755
        %2757 = vrot.lane.b32.xlu0 %v354, 68
        %v2758 = vpop.permute.xlu0 %2757
        %vm2759 = vcmask 556032
        %v2760 = vsel %vm2759, %v2754, %v2756
        %v2761 = vsel %vm2759, %v2756, %v2758
        %v2765 = vsel %vm356, %v2752, 0
        %2767 = vmatprep.subr.mxu0 0.0
        %2768 = vmatpush1.msra.mxu0 0.0
        %2769 = vmatprep.subr.mxu0 0.0
        %2770 = vmatpush1.msra.mxu0 0.0
        %2771 = vmatprep.subr.mxu0 0.0
        %2772 = vmatpush1.msra.mxu0 0.0
        %2773 = vmatprep.subr.mxu0 0.0
        %2774 = vmatpush1.msra.mxu0 0.0
        %2775 = vmatprep.subr.mxu0 0.0
        %2776 = vmatpush1.msra.mxu0 0.0
        %2777 = vmatprep.subr.mxu0 0.0
        %2778 = vmatpush1.msra.mxu0 0.0
        %2779 = vmatprep.subr.mxu0 0.0
        %2780 = vmatpush1.msra.mxu0 0.0
        %2781 = vmatprep.subr.mxu0 0.0
        %2782 = vmatpush1.msra.mxu0 0.0
        %2783 = vmatprep.subr.mxu0 0.0
        %2784 = vmatpush1.msra.mxu0 0.0
        %2785 = vmatprep.subr.mxu0 0.0
        %2786 = vmatpush1.msra.mxu0 0.0
        %2787 = vmatprep.subr.mxu0 0.0
        %2788 = vmatpush1.msra.mxu0 0.0
        %2789 = vmatprep.subr.mxu0 0.0
        %2790 = vmatpush1.msra.mxu0 0.0
        %2791 = vmatprep.subr.mxu0 0.0
        %2792 = vmatpush1.msra.mxu0 0.0
        %2793 = vmatprep.subr.mxu0 0.0
        %2794 = vmatpush1.msra.mxu0 0.0
        %2795 = vmatprep.subr.mxu0 0.0
        %2796 = vmatpush1.msra.mxu0 0.0
        %2797 = vmatprep.subr.mxu0 %v2761
        %2798 = vmatpush1.msra.mxu0 %v2760
        %2799 = vmatprep.subr.mxu0 0.0
        %2800 = vmatpush2.msra.mxu0 0.0
        %2801 = vmatprep.subr.mxu0 0.0
        %2802 = vmatpush2.msra.mxu0 0.0
        %2803 = vmatprep.subr.mxu0 0.0
        %2804 = vmatpush2.msra.mxu0 0.0
        %2805 = vmatprep.subr.mxu0 0.0
        %2806 = vmatpush2.msra.mxu0 0.0
        %2807 = vmatprep.subr.mxu0 0.0
        %2808 = vmatpush2.msra.mxu0 0.0
        %2809 = vmatprep.subr.mxu0 0.0
        %2810 = vmatpush2.msra.mxu0 0.0
        %2811 = vmatprep.subr.mxu0 0.0
        %2812 = vmatpush2.msra.mxu0 0.0
        %2813 = vmatprep.subr.mxu0 0.0
        %2814 = vmatpush2.msra.mxu0 0.0
        %2815 = vmatprep.subr.mxu0 0.0
        %2816 = vmatpush2.msra.mxu0 0.0
        %2817 = vmatprep.subr.mxu0 0.0
        %2818 = vmatpush2.msra.mxu0 0.0
        %2819 = vmatprep.subr.mxu0 0.0
        %2820 = vmatpush2.msra.mxu0 0.0
        %2821 = vmatprep.subr.mxu0 0.0
        %2822 = vmatpush2.msra.mxu0 0.0
        %2823 = vmatprep.subr.mxu0 0.0
        %2824 = vmatpush2.msra.mxu0 0.0
        %2825 = vmatprep.subr.mxu0 0.0
        %2826 = vmatpush2.msra.mxu0 0.0
        %2827 = vmatprep.subr.mxu0 0.0
        %2828 = vmatpush2.msra.mxu0 0.0
        %2829 = vmatprep.subr.mxu0 0.0
        %2830 = vmatpush2.msra.mxu0 0.0
        %2831 = vmatprep.mubr.f32.mxu0 0.0
        %2832 = vmatmul.mubr.f32.gmra.mxu0 %v2765
        %v2833 = vpop.f32.mrf.mxu0
        %v2834 = vadd.f32 0.0, %v2833
        %v2835 = vpop.f32.mrf.mxu0
        %v2836 = vadd.f32 0.0, %v2835
        %2837 = vdwg.mxu0
        %2838 = vmatprep.subr.mxu0 0.0
        %2839 = vmatpush1.msra.mxu0 0.0
        %2840 = vmatprep.subr.mxu0 0.0
        %2841 = vmatpush1.msra.mxu0 0.0
        %2842 = vmatprep.subr.mxu0 0.0
        %2843 = vmatpush1.msra.mxu0 0.0
        %2844 = vmatprep.subr.mxu0 0.0
        %2845 = vmatpush1.msra.mxu0 0.0
        %2846 = vmatprep.subr.mxu0 0.0
        %2847 = vmatpush1.msra.mxu0 0.0
        %2848 = vmatprep.subr.mxu0 0.0
        %2849 = vmatpush1.msra.mxu0 0.0
        %2850 = vmatprep.subr.mxu0 0.0
        %2851 = vmatpush1.msra.mxu0 0.0
        %2852 = vmatprep.subr.mxu0 0.0
        %2853 = vmatpush1.msra.mxu0 0.0
        %2854 = vmatprep.subr.mxu0 0.0
        %2855 = vmatpush1.msra.mxu0 0.0
        %2856 = vmatprep.subr.mxu0 0.0
        %2857 = vmatpush1.msra.mxu0 0.0
        %2858 = vmatprep.subr.mxu0 0.0
        %2859 = vmatpush1.msra.mxu0 0.0
        %2860 = vmatprep.subr.mxu0 0.0
        %2861 = vmatpush1.msra.mxu0 0.0
        %2862 = vmatprep.subr.mxu0 0.0
        %2863 = vmatpush1.msra.mxu0 0.0
        %2864 = vmatprep.subr.mxu0 0.0
        %2865 = vmatpush1.msra.mxu0 0.0
        %2866 = vmatprep.subr.mxu0 0.0
        %2867 = vmatpush1.msra.mxu0 0.0
        %2868 = vmatprep.subr.mxu0 0.0
        %2869 = vmatpush1.msra.mxu0 %v2758
        %2870 = vmatprep.subr.mxu0 0.0
        %2871 = vmatpush2.msra.mxu0 0.0
        %2872 = vmatprep.subr.mxu0 0.0
        %2873 = vmatpush2.msra.mxu0 0.0
        %2874 = vmatprep.subr.mxu0 0.0
        %2875 = vmatpush2.msra.mxu0 0.0
        %2876 = vmatprep.subr.mxu0 0.0
        %2877 = vmatpush2.msra.mxu0 0.0
        %2878 = vmatprep.subr.mxu0 0.0
        %2879 = vmatpush2.msra.mxu0 0.0
        %2880 = vmatprep.subr.mxu0 0.0
        %2881 = vmatpush2.msra.mxu0 0.0
        %2882 = vmatprep.subr.mxu0 0.0
        %2883 = vmatpush2.msra.mxu0 0.0
        %2884 = vmatprep.subr.mxu0 0.0
        %2885 = vmatpush2.msra.mxu0 0.0
        %2886 = vmatprep.subr.mxu0 0.0
        %2887 = vmatpush2.msra.mxu0 0.0
        %2888 = vmatprep.subr.mxu0 0.0
        %2889 = vmatpush2.msra.mxu0 0.0
        %2890 = vmatprep.subr.mxu0 0.0
        %2891 = vmatpush2.msra.mxu0 0.0
        %2892 = vmatprep.subr.mxu0 0.0
        %2893 = vmatpush2.msra.mxu0 0.0
        %2894 = vmatprep.subr.mxu0 0.0
        %2895 = vmatpush2.msra.mxu0 0.0
        %2896 = vmatprep.subr.mxu0 0.0
        %2897 = vmatpush2.msra.mxu0 0.0
        %2898 = vmatprep.subr.mxu0 0.0
        %2899 = vmatpush2.msra.mxu0 0.0
        %2900 = vmatprep.subr.mxu0 0.0
        %2901 = vmatpush2.msra.mxu0 0.0
        %2902 = vmatprep.mubr.f32.mxu0 0.0
        %2903 = vmatmul.mubr.f32.gmra.mxu0 %v2765
        %v2904 = vpop.f32.mrf.mxu0
        %v2905 = vadd.f32 0.0, %v2904
        %v2906 = vpop.f32.mrf.mxu0
        %2907 = vdwg.mxu0
        %v2908 = vadd.f32 %v2748, %v2834
        %v2909 = vadd.f32 %v2749, %v2836
        %v2910 = vadd.f32 %v2750, %v2905
        %v2911 = vld [vmem:[%s1 + $0x8] sm:$0xff]
        %2912 = vrot.lane.b32.xlu0 %v352, 67
        %v2913 = vpop.permute.xlu0 %2912
        %2914 = vrot.lane.b32.xlu0 %v353, 67
        %v2915 = vpop.permute.xlu0 %2914
        %2916 = vrot.lane.b32.xlu0 %v354, 67
        %v2917 = vpop.permute.xlu0 %2916
        %vm2918 = vcmask 547840
        %v2919 = vsel %vm2918, %v2913, %v2915
        %v2920 = vsel %vm2918, %v2915, %v2917
        %v2925 = vsel %vm356, %v2911, 0
        %2927 = vmatprep.subr.mxu0 0.0
        %2928 = vmatpush1.msra.mxu0 0.0
        %2929 = vmatprep.subr.mxu0 0.0
        %2930 = vmatpush1.msra.mxu0 0.0
        %2931 = vmatprep.subr.mxu0 0.0
        %2932 = vmatpush1.msra.mxu0 0.0
        %2933 = vmatprep.subr.mxu0 0.0
        %2934 = vmatpush1.msra.mxu0 0.0
        %2935 = vmatprep.subr.mxu0 0.0
        %2936 = vmatpush1.msra.mxu0 0.0
        %2937 = vmatprep.subr.mxu0 0.0
        %2938 = vmatpush1.msra.mxu0 0.0
        %2939 = vmatprep.subr.mxu0 0.0
        %2940 = vmatpush1.msra.mxu0 0.0
        %2941 = vmatprep.subr.mxu0 0.0
        %2942 = vmatpush1.msra.mxu0 0.0
        %2943 = vmatprep.subr.mxu0 0.0
        %2944 = vmatpush1.msra.mxu0 0.0
        %2945 = vmatprep.subr.mxu0 0.0
        %2946 = vmatpush1.msra.mxu0 0.0
        %2947 = vmatprep.subr.mxu0 0.0
        %2948 = vmatpush1.msra.mxu0 0.0
        %2949 = vmatprep.subr.mxu0 0.0
        %2950 = vmatpush1.msra.mxu0 0.0
        %2951 = vmatprep.subr.mxu0 0.0
        %2952 = vmatpush1.msra.mxu0 0.0
        %2953 = vmatprep.subr.mxu0 0.0
        %2954 = vmatpush1.msra.mxu0 0.0
        %2955 = vmatprep.subr.mxu0 0.0
        %2956 = vmatpush1.msra.mxu0 0.0
        %2957 = vmatprep.subr.mxu0 %v2920
        %2958 = vmatpush1.msra.mxu0 %v2919
        %2959 = vmatprep.subr.mxu0 0.0
        %2960 = vmatpush2.msra.mxu0 0.0
        %2961 = vmatprep.subr.mxu0 0.0
        %2962 = vmatpush2.msra.mxu0 0.0
        %2963 = vmatprep.subr.mxu0 0.0
        %2964 = vmatpush2.msra.mxu0 0.0
        %2965 = vmatprep.subr.mxu0 0.0
        %2966 = vmatpush2.msra.mxu0 0.0
        %2967 = vmatprep.subr.mxu0 0.0
        %2968 = vmatpush2.msra.mxu0 0.0
        %2969 = vmatprep.subr.mxu0 0.0
        %2970 = vmatpush2.msra.mxu0 0.0
        %2971 = vmatprep.subr.mxu0 0.0
        %2972 = vmatpush2.msra.mxu0 0.0
        %2973 = vmatprep.subr.mxu0 0.0
        %2974 = vmatpush2.msra.mxu0 0.0
        %2975 = vmatprep.subr.mxu0 0.0
        %2976 = vmatpush2.msra.mxu0 0.0
        %2977 = vmatprep.subr.mxu0 0.0
        %2978 = vmatpush2.msra.mxu0 0.0
        %2979 = vmatprep.subr.mxu0 0.0
        %2980 = vmatpush2.msra.mxu0 0.0
        %2981 = vmatprep.subr.mxu0 0.0
        %2982 = vmatpush2.msra.mxu0 0.0
        %2983 = vmatprep.subr.mxu0 0.0
        %2984 = vmatpush2.msra.mxu0 0.0
        %2985 = vmatprep.subr.mxu0 0.0
        %2986 = vmatpush2.msra.mxu0 0.0
        %2987 = vmatprep.subr.mxu0 0.0
        %2988 = vmatpush2.msra.mxu0 0.0
        %2989 = vmatprep.subr.mxu0 0.0
        %2990 = vmatpush2.msra.mxu0 0.0
        %2991 = vmatprep.mubr.f32.mxu0 0.0
        %2992 = vmatmul.mubr.f32.gmra.mxu0 %v2925
        %v2993 = vpop.f32.mrf.mxu0
        %v2994 = vadd.f32 0.0, %v2993
        %v2995 = vpop.f32.mrf.mxu0
        %v2996 = vadd.f32 0.0, %v2995
        %2997 = vdwg.mxu0
        %2998 = vmatprep.subr.mxu0 0.0
        %2999 = vmatpush1.msra.mxu0 0.0
        %3000 = vmatprep.subr.mxu0 0.0
        %3001 = vmatpush1.msra.mxu0 0.0
        %3002 = vmatprep.subr.mxu0 0.0
        %3003 = vmatpush1.msra.mxu0 0.0
        %3004 = vmatprep.subr.mxu0 0.0
        %3005 = vmatpush1.msra.mxu0 0.0
        %3006 = vmatprep.subr.mxu0 0.0
        %3007 = vmatpush1.msra.mxu0 0.0
        %3008 = vmatprep.subr.mxu0 0.0
        %3009 = vmatpush1.msra.mxu0 0.0
        %3010 = vmatprep.subr.mxu0 0.0
        %3011 = vmatpush1.msra.mxu0 0.0
        %3012 = vmatprep.subr.mxu0 0.0
        %3013 = vmatpush1.msra.mxu0 0.0
        %3014 = vmatprep.subr.mxu0 0.0
        %3015 = vmatpush1.msra.mxu0 0.0
        %3016 = vmatprep.subr.mxu0 0.0
        %3017 = vmatpush1.msra.mxu0 0.0
        %3018 = vmatprep.subr.mxu0 0.0
        %3019 = vmatpush1.msra.mxu0 0.0
        %3020 = vmatprep.subr.mxu0 0.0
        %3021 = vmatpush1.msra.mxu0 0.0
        %3022 = vmatprep.subr.mxu0 0.0
        %3023 = vmatpush1.msra.mxu0 0.0
        %3024 = vmatprep.subr.mxu0 0.0
        %3025 = vmatpush1.msra.mxu0 0.0
        %3026 = vmatprep.subr.mxu0 0.0
        %3027 = vmatpush1.msra.mxu0 0.0
        %3028 = vmatprep.subr.mxu0 0.0
        %3029 = vmatpush1.msra.mxu0 %v2917
        %3030 = vmatprep.subr.mxu0 0.0
        %3031 = vmatpush2.msra.mxu0 0.0
        %3032 = vmatprep.subr.mxu0 0.0
        %3033 = vmatpush2.msra.mxu0 0.0
        %3034 = vmatprep.subr.mxu0 0.0
        %3035 = vmatpush2.msra.mxu0 0.0
        %3036 = vmatprep.subr.mxu0 0.0
        %3037 = vmatpush2.msra.mxu0 0.0
        %3038 = vmatprep.subr.mxu0 0.0
        %3039 = vmatpush2.msra.mxu0 0.0
        %3040 = vmatprep.subr.mxu0 0.0
        %3041 = vmatpush2.msra.mxu0 0.0
        %3042 = vmatprep.subr.mxu0 0.0
        %3043 = vmatpush2.msra.mxu0 0.0
        %3044 = vmatprep.subr.mxu0 0.0
        %3045 = vmatpush2.msra.mxu0 0.0
        %3046 = vmatprep.subr.mxu0 0.0
        %3047 = vmatpush2.msra.mxu0 0.0
        %3048 = vmatprep.subr.mxu0 0.0
        %3049 = vmatpush2.msra.mxu0 0.0
        %3050 = vmatprep.subr.mxu0 0.0
        %3051 = vmatpush2.msra.mxu0 0.0
        %3052 = vmatprep.subr.mxu0 0.0
        %3053 = vmatpush2.msra.mxu0 0.0
        %3054 = vmatprep.subr.mxu0 0.0
        %3055 = vmatpush2.msra.mxu0 0.0
        %3056 = vmatprep.subr.mxu0 0.0
        %3057 = vmatpush2.msra.mxu0 0.0
        %3058 = vmatprep.subr.mxu0 0.0
        %3059 = vmatpush2.msra.mxu0 0.0
        %3060 = vmatprep.subr.mxu0 0.0
        %3061 = vmatpush2.msra.mxu0 0.0
        %3062 = vmatprep.mubr.f32.mxu0 0.0
        %3063 = vmatmul.mubr.f32.gmra.mxu0 %v2925
        %v3064 = vpop.f32.mrf.mxu0
        %v3065 = vadd.f32 0.0, %v3064
        %v3066 = vpop.f32.mrf.mxu0
        %3067 = vdwg.mxu0
        %v3068 = vadd.f32 %v2908, %v2994
        %v3069 = vadd.f32 %v2909, %v2996
        %v3070 = vadd.f32 %v2910, %v3065
        %3071 = vrot.lane.b32.xlu0 %v2911, 120
        %v3072 = vpop.permute.xlu0 %3071
        %3073 = vrot.lane.b32.xlu0 %v352, 66
        %v3074 = vpop.permute.xlu0 %3073
        %3075 = vrot.lane.b32.xlu0 %v353, 66
        %v3076 = vpop.permute.xlu0 %3075
        %3077 = vrot.lane.b32.xlu0 %v354, 66
        %v3078 = vpop.permute.xlu0 %3077
        %vm3079 = vcmask 539648
        %v3080 = vsel %vm3079, %v3074, %v3076
        %v3081 = vsel %vm3079, %v3076, %v3078
        %v3085 = vsel %vm356, %v3072, 0
        %3087 = vmatprep.subr.mxu0 0.0
        %3088 = vmatpush1.msra.mxu0 0.0
        %3089 = vmatprep.subr.mxu0 0.0
        %3090 = vmatpush1.msra.mxu0 0.0
        %3091 = vmatprep.subr.mxu0 0.0
        %3092 = vmatpush1.msra.mxu0 0.0
        %3093 = vmatprep.subr.mxu0 0.0
        %3094 = vmatpush1.msra.mxu0 0.0
        %3095 = vmatprep.subr.mxu0 0.0
        %3096 = vmatpush1.msra.mxu0 0.0
        %3097 = vmatprep.subr.mxu0 0.0
        %3098 = vmatpush1.msra.mxu0 0.0
        %3099 = vmatprep.subr.mxu0 0.0
        %3100 = vmatpush1.msra.mxu0 0.0
        %3101 = vmatprep.subr.mxu0 0.0
        %3102 = vmatpush1.msra.mxu0 0.0
        %3103 = vmatprep.subr.mxu0 0.0
        %3104 = vmatpush1.msra.mxu0 0.0
        %3105 = vmatprep.subr.mxu0 0.0
        %3106 = vmatpush1.msra.mxu0 0.0
        %3107 = vmatprep.subr.mxu0 0.0
        %3108 = vmatpush1.msra.mxu0 0.0
        %3109 = vmatprep.subr.mxu0 0.0
        %3110 = vmatpush1.msra.mxu0 0.0
        %3111 = vmatprep.subr.mxu0 0.0
        %3112 = vmatpush1.msra.mxu0 0.0
        %3113 = vmatprep.subr.mxu0 0.0
        %3114 = vmatpush1.msra.mxu0 0.0
        %3115 = vmatprep.subr.mxu0 0.0
        %3116 = vmatpush1.msra.mxu0 0.0
        %3117 = vmatprep.subr.mxu0 %v3081
        %3118 = vmatpush1.msra.mxu0 %v3080
        %3119 = vmatprep.subr.mxu0 0.0
        %3120 = vmatpush2.msra.mxu0 0.0
        %3121 = vmatprep.subr.mxu0 0.0
        %3122 = vmatpush2.msra.mxu0 0.0
        %3123 = vmatprep.subr.mxu0 0.0
        %3124 = vmatpush2.msra.mxu0 0.0
        %3125 = vmatprep.subr.mxu0 0.0
        %3126 = vmatpush2.msra.mxu0 0.0
        %3127 = vmatprep.subr.mxu0 0.0
        %3128 = vmatpush2.msra.mxu0 0.0
        %3129 = vmatprep.subr.mxu0 0.0
        %3130 = vmatpush2.msra.mxu0 0.0
        %3131 = vmatprep.subr.mxu0 0.0
        %3132 = vmatpush2.msra.mxu0 0.0
        %3133 = vmatprep.subr.mxu0 0.0
        %3134 = vmatpush2.msra.mxu0 0.0
        %3135 = vmatprep.subr.mxu0 0.0
        %3136 = vmatpush2.msra.mxu0 0.0
        %3137 = vmatprep.subr.mxu0 0.0
        %3138 = vmatpush2.msra.mxu0 0.0
        %3139 = vmatprep.subr.mxu0 0.0
        %3140 = vmatpush2.msra.mxu0 0.0
        %3141 = vmatprep.subr.mxu0 0.0
        %3142 = vmatpush2.msra.mxu0 0.0
        %3143 = vmatprep.subr.mxu0 0.0
        %3144 = vmatpush2.msra.mxu0 0.0
        %3145 = vmatprep.subr.mxu0 0.0
        %3146 = vmatpush2.msra.mxu0 0.0
        %3147 = vmatprep.subr.mxu0 0.0
        %3148 = vmatpush2.msra.mxu0 0.0
        %3149 = vmatprep.subr.mxu0 0.0
        %3150 = vmatpush2.msra.mxu0 0.0
        %3151 = vmatprep.mubr.f32.mxu0 0.0
        %3152 = vmatmul.mubr.f32.gmra.mxu0 %v3085
        %v3153 = vpop.f32.mrf.mxu0
        %v3154 = vadd.f32 0.0, %v3153
        %v3155 = vpop.f32.mrf.mxu0
        %v3156 = vadd.f32 0.0, %v3155
        %3157 = vdwg.mxu0
        %3158 = vmatprep.subr.mxu0 0.0
        %3159 = vmatpush1.msra.mxu0 0.0
        %3160 = vmatprep.subr.mxu0 0.0
        %3161 = vmatpush1.msra.mxu0 0.0
        %3162 = vmatprep.subr.mxu0 0.0
        %3163 = vmatpush1.msra.mxu0 0.0
        %3164 = vmatprep.subr.mxu0 0.0
        %3165 = vmatpush1.msra.mxu0 0.0
        %3166 = vmatprep.subr.mxu0 0.0
        %3167 = vmatpush1.msra.mxu0 0.0
        %3168 = vmatprep.subr.mxu0 0.0
        %3169 = vmatpush1.msra.mxu0 0.0
        %3170 = vmatprep.subr.mxu0 0.0
        %3171 = vmatpush1.msra.mxu0 0.0
        %3172 = vmatprep.subr.mxu0 0.0
        %3173 = vmatpush1.msra.mxu0 0.0
        %3174 = vmatprep.subr.mxu0 0.0
        %3175 = vmatpush1.msra.mxu0 0.0
        %3176 = vmatprep.subr.mxu0 0.0
        %3177 = vmatpush1.msra.mxu0 0.0
        %3178 = vmatprep.subr.mxu0 0.0
        %3179 = vmatpush1.msra.mxu0 0.0
        %3180 = vmatprep.subr.mxu0 0.0
        %3181 = vmatpush1.msra.mxu0 0.0
        %3182 = vmatprep.subr.mxu0 0.0
        %3183 = vmatpush1.msra.mxu0 0.0
        %3184 = vmatprep.subr.mxu0 0.0
        %3185 = vmatpush1.msra.mxu0 0.0
        %3186 = vmatprep.subr.mxu0 0.0
        %3187 = vmatpush1.msra.mxu0 0.0
        %3188 = vmatprep.subr.mxu0 0.0
        %3189 = vmatpush1.msra.mxu0 %v3078
        %3190 = vmatprep.subr.mxu0 0.0
        %3191 = vmatpush2.msra.mxu0 0.0
        %3192 = vmatprep.subr.mxu0 0.0
        %3193 = vmatpush2.msra.mxu0 0.0
        %3194 = vmatprep.subr.mxu0 0.0
        %3195 = vmatpush2.msra.mxu0 0.0
        %3196 = vmatprep.subr.mxu0 0.0
        %3197 = vmatpush2.msra.mxu0 0.0
        %3198 = vmatprep.subr.mxu0 0.0
        %3199 = vmatpush2.msra.mxu0 0.0
        %3200 = vmatprep.subr.mxu0 0.0
        %3201 = vmatpush2.msra.mxu0 0.0
        %3202 = vmatprep.subr.mxu0 0.0
        %3203 = vmatpush2.msra.mxu0 0.0
        %3204 = vmatprep.subr.mxu0 0.0
        %3205 = vmatpush2.msra.mxu0 0.0
        %3206 = vmatprep.subr.mxu0 0.0
        %3207 = vmatpush2.msra.mxu0 0.0
        %3208 = vmatprep.subr.mxu0 0.0
        %3209 = vmatpush2.msra.mxu0 0.0
        %3210 = vmatprep.subr.mxu0 0.0
        %3211 = vmatpush2.msra.mxu0 0.0
        %3212 = vmatprep.subr.mxu0 0.0
        %3213 = vmatpush2.msra.mxu0 0.0
        %3214 = vmatprep.subr.mxu0 0.0
        %3215 = vmatpush2.msra.mxu0 0.0
        %3216 = vmatprep.subr.mxu0 0.0
        %3217 = vmatpush2.msra.mxu0 0.0
        %3218 = vmatprep.subr.mxu0 0.0
        %3219 = vmatpush2.msra.mxu0 0.0
        %3220 = vmatprep.subr.mxu0 0.0
        %3221 = vmatpush2.msra.mxu0 0.0
        %3222 = vmatprep.mubr.f32.mxu0 0.0
        %3223 = vmatmul.mubr.f32.gmra.mxu0 %v3085
        %v3224 = vpop.f32.mrf.mxu0
        %v3225 = vadd.f32 0.0, %v3224
        %v3226 = vpop.f32.mrf.mxu0
        %3227 = vdwg.mxu0
        %v3228 = vadd.f32 %v3068, %v3154
        %v3229 = vadd.f32 %v3069, %v3156
        %v3230 = vadd.f32 %v3070, %v3225
        %3231 = vrot.lane.b32.xlu0 %v2911, 112
        %v3232 = vpop.permute.xlu0 %3231
        %3233 = vrot.lane.b32.xlu0 %v352, 65
        %v3234 = vpop.permute.xlu0 %3233
        %3235 = vrot.lane.b32.xlu0 %v353, 65
        %v3236 = vpop.permute.xlu0 %3235
        %3237 = vrot.lane.b32.xlu0 %v354, 65
        %v3238 = vpop.permute.xlu0 %3237
        %vm3239 = vcmask 531456
        %v3240 = vsel %vm3239, %v3234, %v3236
        %v3241 = vsel %vm3239, %v3236, %v3238
        %v3245 = vsel %vm356, %v3232, 0
        %3247 = vmatprep.subr.mxu0 0.0
        %3248 = vmatpush1.msra.mxu0 0.0
        %3249 = vmatprep.subr.mxu0 0.0
        %3250 = vmatpush1.msra.mxu0 0.0
        %3251 = vmatprep.subr.mxu0 0.0
        %3252 = vmatpush1.msra.mxu0 0.0
        %3253 = vmatprep.subr.mxu0 0.0
        %3254 = vmatpush1.msra.mxu0 0.0
        %3255 = vmatprep.subr.mxu0 0.0
        %3256 = vmatpush1.msra.mxu0 0.0
        %3257 = vmatprep.subr.mxu0 0.0
        %3258 = vmatpush1.msra.mxu0 0.0
        %3259 = vmatprep.subr.mxu0 0.0
        %3260 = vmatpush1.msra.mxu0 0.0
        %3261 = vmatprep.subr.mxu0 0.0
        %3262 = vmatpush1.msra.mxu0 0.0
        %3263 = vmatprep.subr.mxu0 0.0
        %3264 = vmatpush1.msra.mxu0 0.0
        %3265 = vmatprep.subr.mxu0 0.0
        %3266 = vmatpush1.msra.mxu0 0.0
        %3267 = vmatprep.subr.mxu0 0.0
        %3268 = vmatpush1.msra.mxu0 0.0
        %3269 = vmatprep.subr.mxu0 0.0
        %3270 = vmatpush1.msra.mxu0 0.0
        %3271 = vmatprep.subr.mxu0 0.0
        %3272 = vmatpush1.msra.mxu0 0.0
        %3273 = vmatprep.subr.mxu0 0.0
        %3274 = vmatpush1.msra.mxu0 0.0
        %3275 = vmatprep.subr.mxu0 0.0
        %3276 = vmatpush1.msra.mxu0 0.0
        %3277 = vmatprep.subr.mxu0 %v3241
        %3278 = vmatpush1.msra.mxu0 %v3240
        %3279 = vmatprep.subr.mxu0 0.0
        %3280 = vmatpush2.msra.mxu0 0.0
        %3281 = vmatprep.subr.mxu0 0.0
        %3282 = vmatpush2.msra.mxu0 0.0
        %3283 = vmatprep.subr.mxu0 0.0
        %3284 = vmatpush2.msra.mxu0 0.0
        %3285 = vmatprep.subr.mxu0 0.0
        %3286 = vmatpush2.msra.mxu0 0.0
        %3287 = vmatprep.subr.mxu0 0.0
        %3288 = vmatpush2.msra.mxu0 0.0
        %3289 = vmatprep.subr.mxu0 0.0
        %3290 = vmatpush2.msra.mxu0 0.0
        %3291 = vmatprep.subr.mxu0 0.0
        %3292 = vmatpush2.msra.mxu0 0.0
        %3293 = vmatprep.subr.mxu0 0.0
        %3294 = vmatpush2.msra.mxu0 0.0
        %3295 = vmatprep.subr.mxu0 0.0
        %3296 = vmatpush2.msra.mxu0 0.0
        %3297 = vmatprep.subr.mxu0 0.0
        %3298 = vmatpush2.msra.mxu0 0.0
        %3299 = vmatprep.subr.mxu0 0.0
        %3300 = vmatpush2.msra.mxu0 0.0
        %3301 = vmatprep.subr.mxu0 0.0
        %3302 = vmatpush2.msra.mxu0 0.0
        %3303 = vmatprep.subr.mxu0 0.0
        %3304 = vmatpush2.msra.mxu0 0.0
        %3305 = vmatprep.subr.mxu0 0.0
        %3306 = vmatpush2.msra.mxu0 0.0
        %3307 = vmatprep.subr.mxu0 0.0
        %3308 = vmatpush2.msra.mxu0 0.0
        %3309 = vmatprep.subr.mxu0 0.0
        %3310 = vmatpush2.msra.mxu0 0.0
        %3311 = vmatprep.mubr.f32.mxu0 0.0
        %3312 = vmatmul.mubr.f32.gmra.mxu0 %v3245
        %v3313 = vpop.f32.mrf.mxu0
        %v3314 = vadd.f32 0.0, %v3313
        %v3315 = vpop.f32.mrf.mxu0
        %v3316 = vadd.f32 0.0, %v3315
        %3317 = vdwg.mxu0
        %3318 = vmatprep.subr.mxu0 0.0
        %3319 = vmatpush1.msra.mxu0 0.0
        %3320 = vmatprep.subr.mxu0 0.0
        %3321 = vmatpush1.msra.mxu0 0.0
        %3322 = vmatprep.subr.mxu0 0.0
        %3323 = vmatpush1.msra.mxu0 0.0
        %3324 = vmatprep.subr.mxu0 0.0
        %3325 = vmatpush1.msra.mxu0 0.0
        %3326 = vmatprep.subr.mxu0 0.0
        %3327 = vmatpush1.msra.mxu0 0.0
        %3328 = vmatprep.subr.mxu0 0.0
        %3329 = vmatpush1.msra.mxu0 0.0
        %3330 = vmatprep.subr.mxu0 0.0
        %3331 = vmatpush1.msra.mxu0 0.0
        %3332 = vmatprep.subr.mxu0 0.0
        %3333 = vmatpush1.msra.mxu0 0.0
        %3334 = vmatprep.subr.mxu0 0.0
        %3335 = vmatpush1.msra.mxu0 0.0
        %3336 = vmatprep.subr.mxu0 0.0
        %3337 = vmatpush1.msra.mxu0 0.0
        %3338 = vmatprep.subr.mxu0 0.0
        %3339 = vmatpush1.msra.mxu0 0.0
        %3340 = vmatprep.subr.mxu0 0.0
        %3341 = vmatpush1.msra.mxu0 0.0
        %3342 = vmatprep.subr.mxu0 0.0
        %3343 = vmatpush1.msra.mxu0 0.0
        %3344 = vmatprep.subr.mxu0 0.0
        %3345 = vmatpush1.msra.mxu0 0.0
        %3346 = vmatprep.subr.mxu0 0.0
        %3347 = vmatpush1.msra.mxu0 0.0
        %3348 = vmatprep.subr.mxu0 0.0
        %3349 = vmatpush1.msra.mxu0 %v3238
        %3350 = vmatprep.subr.mxu0 0.0
        %3351 = vmatpush2.msra.mxu0 0.0
        %3352 = vmatprep.subr.mxu0 0.0
        %3353 = vmatpush2.msra.mxu0 0.0
        %3354 = vmatprep.subr.mxu0 0.0
        %3355 = vmatpush2.msra.mxu0 0.0
        %3356 = vmatprep.subr.mxu0 0.0
        %3357 = vmatpush2.msra.mxu0 0.0
        %3358 = vmatprep.subr.mxu0 0.0
        %3359 = vmatpush2.msra.mxu0 0.0
        %3360 = vmatprep.subr.mxu0 0.0
        %3361 = vmatpush2.msra.mxu0 0.0
        %3362 = vmatprep.subr.mxu0 0.0
        %3363 = vmatpush2.msra.mxu0 0.0
        %3364 = vmatprep.subr.mxu0 0.0
        %3365 = vmatpush2.msra.mxu0 0.0
        %3366 = vmatprep.subr.mxu0 0.0
        %3367 = vmatpush2.msra.mxu0 0.0
        %3368 = vmatprep.subr.mxu0 0.0
        %3369 = vmatpush2.msra.mxu0 0.0
        %3370 = vmatprep.subr.mxu0 0.0
        %3371 = vmatpush2.msra.mxu0 0.0
        %3372 = vmatprep.subr.mxu0 0.0
        %3373 = vmatpush2.msra.mxu0 0.0
        %3374 = vmatprep.subr.mxu0 0.0
        %3375 = vmatpush2.msra.mxu0 0.0
        %3376 = vmatprep.subr.mxu0 0.0
        %3377 = vmatpush2.msra.mxu0 0.0
        %3378 = vmatprep.subr.mxu0 0.0
        %3379 = vmatpush2.msra.mxu0 0.0
        %3380 = vmatprep.subr.mxu0 0.0
        %3381 = vmatpush2.msra.mxu0 0.0
        %3382 = vmatprep.mubr.f32.mxu0 0.0
        %3383 = vmatmul.mubr.f32.gmra.mxu0 %v3245
        %v3384 = vpop.f32.mrf.mxu0
        %v3385 = vadd.f32 0.0, %v3384
        %v3386 = vpop.f32.mrf.mxu0
        %3387 = vdwg.mxu0
        %v3388 = vadd.f32 %v3228, %v3314
        %v3389 = vadd.f32 %v3229, %v3316
        %v3390 = vadd.f32 %v3230, %v3385
        %3391 = vrot.lane.b32.xlu0 %v2911, 104
        %v3392 = vpop.permute.xlu0 %3391
        %3393 = vrot.lane.b32.xlu0 %v352, 64
        %v3394 = vpop.permute.xlu0 %3393
        %3395 = vrot.lane.b32.xlu0 %v353, 64
        %v3396 = vpop.permute.xlu0 %3395
        %3397 = vrot.lane.b32.xlu0 %v354, 64
        %v3398 = vpop.permute.xlu0 %3397
        %vm3399 = vcmask 523264
        %v3400 = vsel %vm3399, %v3394, %v3396
        %v3401 = vsel %vm3399, %v3396, %v3398
        %v3405 = vsel %vm356, %v3392, 0
        %3407 = vmatprep.subr.mxu0 0.0
        %3408 = vmatpush1.msra.mxu0 0.0
        %3409 = vmatprep.subr.mxu0 0.0
        %3410 = vmatpush1.msra.mxu0 0.0
        %3411 = vmatprep.subr.mxu0 0.0
        %3412 = vmatpush1.msra.mxu0 0.0
        %3413 = vmatprep.subr.mxu0 0.0
        %3414 = vmatpush1.msra.mxu0 0.0
        %3415 = vmatprep.subr.mxu0 0.0
        %3416 = vmatpush1.msra.mxu0 0.0
        %3417 = vmatprep.subr.mxu0 0.0
        %3418 = vmatpush1.msra.mxu0 0.0
        %3419 = vmatprep.subr.mxu0 0.0
        %3420 = vmatpush1.msra.mxu0 0.0
        %3421 = vmatprep.subr.mxu0 0.0
        %3422 = vmatpush1.msra.mxu0 0.0
        %3423 = vmatprep.subr.mxu0 0.0
        %3424 = vmatpush1.msra.mxu0 0.0
        %3425 = vmatprep.subr.mxu0 0.0
        %3426 = vmatpush1.msra.mxu0 0.0
        %3427 = vmatprep.subr.mxu0 0.0
        %3428 = vmatpush1.msra.mxu0 0.0
        %3429 = vmatprep.subr.mxu0 0.0
        %3430 = vmatpush1.msra.mxu0 0.0
        %3431 = vmatprep.subr.mxu0 0.0
        %3432 = vmatpush1.msra.mxu0 0.0
        %3433 = vmatprep.subr.mxu0 0.0
        %3434 = vmatpush1.msra.mxu0 0.0
        %3435 = vmatprep.subr.mxu0 0.0
        %3436 = vmatpush1.msra.mxu0 0.0
        %3437 = vmatprep.subr.mxu0 %v3401
        %3438 = vmatpush1.msra.mxu0 %v3400
        %3439 = vmatprep.subr.mxu0 0.0
        %3440 = vmatpush2.msra.mxu0 0.0
        %3441 = vmatprep.subr.mxu0 0.0
        %3442 = vmatpush2.msra.mxu0 0.0
        %3443 = vmatprep.subr.mxu0 0.0
        %3444 = vmatpush2.msra.mxu0 0.0
        %3445 = vmatprep.subr.mxu0 0.0
        %3446 = vmatpush2.msra.mxu0 0.0
        %3447 = vmatprep.subr.mxu0 0.0
        %3448 = vmatpush2.msra.mxu0 0.0
        %3449 = vmatprep.subr.mxu0 0.0
        %3450 = vmatpush2.msra.mxu0 0.0
        %3451 = vmatprep.subr.mxu0 0.0
        %3452 = vmatpush2.msra.mxu0 0.0
        %3453 = vmatprep.subr.mxu0 0.0
        %3454 = vmatpush2.msra.mxu0 0.0
        %3455 = vmatprep.subr.mxu0 0.0
        %3456 = vmatpush2.msra.mxu0 0.0
        %3457 = vmatprep.subr.mxu0 0.0
        %3458 = vmatpush2.msra.mxu0 0.0
        %3459 = vmatprep.subr.mxu0 0.0
        %3460 = vmatpush2.msra.mxu0 0.0
        %3461 = vmatprep.subr.mxu0 0.0
        %3462 = vmatpush2.msra.mxu0 0.0
        %3463 = vmatprep.subr.mxu0 0.0
        %3464 = vmatpush2.msra.mxu0 0.0
        %3465 = vmatprep.subr.mxu0 0.0
        %3466 = vmatpush2.msra.mxu0 0.0
        %3467 = vmatprep.subr.mxu0 0.0
        %3468 = vmatpush2.msra.mxu0 0.0
        %3469 = vmatprep.subr.mxu0 0.0
        %3470 = vmatpush2.msra.mxu0 0.0
        %3471 = vmatprep.mubr.f32.mxu0 0.0
        %3472 = vmatmul.mubr.f32.gmra.mxu0 %v3405
        %v3473 = vpop.f32.mrf.mxu0
        %v3474 = vadd.f32 0.0, %v3473
        %v3475 = vpop.f32.mrf.mxu0
        %v3476 = vadd.f32 0.0, %v3475
        %3477 = vdwg.mxu0
        %3478 = vmatprep.subr.mxu0 0.0
        %3479 = vmatpush1.msra.mxu0 0.0
        %3480 = vmatprep.subr.mxu0 0.0
        %3481 = vmatpush1.msra.mxu0 0.0
        %3482 = vmatprep.subr.mxu0 0.0
        %3483 = vmatpush1.msra.mxu0 0.0
        %3484 = vmatprep.subr.mxu0 0.0
        %3485 = vmatpush1.msra.mxu0 0.0
        %3486 = vmatprep.subr.mxu0 0.0
        %3487 = vmatpush1.msra.mxu0 0.0
        %3488 = vmatprep.subr.mxu0 0.0
        %3489 = vmatpush1.msra.mxu0 0.0
        %3490 = vmatprep.subr.mxu0 0.0
        %3491 = vmatpush1.msra.mxu0 0.0
        %3492 = vmatprep.subr.mxu0 0.0
        %3493 = vmatpush1.msra.mxu0 0.0
        %3494 = vmatprep.subr.mxu0 0.0
        %3495 = vmatpush1.msra.mxu0 0.0
        %3496 = vmatprep.subr.mxu0 0.0
        %3497 = vmatpush1.msra.mxu0 0.0
        %3498 = vmatprep.subr.mxu0 0.0
        %3499 = vmatpush1.msra.mxu0 0.0
        %3500 = vmatprep.subr.mxu0 0.0
        %3501 = vmatpush1.msra.mxu0 0.0
        %3502 = vmatprep.subr.mxu0 0.0
        %3503 = vmatpush1.msra.mxu0 0.0
        %3504 = vmatprep.subr.mxu0 0.0
        %3505 = vmatpush1.msra.mxu0 0.0
        %3506 = vmatprep.subr.mxu0 0.0
        %3507 = vmatpush1.msra.mxu0 0.0
        %3508 = vmatprep.subr.mxu0 0.0
        %3509 = vmatpush1.msra.mxu0 %v3398
        %3510 = vmatprep.subr.mxu0 0.0
        %3511 = vmatpush2.msra.mxu0 0.0
        %3512 = vmatprep.subr.mxu0 0.0
        %3513 = vmatpush2.msra.mxu0 0.0
        %3514 = vmatprep.subr.mxu0 0.0
        %3515 = vmatpush2.msra.mxu0 0.0
        %3516 = vmatprep.subr.mxu0 0.0
        %3517 = vmatpush2.msra.mxu0 0.0
        %3518 = vmatprep.subr.mxu0 0.0
        %3519 = vmatpush2.msra.mxu0 0.0
        %3520 = vmatprep.subr.mxu0 0.0
        %3521 = vmatpush2.msra.mxu0 0.0
        %3522 = vmatprep.subr.mxu0 0.0
        %3523 = vmatpush2.msra.mxu0 0.0
        %3524 = vmatprep.subr.mxu0 0.0
        %3525 = vmatpush2.msra.mxu0 0.0
        %3526 = vmatprep.subr.mxu0 0.0
        %3527 = vmatpush2.msra.mxu0 0.0
        %3528 = vmatprep.subr.mxu0 0.0
        %3529 = vmatpush2.msra.mxu0 0.0
        %3530 = vmatprep.subr.mxu0 0.0
        %3531 = vmatpush2.msra.mxu0 0.0
        %3532 = vmatprep.subr.mxu0 0.0
        %3533 = vmatpush2.msra.mxu0 0.0
        %3534 = vmatprep.subr.mxu0 0.0
        %3535 = vmatpush2.msra.mxu0 0.0
        %3536 = vmatprep.subr.mxu0 0.0
        %3537 = vmatpush2.msra.mxu0 0.0
        %3538 = vmatprep.subr.mxu0 0.0
        %3539 = vmatpush2.msra.mxu0 0.0
        %3540 = vmatprep.subr.mxu0 0.0
        %3541 = vmatpush2.msra.mxu0 0.0
        %3542 = vmatprep.mubr.f32.mxu0 0.0
        %3543 = vmatmul.mubr.f32.gmra.mxu0 %v3405
        %v3544 = vpop.f32.mrf.mxu0
        %v3545 = vadd.f32 0.0, %v3544
        %v3546 = vpop.f32.mrf.mxu0
        %3547 = vdwg.mxu0
        %v3548 = vadd.f32 %v3388, %v3474
        %v3549 = vadd.f32 %v3389, %v3476
        %v3550 = vadd.f32 %v3390, %v3545
        %v3551 = vld [vmem:[#allocation2] sm:$0xff]
        %v3552 = vld [vmem:[#allocation2 + $0x8] sm:$0xff]
        %v3553 = vld [vmem:[#allocation2 + $0x10] sm:$0xff]
        %v3554 = vld [vmem:[#allocation2 + $0x18] sm:$0xff]
        %3555 = vrot.lane.b32.xlu0 %v2911, 96
        %v3556 = vpop.permute.xlu0 %3555
        %3561 = vrot.lane.b32.xlu0 %v3551, 48
        %v3562 = vpop.permute.xlu0 %3561
        %3563 = vrot.lane.b32.xlu0 %v3552, 48
        %v3564 = vpop.permute.xlu0 %3563
        %3565 = vrot.lane.b32.xlu0 %v3553, 48
        %v3566 = vpop.permute.xlu0 %3565
        %3567 = vrot.lane.b32.xlu0 %v3554, 48
        %v3568 = vpop.permute.xlu0 %3567
        %vm3569 = vcmask 392192
        %v3570 = vsel %vm3569, %v3562, %v3564
        %v3571 = vsel %vm3569, %v3564, %v3566
        %v3572 = vsel %vm3569, %v3566, %v3568
        %v3576 = vsel %vm356, %v3556, 0
        %3578 = vmatprep.subr.mxu0 0.0
        %3579 = vmatpush1.msra.mxu0 0.0
        %3580 = vmatprep.subr.mxu0 0.0
        %3581 = vmatpush1.msra.mxu0 0.0
        %3582 = vmatprep.subr.mxu0 0.0
        %3583 = vmatpush1.msra.mxu0 0.0
        %3584 = vmatprep.subr.mxu0 0.0
        %3585 = vmatpush1.msra.mxu0 0.0
        %3586 = vmatprep.subr.mxu0 0.0
        %3587 = vmatpush1.msra.mxu0 0.0
        %3588 = vmatprep.subr.mxu0 0.0
        %3589 = vmatpush1.msra.mxu0 0.0
        %3590 = vmatprep.subr.mxu0 0.0
        %3591 = vmatpush1.msra.mxu0 0.0
        %3592 = vmatprep.subr.mxu0 0.0
        %3593 = vmatpush1.msra.mxu0 0.0
        %3594 = vmatprep.subr.mxu0 0.0
        %3595 = vmatpush1.msra.mxu0 0.0
        %3596 = vmatprep.subr.mxu0 0.0
        %3597 = vmatpush1.msra.mxu0 0.0
        %3598 = vmatprep.subr.mxu0 0.0
        %3599 = vmatpush1.msra.mxu0 0.0
        %3600 = vmatprep.subr.mxu0 0.0
        %3601 = vmatpush1.msra.mxu0 0.0
        %3602 = vmatprep.subr.mxu0 0.0
        %3603 = vmatpush1.msra.mxu0 0.0
        %3604 = vmatprep.subr.mxu0 0.0
        %3605 = vmatpush1.msra.mxu0 0.0
        %3606 = vmatprep.subr.mxu0 0.0
        %3607 = vmatpush1.msra.mxu0 0.0
        %3608 = vmatprep.subr.mxu0 %v3571
        %3609 = vmatpush1.msra.mxu0 %v3570
        %3610 = vmatprep.subr.mxu0 0.0
        %3611 = vmatpush2.msra.mxu0 0.0
        %3612 = vmatprep.subr.mxu0 0.0
        %3613 = vmatpush2.msra.mxu0 0.0
        %3614 = vmatprep.subr.mxu0 0.0
        %3615 = vmatpush2.msra.mxu0 0.0
        %3616 = vmatprep.subr.mxu0 0.0
        %3617 = vmatpush2.msra.mxu0 0.0
        %3618 = vmatprep.subr.mxu0 0.0
        %3619 = vmatpush2.msra.mxu0 0.0
        %3620 = vmatprep.subr.mxu0 0.0
        %3621 = vmatpush2.msra.mxu0 0.0
        %3622 = vmatprep.subr.mxu0 0.0
        %3623 = vmatpush2.msra.mxu0 0.0
        %3624 = vmatprep.subr.mxu0 0.0
        %3625 = vmatpush2.msra.mxu0 0.0
        %3626 = vmatprep.subr.mxu0 0.0
        %3627 = vmatpush2.msra.mxu0 0.0
        %3628 = vmatprep.subr.mxu0 0.0
        %3629 = vmatpush2.msra.mxu0 0.0
        %3630 = vmatprep.subr.mxu0 0.0
        %3631 = vmatpush2.msra.mxu0 0.0
        %3632 = vmatprep.subr.mxu0 0.0
        %3633 = vmatpush2.msra.mxu0 0.0
        %3634 = vmatprep.subr.mxu0 0.0
        %3635 = vmatpush2.msra.mxu0 0.0
        %3636 = vmatprep.subr.mxu0 0.0
        %3637 = vmatpush2.msra.mxu0 0.0
        %3638 = vmatprep.subr.mxu0 0.0
        %3639 = vmatpush2.msra.mxu0 0.0
        %3640 = vmatprep.subr.mxu0 0.0
        %3641 = vmatpush2.msra.mxu0 0.0
        %3642 = vmatprep.mubr.f32.mxu0 0.0
        %3643 = vmatmul.mubr.f32.gmra.mxu0 %v3576
        %v3644 = vpop.f32.mrf.mxu0
        %v3645 = vadd.f32 0.0, %v3644
        %v3646 = vpop.f32.mrf.mxu0
        %v3647 = vadd.f32 0.0, %v3646
        %3648 = vdwg.mxu0
        %3649 = vmatprep.subr.mxu0 0.0
        %3650 = vmatpush1.msra.mxu0 0.0
        %3651 = vmatprep.subr.mxu0 0.0
        %3652 = vmatpush1.msra.mxu0 0.0
        %3653 = vmatprep.subr.mxu0 0.0
        %3654 = vmatpush1.msra.mxu0 0.0
        %3655 = vmatprep.subr.mxu0 0.0
        %3656 = vmatpush1.msra.mxu0 0.0
        %3657 = vmatprep.subr.mxu0 0.0
        %3658 = vmatpush1.msra.mxu0 0.0
        %3659 = vmatprep.subr.mxu0 0.0
        %3660 = vmatpush1.msra.mxu0 0.0
        %3661 = vmatprep.subr.mxu0 0.0
        %3662 = vmatpush1.msra.mxu0 0.0
        %3663 = vmatprep.subr.mxu0 0.0
        %3664 = vmatpush1.msra.mxu0 0.0
        %3665 = vmatprep.subr.mxu0 0.0
        %3666 = vmatpush1.msra.mxu0 0.0
        %3667 = vmatprep.subr.mxu0 0.0
        %3668 = vmatpush1.msra.mxu0 0.0
        %3669 = vmatprep.subr.mxu0 0.0
        %3670 = vmatpush1.msra.mxu0 0.0
        %3671 = vmatprep.subr.mxu0 0.0
        %3672 = vmatpush1.msra.mxu0 0.0
        %3673 = vmatprep.subr.mxu0 0.0
        %3674 = vmatpush1.msra.mxu0 0.0
        %3675 = vmatprep.subr.mxu0 0.0
        %3676 = vmatpush1.msra.mxu0 0.0
        %3677 = vmatprep.subr.mxu0 0.0
        %3678 = vmatpush1.msra.mxu0 0.0
        %3679 = vmatprep.subr.mxu0 0.0
        %3680 = vmatpush1.msra.mxu0 %v3572
        %3681 = vmatprep.subr.mxu0 0.0
        %3682 = vmatpush2.msra.mxu0 0.0
        %3683 = vmatprep.subr.mxu0 0.0
        %3684 = vmatpush2.msra.mxu0 0.0
        %3685 = vmatprep.subr.mxu0 0.0
        %3686 = vmatpush2.msra.mxu0 0.0
        %3687 = vmatprep.subr.mxu0 0.0
        %3688 = vmatpush2.msra.mxu0 0.0
        %3689 = vmatprep.subr.mxu0 0.0
        %3690 = vmatpush2.msra.mxu0 0.0
        %3691 = vmatprep.subr.mxu0 0.0
        %3692 = vmatpush2.msra.mxu0 0.0
        %3693 = vmatprep.subr.mxu0 0.0
        %3694 = vmatpush2.msra.mxu0 0.0
        %3695 = vmatprep.subr.mxu0 0.0
        %3696 = vmatpush2.msra.mxu0 0.0
        %3697 = vmatprep.subr.mxu0 0.0
        %3698 = vmatpush2.msra.mxu0 0.0
        %3699 = vmatprep.subr.mxu0 0.0
        %3700 = vmatpush2.msra.mxu0 0.0
        %3701 = vmatprep.subr.mxu0 0.0
        %3702 = vmatpush2.msra.mxu0 0.0
        %3703 = vmatprep.subr.mxu0 0.0
        %3704 = vmatpush2.msra.mxu0 0.0
        %3705 = vmatprep.subr.mxu0 0.0
        %3706 = vmatpush2.msra.mxu0 0.0
        %3707 = vmatprep.subr.mxu0 0.0
        %3708 = vmatpush2.msra.mxu0 0.0
        %3709 = vmatprep.subr.mxu0 0.0
        %3710 = vmatpush2.msra.mxu0 0.0
        %3711 = vmatprep.subr.mxu0 0.0
        %3712 = vmatpush2.msra.mxu0 0.0
        %3713 = vmatprep.mubr.f32.mxu0 0.0
        %3714 = vmatmul.mubr.f32.gmra.mxu0 %v3576
        %v3715 = vpop.f32.mrf.mxu0
        %v3716 = vadd.f32 0.0, %v3715
        %v3717 = vpop.f32.mrf.mxu0
        %3718 = vdwg.mxu0
        %v3719 = vadd.f32 %v3548, %v3645
        %v3720 = vadd.f32 %v3549, %v3647
        %v3721 = vadd.f32 %v3550, %v3716
        %3722 = vrot.lane.b32.xlu0 %v2911, 88
        %v3723 = vpop.permute.xlu0 %3722
        %3724 = vrot.lane.b32.xlu0 %v3551, 47
        %v3725 = vpop.permute.xlu0 %3724
        %3726 = vrot.lane.b32.xlu0 %v3552, 47
        %v3727 = vpop.permute.xlu0 %3726
        %3728 = vrot.lane.b32.xlu0 %v3553, 47
        %v3729 = vpop.permute.xlu0 %3728
        %3730 = vrot.lane.b32.xlu0 %v3554, 47
        %v3731 = vpop.permute.xlu0 %3730
        %vm3732 = vcmask 384000
        %v3733 = vsel %vm3732, %v3725, %v3727
        %v3734 = vsel %vm3732, %v3727, %v3729
        %v3735 = vsel %vm3732, %v3729, %v3731
        %v3739 = vsel %vm356, %v3723, 0
        %3741 = vmatprep.subr.mxu0 0.0
        %3742 = vmatpush1.msra.mxu0 0.0
        %3743 = vmatprep.subr.mxu0 0.0
        %3744 = vmatpush1.msra.mxu0 0.0
        %3745 = vmatprep.subr.mxu0 0.0
        %3746 = vmatpush1.msra.mxu0 0.0
        %3747 = vmatprep.subr.mxu0 0.0
        %3748 = vmatpush1.msra.mxu0 0.0
        %3749 = vmatprep.subr.mxu0 0.0
        %3750 = vmatpush1.msra.mxu0 0.0
        %3751 = vmatprep.subr.mxu0 0.0
        %3752 = vmatpush1.msra.mxu0 0.0
        %3753 = vmatprep.subr.mxu0 0.0
        %3754 = vmatpush1.msra.mxu0 0.0
        %3755 = vmatprep.subr.mxu0 0.0
        %3756 = vmatpush1.msra.mxu0 0.0
        %3757 = vmatprep.subr.mxu0 0.0
        %3758 = vmatpush1.msra.mxu0 0.0
        %3759 = vmatprep.subr.mxu0 0.0
        %3760 = vmatpush1.msra.mxu0 0.0
        %3761 = vmatprep.subr.mxu0 0.0
        %3762 = vmatpush1.msra.mxu0 0.0
        %3763 = vmatprep.subr.mxu0 0.0
        %3764 = vmatpush1.msra.mxu0 0.0
        %3765 = vmatprep.subr.mxu0 0.0
        %3766 = vmatpush1.msra.mxu0 0.0
        %3767 = vmatprep.subr.mxu0 0.0
        %3768 = vmatpush1.msra.mxu0 0.0
        %3769 = vmatprep.subr.mxu0 0.0
        %3770 = vmatpush1.msra.mxu0 0.0
        %3771 = vmatprep.subr.mxu0 %v3734
        %3772 = vmatpush1.msra.mxu0 %v3733
        %3773 = vmatprep.subr.mxu0 0.0
        %3774 = vmatpush2.msra.mxu0 0.0
        %3775 = vmatprep.subr.mxu0 0.0
        %3776 = vmatpush2.msra.mxu0 0.0
        %3777 = vmatprep.subr.mxu0 0.0
        %3778 = vmatpush2.msra.mxu0 0.0
        %3779 = vmatprep.subr.mxu0 0.0
        %3780 = vmatpush2.msra.mxu0 0.0
        %3781 = vmatprep.subr.mxu0 0.0
        %3782 = vmatpush2.msra.mxu0 0.0
        %3783 = vmatprep.subr.mxu0 0.0
        %3784 = vmatpush2.msra.mxu0 0.0
        %3785 = vmatprep.subr.mxu0 0.0
        %3786 = vmatpush2.msra.mxu0 0.0
        %3787 = vmatprep.subr.mxu0 0.0
        %3788 = vmatpush2.msra.mxu0 0.0
        %3789 = vmatprep.subr.mxu0 0.0
        %3790 = vmatpush2.msra.mxu0 0.0
        %3791 = vmatprep.subr.mxu0 0.0
        %3792 = vmatpush2.msra.mxu0 0.0
        %3793 = vmatprep.subr.mxu0 0.0
        %3794 = vmatpush2.msra.mxu0 0.0
        %3795 = vmatprep.subr.mxu0 0.0
        %3796 = vmatpush2.msra.mxu0 0.0
        %3797 = vmatprep.subr.mxu0 0.0
        %3798 = vmatpush2.msra.mxu0 0.0
        %3799 = vmatprep.subr.mxu0 0.0
        %3800 = vmatpush2.msra.mxu0 0.0
        %3801 = vmatprep.subr.mxu0 0.0
        %3802 = vmatpush2.msra.mxu0 0.0
        %3803 = vmatprep.subr.mxu0 0.0
        %3804 = vmatpush2.msra.mxu0 0.0
        %3805 = vmatprep.mubr.f32.mxu0 0.0
        %3806 = vmatmul.mubr.f32.gmra.mxu0 %v3739
        %v3807 = vpop.f32.mrf.mxu0
        %v3808 = vadd.f32 0.0, %v3807
        %v3809 = vpop.f32.mrf.mxu0
        %v3810 = vadd.f32 0.0, %v3809
        %3811 = vdwg.mxu0
        %3812 = vmatprep.subr.mxu0 0.0
        %3813 = vmatpush1.msra.mxu0 0.0
        %3814 = vmatprep.subr.mxu0 0.0
        %3815 = vmatpush1.msra.mxu0 0.0
        %3816 = vmatprep.subr.mxu0 0.0
        %3817 = vmatpush1.msra.mxu0 0.0
        %3818 = vmatprep.subr.mxu0 0.0
        %3819 = vmatpush1.msra.mxu0 0.0
        %3820 = vmatprep.subr.mxu0 0.0
        %3821 = vmatpush1.msra.mxu0 0.0
        %3822 = vmatprep.subr.mxu0 0.0
        %3823 = vmatpush1.msra.mxu0 0.0
        %3824 = vmatprep.subr.mxu0 0.0
        %3825 = vmatpush1.msra.mxu0 0.0
        %3826 = vmatprep.subr.mxu0 0.0
        %3827 = vmatpush1.msra.mxu0 0.0
        %3828 = vmatprep.subr.mxu0 0.0
        %3829 = vmatpush1.msra.mxu0 0.0
        %3830 = vmatprep.subr.mxu0 0.0
        %3831 = vmatpush1.msra.mxu0 0.0
        %3832 = vmatprep.subr.mxu0 0.0
        %3833 = vmatpush1.msra.mxu0 0.0
        %3834 = vmatprep.subr.mxu0 0.0
        %3835 = vmatpush1.msra.mxu0 0.0
        %3836 = vmatprep.subr.mxu0 0.0
        %3837 = vmatpush1.msra.mxu0 0.0
        %3838 = vmatprep.subr.mxu0 0.0
        %3839 = vmatpush1.msra.mxu0 0.0
        %3840 = vmatprep.subr.mxu0 0.0
        %3841 = vmatpush1.msra.mxu0 0.0
        %3842 = vmatprep.subr.mxu0 0.0
        %3843 = vmatpush1.msra.mxu0 %v3735
        %3844 = vmatprep.subr.mxu0 0.0
        %3845 = vmatpush2.msra.mxu0 0.0
        %3846 = vmatprep.subr.mxu0 0.0
        %3847 = vmatpush2.msra.mxu0 0.0
        %3848 = vmatprep.subr.mxu0 0.0
        %3849 = vmatpush2.msra.mxu0 0.0
        %3850 = vmatprep.subr.mxu0 0.0
        %3851 = vmatpush2.msra.mxu0 0.0
        %3852 = vmatprep.subr.mxu0 0.0
        %3853 = vmatpush2.msra.mxu0 0.0
        %3854 = vmatprep.subr.mxu0 0.0
        %3855 = vmatpush2.msra.mxu0 0.0
        %3856 = vmatprep.subr.mxu0 0.0
        %3857 = vmatpush2.msra.mxu0 0.0
        %3858 = vmatprep.subr.mxu0 0.0
        %3859 = vmatpush2.msra.mxu0 0.0
        %3860 = vmatprep.subr.mxu0 0.0
        %3861 = vmatpush2.msra.mxu0 0.0
        %3862 = vmatprep.subr.mxu0 0.0
        %3863 = vmatpush2.msra.mxu0 0.0
        %3864 = vmatprep.subr.mxu0 0.0
        %3865 = vmatpush2.msra.mxu0 0.0
        %3866 = vmatprep.subr.mxu0 0.0
        %3867 = vmatpush2.msra.mxu0 0.0
        %3868 = vmatprep.subr.mxu0 0.0
        %3869 = vmatpush2.msra.mxu0 0.0
        %3870 = vmatprep.subr.mxu0 0.0
        %3871 = vmatpush2.msra.mxu0 0.0
        %3872 = vmatprep.subr.mxu0 0.0
        %3873 = vmatpush2.msra.mxu0 0.0
        %3874 = vmatprep.subr.mxu0 0.0
        %3875 = vmatpush2.msra.mxu0 0.0
        %3876 = vmatprep.mubr.f32.mxu0 0.0
        %3877 = vmatmul.mubr.f32.gmra.mxu0 %v3739
        %v3878 = vpop.f32.mrf.mxu0
        %v3879 = vadd.f32 0.0, %v3878
        %v3880 = vpop.f32.mrf.mxu0
        %3881 = vdwg.mxu0
        %v3882 = vadd.f32 %v3719, %v3808
        %v3883 = vadd.f32 %v3720, %v3810
        %v3884 = vadd.f32 %v3721, %v3879
        %3885 = vrot.lane.b32.xlu0 %v2911, 80
        %v3886 = vpop.permute.xlu0 %3885
        %3887 = vrot.lane.b32.xlu0 %v3551, 46
        %v3888 = vpop.permute.xlu0 %3887
        %3889 = vrot.lane.b32.xlu0 %v3552, 46
        %v3890 = vpop.permute.xlu0 %3889
        %3891 = vrot.lane.b32.xlu0 %v3553, 46
        %v3892 = vpop.permute.xlu0 %3891
        %3893 = vrot.lane.b32.xlu0 %v3554, 46
        %v3894 = vpop.permute.xlu0 %3893
        %vm3895 = vcmask 375808
        %v3896 = vsel %vm3895, %v3888, %v3890
        %v3897 = vsel %vm3895, %v3890, %v3892
        %v3898 = vsel %vm3895, %v3892, %v3894
        %v3902 = vsel %vm356, %v3886, 0
        %3904 = vmatprep.subr.mxu0 0.0
        %3905 = vmatpush1.msra.mxu0 0.0
        %3906 = vmatprep.subr.mxu0 0.0
        %3907 = vmatpush1.msra.mxu0 0.0
        %3908 = vmatprep.subr.mxu0 0.0
        %3909 = vmatpush1.msra.mxu0 0.0
        %3910 = vmatprep.subr.mxu0 0.0
        %3911 = vmatpush1.msra.mxu0 0.0
        %3912 = vmatprep.subr.mxu0 0.0
        %3913 = vmatpush1.msra.mxu0 0.0
        %3914 = vmatprep.subr.mxu0 0.0
        %3915 = vmatpush1.msra.mxu0 0.0
        %3916 = vmatprep.subr.mxu0 0.0
        %3917 = vmatpush1.msra.mxu0 0.0
        %3918 = vmatprep.subr.mxu0 0.0
        %3919 = vmatpush1.msra.mxu0 0.0
        %3920 = vmatprep.subr.mxu0 0.0
        %3921 = vmatpush1.msra.mxu0 0.0
        %3922 = vmatprep.subr.mxu0 0.0
        %3923 = vmatpush1.msra.mxu0 0.0
        %3924 = vmatprep.subr.mxu0 0.0
        %3925 = vmatpush1.msra.mxu0 0.0
        %3926 = vmatprep.subr.mxu0 0.0
        %3927 = vmatpush1.msra.mxu0 0.0
        %3928 = vmatprep.subr.mxu0 0.0
        %3929 = vmatpush1.msra.mxu0 0.0
        %3930 = vmatprep.subr.mxu0 0.0
        %3931 = vmatpush1.msra.mxu0 0.0
        %3932 = vmatprep.subr.mxu0 0.0
        %3933 = vmatpush1.msra.mxu0 0.0
        %3934 = vmatprep.subr.mxu0 %v3897
        %3935 = vmatpush1.msra.mxu0 %v3896
        %3936 = vmatprep.subr.mxu0 0.0
        %3937 = vmatpush2.msra.mxu0 0.0
        %3938 = vmatprep.subr.mxu0 0.0
        %3939 = vmatpush2.msra.mxu0 0.0
        %3940 = vmatprep.subr.mxu0 0.0
        %3941 = vmatpush2.msra.mxu0 0.0
        %3942 = vmatprep.subr.mxu0 0.0
        %3943 = vmatpush2.msra.mxu0 0.0
        %3944 = vmatprep.subr.mxu0 0.0
        %3945 = vmatpush2.msra.mxu0 0.0
        %3946 = vmatprep.subr.mxu0 0.0
        %3947 = vmatpush2.msra.mxu0 0.0
        %3948 = vmatprep.subr.mxu0 0.0
        %3949 = vmatpush2.msra.mxu0 0.0
        %3950 = vmatprep.subr.mxu0 0.0
        %3951 = vmatpush2.msra.mxu0 0.0
        %3952 = vmatprep.subr.mxu0 0.0
        %3953 = vmatpush2.msra.mxu0 0.0
        %3954 = vmatprep.subr.mxu0 0.0
        %3955 = vmatpush2.msra.mxu0 0.0
        %3956 = vmatprep.subr.mxu0 0.0
        %3957 = vmatpush2.msra.mxu0 0.0
        %3958 = vmatprep.subr.mxu0 0.0
        %3959 = vmatpush2.msra.mxu0 0.0
        %3960 = vmatprep.subr.mxu0 0.0
        %3961 = vmatpush2.msra.mxu0 0.0
        %3962 = vmatprep.subr.mxu0 0.0
        %3963 = vmatpush2.msra.mxu0 0.0
        %3964 = vmatprep.subr.mxu0 0.0
        %3965 = vmatpush2.msra.mxu0 0.0
        %3966 = vmatprep.subr.mxu0 0.0
        %3967 = vmatpush2.msra.mxu0 0.0
        %3968 = vmatprep.mubr.f32.mxu0 0.0
        %3969 = vmatmul.mubr.f32.gmra.mxu0 %v3902
        %v3970 = vpop.f32.mrf.mxu0
        %v3971 = vadd.f32 0.0, %v3970
        %v3972 = vpop.f32.mrf.mxu0
        %v3973 = vadd.f32 0.0, %v3972
        %3974 = vdwg.mxu0
        %3975 = vmatprep.subr.mxu0 0.0
        %3976 = vmatpush1.msra.mxu0 0.0
        %3977 = vmatprep.subr.mxu0 0.0
        %3978 = vmatpush1.msra.mxu0 0.0
        %3979 = vmatprep.subr.mxu0 0.0
        %3980 = vmatpush1.msra.mxu0 0.0
        %3981 = vmatprep.subr.mxu0 0.0
        %3982 = vmatpush1.msra.mxu0 0.0
        %3983 = vmatprep.subr.mxu0 0.0
        %3984 = vmatpush1.msra.mxu0 0.0
        %3985 = vmatprep.subr.mxu0 0.0
        %3986 = vmatpush1.msra.mxu0 0.0
        %3987 = vmatprep.subr.mxu0 0.0
        %3988 = vmatpush1.msra.mxu0 0.0
        %3989 = vmatprep.subr.mxu0 0.0
        %3990 = vmatpush1.msra.mxu0 0.0
        %3991 = vmatprep.subr.mxu0 0.0
        %3992 = vmatpush1.msra.mxu0 0.0
        %3993 = vmatprep.subr.mxu0 0.0
        %3994 = vmatpush1.msra.mxu0 0.0
        %3995 = vmatprep.subr.mxu0 0.0
        %3996 = vmatpush1.msra.mxu0 0.0
        %3997 = vmatprep.subr.mxu0 0.0
        %3998 = vmatpush1.msra.mxu0 0.0
        %3999 = vmatprep.subr.mxu0 0.0
        %4000 = vmatpush1.msra.mxu0 0.0
        %4001 = vmatprep.subr.mxu0 0.0
        %4002 = vmatpush1.msra.mxu0 0.0
        %4003 = vmatprep.subr.mxu0 0.0
        %4004 = vmatpush1.msra.mxu0 0.0
        %4005 = vmatprep.subr.mxu0 0.0
        %4006 = vmatpush1.msra.mxu0 %v3898
        %4007 = vmatprep.subr.mxu0 0.0
        %4008 = vmatpush2.msra.mxu0 0.0
        %4009 = vmatprep.subr.mxu0 0.0
        %4010 = vmatpush2.msra.mxu0 0.0
        %4011 = vmatprep.subr.mxu0 0.0
        %4012 = vmatpush2.msra.mxu0 0.0
        %4013 = vmatprep.subr.mxu0 0.0
        %4014 = vmatpush2.msra.mxu0 0.0
        %4015 = vmatprep.subr.mxu0 0.0
        %4016 = vmatpush2.msra.mxu0 0.0
        %4017 = vmatprep.subr.mxu0 0.0
        %4018 = vmatpush2.msra.mxu0 0.0
        %4019 = vmatprep.subr.mxu0 0.0
        %4020 = vmatpush2.msra.mxu0 0.0
        %4021 = vmatprep.subr.mxu0 0.0
        %4022 = vmatpush2.msra.mxu0 0.0
        %4023 = vmatprep.subr.mxu0 0.0
        %4024 = vmatpush2.msra.mxu0 0.0
        %4025 = vmatprep.subr.mxu0 0.0
        %4026 = vmatpush2.msra.mxu0 0.0
        %4027 = vmatprep.subr.mxu0 0.0
        %4028 = vmatpush2.msra.mxu0 0.0
        %4029 = vmatprep.subr.mxu0 0.0
        %4030 = vmatpush2.msra.mxu0 0.0
        %4031 = vmatprep.subr.mxu0 0.0
        %4032 = vmatpush2.msra.mxu0 0.0
        %4033 = vmatprep.subr.mxu0 0.0
        %4034 = vmatpush2.msra.mxu0 0.0
        %4035 = vmatprep.subr.mxu0 0.0
        %4036 = vmatpush2.msra.mxu0 0.0
        %4037 = vmatprep.subr.mxu0 0.0
        %4038 = vmatpush2.msra.mxu0 0.0
        %4039 = vmatprep.mubr.f32.mxu0 0.0
        %4040 = vmatmul.mubr.f32.gmra.mxu0 %v3902
        %v4041 = vpop.f32.mrf.mxu0
        %v4042 = vadd.f32 0.0, %v4041
        %v4043 = vpop.f32.mrf.mxu0
        %4044 = vdwg.mxu0
        %v4045 = vadd.f32 %v3882, %v3971
        %v4046 = vadd.f32 %v3883, %v3973
        %v4047 = vadd.f32 %v3884, %v4042
        %4048 = vrot.lane.b32.xlu0 %v2911, 72
        %v4049 = vpop.permute.xlu0 %4048
        %4050 = vrot.lane.b32.xlu0 %v3551, 45
        %v4051 = vpop.permute.xlu0 %4050
        %4052 = vrot.lane.b32.xlu0 %v3552, 45
        %v4053 = vpop.permute.xlu0 %4052
        %4054 = vrot.lane.b32.xlu0 %v3553, 45
        %v4055 = vpop.permute.xlu0 %4054
        %4056 = vrot.lane.b32.xlu0 %v3554, 45
        %v4057 = vpop.permute.xlu0 %4056
        %vm4058 = vcmask 367616
        %v4059 = vsel %vm4058, %v4051, %v4053
        %v4060 = vsel %vm4058, %v4053, %v4055
        %v4061 = vsel %vm4058, %v4055, %v4057
        %v4065 = vsel %vm356, %v4049, 0
        %4067 = vmatprep.subr.mxu0 0.0
        %4068 = vmatpush1.msra.mxu0 0.0
        %4069 = vmatprep.subr.mxu0 0.0
        %4070 = vmatpush1.msra.mxu0 0.0
        %4071 = vmatprep.subr.mxu0 0.0
        %4072 = vmatpush1.msra.mxu0 0.0
        %4073 = vmatprep.subr.mxu0 0.0
        %4074 = vmatpush1.msra.mxu0 0.0
        %4075 = vmatprep.subr.mxu0 0.0
        %4076 = vmatpush1.msra.mxu0 0.0
        %4077 = vmatprep.subr.mxu0 0.0
        %4078 = vmatpush1.msra.mxu0 0.0
        %4079 = vmatprep.subr.mxu0 0.0
        %4080 = vmatpush1.msra.mxu0 0.0
        %4081 = vmatprep.subr.mxu0 0.0
        %4082 = vmatpush1.msra.mxu0 0.0
        %4083 = vmatprep.subr.mxu0 0.0
        %4084 = vmatpush1.msra.mxu0 0.0
        %4085 = vmatprep.subr.mxu0 0.0
        %4086 = vmatpush1.msra.mxu0 0.0
        %4087 = vmatprep.subr.mxu0 0.0
        %4088 = vmatpush1.msra.mxu0 0.0
        %4089 = vmatprep.subr.mxu0 0.0
        %4090 = vmatpush1.msra.mxu0 0.0
        %4091 = vmatprep.subr.mxu0 0.0
        %4092 = vmatpush1.msra.mxu0 0.0
        %4093 = vmatprep.subr.mxu0 0.0
        %4094 = vmatpush1.msra.mxu0 0.0
        %4095 = vmatprep.subr.mxu0 0.0
        %4096 = vmatpush1.msra.mxu0 0.0
        %4097 = vmatprep.subr.mxu0 %v4060
        %4098 = vmatpush1.msra.mxu0 %v4059
        %4099 = vmatprep.subr.mxu0 0.0
        %4100 = vmatpush2.msra.mxu0 0.0
        %4101 = vmatprep.subr.mxu0 0.0
        %4102 = vmatpush2.msra.mxu0 0.0
        %4103 = vmatprep.subr.mxu0 0.0
        %4104 = vmatpush2.msra.mxu0 0.0
        %4105 = vmatprep.subr.mxu0 0.0
        %4106 = vmatpush2.msra.mxu0 0.0
        %4107 = vmatprep.subr.mxu0 0.0
        %4108 = vmatpush2.msra.mxu0 0.0
        %4109 = vmatprep.subr.mxu0 0.0
        %4110 = vmatpush2.msra.mxu0 0.0
        %4111 = vmatprep.subr.mxu0 0.0
        %4112 = vmatpush2.msra.mxu0 0.0
        %4113 = vmatprep.subr.mxu0 0.0
        %4114 = vmatpush2.msra.mxu0 0.0
        %4115 = vmatprep.subr.mxu0 0.0
        %4116 = vmatpush2.msra.mxu0 0.0
        %4117 = vmatprep.subr.mxu0 0.0
        %4118 = vmatpush2.msra.mxu0 0.0
        %4119 = vmatprep.subr.mxu0 0.0
        %4120 = vmatpush2.msra.mxu0 0.0
        %4121 = vmatprep.subr.mxu0 0.0
        %4122 = vmatpush2.msra.mxu0 0.0
        %4123 = vmatprep.subr.mxu0 0.0
        %4124 = vmatpush2.msra.mxu0 0.0
        %4125 = vmatprep.subr.mxu0 0.0
        %4126 = vmatpush2.msra.mxu0 0.0
        %4127 = vmatprep.subr.mxu0 0.0
        %4128 = vmatpush2.msra.mxu0 0.0
        %4129 = vmatprep.subr.mxu0 0.0
        %4130 = vmatpush2.msra.mxu0 0.0
        %4131 = vmatprep.mubr.f32.mxu0 0.0
        %4132 = vmatmul.mubr.f32.gmra.mxu0 %v4065
        %v4133 = vpop.f32.mrf.mxu0
        %v4134 = vadd.f32 0.0, %v4133
        %v4135 = vpop.f32.mrf.mxu0
        %v4136 = vadd.f32 0.0, %v4135
        %4137 = vdwg.mxu0
        %4138 = vmatprep.subr.mxu0 0.0
        %4139 = vmatpush1.msra.mxu0 0.0
        %4140 = vmatprep.subr.mxu0 0.0
        %4141 = vmatpush1.msra.mxu0 0.0
        %4142 = vmatprep.subr.mxu0 0.0
        %4143 = vmatpush1.msra.mxu0 0.0
        %4144 = vmatprep.subr.mxu0 0.0
        %4145 = vmatpush1.msra.mxu0 0.0
        %4146 = vmatprep.subr.mxu0 0.0
        %4147 = vmatpush1.msra.mxu0 0.0
        %4148 = vmatprep.subr.mxu0 0.0
        %4149 = vmatpush1.msra.mxu0 0.0
        %4150 = vmatprep.subr.mxu0 0.0
        %4151 = vmatpush1.msra.mxu0 0.0
        %4152 = vmatprep.subr.mxu0 0.0
        %4153 = vmatpush1.msra.mxu0 0.0
        %4154 = vmatprep.subr.mxu0 0.0
        %4155 = vmatpush1.msra.mxu0 0.0
        %4156 = vmatprep.subr.mxu0 0.0
        %4157 = vmatpush1.msra.mxu0 0.0
        %4158 = vmatprep.subr.mxu0 0.0
        %4159 = vmatpush1.msra.mxu0 0.0
        %4160 = vmatprep.subr.mxu0 0.0
        %4161 = vmatpush1.msra.mxu0 0.0
        %4162 = vmatprep.subr.mxu0 0.0
        %4163 = vmatpush1.msra.mxu0 0.0
        %4164 = vmatprep.subr.mxu0 0.0
        %4165 = vmatpush1.msra.mxu0 0.0
        %4166 = vmatprep.subr.mxu0 0.0
        %4167 = vmatpush1.msra.mxu0 0.0
        %4168 = vmatprep.subr.mxu0 0.0
        %4169 = vmatpush1.msra.mxu0 %v4061
        %4170 = vmatprep.subr.mxu0 0.0
        %4171 = vmatpush2.msra.mxu0 0.0
        %4172 = vmatprep.subr.mxu0 0.0
        %4173 = vmatpush2.msra.mxu0 0.0
        %4174 = vmatprep.subr.mxu0 0.0
        %4175 = vmatpush2.msra.mxu0 0.0
        %4176 = vmatprep.subr.mxu0 0.0
        %4177 = vmatpush2.msra.mxu0 0.0
        %4178 = vmatprep.subr.mxu0 0.0
        %4179 = vmatpush2.msra.mxu0 0.0
        %4180 = vmatprep.subr.mxu0 0.0
        %4181 = vmatpush2.msra.mxu0 0.0
        %4182 = vmatprep.subr.mxu0 0.0
        %4183 = vmatpush2.msra.mxu0 0.0
        %4184 = vmatprep.subr.mxu0 0.0
        %4185 = vmatpush2.msra.mxu0 0.0
        %4186 = vmatprep.subr.mxu0 0.0
        %4187 = vmatpush2.msra.mxu0 0.0
        %4188 = vmatprep.subr.mxu0 0.0
        %4189 = vmatpush2.msra.mxu0 0.0
        %4190 = vmatprep.subr.mxu0 0.0
        %4191 = vmatpush2.msra.mxu0 0.0
        %4192 = vmatprep.subr.mxu0 0.0
        %4193 = vmatpush2.msra.mxu0 0.0
        %4194 = vmatprep.subr.mxu0 0.0
        %4195 = vmatpush2.msra.mxu0 0.0
        %4196 = vmatprep.subr.mxu0 0.0
        %4197 = vmatpush2.msra.mxu0 0.0
        %4198 = vmatprep.subr.mxu0 0.0
        %4199 = vmatpush2.msra.mxu0 0.0
        %4200 = vmatprep.subr.mxu0 0.0
        %4201 = vmatpush2.msra.mxu0 0.0
        %4202 = vmatprep.mubr.f32.mxu0 0.0
        %4203 = vmatmul.mubr.f32.gmra.mxu0 %v4065
        %v4204 = vpop.f32.mrf.mxu0
        %v4205 = vadd.f32 0.0, %v4204
        %v4206 = vpop.f32.mrf.mxu0
        %4207 = vdwg.mxu0
        %v4208 = vadd.f32 %v4045, %v4134
        %v4209 = vadd.f32 %v4046, %v4136
        %v4210 = vadd.f32 %v4047, %v4205
        %4211 = vrot.lane.b32.xlu0 %v2911, 64
        %v4212 = vpop.permute.xlu0 %4211
        %4213 = vrot.lane.b32.xlu0 %v3551, 44
        %v4214 = vpop.permute.xlu0 %4213
        %4215 = vrot.lane.b32.xlu0 %v3552, 44
        %v4216 = vpop.permute.xlu0 %4215
        %4217 = vrot.lane.b32.xlu0 %v3553, 44
        %v4218 = vpop.permute.xlu0 %4217
        %4219 = vrot.lane.b32.xlu0 %v3554, 44
        %v4220 = vpop.permute.xlu0 %4219
        %vm4221 = vcmask 359424
        %v4222 = vsel %vm4221, %v4214, %v4216
        %v4223 = vsel %vm4221, %v4216, %v4218
        %v4224 = vsel %vm4221, %v4218, %v4220
        %v4228 = vsel %vm356, %v4212, 0
        %4230 = vmatprep.subr.mxu0 0.0
        %4231 = vmatpush1.msra.mxu0 0.0
        %4232 = vmatprep.subr.mxu0 0.0
        %4233 = vmatpush1.msra.mxu0 0.0
        %4234 = vmatprep.subr.mxu0 0.0
        %4235 = vmatpush1.msra.mxu0 0.0
        %4236 = vmatprep.subr.mxu0 0.0
        %4237 = vmatpush1.msra.mxu0 0.0
        %4238 = vmatprep.subr.mxu0 0.0
        %4239 = vmatpush1.msra.mxu0 0.0
        %4240 = vmatprep.subr.mxu0 0.0
        %4241 = vmatpush1.msra.mxu0 0.0
        %4242 = vmatprep.subr.mxu0 0.0
        %4243 = vmatpush1.msra.mxu0 0.0
        %4244 = vmatprep.subr.mxu0 0.0
        %4245 = vmatpush1.msra.mxu0 0.0
        %4246 = vmatprep.subr.mxu0 0.0
        %4247 = vmatpush1.msra.mxu0 0.0
        %4248 = vmatprep.subr.mxu0 0.0
        %4249 = vmatpush1.msra.mxu0 0.0
        %4250 = vmatprep.subr.mxu0 0.0
        %4251 = vmatpush1.msra.mxu0 0.0
        %4252 = vmatprep.subr.mxu0 0.0
        %4253 = vmatpush1.msra.mxu0 0.0
        %4254 = vmatprep.subr.mxu0 0.0
        %4255 = vmatpush1.msra.mxu0 0.0
        %4256 = vmatprep.subr.mxu0 0.0
        %4257 = vmatpush1.msra.mxu0 0.0
        %4258 = vmatprep.subr.mxu0 0.0
        %4259 = vmatpush1.msra.mxu0 0.0
        %4260 = vmatprep.subr.mxu0 %v4223
        %4261 = vmatpush1.msra.mxu0 %v4222
        %4262 = vmatprep.subr.mxu0 0.0
        %4263 = vmatpush2.msra.mxu0 0.0
        %4264 = vmatprep.subr.mxu0 0.0
        %4265 = vmatpush2.msra.mxu0 0.0
        %4266 = vmatprep.subr.mxu0 0.0
        %4267 = vmatpush2.msra.mxu0 0.0
        %4268 = vmatprep.subr.mxu0 0.0
        %4269 = vmatpush2.msra.mxu0 0.0
        %4270 = vmatprep.subr.mxu0 0.0
        %4271 = vmatpush2.msra.mxu0 0.0
        %4272 = vmatprep.subr.mxu0 0.0
        %4273 = vmatpush2.msra.mxu0 0.0
        %4274 = vmatprep.subr.mxu0 0.0
        %4275 = vmatpush2.msra.mxu0 0.0
        %4276 = vmatprep.subr.mxu0 0.0
        %4277 = vmatpush2.msra.mxu0 0.0
        %4278 = vmatprep.subr.mxu0 0.0
        %4279 = vmatpush2.msra.mxu0 0.0
        %4280 = vmatprep.subr.mxu0 0.0
        %4281 = vmatpush2.msra.mxu0 0.0
        %4282 = vmatprep.subr.mxu0 0.0
        %4283 = vmatpush2.msra.mxu0 0.0
        %4284 = vmatprep.subr.mxu0 0.0
        %4285 = vmatpush2.msra.mxu0 0.0
        %4286 = vmatprep.subr.mxu0 0.0
        %4287 = vmatpush2.msra.mxu0 0.0
        %4288 = vmatprep.subr.mxu0 0.0
        %4289 = vmatpush2.msra.mxu0 0.0
        %4290 = vmatprep.subr.mxu0 0.0
        %4291 = vmatpush2.msra.mxu0 0.0
        %4292 = vmatprep.subr.mxu0 0.0
        %4293 = vmatpush2.msra.mxu0 0.0
        %4294 = vmatprep.mubr.f32.mxu0 0.0
        %4295 = vmatmul.mubr.f32.gmra.mxu0 %v4228
        %v4296 = vpop.f32.mrf.mxu0
        %v4297 = vadd.f32 0.0, %v4296
        %v4298 = vpop.f32.mrf.mxu0
        %v4299 = vadd.f32 0.0, %v4298
        %4300 = vdwg.mxu0
        %4301 = vmatprep.subr.mxu0 0.0
        %4302 = vmatpush1.msra.mxu0 0.0
        %4303 = vmatprep.subr.mxu0 0.0
        %4304 = vmatpush1.msra.mxu0 0.0
        %4305 = vmatprep.subr.mxu0 0.0
        %4306 = vmatpush1.msra.mxu0 0.0
        %4307 = vmatprep.subr.mxu0 0.0
        %4308 = vmatpush1.msra.mxu0 0.0
        %4309 = vmatprep.subr.mxu0 0.0
        %4310 = vmatpush1.msra.mxu0 0.0
        %4311 = vmatprep.subr.mxu0 0.0
        %4312 = vmatpush1.msra.mxu0 0.0
        %4313 = vmatprep.subr.mxu0 0.0
        %4314 = vmatpush1.msra.mxu0 0.0
        %4315 = vmatprep.subr.mxu0 0.0
        %4316 = vmatpush1.msra.mxu0 0.0
        %4317 = vmatprep.subr.mxu0 0.0
        %4318 = vmatpush1.msra.mxu0 0.0
        %4319 = vmatprep.subr.mxu0 0.0
        %4320 = vmatpush1.msra.mxu0 0.0
        %4321 = vmatprep.subr.mxu0 0.0
        %4322 = vmatpush1.msra.mxu0 0.0
        %4323 = vmatprep.subr.mxu0 0.0
        %4324 = vmatpush1.msra.mxu0 0.0
        %4325 = vmatprep.subr.mxu0 0.0
        %4326 = vmatpush1.msra.mxu0 0.0
        %4327 = vmatprep.subr.mxu0 0.0
        %4328 = vmatpush1.msra.mxu0 0.0
        %4329 = vmatprep.subr.mxu0 0.0
        %4330 = vmatpush1.msra.mxu0 0.0
        %4331 = vmatprep.subr.mxu0 0.0
        %4332 = vmatpush1.msra.mxu0 %v4224
        %4333 = vmatprep.subr.mxu0 0.0
        %4334 = vmatpush2.msra.mxu0 0.0
        %4335 = vmatprep.subr.mxu0 0.0
        %4336 = vmatpush2.msra.mxu0 0.0
        %4337 = vmatprep.subr.mxu0 0.0
        %4338 = vmatpush2.msra.mxu0 0.0
        %4339 = vmatprep.subr.mxu0 0.0
        %4340 = vmatpush2.msra.mxu0 0.0
        %4341 = vmatprep.subr.mxu0 0.0
        %4342 = vmatpush2.msra.mxu0 0.0
        %4343 = vmatprep.subr.mxu0 0.0
        %4344 = vmatpush2.msra.mxu0 0.0
        %4345 = vmatprep.subr.mxu0 0.0
        %4346 = vmatpush2.msra.mxu0 0.0
        %4347 = vmatprep.subr.mxu0 0.0
        %4348 = vmatpush2.msra.mxu0 0.0
        %4349 = vmatprep.subr.mxu0 0.0
        %4350 = vmatpush2.msra.mxu0 0.0
        %4351 = vmatprep.subr.mxu0 0.0
        %4352 = vmatpush2.msra.mxu0 0.0
        %4353 = vmatprep.subr.mxu0 0.0
        %4354 = vmatpush2.msra.mxu0 0.0
        %4355 = vmatprep.subr.mxu0 0.0
        %4356 = vmatpush2.msra.mxu0 0.0
        %4357 = vmatprep.subr.mxu0 0.0
        %4358 = vmatpush2.msra.mxu0 0.0
        %4359 = vmatprep.subr.mxu0 0.0
        %4360 = vmatpush2.msra.mxu0 0.0
        %4361 = vmatprep.subr.mxu0 0.0
        %4362 = vmatpush2.msra.mxu0 0.0
        %4363 = vmatprep.subr.mxu0 0.0
        %4364 = vmatpush2.msra.mxu0 0.0
        %4365 = vmatprep.mubr.f32.mxu0 0.0
        %4366 = vmatmul.mubr.f32.gmra.mxu0 %v4228
        %v4367 = vpop.f32.mrf.mxu0
        %v4368 = vadd.f32 0.0, %v4367
        %v4369 = vpop.f32.mrf.mxu0
        %4370 = vdwg.mxu0
        %v4371 = vadd.f32 %v4208, %v4297
        %v4372 = vadd.f32 %v4209, %v4299
        %v4373 = vadd.f32 %v4210, %v4368
        %v4374 = vsel %vm348, 1, 0
        %v4375 = vsel %vm349, 1, 0
        %v4376 = vsel %vm350, 1, 0
        %vm4377 = vcmp.eq.s32.totalorder %v4374, 1
        %vm4378 = vcmp.eq.s32.totalorder %v4375, 1
        %vm4379 = vcmp.eq.s32.totalorder %v4376, 1
        %v4380 = vsel %vm4377, %v4371, 0.0
        %v4381 = vsel %vm4378, %v4372, 0.0
        %v4382 = vsel %vm4379, %v4373, 0.0
        %4386 = vrot.lane.b32.xlu0 %v4380, 42
        %v4387 = vpop.permute.xlu0 %4386
        %4388 = vrot.lane.b32.xlu0 %v4381, 42
        %v4389 = vpop.permute.xlu0 %4388
        %4390 = vrot.lane.b32.xlu0 %v4382, 42
        %v4391 = vpop.permute.xlu0 %4390
        %v4392 = vsel %vm297, %v4387, %v4389
        %v4393 = vsel %vm297, %v4389, %v4391
        %4397 = vst.msk [vmem:[#allocation2] sm:$0xff] %vm320, %v4387
        %4398 = vst [vmem:[#allocation2 + $0x8] sm:$0xff] %v4392
        %4399 = vst.msk [vmem:[#allocation2 + $0x10] sm:$0xff] %vm323, %v4393
        %v4400 = vld [vmem:[%s4] sm:$0xff]
        %v4401 = vld [vmem:[#allocation2] sm:$0xff]
        %v4402 = vld [vmem:[#allocation2 + $0x8] sm:$0xff]
        %v4403 = vld [vmem:[#allocation2 + $0x10] sm:$0xff]
        %v4404 = vld [vmem:[%s3] sm:$0xff]
        %4408 = vrot.lane.b32.xlu0 %v4401, 107
        %v4409 = vpop.permute.xlu0 %4408
        %4410 = vrot.lane.b32.xlu0 %v4402, 107
        %v4411 = vpop.permute.xlu0 %4410
        %4412 = vrot.lane.b32.xlu0 %v4403, 107
        %v4413 = vpop.permute.xlu0 %4412
        %v4414 = vsel %vm1320, %v4409, %v4411
        %v4415 = vsel %vm1320, %v4411, %v4413
        %v4420 = vsel %vm356, %v4404, 0
        %4422 = vmatprep.subr.mxu0 0.0
        %4423 = vmatpush1.msra.mxu0 0.0
        %4424 = vmatprep.subr.mxu0 0.0
        %4425 = vmatpush1.msra.mxu0 0.0
        %4426 = vmatprep.subr.mxu0 0.0
        %4427 = vmatpush1.msra.mxu0 0.0
        %4428 = vmatprep.subr.mxu0 0.0
        %4429 = vmatpush1.msra.mxu0 0.0
        %4430 = vmatprep.subr.mxu0 0.0
        %4431 = vmatpush1.msra.mxu0 0.0
        %4432 = vmatprep.subr.mxu0 0.0
        %4433 = vmatpush1.msra.mxu0 0.0
        %4434 = vmatprep.subr.mxu0 0.0
        %4435 = vmatpush1.msra.mxu0 0.0
        %4436 = vmatprep.subr.mxu0 0.0
        %4437 = vmatpush1.msra.mxu0 0.0
        %4438 = vmatprep.subr.mxu0 0.0
        %4439 = vmatpush1.msra.mxu0 0.0
        %4440 = vmatprep.subr.mxu0 0.0
        %4441 = vmatpush1.msra.mxu0 0.0
        %4442 = vmatprep.subr.mxu0 0.0
        %4443 = vmatpush1.msra.mxu0 0.0
        %4444 = vmatprep.subr.mxu0 0.0
        %4445 = vmatpush1.msra.mxu0 0.0
        %4446 = vmatprep.subr.mxu0 0.0
        %4447 = vmatpush1.msra.mxu0 0.0
        %4448 = vmatprep.subr.mxu0 0.0
        %4449 = vmatpush1.msra.mxu0 0.0
        %4450 = vmatprep.subr.mxu0 0.0
        %4451 = vmatpush1.msra.mxu0 0.0
        %4452 = vmatprep.subr.mxu0 %v4415
        %4453 = vmatpush1.msra.mxu0 %v4414
        %4454 = vmatprep.subr.mxu0 0.0
        %4455 = vmatpush2.msra.mxu0 0.0
        %4456 = vmatprep.subr.mxu0 0.0
        %4457 = vmatpush2.msra.mxu0 0.0
        %4458 = vmatprep.subr.mxu0 0.0
        %4459 = vmatpush2.msra.mxu0 0.0
        %4460 = vmatprep.subr.mxu0 0.0
        %4461 = vmatpush2.msra.mxu0 0.0
        %4462 = vmatprep.subr.mxu0 0.0
        %4463 = vmatpush2.msra.mxu0 0.0
        %4464 = vmatprep.subr.mxu0 0.0
        %4465 = vmatpush2.msra.mxu0 0.0
        %4466 = vmatprep.subr.mxu0 0.0
        %4467 = vmatpush2.msra.mxu0 0.0
        %4468 = vmatprep.subr.mxu0 0.0
        %4469 = vmatpush2.msra.mxu0 0.0
        %4470 = vmatprep.subr.mxu0 0.0
        %4471 = vmatpush2.msra.mxu0 0.0
        %4472 = vmatprep.subr.mxu0 0.0
        %4473 = vmatpush2.msra.mxu0 0.0
        %4474 = vmatprep.subr.mxu0 0.0
        %4475 = vmatpush2.msra.mxu0 0.0
        %4476 = vmatprep.subr.mxu0 0.0
        %4477 = vmatpush2.msra.mxu0 0.0
        %4478 = vmatprep.subr.mxu0 0.0
        %4479 = vmatpush2.msra.mxu0 0.0
        %4480 = vmatprep.subr.mxu0 0.0
        %4481 = vmatpush2.msra.mxu0 0.0
        %4482 = vmatprep.subr.mxu0 0.0
        %4483 = vmatpush2.msra.mxu0 0.0
        %4484 = vmatprep.subr.mxu0 0.0
        %4485 = vmatpush2.msra.mxu0 0.0
        %4486 = vmatprep.mubr.f32.mxu0 0.0
        %4487 = vmatmul.mubr.f32.gmra.mxu0 %v4420
        %v4488 = vpop.f32.mrf.mxu0
        %v4489 = vadd.f32 0.0, %v4488
        %v4490 = vpop.f32.mrf.mxu0
        %v4491 = vadd.f32 0.0, %v4490
        %4492 = vdwg.mxu0
        %4493 = vmatprep.subr.mxu0 0.0
        %4494 = vmatpush1.msra.mxu0 0.0
        %4495 = vmatprep.subr.mxu0 0.0
        %4496 = vmatpush1.msra.mxu0 0.0
        %4497 = vmatprep.subr.mxu0 0.0
        %4498 = vmatpush1.msra.mxu0 0.0
        %4499 = vmatprep.subr.mxu0 0.0
        %4500 = vmatpush1.msra.mxu0 0.0
        %4501 = vmatprep.subr.mxu0 0.0
        %4502 = vmatpush1.msra.mxu0 0.0
        %4503 = vmatprep.subr.mxu0 0.0
        %4504 = vmatpush1.msra.mxu0 0.0
        %4505 = vmatprep.subr.mxu0 0.0
        %4506 = vmatpush1.msra.mxu0 0.0
        %4507 = vmatprep.subr.mxu0 0.0
        %4508 = vmatpush1.msra.mxu0 0.0
        %4509 = vmatprep.subr.mxu0 0.0
        %4510 = vmatpush1.msra.mxu0 0.0
        %4511 = vmatprep.subr.mxu0 0.0
        %4512 = vmatpush1.msra.mxu0 0.0
        %4513 = vmatprep.subr.mxu0 0.0
        %4514 = vmatpush1.msra.mxu0 0.0
        %4515 = vmatprep.subr.mxu0 0.0
        %4516 = vmatpush1.msra.mxu0 0.0
        %4517 = vmatprep.subr.mxu0 0.0
        %4518 = vmatpush1.msra.mxu0 0.0
        %4519 = vmatprep.subr.mxu0 0.0
        %4520 = vmatpush1.msra.mxu0 0.0
        %4521 = vmatprep.subr.mxu0 0.0
        %4522 = vmatpush1.msra.mxu0 0.0
        %4523 = vmatprep.subr.mxu0 0.0
        %4524 = vmatpush1.msra.mxu0 %v4413
        %4525 = vmatprep.subr.mxu0 0.0
        %4526 = vmatpush2.msra.mxu0 0.0
        %4527 = vmatprep.subr.mxu0 0.0
        %4528 = vmatpush2.msra.mxu0 0.0
        %4529 = vmatprep.subr.mxu0 0.0
        %4530 = vmatpush2.msra.mxu0 0.0
        %4531 = vmatprep.subr.mxu0 0.0
        %4532 = vmatpush2.msra.mxu0 0.0
        %4533 = vmatprep.subr.mxu0 0.0
        %4534 = vmatpush2.msra.mxu0 0.0
        %4535 = vmatprep.subr.mxu0 0.0
        %4536 = vmatpush2.msra.mxu0 0.0
        %4537 = vmatprep.subr.mxu0 0.0
        %4538 = vmatpush2.msra.mxu0 0.0
        %4539 = vmatprep.subr.mxu0 0.0
        %4540 = vmatpush2.msra.mxu0 0.0
        %4541 = vmatprep.subr.mxu0 0.0
        %4542 = vmatpush2.msra.mxu0 0.0
        %4543 = vmatprep.subr.mxu0 0.0
        %4544 = vmatpush2.msra.mxu0 0.0
        %4545 = vmatprep.subr.mxu0 0.0
        %4546 = vmatpush2.msra.mxu0 0.0
        %4547 = vmatprep.subr.mxu0 0.0
        %4548 = vmatpush2.msra.mxu0 0.0
        %4549 = vmatprep.subr.mxu0 0.0
        %4550 = vmatpush2.msra.mxu0 0.0
        %4551 = vmatprep.subr.mxu0 0.0
        %4552 = vmatpush2.msra.mxu0 0.0
        %4553 = vmatprep.subr.mxu0 0.0
        %4554 = vmatpush2.msra.mxu0 0.0
        %4555 = vmatprep.subr.mxu0 0.0
        %4556 = vmatpush2.msra.mxu0 0.0
        %4557 = vmatprep.mubr.f32.mxu0 0.0
        %4558 = vmatmul.mubr.f32.gmra.mxu0 %v4420
        %v4559 = vpop.f32.mrf.mxu0
        %v4560 = vadd.f32 0.0, %v4559
        %v4561 = vpop.f32.mrf.mxu0
        %4562 = vdwg.mxu0
        %4564 = vset.pattern.permute.xlu0 0
        %4565 = vperm.xlu0 %4564, %v4400
        %v4566 = vpop.permute.xlu0 %4565
        %v4568 = vadd.f32 %v4566, %v4489
        %v4569 = vadd.f32 %v4566, %v4491
        %v4570 = vadd.f32 %v4566, %v4560
        %4571 = vrot.lane.b32.xlu0 %v4404, 120
        %v4572 = vpop.permute.xlu0 %4571
        %4573 = vrot.lane.b32.xlu0 %v4401, 106
        %v4574 = vpop.permute.xlu0 %4573
        %4575 = vrot.lane.b32.xlu0 %v4402, 106
        %v4576 = vpop.permute.xlu0 %4575
        %4577 = vrot.lane.b32.xlu0 %v4403, 106
        %v4578 = vpop.permute.xlu0 %4577
        %v4579 = vsel %vm323, %v4574, %v4576
        %v4580 = vsel %vm323, %v4576, %v4578
        %v4584 = vsel %vm356, %v4572, 0
        %4586 = vmatprep.subr.mxu0 0.0
        %4587 = vmatpush1.msra.mxu0 0.0
        %4588 = vmatprep.subr.mxu0 0.0
        %4589 = vmatpush1.msra.mxu0 0.0
        %4590 = vmatprep.subr.mxu0 0.0
        %4591 = vmatpush1.msra.mxu0 0.0
        %4592 = vmatprep.subr.mxu0 0.0
        %4593 = vmatpush1.msra.mxu0 0.0
        %4594 = vmatprep.subr.mxu0 0.0
        %4595 = vmatpush1.msra.mxu0 0.0
        %4596 = vmatprep.subr.mxu0 0.0
        %4597 = vmatpush1.msra.mxu0 0.0
        %4598 = vmatprep.subr.mxu0 0.0
        %4599 = vmatpush1.msra.mxu0 0.0
        %4600 = vmatprep.subr.mxu0 0.0
        %4601 = vmatpush1.msra.mxu0 0.0
        %4602 = vmatprep.subr.mxu0 0.0
        %4603 = vmatpush1.msra.mxu0 0.0
        %4604 = vmatprep.subr.mxu0 0.0
        %4605 = vmatpush1.msra.mxu0 0.0
        %4606 = vmatprep.subr.mxu0 0.0
        %4607 = vmatpush1.msra.mxu0 0.0
        %4608 = vmatprep.subr.mxu0 0.0
        %4609 = vmatpush1.msra.mxu0 0.0
        %4610 = vmatprep.subr.mxu0 0.0
        %4611 = vmatpush1.msra.mxu0 0.0
        %4612 = vmatprep.subr.mxu0 0.0
        %4613 = vmatpush1.msra.mxu0 0.0
        %4614 = vmatprep.subr.mxu0 0.0
        %4615 = vmatpush1.msra.mxu0 0.0
        %4616 = vmatprep.subr.mxu0 %v4580
        %4617 = vmatpush1.msra.mxu0 %v4579
        %4618 = vmatprep.subr.mxu0 0.0
        %4619 = vmatpush2.msra.mxu0 0.0
        %4620 = vmatprep.subr.mxu0 0.0
        %4621 = vmatpush2.msra.mxu0 0.0
        %4622 = vmatprep.subr.mxu0 0.0
        %4623 = vmatpush2.msra.mxu0 0.0
        %4624 = vmatprep.subr.mxu0 0.0
        %4625 = vmatpush2.msra.mxu0 0.0
        %4626 = vmatprep.subr.mxu0 0.0
        %4627 = vmatpush2.msra.mxu0 0.0
        %4628 = vmatprep.subr.mxu0 0.0
        %4629 = vmatpush2.msra.mxu0 0.0
        %4630 = vmatprep.subr.mxu0 0.0
        %4631 = vmatpush2.msra.mxu0 0.0
        %4632 = vmatprep.subr.mxu0 0.0
        %4633 = vmatpush2.msra.mxu0 0.0
        %4634 = vmatprep.subr.mxu0 0.0
        %4635 = vmatpush2.msra.mxu0 0.0
        %4636 = vmatprep.subr.mxu0 0.0
        %4637 = vmatpush2.msra.mxu0 0.0
        %4638 = vmatprep.subr.mxu0 0.0
        %4639 = vmatpush2.msra.mxu0 0.0
        %4640 = vmatprep.subr.mxu0 0.0
        %4641 = vmatpush2.msra.mxu0 0.0
        %4642 = vmatprep.subr.mxu0 0.0
        %4643 = vmatpush2.msra.mxu0 0.0
        %4644 = vmatprep.subr.mxu0 0.0
        %4645 = vmatpush2.msra.mxu0 0.0
        %4646 = vmatprep.subr.mxu0 0.0
        %4647 = vmatpush2.msra.mxu0 0.0
        %4648 = vmatprep.subr.mxu0 0.0
        %4649 = vmatpush2.msra.mxu0 0.0
        %4650 = vmatprep.mubr.f32.mxu0 0.0
        %4651 = vmatmul.mubr.f32.gmra.mxu0 %v4584
        %v4652 = vpop.f32.mrf.mxu0
        %v4653 = vadd.f32 0.0, %v4652
        %v4654 = vpop.f32.mrf.mxu0
        %v4655 = vadd.f32 0.0, %v4654
        %4656 = vdwg.mxu0
        %4657 = vmatprep.subr.mxu0 0.0
        %4658 = vmatpush1.msra.mxu0 0.0
        %4659 = vmatprep.subr.mxu0 0.0
        %4660 = vmatpush1.msra.mxu0 0.0
        %4661 = vmatprep.subr.mxu0 0.0
        %4662 = vmatpush1.msra.mxu0 0.0
        %4663 = vmatprep.subr.mxu0 0.0
        %4664 = vmatpush1.msra.mxu0 0.0
        %4665 = vmatprep.subr.mxu0 0.0
        %4666 = vmatpush1.msra.mxu0 0.0
        %4667 = vmatprep.subr.mxu0 0.0
        %4668 = vmatpush1.msra.mxu0 0.0
        %4669 = vmatprep.subr.mxu0 0.0
        %4670 = vmatpush1.msra.mxu0 0.0
        %4671 = vmatprep.subr.mxu0 0.0
        %4672 = vmatpush1.msra.mxu0 0.0
        %4673 = vmatprep.subr.mxu0 0.0
        %4674 = vmatpush1.msra.mxu0 0.0
        %4675 = vmatprep.subr.mxu0 0.0
        %4676 = vmatpush1.msra.mxu0 0.0
        %4677 = vmatprep.subr.mxu0 0.0
        %4678 = vmatpush1.msra.mxu0 0.0
        %4679 = vmatprep.subr.mxu0 0.0
        %4680 = vmatpush1.msra.mxu0 0.0
        %4681 = vmatprep.subr.mxu0 0.0
        %4682 = vmatpush1.msra.mxu0 0.0
        %4683 = vmatprep.subr.mxu0 0.0
        %4684 = vmatpush1.msra.mxu0 0.0
        %4685 = vmatprep.subr.mxu0 0.0
        %4686 = vmatpush1.msra.mxu0 0.0
        %4687 = vmatprep.subr.mxu0 0.0
        %4688 = vmatpush1.msra.mxu0 %v4578
        %4689 = vmatprep.subr.mxu0 0.0
        %4690 = vmatpush2.msra.mxu0 0.0
        %4691 = vmatprep.subr.mxu0 0.0
        %4692 = vmatpush2.msra.mxu0 0.0
        %4693 = vmatprep.subr.mxu0 0.0
        %4694 = vmatpush2.msra.mxu0 0.0
        %4695 = vmatprep.subr.mxu0 0.0
        %4696 = vmatpush2.msra.mxu0 0.0
        %4697 = vmatprep.subr.mxu0 0.0
        %4698 = vmatpush2.msra.mxu0 0.0
        %4699 = vmatprep.subr.mxu0 0.0
        %4700 = vmatpush2.msra.mxu0 0.0
        %4701 = vmatprep.subr.mxu0 0.0
        %4702 = vmatpush2.msra.mxu0 0.0
        %4703 = vmatprep.subr.mxu0 0.0
        %4704 = vmatpush2.msra.mxu0 0.0
        %4705 = vmatprep.subr.mxu0 0.0
        %4706 = vmatpush2.msra.mxu0 0.0
        %4707 = vmatprep.subr.mxu0 0.0
        %4708 = vmatpush2.msra.mxu0 0.0
        %4709 = vmatprep.subr.mxu0 0.0
        %4710 = vmatpush2.msra.mxu0 0.0
        %4711 = vmatprep.subr.mxu0 0.0
        %4712 = vmatpush2.msra.mxu0 0.0
        %4713 = vmatprep.subr.mxu0 0.0
        %4714 = vmatpush2.msra.mxu0 0.0
        %4715 = vmatprep.subr.mxu0 0.0
        %4716 = vmatpush2.msra.mxu0 0.0
        %4717 = vmatprep.subr.mxu0 0.0
        %4718 = vmatpush2.msra.mxu0 0.0
        %4719 = vmatprep.subr.mxu0 0.0
        %4720 = vmatpush2.msra.mxu0 0.0
        %4721 = vmatprep.mubr.f32.mxu0 0.0
        %4722 = vmatmul.mubr.f32.gmra.mxu0 %v4584
        %v4723 = vpop.f32.mrf.mxu0
        %v4724 = vadd.f32 0.0, %v4723
        %v4725 = vpop.f32.mrf.mxu0
        %4726 = vdwg.mxu0
        %v4727 = vadd.f32 %v4568, %v4653
        %v4728 = vadd.f32 %v4569, %v4655
        %v4729 = vadd.f32 %v4570, %v4724
        %4730 = vrot.lane.b32.xlu0 %v4404, 112
        %v4731 = vpop.permute.xlu0 %4730
        %4732 = vrot.lane.b32.xlu0 %v4401, 105
        %v4733 = vpop.permute.xlu0 %4732
        %4734 = vrot.lane.b32.xlu0 %v4402, 105
        %v4735 = vpop.permute.xlu0 %4734
        %4736 = vrot.lane.b32.xlu0 %v4403, 105
        %v4737 = vpop.permute.xlu0 %4736
        %v4738 = vsel %vm1639, %v4733, %v4735
        %v4739 = vsel %vm1639, %v4735, %v4737
        %v4743 = vsel %vm356, %v4731, 0
        %4745 = vmatprep.subr.mxu0 0.0
        %4746 = vmatpush1.msra.mxu0 0.0
        %4747 = vmatprep.subr.mxu0 0.0
        %4748 = vmatpush1.msra.mxu0 0.0
        %4749 = vmatprep.subr.mxu0 0.0
        %4750 = vmatpush1.msra.mxu0 0.0
        %4751 = vmatprep.subr.mxu0 0.0
        %4752 = vmatpush1.msra.mxu0 0.0
        %4753 = vmatprep.subr.mxu0 0.0
        %4754 = vmatpush1.msra.mxu0 0.0
        %4755 = vmatprep.subr.mxu0 0.0
        %4756 = vmatpush1.msra.mxu0 0.0
        %4757 = vmatprep.subr.mxu0 0.0
        %4758 = vmatpush1.msra.mxu0 0.0
        %4759 = vmatprep.subr.mxu0 0.0
        %4760 = vmatpush1.msra.mxu0 0.0
        %4761 = vmatprep.subr.mxu0 0.0
        %4762 = vmatpush1.msra.mxu0 0.0
        %4763 = vmatprep.subr.mxu0 0.0
        %4764 = vmatpush1.msra.mxu0 0.0
        %4765 = vmatprep.subr.mxu0 0.0
        %4766 = vmatpush1.msra.mxu0 0.0
        %4767 = vmatprep.subr.mxu0 0.0
        %4768 = vmatpush1.msra.mxu0 0.0
        %4769 = vmatprep.subr.mxu0 0.0
        %4770 = vmatpush1.msra.mxu0 0.0
        %4771 = vmatprep.subr.mxu0 0.0
        %4772 = vmatpush1.msra.mxu0 0.0
        %4773 = vmatprep.subr.mxu0 0.0
        %4774 = vmatpush1.msra.mxu0 0.0
        %4775 = vmatprep.subr.mxu0 %v4739
        %4776 = vmatpush1.msra.mxu0 %v4738
        %4777 = vmatprep.subr.mxu0 0.0
        %4778 = vmatpush2.msra.mxu0 0.0
        %4779 = vmatprep.subr.mxu0 0.0
        %4780 = vmatpush2.msra.mxu0 0.0
        %4781 = vmatprep.subr.mxu0 0.0
        %4782 = vmatpush2.msra.mxu0 0.0
        %4783 = vmatprep.subr.mxu0 0.0
        %4784 = vmatpush2.msra.mxu0 0.0
        %4785 = vmatprep.subr.mxu0 0.0
        %4786 = vmatpush2.msra.mxu0 0.0
        %4787 = vmatprep.subr.mxu0 0.0
        %4788 = vmatpush2.msra.mxu0 0.0
        %4789 = vmatprep.subr.mxu0 0.0
        %4790 = vmatpush2.msra.mxu0 0.0
        %4791 = vmatprep.subr.mxu0 0.0
        %4792 = vmatpush2.msra.mxu0 0.0
        %4793 = vmatprep.subr.mxu0 0.0
        %4794 = vmatpush2.msra.mxu0 0.0
        %4795 = vmatprep.subr.mxu0 0.0
        %4796 = vmatpush2.msra.mxu0 0.0
        %4797 = vmatprep.subr.mxu0 0.0
        %4798 = vmatpush2.msra.mxu0 0.0
        %4799 = vmatprep.subr.mxu0 0.0
        %4800 = vmatpush2.msra.mxu0 0.0
        %4801 = vmatprep.subr.mxu0 0.0
        %4802 = vmatpush2.msra.mxu0 0.0
        %4803 = vmatprep.subr.mxu0 0.0
        %4804 = vmatpush2.msra.mxu0 0.0
        %4805 = vmatprep.subr.mxu0 0.0
        %4806 = vmatpush2.msra.mxu0 0.0
        %4807 = vmatprep.subr.mxu0 0.0
        %4808 = vmatpush2.msra.mxu0 0.0
        %4809 = vmatprep.mubr.f32.mxu0 0.0
        %4810 = vmatmul.mubr.f32.gmra.mxu0 %v4743
        %v4811 = vpop.f32.mrf.mxu0
        %v4812 = vadd.f32 0.0, %v4811
        %v4813 = vpop.f32.mrf.mxu0
        %v4814 = vadd.f32 0.0, %v4813
        %4815 = vdwg.mxu0
        %4816 = vmatprep.subr.mxu0 0.0
        %4817 = vmatpush1.msra.mxu0 0.0
        %4818 = vmatprep.subr.mxu0 0.0
        %4819 = vmatpush1.msra.mxu0 0.0
        %4820 = vmatprep.subr.mxu0 0.0
        %4821 = vmatpush1.msra.mxu0 0.0
        %4822 = vmatprep.subr.mxu0 0.0
        %4823 = vmatpush1.msra.mxu0 0.0
        %4824 = vmatprep.subr.mxu0 0.0
        %4825 = vmatpush1.msra.mxu0 0.0
        %4826 = vmatprep.subr.mxu0 0.0
        %4827 = vmatpush1.msra.mxu0 0.0
        %4828 = vmatprep.subr.mxu0 0.0
        %4829 = vmatpush1.msra.mxu0 0.0
        %4830 = vmatprep.subr.mxu0 0.0
        %4831 = vmatpush1.msra.mxu0 0.0
        %4832 = vmatprep.subr.mxu0 0.0
        %4833 = vmatpush1.msra.mxu0 0.0
        %4834 = vmatprep.subr.mxu0 0.0
        %4835 = vmatpush1.msra.mxu0 0.0
        %4836 = vmatprep.subr.mxu0 0.0
        %4837 = vmatpush1.msra.mxu0 0.0
        %4838 = vmatprep.subr.mxu0 0.0
        %4839 = vmatpush1.msra.mxu0 0.0
        %4840 = vmatprep.subr.mxu0 0.0
        %4841 = vmatpush1.msra.mxu0 0.0
        %4842 = vmatprep.subr.mxu0 0.0
        %4843 = vmatpush1.msra.mxu0 0.0
        %4844 = vmatprep.subr.mxu0 0.0
        %4845 = vmatpush1.msra.mxu0 0.0
        %4846 = vmatprep.subr.mxu0 0.0
        %4847 = vmatpush1.msra.mxu0 %v4737
        %4848 = vmatprep.subr.mxu0 0.0
        %4849 = vmatpush2.msra.mxu0 0.0
        %4850 = vmatprep.subr.mxu0 0.0
        %4851 = vmatpush2.msra.mxu0 0.0
        %4852 = vmatprep.subr.mxu0 0.0
        %4853 = vmatpush2.msra.mxu0 0.0
        %4854 = vmatprep.subr.mxu0 0.0
        %4855 = vmatpush2.msra.mxu0 0.0
        %4856 = vmatprep.subr.mxu0 0.0
        %4857 = vmatpush2.msra.mxu0 0.0
        %4858 = vmatprep.subr.mxu0 0.0
        %4859 = vmatpush2.msra.mxu0 0.0
        %4860 = vmatprep.subr.mxu0 0.0
        %4861 = vmatpush2.msra.mxu0 0.0
        %4862 = vmatprep.subr.mxu0 0.0
        %4863 = vmatpush2.msra.mxu0 0.0
        %4864 = vmatprep.subr.mxu0 0.0
        %4865 = vmatpush2.msra.mxu0 0.0
        %4866 = vmatprep.subr.mxu0 0.0
        %4867 = vmatpush2.msra.mxu0 0.0
        %4868 = vmatprep.subr.mxu0 0.0
        %4869 = vmatpush2.msra.mxu0 0.0
        %4870 = vmatprep.subr.mxu0 0.0
        %4871 = vmatpush2.msra.mxu0 0.0
        %4872 = vmatprep.subr.mxu0 0.0
        %4873 = vmatpush2.msra.mxu0 0.0
        %4874 = vmatprep.subr.mxu0 0.0
        %4875 = vmatpush2.msra.mxu0 0.0
        %4876 = vmatprep.subr.mxu0 0.0
        %4877 = vmatpush2.msra.mxu0 0.0
        %4878 = vmatprep.subr.mxu0 0.0
        %4879 = vmatpush2.msra.mxu0 0.0
        %4880 = vmatprep.mubr.f32.mxu0 0.0
        %4881 = vmatmul.mubr.f32.gmra.mxu0 %v4743
        %v4882 = vpop.f32.mrf.mxu0
        %v4883 = vadd.f32 0.0, %v4882
        %v4884 = vpop.f32.mrf.mxu0
        %4885 = vdwg.mxu0
        %v4886 = vadd.f32 %v4727, %v4812
        %v4887 = vadd.f32 %v4728, %v4814
        %v4888 = vadd.f32 %v4729, %v4883
        %4889 = vrot.lane.b32.xlu0 %v4404, 104
        %v4890 = vpop.permute.xlu0 %4889
        %4891 = vrot.lane.b32.xlu0 %v4401, 87
        %v4892 = vpop.permute.xlu0 %4891
        %4893 = vrot.lane.b32.xlu0 %v4402, 87
        %v4894 = vpop.permute.xlu0 %4893
        %4895 = vrot.lane.b32.xlu0 %v4403, 87
        %v4896 = vpop.permute.xlu0 %4895
        %v4897 = vsel %vm2119, %v4892, %v4894
        %v4898 = vsel %vm2119, %v4894, %v4896
        %v4902 = vsel %vm356, %v4890, 0
        %4904 = vmatprep.subr.mxu0 0.0
        %4905 = vmatpush1.msra.mxu0 0.0
        %4906 = vmatprep.subr.mxu0 0.0
        %4907 = vmatpush1.msra.mxu0 0.0
        %4908 = vmatprep.subr.mxu0 0.0
        %4909 = vmatpush1.msra.mxu0 0.0
        %4910 = vmatprep.subr.mxu0 0.0
        %4911 = vmatpush1.msra.mxu0 0.0
        %4912 = vmatprep.subr.mxu0 0.0
        %4913 = vmatpush1.msra.mxu0 0.0
        %4914 = vmatprep.subr.mxu0 0.0
        %4915 = vmatpush1.msra.mxu0 0.0
        %4916 = vmatprep.subr.mxu0 0.0
        %4917 = vmatpush1.msra.mxu0 0.0
        %4918 = vmatprep.subr.mxu0 0.0
        %4919 = vmatpush1.msra.mxu0 0.0
        %4920 = vmatprep.subr.mxu0 0.0
        %4921 = vmatpush1.msra.mxu0 0.0
        %4922 = vmatprep.subr.mxu0 0.0
        %4923 = vmatpush1.msra.mxu0 0.0
        %4924 = vmatprep.subr.mxu0 0.0
        %4925 = vmatpush1.msra.mxu0 0.0
        %4926 = vmatprep.subr.mxu0 0.0
        %4927 = vmatpush1.msra.mxu0 0.0
        %4928 = vmatprep.subr.mxu0 0.0
        %4929 = vmatpush1.msra.mxu0 0.0
        %4930 = vmatprep.subr.mxu0 0.0
        %4931 = vmatpush1.msra.mxu0 0.0
        %4932 = vmatprep.subr.mxu0 0.0
        %4933 = vmatpush1.msra.mxu0 0.0
        %4934 = vmatprep.subr.mxu0 %v4898
        %4935 = vmatpush1.msra.mxu0 %v4897
        %4936 = vmatprep.subr.mxu0 0.0
        %4937 = vmatpush2.msra.mxu0 0.0
        %4938 = vmatprep.subr.mxu0 0.0
        %4939 = vmatpush2.msra.mxu0 0.0
        %4940 = vmatprep.subr.mxu0 0.0
        %4941 = vmatpush2.msra.mxu0 0.0
        %4942 = vmatprep.subr.mxu0 0.0
        %4943 = vmatpush2.msra.mxu0 0.0
        %4944 = vmatprep.subr.mxu0 0.0
        %4945 = vmatpush2.msra.mxu0 0.0
        %4946 = vmatprep.subr.mxu0 0.0
        %4947 = vmatpush2.msra.mxu0 0.0
        %4948 = vmatprep.subr.mxu0 0.0
        %4949 = vmatpush2.msra.mxu0 0.0
        %4950 = vmatprep.subr.mxu0 0.0
        %4951 = vmatpush2.msra.mxu0 0.0
        %4952 = vmatprep.subr.mxu0 0.0
        %4953 = vmatpush2.msra.mxu0 0.0
        %4954 = vmatprep.subr.mxu0 0.0
        %4955 = vmatpush2.msra.mxu0 0.0
        %4956 = vmatprep.subr.mxu0 0.0
        %4957 = vmatpush2.msra.mxu0 0.0
        %4958 = vmatprep.subr.mxu0 0.0
        %4959 = vmatpush2.msra.mxu0 0.0
        %4960 = vmatprep.subr.mxu0 0.0
        %4961 = vmatpush2.msra.mxu0 0.0
        %4962 = vmatprep.subr.mxu0 0.0
        %4963 = vmatpush2.msra.mxu0 0.0
        %4964 = vmatprep.subr.mxu0 0.0
        %4965 = vmatpush2.msra.mxu0 0.0
        %4966 = vmatprep.subr.mxu0 0.0
        %4967 = vmatpush2.msra.mxu0 0.0
        %4968 = vmatprep.mubr.f32.mxu0 0.0
        %4969 = vmatmul.mubr.f32.gmra.mxu0 %v4902
        %v4970 = vpop.f32.mrf.mxu0
        %v4971 = vadd.f32 0.0, %v4970
        %v4972 = vpop.f32.mrf.mxu0
        %v4973 = vadd.f32 0.0, %v4972
        %4974 = vdwg.mxu0
        %4975 = vmatprep.subr.mxu0 0.0
        %4976 = vmatpush1.msra.mxu0 0.0
        %4977 = vmatprep.subr.mxu0 0.0
        %4978 = vmatpush1.msra.mxu0 0.0
        %4979 = vmatprep.subr.mxu0 0.0
        %4980 = vmatpush1.msra.mxu0 0.0
        %4981 = vmatprep.subr.mxu0 0.0
        %4982 = vmatpush1.msra.mxu0 0.0
        %4983 = vmatprep.subr.mxu0 0.0
        %4984 = vmatpush1.msra.mxu0 0.0
        %4985 = vmatprep.subr.mxu0 0.0
        %4986 = vmatpush1.msra.mxu0 0.0
        %4987 = vmatprep.subr.mxu0 0.0
        %4988 = vmatpush1.msra.mxu0 0.0
        %4989 = vmatprep.subr.mxu0 0.0
        %4990 = vmatpush1.msra.mxu0 0.0
        %4991 = vmatprep.subr.mxu0 0.0
        %4992 = vmatpush1.msra.mxu0 0.0
        %4993 = vmatprep.subr.mxu0 0.0
        %4994 = vmatpush1.msra.mxu0 0.0
        %4995 = vmatprep.subr.mxu0 0.0
        %4996 = vmatpush1.msra.mxu0 0.0
        %4997 = vmatprep.subr.mxu0 0.0
        %4998 = vmatpush1.msra.mxu0 0.0
        %4999 = vmatprep.subr.mxu0 0.0
        %5000 = vmatpush1.msra.mxu0 0.0
        %5001 = vmatprep.subr.mxu0 0.0
        %5002 = vmatpush1.msra.mxu0 0.0
        %5003 = vmatprep.subr.mxu0 0.0
        %5004 = vmatpush1.msra.mxu0 0.0
        %5005 = vmatprep.subr.mxu0 0.0
        %5006 = vmatpush1.msra.mxu0 %v4896
        %5007 = vmatprep.subr.mxu0 0.0
        %5008 = vmatpush2.msra.mxu0 0.0
        %5009 = vmatprep.subr.mxu0 0.0
        %5010 = vmatpush2.msra.mxu0 0.0
        %5011 = vmatprep.subr.mxu0 0.0
        %5012 = vmatpush2.msra.mxu0 0.0
        %5013 = vmatprep.subr.mxu0 0.0
        %5014 = vmatpush2.msra.mxu0 0.0
        %5015 = vmatprep.subr.mxu0 0.0
        %5016 = vmatpush2.msra.mxu0 0.0
        %5017 = vmatprep.subr.mxu0 0.0
        %5018 = vmatpush2.msra.mxu0 0.0
        %5019 = vmatprep.subr.mxu0 0.0
        %5020 = vmatpush2.msra.mxu0 0.0
        %5021 = vmatprep.subr.mxu0 0.0
        %5022 = vmatpush2.msra.mxu0 0.0
        %5023 = vmatprep.subr.mxu0 0.0
        %5024 = vmatpush2.msra.mxu0 0.0
        %5025 = vmatprep.subr.mxu0 0.0
        %5026 = vmatpush2.msra.mxu0 0.0
        %5027 = vmatprep.subr.mxu0 0.0
        %5028 = vmatpush2.msra.mxu0 0.0
        %5029 = vmatprep.subr.mxu0 0.0
        %5030 = vmatpush2.msra.mxu0 0.0
        %5031 = vmatprep.subr.mxu0 0.0
        %5032 = vmatpush2.msra.mxu0 0.0
        %5033 = vmatprep.subr.mxu0 0.0
        %5034 = vmatpush2.msra.mxu0 0.0
        %5035 = vmatprep.subr.mxu0 0.0
        %5036 = vmatpush2.msra.mxu0 0.0
        %5037 = vmatprep.subr.mxu0 0.0
        %5038 = vmatpush2.msra.mxu0 0.0
        %5039 = vmatprep.mubr.f32.mxu0 0.0
        %5040 = vmatmul.mubr.f32.gmra.mxu0 %v4902
        %v5041 = vpop.f32.mrf.mxu0
        %v5042 = vadd.f32 0.0, %v5041
        %v5043 = vpop.f32.mrf.mxu0
        %5044 = vdwg.mxu0
        %v5045 = vadd.f32 %v4886, %v4971
        %v5046 = vadd.f32 %v4887, %v4973
        %v5047 = vadd.f32 %v4888, %v5042
        %5048 = vrot.lane.b32.xlu0 %v4404, 96
        %v5049 = vpop.permute.xlu0 %5048
        %5050 = vrot.lane.b32.xlu0 %v4401, 86
        %v5051 = vpop.permute.xlu0 %5050
        %5052 = vrot.lane.b32.xlu0 %v4402, 86
        %v5053 = vpop.permute.xlu0 %5052
        %5054 = vrot.lane.b32.xlu0 %v4403, 86
        %v5055 = vpop.permute.xlu0 %5054
        %v5056 = vsel %vm2279, %v5051, %v5053
        %v5057 = vsel %vm2279, %v5053, %v5055
        %v5061 = vsel %vm356, %v5049, 0
        %5063 = vmatprep.subr.mxu0 0.0
        %5064 = vmatpush1.msra.mxu0 0.0
        %5065 = vmatprep.subr.mxu0 0.0
        %5066 = vmatpush1.msra.mxu0 0.0
        %5067 = vmatprep.subr.mxu0 0.0
        %5068 = vmatpush1.msra.mxu0 0.0
        %5069 = vmatprep.subr.mxu0 0.0
        %5070 = vmatpush1.msra.mxu0 0.0
        %5071 = vmatprep.subr.mxu0 0.0
        %5072 = vmatpush1.msra.mxu0 0.0
        %5073 = vmatprep.subr.mxu0 0.0
        %5074 = vmatpush1.msra.mxu0 0.0
        %5075 = vmatprep.subr.mxu0 0.0
        %5076 = vmatpush1.msra.mxu0 0.0
        %5077 = vmatprep.subr.mxu0 0.0
        %5078 = vmatpush1.msra.mxu0 0.0
        %5079 = vmatprep.subr.mxu0 0.0
        %5080 = vmatpush1.msra.mxu0 0.0
        %5081 = vmatprep.subr.mxu0 0.0
        %5082 = vmatpush1.msra.mxu0 0.0
        %5083 = vmatprep.subr.mxu0 0.0
        %5084 = vmatpush1.msra.mxu0 0.0
        %5085 = vmatprep.subr.mxu0 0.0
        %5086 = vmatpush1.msra.mxu0 0.0
        %5087 = vmatprep.subr.mxu0 0.0
        %5088 = vmatpush1.msra.mxu0 0.0
        %5089 = vmatprep.subr.mxu0 0.0
        %5090 = vmatpush1.msra.mxu0 0.0
        %5091 = vmatprep.subr.mxu0 0.0
        %5092 = vmatpush1.msra.mxu0 0.0
        %5093 = vmatprep.subr.mxu0 %v5057
        %5094 = vmatpush1.msra.mxu0 %v5056
        %5095 = vmatprep.subr.mxu0 0.0
        %5096 = vmatpush2.msra.mxu0 0.0
        %5097 = vmatprep.subr.mxu0 0.0
        %5098 = vmatpush2.msra.mxu0 0.0
        %5099 = vmatprep.subr.mxu0 0.0
        %5100 = vmatpush2.msra.mxu0 0.0
        %5101 = vmatprep.subr.mxu0 0.0
        %5102 = vmatpush2.msra.mxu0 0.0
        %5103 = vmatprep.subr.mxu0 0.0
        %5104 = vmatpush2.msra.mxu0 0.0
        %5105 = vmatprep.subr.mxu0 0.0
        %5106 = vmatpush2.msra.mxu0 0.0
        %5107 = vmatprep.subr.mxu0 0.0
        %5108 = vmatpush2.msra.mxu0 0.0
        %5109 = vmatprep.subr.mxu0 0.0
        %5110 = vmatpush2.msra.mxu0 0.0
        %5111 = vmatprep.subr.mxu0 0.0
        %5112 = vmatpush2.msra.mxu0 0.0
        %5113 = vmatprep.subr.mxu0 0.0
        %5114 = vmatpush2.msra.mxu0 0.0
        %5115 = vmatprep.subr.mxu0 0.0
        %5116 = vmatpush2.msra.mxu0 0.0
        %5117 = vmatprep.subr.mxu0 0.0
        %5118 = vmatpush2.msra.mxu0 0.0
        %5119 = vmatprep.subr.mxu0 0.0
        %5120 = vmatpush2.msra.mxu0 0.0
        %5121 = vmatprep.subr.mxu0 0.0
        %5122 = vmatpush2.msra.mxu0 0.0
        %5123 = vmatprep.subr.mxu0 0.0
        %5124 = vmatpush2.msra.mxu0 0.0
        %5125 = vmatprep.subr.mxu0 0.0
        %5126 = vmatpush2.msra.mxu0 0.0
        %5127 = vmatprep.mubr.f32.mxu0 0.0
        %5128 = vmatmul.mubr.f32.gmra.mxu0 %v5061
        %v5129 = vpop.f32.mrf.mxu0
        %v5130 = vadd.f32 0.0, %v5129
        %v5131 = vpop.f32.mrf.mxu0
        %v5132 = vadd.f32 0.0, %v5131
        %5133 = vdwg.mxu0
        %5134 = vmatprep.subr.mxu0 0.0
        %5135 = vmatpush1.msra.mxu0 0.0
        %5136 = vmatprep.subr.mxu0 0.0
        %5137 = vmatpush1.msra.mxu0 0.0
        %5138 = vmatprep.subr.mxu0 0.0
        %5139 = vmatpush1.msra.mxu0 0.0
        %5140 = vmatprep.subr.mxu0 0.0
        %5141 = vmatpush1.msra.mxu0 0.0
        %5142 = vmatprep.subr.mxu0 0.0
        %5143 = vmatpush1.msra.mxu0 0.0
        %5144 = vmatprep.subr.mxu0 0.0
        %5145 = vmatpush1.msra.mxu0 0.0
        %5146 = vmatprep.subr.mxu0 0.0
        %5147 = vmatpush1.msra.mxu0 0.0
        %5148 = vmatprep.subr.mxu0 0.0
        %5149 = vmatpush1.msra.mxu0 0.0
        %5150 = vmatprep.subr.mxu0 0.0
        %5151 = vmatpush1.msra.mxu0 0.0
        %5152 = vmatprep.subr.mxu0 0.0
        %5153 = vmatpush1.msra.mxu0 0.0
        %5154 = vmatprep.subr.mxu0 0.0
        %5155 = vmatpush1.msra.mxu0 0.0
        %5156 = vmatprep.subr.mxu0 0.0
        %5157 = vmatpush1.msra.mxu0 0.0
        %5158 = vmatprep.subr.mxu0 0.0
        %5159 = vmatpush1.msra.mxu0 0.0
        %5160 = vmatprep.subr.mxu0 0.0
        %5161 = vmatpush1.msra.mxu0 0.0
        %5162 = vmatprep.subr.mxu0 0.0
        %5163 = vmatpush1.msra.mxu0 0.0
        %5164 = vmatprep.subr.mxu0 0.0
        %5165 = vmatpush1.msra.mxu0 %v5055
        %5166 = vmatprep.subr.mxu0 0.0
        %5167 = vmatpush2.msra.mxu0 0.0
        %5168 = vmatprep.subr.mxu0 0.0
        %5169 = vmatpush2.msra.mxu0 0.0
        %5170 = vmatprep.subr.mxu0 0.0
        %5171 = vmatpush2.msra.mxu0 0.0
        %5172 = vmatprep.subr.mxu0 0.0
        %5173 = vmatpush2.msra.mxu0 0.0
        %5174 = vmatprep.subr.mxu0 0.0
        %5175 = vmatpush2.msra.mxu0 0.0
        %5176 = vmatprep.subr.mxu0 0.0
        %5177 = vmatpush2.msra.mxu0 0.0
        %5178 = vmatprep.subr.mxu0 0.0
        %5179 = vmatpush2.msra.mxu0 0.0
        %5180 = vmatprep.subr.mxu0 0.0
        %5181 = vmatpush2.msra.mxu0 0.0
        %5182 = vmatprep.subr.mxu0 0.0
        %5183 = vmatpush2.msra.mxu0 0.0
        %5184 = vmatprep.subr.mxu0 0.0
        %5185 = vmatpush2.msra.mxu0 0.0
        %5186 = vmatprep.subr.mxu0 0.0
        %5187 = vmatpush2.msra.mxu0 0.0
        %5188 = vmatprep.subr.mxu0 0.0
        %5189 = vmatpush2.msra.mxu0 0.0
        %5190 = vmatprep.subr.mxu0 0.0
        %5191 = vmatpush2.msra.mxu0 0.0
        %5192 = vmatprep.subr.mxu0 0.0
        %5193 = vmatpush2.msra.mxu0 0.0
        %5194 = vmatprep.subr.mxu0 0.0
        %5195 = vmatpush2.msra.mxu0 0.0
        %5196 = vmatprep.subr.mxu0 0.0
        %5197 = vmatpush2.msra.mxu0 0.0
        %5198 = vmatprep.mubr.f32.mxu0 0.0
        %5199 = vmatmul.mubr.f32.gmra.mxu0 %v5061
        %v5200 = vpop.f32.mrf.mxu0
        %v5201 = vadd.f32 0.0, %v5200
        %v5202 = vpop.f32.mrf.mxu0
        %5203 = vdwg.mxu0
        %v5204 = vadd.f32 %v5045, %v5130
        %v5205 = vadd.f32 %v5046, %v5132
        %v5206 = vadd.f32 %v5047, %v5201
        %5207 = vrot.lane.b32.xlu0 %v4404, 88
        %v5208 = vpop.permute.xlu0 %5207
        %5209 = vrot.lane.b32.xlu0 %v4401, 85
        %v5210 = vpop.permute.xlu0 %5209
        %5211 = vrot.lane.b32.xlu0 %v4402, 85
        %v5212 = vpop.permute.xlu0 %5211
        %5213 = vrot.lane.b32.xlu0 %v4403, 85
        %v5214 = vpop.permute.xlu0 %5213
        %v5215 = vsel %vm2439, %v5210, %v5212
        %v5216 = vsel %vm2439, %v5212, %v5214
        %v5220 = vsel %vm356, %v5208, 0
        %5222 = vmatprep.subr.mxu0 0.0
        %5223 = vmatpush1.msra.mxu0 0.0
        %5224 = vmatprep.subr.mxu0 0.0
        %5225 = vmatpush1.msra.mxu0 0.0
        %5226 = vmatprep.subr.mxu0 0.0
        %5227 = vmatpush1.msra.mxu0 0.0
        %5228 = vmatprep.subr.mxu0 0.0
        %5229 = vmatpush1.msra.mxu0 0.0
        %5230 = vmatprep.subr.mxu0 0.0
        %5231 = vmatpush1.msra.mxu0 0.0
        %5232 = vmatprep.subr.mxu0 0.0
        %5233 = vmatpush1.msra.mxu0 0.0
        %5234 = vmatprep.subr.mxu0 0.0
        %5235 = vmatpush1.msra.mxu0 0.0
        %5236 = vmatprep.subr.mxu0 0.0
        %5237 = vmatpush1.msra.mxu0 0.0
        %5238 = vmatprep.subr.mxu0 0.0
        %5239 = vmatpush1.msra.mxu0 0.0
        %5240 = vmatprep.subr.mxu0 0.0
        %5241 = vmatpush1.msra.mxu0 0.0
        %5242 = vmatprep.subr.mxu0 0.0
        %5243 = vmatpush1.msra.mxu0 0.0
        %5244 = vmatprep.subr.mxu0 0.0
        %5245 = vmatpush1.msra.mxu0 0.0
        %5246 = vmatprep.subr.mxu0 0.0
        %5247 = vmatpush1.msra.mxu0 0.0
        %5248 = vmatprep.subr.mxu0 0.0
        %5249 = vmatpush1.msra.mxu0 0.0
        %5250 = vmatprep.subr.mxu0 0.0
        %5251 = vmatpush1.msra.mxu0 0.0
        %5252 = vmatprep.subr.mxu0 %v5216
        %5253 = vmatpush1.msra.mxu0 %v5215
        %5254 = vmatprep.subr.mxu0 0.0
        %5255 = vmatpush2.msra.mxu0 0.0
        %5256 = vmatprep.subr.mxu0 0.0
        %5257 = vmatpush2.msra.mxu0 0.0
        %5258 = vmatprep.subr.mxu0 0.0
        %5259 = vmatpush2.msra.mxu0 0.0
        %5260 = vmatprep.subr.mxu0 0.0
        %5261 = vmatpush2.msra.mxu0 0.0
        %5262 = vmatprep.subr.mxu0 0.0
        %5263 = vmatpush2.msra.mxu0 0.0
        %5264 = vmatprep.subr.mxu0 0.0
        %5265 = vmatpush2.msra.mxu0 0.0
        %5266 = vmatprep.subr.mxu0 0.0
        %5267 = vmatpush2.msra.mxu0 0.0
        %5268 = vmatprep.subr.mxu0 0.0
        %5269 = vmatpush2.msra.mxu0 0.0
        %5270 = vmatprep.subr.mxu0 0.0
        %5271 = vmatpush2.msra.mxu0 0.0
        %5272 = vmatprep.subr.mxu0 0.0
        %5273 = vmatpush2.msra.mxu0 0.0
        %5274 = vmatprep.subr.mxu0 0.0
        %5275 = vmatpush2.msra.mxu0 0.0
        %5276 = vmatprep.subr.mxu0 0.0
        %5277 = vmatpush2.msra.mxu0 0.0
        %5278 = vmatprep.subr.mxu0 0.0
        %5279 = vmatpush2.msra.mxu0 0.0
        %5280 = vmatprep.subr.mxu0 0.0
        %5281 = vmatpush2.msra.mxu0 0.0
        %5282 = vmatprep.subr.mxu0 0.0
        %5283 = vmatpush2.msra.mxu0 0.0
        %5284 = vmatprep.subr.mxu0 0.0
        %5285 = vmatpush2.msra.mxu0 0.0
        %5286 = vmatprep.mubr.f32.mxu0 0.0
        %5287 = vmatmul.mubr.f32.gmra.mxu0 %v5220
        %v5288 = vpop.f32.mrf.mxu0
        %v5289 = vadd.f32 0.0, %v5288
        %v5290 = vpop.f32.mrf.mxu0
        %v5291 = vadd.f32 0.0, %v5290
        %5292 = vdwg.mxu0
        %5293 = vmatprep.subr.mxu0 0.0
        %5294 = vmatpush1.msra.mxu0 0.0
        %5295 = vmatprep.subr.mxu0 0.0
        %5296 = vmatpush1.msra.mxu0 0.0
        %5297 = vmatprep.subr.mxu0 0.0
        %5298 = vmatpush1.msra.mxu0 0.0
        %5299 = vmatprep.subr.mxu0 0.0
        %5300 = vmatpush1.msra.mxu0 0.0
        %5301 = vmatprep.subr.mxu0 0.0
        %5302 = vmatpush1.msra.mxu0 0.0
        %5303 = vmatprep.subr.mxu0 0.0
        %5304 = vmatpush1.msra.mxu0 0.0
        %5305 = vmatprep.subr.mxu0 0.0
        %5306 = vmatpush1.msra.mxu0 0.0
        %5307 = vmatprep.subr.mxu0 0.0
        %5308 = vmatpush1.msra.mxu0 0.0
        %5309 = vmatprep.subr.mxu0 0.0
        %5310 = vmatpush1.msra.mxu0 0.0
        %5311 = vmatprep.subr.mxu0 0.0
        %5312 = vmatpush1.msra.mxu0 0.0
        %5313 = vmatprep.subr.mxu0 0.0
        %5314 = vmatpush1.msra.mxu0 0.0
        %5315 = vmatprep.subr.mxu0 0.0
        %5316 = vmatpush1.msra.mxu0 0.0
        %5317 = vmatprep.subr.mxu0 0.0
        %5318 = vmatpush1.msra.mxu0 0.0
        %5319 = vmatprep.subr.mxu0 0.0
        %5320 = vmatpush1.msra.mxu0 0.0
        %5321 = vmatprep.subr.mxu0 0.0
        %5322 = vmatpush1.msra.mxu0 0.0
        %5323 = vmatprep.subr.mxu0 0.0
        %5324 = vmatpush1.msra.mxu0 %v5214
        %5325 = vmatprep.subr.mxu0 0.0
        %5326 = vmatpush2.msra.mxu0 0.0
        %5327 = vmatprep.subr.mxu0 0.0
        %5328 = vmatpush2.msra.mxu0 0.0
        %5329 = vmatprep.subr.mxu0 0.0
        %5330 = vmatpush2.msra.mxu0 0.0
        %5331 = vmatprep.subr.mxu0 0.0
        %5332 = vmatpush2.msra.mxu0 0.0
        %5333 = vmatprep.subr.mxu0 0.0
        %5334 = vmatpush2.msra.mxu0 0.0
        %5335 = vmatprep.subr.mxu0 0.0
        %5336 = vmatpush2.msra.mxu0 0.0
        %5337 = vmatprep.subr.mxu0 0.0
        %5338 = vmatpush2.msra.mxu0 0.0
        %5339 = vmatprep.subr.mxu0 0.0
        %5340 = vmatpush2.msra.mxu0 0.0
        %5341 = vmatprep.subr.mxu0 0.0
        %5342 = vmatpush2.msra.mxu0 0.0
        %5343 = vmatprep.subr.mxu0 0.0
        %5344 = vmatpush2.msra.mxu0 0.0
        %5345 = vmatprep.subr.mxu0 0.0
        %5346 = vmatpush2.msra.mxu0 0.0
        %5347 = vmatprep.subr.mxu0 0.0
        %5348 = vmatpush2.msra.mxu0 0.0
        %5349 = vmatprep.subr.mxu0 0.0
        %5350 = vmatpush2.msra.mxu0 0.0
        %5351 = vmatprep.subr.mxu0 0.0
        %5352 = vmatpush2.msra.mxu0 0.0
        %5353 = vmatprep.subr.mxu0 0.0
        %5354 = vmatpush2.msra.mxu0 0.0
        %5355 = vmatprep.subr.mxu0 0.0
        %5356 = vmatpush2.msra.mxu0 0.0
        %5357 = vmatprep.mubr.f32.mxu0 0.0
        %5358 = vmatmul.mubr.f32.gmra.mxu0 %v5220
        %v5359 = vpop.f32.mrf.mxu0
        %v5360 = vadd.f32 0.0, %v5359
        %v5361 = vpop.f32.mrf.mxu0
        %5362 = vdwg.mxu0
        %v5363 = vadd.f32 %v5204, %v5289
        %v5364 = vadd.f32 %v5205, %v5291
        %v5365 = vadd.f32 %v5206, %v5360
        %5366 = vrot.lane.b32.xlu0 %v4404, 80
        %v5367 = vpop.permute.xlu0 %5366
        %5368 = vrot.lane.b32.xlu0 %v4401, 67
        %v5369 = vpop.permute.xlu0 %5368
        %5370 = vrot.lane.b32.xlu0 %v4402, 67
        %v5371 = vpop.permute.xlu0 %5370
        %5372 = vrot.lane.b32.xlu0 %v4403, 67
        %v5373 = vpop.permute.xlu0 %5372
        %v5374 = vsel %vm2918, %v5369, %v5371
        %v5375 = vsel %vm2918, %v5371, %v5373
        %v5379 = vsel %vm356, %v5367, 0
        %5381 = vmatprep.subr.mxu0 0.0
        %5382 = vmatpush1.msra.mxu0 0.0
        %5383 = vmatprep.subr.mxu0 0.0
        %5384 = vmatpush1.msra.mxu0 0.0
        %5385 = vmatprep.subr.mxu0 0.0
        %5386 = vmatpush1.msra.mxu0 0.0
        %5387 = vmatprep.subr.mxu0 0.0
        %5388 = vmatpush1.msra.mxu0 0.0
        %5389 = vmatprep.subr.mxu0 0.0
        %5390 = vmatpush1.msra.mxu0 0.0
        %5391 = vmatprep.subr.mxu0 0.0
        %5392 = vmatpush1.msra.mxu0 0.0
        %5393 = vmatprep.subr.mxu0 0.0
        %5394 = vmatpush1.msra.mxu0 0.0
        %5395 = vmatprep.subr.mxu0 0.0
        %5396 = vmatpush1.msra.mxu0 0.0
        %5397 = vmatprep.subr.mxu0 0.0
        %5398 = vmatpush1.msra.mxu0 0.0
        %5399 = vmatprep.subr.mxu0 0.0
        %5400 = vmatpush1.msra.mxu0 0.0
        %5401 = vmatprep.subr.mxu0 0.0
        %5402 = vmatpush1.msra.mxu0 0.0
        %5403 = vmatprep.subr.mxu0 0.0
        %5404 = vmatpush1.msra.mxu0 0.0
        %5405 = vmatprep.subr.mxu0 0.0
        %5406 = vmatpush1.msra.mxu0 0.0
        %5407 = vmatprep.subr.mxu0 0.0
        %5408 = vmatpush1.msra.mxu0 0.0
        %5409 = vmatprep.subr.mxu0 0.0
        %5410 = vmatpush1.msra.mxu0 0.0
        %5411 = vmatprep.subr.mxu0 %v5375
        %5412 = vmatpush1.msra.mxu0 %v5374
        %5413 = vmatprep.subr.mxu0 0.0
        %5414 = vmatpush2.msra.mxu0 0.0
        %5415 = vmatprep.subr.mxu0 0.0
        %5416 = vmatpush2.msra.mxu0 0.0
        %5417 = vmatprep.subr.mxu0 0.0
        %5418 = vmatpush2.msra.mxu0 0.0
        %5419 = vmatprep.subr.mxu0 0.0
        %5420 = vmatpush2.msra.mxu0 0.0
        %5421 = vmatprep.subr.mxu0 0.0
        %5422 = vmatpush2.msra.mxu0 0.0
        %5423 = vmatprep.subr.mxu0 0.0
        %5424 = vmatpush2.msra.mxu0 0.0
        %5425 = vmatprep.subr.mxu0 0.0
        %5426 = vmatpush2.msra.mxu0 0.0
        %5427 = vmatprep.subr.mxu0 0.0
        %5428 = vmatpush2.msra.mxu0 0.0
        %5429 = vmatprep.subr.mxu0 0.0
        %5430 = vmatpush2.msra.mxu0 0.0
        %5431 = vmatprep.subr.mxu0 0.0
        %5432 = vmatpush2.msra.mxu0 0.0
        %5433 = vmatprep.subr.mxu0 0.0
        %5434 = vmatpush2.msra.mxu0 0.0
        %5435 = vmatprep.subr.mxu0 0.0
        %5436 = vmatpush2.msra.mxu0 0.0
        %5437 = vmatprep.subr.mxu0 0.0
        %5438 = vmatpush2.msra.mxu0 0.0
        %5439 = vmatprep.subr.mxu0 0.0
        %5440 = vmatpush2.msra.mxu0 0.0
        %5441 = vmatprep.subr.mxu0 0.0
        %5442 = vmatpush2.msra.mxu0 0.0
        %5443 = vmatprep.subr.mxu0 0.0
        %5444 = vmatpush2.msra.mxu0 0.0
        %5445 = vmatprep.mubr.f32.mxu0 0.0
        %5446 = vmatmul.mubr.f32.gmra.mxu0 %v5379
        %v5447 = vpop.f32.mrf.mxu0
        %v5448 = vadd.f32 0.0, %v5447
        %v5449 = vpop.f32.mrf.mxu0
        %v5450 = vadd.f32 0.0, %v5449
        %5451 = vdwg.mxu0
        %5452 = vmatprep.subr.mxu0 0.0
        %5453 = vmatpush1.msra.mxu0 0.0
        %5454 = vmatprep.subr.mxu0 0.0
        %5455 = vmatpush1.msra.mxu0 0.0
        %5456 = vmatprep.subr.mxu0 0.0
        %5457 = vmatpush1.msra.mxu0 0.0
        %5458 = vmatprep.subr.mxu0 0.0
        %5459 = vmatpush1.msra.mxu0 0.0
        %5460 = vmatprep.subr.mxu0 0.0
        %5461 = vmatpush1.msra.mxu0 0.0
        %5462 = vmatprep.subr.mxu0 0.0
        %5463 = vmatpush1.msra.mxu0 0.0
        %5464 = vmatprep.subr.mxu0 0.0
        %5465 = vmatpush1.msra.mxu0 0.0
        %5466 = vmatprep.subr.mxu0 0.0
        %5467 = vmatpush1.msra.mxu0 0.0
        %5468 = vmatprep.subr.mxu0 0.0
        %5469 = vmatpush1.msra.mxu0 0.0
        %5470 = vmatprep.subr.mxu0 0.0
        %5471 = vmatpush1.msra.mxu0 0.0
        %5472 = vmatprep.subr.mxu0 0.0
        %5473 = vmatpush1.msra.mxu0 0.0
        %5474 = vmatprep.subr.mxu0 0.0
        %5475 = vmatpush1.msra.mxu0 0.0
        %5476 = vmatprep.subr.mxu0 0.0
        %5477 = vmatpush1.msra.mxu0 0.0
        %5478 = vmatprep.subr.mxu0 0.0
        %5479 = vmatpush1.msra.mxu0 0.0
        %5480 = vmatprep.subr.mxu0 0.0
        %5481 = vmatpush1.msra.mxu0 0.0
        %5482 = vmatprep.subr.mxu0 0.0
        %5483 = vmatpush1.msra.mxu0 %v5373
        %5484 = vmatprep.subr.mxu0 0.0
        %5485 = vmatpush2.msra.mxu0 0.0
        %5486 = vmatprep.subr.mxu0 0.0
        %5487 = vmatpush2.msra.mxu0 0.0
        %5488 = vmatprep.subr.mxu0 0.0
        %5489 = vmatpush2.msra.mxu0 0.0
        %5490 = vmatprep.subr.mxu0 0.0
        %5491 = vmatpush2.msra.mxu0 0.0
        %5492 = vmatprep.subr.mxu0 0.0
        %5493 = vmatpush2.msra.mxu0 0.0
        %5494 = vmatprep.subr.mxu0 0.0
        %5495 = vmatpush2.msra.mxu0 0.0
        %5496 = vmatprep.subr.mxu0 0.0
        %5497 = vmatpush2.msra.mxu0 0.0
        %5498 = vmatprep.subr.mxu0 0.0
        %5499 = vmatpush2.msra.mxu0 0.0
        %5500 = vmatprep.subr.mxu0 0.0
        %5501 = vmatpush2.msra.mxu0 0.0
        %5502 = vmatprep.subr.mxu0 0.0
        %5503 = vmatpush2.msra.mxu0 0.0
        %5504 = vmatprep.subr.mxu0 0.0
        %5505 = vmatpush2.msra.mxu0 0.0
        %5506 = vmatprep.subr.mxu0 0.0
        %5507 = vmatpush2.msra.mxu0 0.0
        %5508 = vmatprep.subr.mxu0 0.0
        %5509 = vmatpush2.msra.mxu0 0.0
        %5510 = vmatprep.subr.mxu0 0.0
        %5511 = vmatpush2.msra.mxu0 0.0
        %5512 = vmatprep.subr.mxu0 0.0
        %5513 = vmatpush2.msra.mxu0 0.0
        %5514 = vmatprep.subr.mxu0 0.0
        %5515 = vmatpush2.msra.mxu0 0.0
        %5516 = vmatprep.mubr.f32.mxu0 0.0
        %5517 = vmatmul.mubr.f32.gmra.mxu0 %v5379
        %v5518 = vpop.f32.mrf.mxu0
        %v5519 = vadd.f32 0.0, %v5518
        %v5520 = vpop.f32.mrf.mxu0
        %5521 = vdwg.mxu0
        %v5522 = vadd.f32 %v5363, %v5448
        %v5523 = vadd.f32 %v5364, %v5450
        %v5524 = vadd.f32 %v5365, %v5519
        %5525 = vrot.lane.b32.xlu0 %v4404, 72
        %v5526 = vpop.permute.xlu0 %5525
        %5527 = vrot.lane.b32.xlu0 %v4401, 66
        %v5528 = vpop.permute.xlu0 %5527
        %5529 = vrot.lane.b32.xlu0 %v4402, 66
        %v5530 = vpop.permute.xlu0 %5529
        %5531 = vrot.lane.b32.xlu0 %v4403, 66
        %v5532 = vpop.permute.xlu0 %5531
        %v5533 = vsel %vm3079, %v5528, %v5530
        %v5534 = vsel %vm3079, %v5530, %v5532
        %v5538 = vsel %vm356, %v5526, 0
        %5540 = vmatprep.subr.mxu0 0.0
        %5541 = vmatpush1.msra.mxu0 0.0
        %5542 = vmatprep.subr.mxu0 0.0
        %5543 = vmatpush1.msra.mxu0 0.0
        %5544 = vmatprep.subr.mxu0 0.0
        %5545 = vmatpush1.msra.mxu0 0.0
        %5546 = vmatprep.subr.mxu0 0.0
        %5547 = vmatpush1.msra.mxu0 0.0
        %5548 = vmatprep.subr.mxu0 0.0
        %5549 = vmatpush1.msra.mxu0 0.0
        %5550 = vmatprep.subr.mxu0 0.0
        %5551 = vmatpush1.msra.mxu0 0.0
        %5552 = vmatprep.subr.mxu0 0.0
        %5553 = vmatpush1.msra.mxu0 0.0
        %5554 = vmatprep.subr.mxu0 0.0
        %5555 = vmatpush1.msra.mxu0 0.0
        %5556 = vmatprep.subr.mxu0 0.0
        %5557 = vmatpush1.msra.mxu0 0.0
        %5558 = vmatprep.subr.mxu0 0.0
        %5559 = vmatpush1.msra.mxu0 0.0
        %5560 = vmatprep.subr.mxu0 0.0
        %5561 = vmatpush1.msra.mxu0 0.0
        %5562 = vmatprep.subr.mxu0 0.0
        %5563 = vmatpush1.msra.mxu0 0.0
        %5564 = vmatprep.subr.mxu0 0.0
        %5565 = vmatpush1.msra.mxu0 0.0
        %5566 = vmatprep.subr.mxu0 0.0
        %5567 = vmatpush1.msra.mxu0 0.0
        %5568 = vmatprep.subr.mxu0 0.0
        %5569 = vmatpush1.msra.mxu0 0.0
        %5570 = vmatprep.subr.mxu0 %v5534
        %5571 = vmatpush1.msra.mxu0 %v5533
        %5572 = vmatprep.subr.mxu0 0.0
        %5573 = vmatpush2.msra.mxu0 0.0
        %5574 = vmatprep.subr.mxu0 0.0
        %5575 = vmatpush2.msra.mxu0 0.0
        %5576 = vmatprep.subr.mxu0 0.0
        %5577 = vmatpush2.msra.mxu0 0.0
        %5578 = vmatprep.subr.mxu0 0.0
        %5579 = vmatpush2.msra.mxu0 0.0
        %5580 = vmatprep.subr.mxu0 0.0
        %5581 = vmatpush2.msra.mxu0 0.0
        %5582 = vmatprep.subr.mxu0 0.0
        %5583 = vmatpush2.msra.mxu0 0.0
        %5584 = vmatprep.subr.mxu0 0.0
        %5585 = vmatpush2.msra.mxu0 0.0
        %5586 = vmatprep.subr.mxu0 0.0
        %5587 = vmatpush2.msra.mxu0 0.0
        %5588 = vmatprep.subr.mxu0 0.0
        %5589 = vmatpush2.msra.mxu0 0.0
        %5590 = vmatprep.subr.mxu0 0.0
        %5591 = vmatpush2.msra.mxu0 0.0
        %5592 = vmatprep.subr.mxu0 0.0
        %5593 = vmatpush2.msra.mxu0 0.0
        %5594 = vmatprep.subr.mxu0 0.0
        %5595 = vmatpush2.msra.mxu0 0.0
        %5596 = vmatprep.subr.mxu0 0.0
        %5597 = vmatpush2.msra.mxu0 0.0
        %5598 = vmatprep.subr.mxu0 0.0
        %5599 = vmatpush2.msra.mxu0 0.0
        %5600 = vmatprep.subr.mxu0 0.0
        %5601 = vmatpush2.msra.mxu0 0.0
        %5602 = vmatprep.subr.mxu0 0.0
        %5603 = vmatpush2.msra.mxu0 0.0
        %5604 = vmatprep.mubr.f32.mxu0 0.0
        %5605 = vmatmul.mubr.f32.gmra.mxu0 %v5538
        %v5606 = vpop.f32.mrf.mxu0
        %v5607 = vadd.f32 0.0, %v5606
        %v5608 = vpop.f32.mrf.mxu0
        %v5609 = vadd.f32 0.0, %v5608
        %5610 = vdwg.mxu0
        %5611 = vmatprep.subr.mxu0 0.0
        %5612 = vmatpush1.msra.mxu0 0.0
        %5613 = vmatprep.subr.mxu0 0.0
        %5614 = vmatpush1.msra.mxu0 0.0
        %5615 = vmatprep.subr.mxu0 0.0
        %5616 = vmatpush1.msra.mxu0 0.0
        %5617 = vmatprep.subr.mxu0 0.0
        %5618 = vmatpush1.msra.mxu0 0.0
        %5619 = vmatprep.subr.mxu0 0.0
        %5620 = vmatpush1.msra.mxu0 0.0
        %5621 = vmatprep.subr.mxu0 0.0
        %5622 = vmatpush1.msra.mxu0 0.0
        %5623 = vmatprep.subr.mxu0 0.0
        %5624 = vmatpush1.msra.mxu0 0.0
        %5625 = vmatprep.subr.mxu0 0.0
        %5626 = vmatpush1.msra.mxu0 0.0
        %5627 = vmatprep.subr.mxu0 0.0
        %5628 = vmatpush1.msra.mxu0 0.0
        %5629 = vmatprep.subr.mxu0 0.0
        %5630 = vmatpush1.msra.mxu0 0.0
        %5631 = vmatprep.subr.mxu0 0.0
        %5632 = vmatpush1.msra.mxu0 0.0
        %5633 = vmatprep.subr.mxu0 0.0
        %5634 = vmatpush1.msra.mxu0 0.0
        %5635 = vmatprep.subr.mxu0 0.0
        %5636 = vmatpush1.msra.mxu0 0.0
        %5637 = vmatprep.subr.mxu0 0.0
        %5638 = vmatpush1.msra.mxu0 0.0
        %5639 = vmatprep.subr.mxu0 0.0
        %5640 = vmatpush1.msra.mxu0 0.0
        %5641 = vmatprep.subr.mxu0 0.0
        %5642 = vmatpush1.msra.mxu0 %v5532
        %5643 = vmatprep.subr.mxu0 0.0
        %5644 = vmatpush2.msra.mxu0 0.0
        %5645 = vmatprep.subr.mxu0 0.0
        %5646 = vmatpush2.msra.mxu0 0.0
        %5647 = vmatprep.subr.mxu0 0.0
        %5648 = vmatpush2.msra.mxu0 0.0
        %5649 = vmatprep.subr.mxu0 0.0
        %5650 = vmatpush2.msra.mxu0 0.0
        %5651 = vmatprep.subr.mxu0 0.0
        %5652 = vmatpush2.msra.mxu0 0.0
        %5653 = vmatprep.subr.mxu0 0.0
        %5654 = vmatpush2.msra.mxu0 0.0
        %5655 = vmatprep.subr.mxu0 0.0
        %5656 = vmatpush2.msra.mxu0 0.0
        %5657 = vmatprep.subr.mxu0 0.0
        %5658 = vmatpush2.msra.mxu0 0.0
        %5659 = vmatprep.subr.mxu0 0.0
        %5660 = vmatpush2.msra.mxu0 0.0
        %5661 = vmatprep.subr.mxu0 0.0
        %5662 = vmatpush2.msra.mxu0 0.0
        %5663 = vmatprep.subr.mxu0 0.0
        %5664 = vmatpush2.msra.mxu0 0.0
        %5665 = vmatprep.subr.mxu0 0.0
        %5666 = vmatpush2.msra.mxu0 0.0
        %5667 = vmatprep.subr.mxu0 0.0
        %5668 = vmatpush2.msra.mxu0 0.0
        %5669 = vmatprep.subr.mxu0 0.0
        %5670 = vmatpush2.msra.mxu0 0.0
        %5671 = vmatprep.subr.mxu0 0.0
        %5672 = vmatpush2.msra.mxu0 0.0
        %5673 = vmatprep.subr.mxu0 0.0
        %5674 = vmatpush2.msra.mxu0 0.0
        %5675 = vmatprep.mubr.f32.mxu0 0.0
        %5676 = vmatmul.mubr.f32.gmra.mxu0 %v5538
        %v5677 = vpop.f32.mrf.mxu0
        %v5678 = vadd.f32 0.0, %v5677
        %v5679 = vpop.f32.mrf.mxu0
        %5680 = vdwg.mxu0
        %v5681 = vadd.f32 %v5522, %v5607
        %v5682 = vadd.f32 %v5523, %v5609
        %v5683 = vadd.f32 %v5524, %v5678
        %5684 = vrot.lane.b32.xlu0 %v4404, 64
        %v5685 = vpop.permute.xlu0 %5684
        %5686 = vrot.lane.b32.xlu0 %v4401, 65
        %v5687 = vpop.permute.xlu0 %5686
        %5688 = vrot.lane.b32.xlu0 %v4402, 65
        %v5689 = vpop.permute.xlu0 %5688
        %5690 = vrot.lane.b32.xlu0 %v4403, 65
        %v5691 = vpop.permute.xlu0 %5690
        %v5692 = vsel %vm3239, %v5687, %v5689
        %v5693 = vsel %vm3239, %v5689, %v5691
        %v5697 = vsel %vm356, %v5685, 0
        %5699 = vmatprep.subr.mxu0 0.0
        %5700 = vmatpush1.msra.mxu0 0.0
        %5701 = vmatprep.subr.mxu0 0.0
        %5702 = vmatpush1.msra.mxu0 0.0
        %5703 = vmatprep.subr.mxu0 0.0
        %5704 = vmatpush1.msra.mxu0 0.0
        %5705 = vmatprep.subr.mxu0 0.0
        %5706 = vmatpush1.msra.mxu0 0.0
        %5707 = vmatprep.subr.mxu0 0.0
        %5708 = vmatpush1.msra.mxu0 0.0
        %5709 = vmatprep.subr.mxu0 0.0
        %5710 = vmatpush1.msra.mxu0 0.0
        %5711 = vmatprep.subr.mxu0 0.0
        %5712 = vmatpush1.msra.mxu0 0.0
        %5713 = vmatprep.subr.mxu0 0.0
        %5714 = vmatpush1.msra.mxu0 0.0
        %5715 = vmatprep.subr.mxu0 0.0
        %5716 = vmatpush1.msra.mxu0 0.0
        %5717 = vmatprep.subr.mxu0 0.0
        %5718 = vmatpush1.msra.mxu0 0.0
        %5719 = vmatprep.subr.mxu0 0.0
        %5720 = vmatpush1.msra.mxu0 0.0
        %5721 = vmatprep.subr.mxu0 0.0
        %5722 = vmatpush1.msra.mxu0 0.0
        %5723 = vmatprep.subr.mxu0 0.0
        %5724 = vmatpush1.msra.mxu0 0.0
        %5725 = vmatprep.subr.mxu0 0.0
        %5726 = vmatpush1.msra.mxu0 0.0
        %5727 = vmatprep.subr.mxu0 0.0
        %5728 = vmatpush1.msra.mxu0 0.0
        %5729 = vmatprep.subr.mxu0 %v5693
        %5730 = vmatpush1.msra.mxu0 %v5692
        %5731 = vmatprep.subr.mxu0 0.0
        %5732 = vmatpush2.msra.mxu0 0.0
        %5733 = vmatprep.subr.mxu0 0.0
        %5734 = vmatpush2.msra.mxu0 0.0
        %5735 = vmatprep.subr.mxu0 0.0
        %5736 = vmatpush2.msra.mxu0 0.0
        %5737 = vmatprep.subr.mxu0 0.0
        %5738 = vmatpush2.msra.mxu0 0.0
        %5739 = vmatprep.subr.mxu0 0.0
        %5740 = vmatpush2.msra.mxu0 0.0
        %5741 = vmatprep.subr.mxu0 0.0
        %5742 = vmatpush2.msra.mxu0 0.0
        %5743 = vmatprep.subr.mxu0 0.0
        %5744 = vmatpush2.msra.mxu0 0.0
        %5745 = vmatprep.subr.mxu0 0.0
        %5746 = vmatpush2.msra.mxu0 0.0
        %5747 = vmatprep.subr.mxu0 0.0
        %5748 = vmatpush2.msra.mxu0 0.0
        %5749 = vmatprep.subr.mxu0 0.0
        %5750 = vmatpush2.msra.mxu0 0.0
        %5751 = vmatprep.subr.mxu0 0.0
        %5752 = vmatpush2.msra.mxu0 0.0
        %5753 = vmatprep.subr.mxu0 0.0
        %5754 = vmatpush2.msra.mxu0 0.0
        %5755 = vmatprep.subr.mxu0 0.0
        %5756 = vmatpush2.msra.mxu0 0.0
        %5757 = vmatprep.subr.mxu0 0.0
        %5758 = vmatpush2.msra.mxu0 0.0
        %5759 = vmatprep.subr.mxu0 0.0
        %5760 = vmatpush2.msra.mxu0 0.0
        %5761 = vmatprep.subr.mxu0 0.0
        %5762 = vmatpush2.msra.mxu0 0.0
        %5763 = vmatprep.mubr.f32.mxu0 0.0
        %5764 = vmatmul.mubr.f32.gmra.mxu0 %v5697
        %v5765 = vpop.f32.mrf.mxu0
        %v5766 = vadd.f32 0.0, %v5765
        %v5767 = vpop.f32.mrf.mxu0
        %v5768 = vadd.f32 0.0, %v5767
        %5769 = vdwg.mxu0
        %5770 = vmatprep.subr.mxu0 0.0
        %5771 = vmatpush1.msra.mxu0 0.0
        %5772 = vmatprep.subr.mxu0 0.0
        %5773 = vmatpush1.msra.mxu0 0.0
        %5774 = vmatprep.subr.mxu0 0.0
        %5775 = vmatpush1.msra.mxu0 0.0
        %5776 = vmatprep.subr.mxu0 0.0
        %5777 = vmatpush1.msra.mxu0 0.0
        %5778 = vmatprep.subr.mxu0 0.0
        %5779 = vmatpush1.msra.mxu0 0.0
        %5780 = vmatprep.subr.mxu0 0.0
        %5781 = vmatpush1.msra.mxu0 0.0
        %5782 = vmatprep.subr.mxu0 0.0
        %5783 = vmatpush1.msra.mxu0 0.0
        %5784 = vmatprep.subr.mxu0 0.0
        %5785 = vmatpush1.msra.mxu0 0.0
        %5786 = vmatprep.subr.mxu0 0.0
        %5787 = vmatpush1.msra.mxu0 0.0
        %5788 = vmatprep.subr.mxu0 0.0
        %5789 = vmatpush1.msra.mxu0 0.0
        %5790 = vmatprep.subr.mxu0 0.0
        %5791 = vmatpush1.msra.mxu0 0.0
        %5792 = vmatprep.subr.mxu0 0.0
        %5793 = vmatpush1.msra.mxu0 0.0
        %5794 = vmatprep.subr.mxu0 0.0
        %5795 = vmatpush1.msra.mxu0 0.0
        %5796 = vmatprep.subr.mxu0 0.0
        %5797 = vmatpush1.msra.mxu0 0.0
        %5798 = vmatprep.subr.mxu0 0.0
        %5799 = vmatpush1.msra.mxu0 0.0
        %5800 = vmatprep.subr.mxu0 0.0
        %5801 = vmatpush1.msra.mxu0 %v5691
        %5802 = vmatprep.subr.mxu0 0.0
        %5803 = vmatpush2.msra.mxu0 0.0
        %5804 = vmatprep.subr.mxu0 0.0
        %5805 = vmatpush2.msra.mxu0 0.0
        %5806 = vmatprep.subr.mxu0 0.0
        %5807 = vmatpush2.msra.mxu0 0.0
        %5808 = vmatprep.subr.mxu0 0.0
        %5809 = vmatpush2.msra.mxu0 0.0
        %5810 = vmatprep.subr.mxu0 0.0
        %5811 = vmatpush2.msra.mxu0 0.0
        %5812 = vmatprep.subr.mxu0 0.0
        %5813 = vmatpush2.msra.mxu0 0.0
        %5814 = vmatprep.subr.mxu0 0.0
        %5815 = vmatpush2.msra.mxu0 0.0
        %5816 = vmatprep.subr.mxu0 0.0
        %5817 = vmatpush2.msra.mxu0 0.0
        %5818 = vmatprep.subr.mxu0 0.0
        %5819 = vmatpush2.msra.mxu0 0.0
        %5820 = vmatprep.subr.mxu0 0.0
        %5821 = vmatpush2.msra.mxu0 0.0
        %5822 = vmatprep.subr.mxu0 0.0
        %5823 = vmatpush2.msra.mxu0 0.0
        %5824 = vmatprep.subr.mxu0 0.0
        %5825 = vmatpush2.msra.mxu0 0.0
        %5826 = vmatprep.subr.mxu0 0.0
        %5827 = vmatpush2.msra.mxu0 0.0
        %5828 = vmatprep.subr.mxu0 0.0
        %5829 = vmatpush2.msra.mxu0 0.0
        %5830 = vmatprep.subr.mxu0 0.0
        %5831 = vmatpush2.msra.mxu0 0.0
        %5832 = vmatprep.subr.mxu0 0.0
        %5833 = vmatpush2.msra.mxu0 0.0
        %5834 = vmatprep.mubr.f32.mxu0 0.0
        %5835 = vmatmul.mubr.f32.gmra.mxu0 %v5697
        %v5836 = vpop.f32.mrf.mxu0
        %v5837 = vadd.f32 0.0, %v5836
        %v5838 = vpop.f32.mrf.mxu0
        %5839 = vdwg.mxu0
        %v5840 = vadd.f32 %v5681, %v5766
        %v5841 = vadd.f32 %v5682, %v5768
        %v5842 = vadd.f32 %v5683, %v5837
        %v5843 = vmax.f32 %v5840, 0.0
        %v5844 = vmax.f32 %v5841, 0.0
        %v5845 = vmax.f32 %v5842, 0.0
        %v5846 = vsel %vm4377, %v5843, 0.0
        %v5847 = vsel %vm4378, %v5844, 0.0
        %v5848 = vsel %vm4379, %v5845, 0.0
        %5852 = vrot.lane.b32.xlu0 %v5846, 42
        %v5853 = vpop.permute.xlu0 %5852
        %5854 = vrot.lane.b32.xlu0 %v5847, 42
        %v5855 = vpop.permute.xlu0 %5854
        %5856 = vrot.lane.b32.xlu0 %v5848, 42
        %v5857 = vpop.permute.xlu0 %5856
        %v5858 = vsel %vm297, %v5853, %v5855
        %v5859 = vsel %vm297, %v5855, %v5857
        %5863 = vst.msk [vmem:[#allocation2] sm:$0xff] %vm320, %v5853
        %5864 = vst [vmem:[#allocation2 + $0x8] sm:$0xff] %v5858
        %5865 = vst.msk [vmem:[#allocation2 + $0x10] sm:$0xff] %vm323, %v5859
        %v5866 = vld [vmem:[%s6] sm:$0x7]
        %v5867 = vld [vmem:[#allocation2] sm:$0xff]
        %v5868 = vld [vmem:[#allocation2 + $0x8] sm:$0xff]
        %v5869 = vld [vmem:[#allocation2 + $0x10] sm:$0xff]
        %v5870 = vld [vmem:[%s5] sm:$0x7]
        %5874 = vrot.lane.b32.xlu0 %v5867, 107
        %v5875 = vpop.permute.xlu0 %5874
        %5876 = vrot.lane.b32.xlu0 %v5868, 107
        %v5877 = vpop.permute.xlu0 %5876
        %5878 = vrot.lane.b32.xlu0 %v5869, 107
        %v5879 = vpop.permute.xlu0 %5878
        %v5880 = vsel %vm1320, %v5875, %v5877
        %v5881 = vsel %vm1320, %v5877, %v5879
        %v5886 = vsel %vm356, %v5870, 0
        %5888 = vmatprep.subr.mxu0 0.0
        %5889 = vmatpush1.msra.mxu0 0.0
        %5890 = vmatprep.subr.mxu0 0.0
        %5891 = vmatpush1.msra.mxu0 0.0
        %5892 = vmatprep.subr.mxu0 0.0
        %5893 = vmatpush1.msra.mxu0 0.0
        %5894 = vmatprep.subr.mxu0 0.0
        %5895 = vmatpush1.msra.mxu0 0.0
        %5896 = vmatprep.subr.mxu0 0.0
        %5897 = vmatpush1.msra.mxu0 0.0
        %5898 = vmatprep.subr.mxu0 0.0
        %5899 = vmatpush1.msra.mxu0 0.0
        %5900 = vmatprep.subr.mxu0 0.0
        %5901 = vmatpush1.msra.mxu0 0.0
        %5902 = vmatprep.subr.mxu0 0.0
        %5903 = vmatpush1.msra.mxu0 0.0
        %5904 = vmatprep.subr.mxu0 0.0
        %5905 = vmatpush1.msra.mxu0 0.0
        %5906 = vmatprep.subr.mxu0 0.0
        %5907 = vmatpush1.msra.mxu0 0.0
        %5908 = vmatprep.subr.mxu0 0.0
        %5909 = vmatpush1.msra.mxu0 0.0
        %5910 = vmatprep.subr.mxu0 0.0
        %5911 = vmatpush1.msra.mxu0 0.0
        %5912 = vmatprep.subr.mxu0 0.0
        %5913 = vmatpush1.msra.mxu0 0.0
        %5914 = vmatprep.subr.mxu0 0.0
        %5915 = vmatpush1.msra.mxu0 0.0
        %5916 = vmatprep.subr.mxu0 0.0
        %5917 = vmatpush1.msra.mxu0 0.0
        %5918 = vmatprep.subr.mxu0 %v5881
        %5919 = vmatpush1.msra.mxu0 %v5880
        %5920 = vmatprep.subr.mxu0 0.0
        %5921 = vmatpush2.msra.mxu0 0.0
        %5922 = vmatprep.subr.mxu0 0.0
        %5923 = vmatpush2.msra.mxu0 0.0
        %5924 = vmatprep.subr.mxu0 0.0
        %5925 = vmatpush2.msra.mxu0 0.0
        %5926 = vmatprep.subr.mxu0 0.0
        %5927 = vmatpush2.msra.mxu0 0.0
        %5928 = vmatprep.subr.mxu0 0.0
        %5929 = vmatpush2.msra.mxu0 0.0
        %5930 = vmatprep.subr.mxu0 0.0
        %5931 = vmatpush2.msra.mxu0 0.0
        %5932 = vmatprep.subr.mxu0 0.0
        %5933 = vmatpush2.msra.mxu0 0.0
        %5934 = vmatprep.subr.mxu0 0.0
        %5935 = vmatpush2.msra.mxu0 0.0
        %5936 = vmatprep.subr.mxu0 0.0
        %5937 = vmatpush2.msra.mxu0 0.0
        %5938 = vmatprep.subr.mxu0 0.0
        %5939 = vmatpush2.msra.mxu0 0.0
        %5940 = vmatprep.subr.mxu0 0.0
        %5941 = vmatpush2.msra.mxu0 0.0
        %5942 = vmatprep.subr.mxu0 0.0
        %5943 = vmatpush2.msra.mxu0 0.0
        %5944 = vmatprep.subr.mxu0 0.0
        %5945 = vmatpush2.msra.mxu0 0.0
        %5946 = vmatprep.subr.mxu0 0.0
        %5947 = vmatpush2.msra.mxu0 0.0
        %5948 = vmatprep.subr.mxu0 0.0
        %5949 = vmatpush2.msra.mxu0 0.0
        %5950 = vmatprep.subr.mxu0 0.0
        %5951 = vmatpush2.msra.mxu0 0.0
        %5952 = vmatprep.mubr.f32.mxu0 0.0
        %5953 = vmatmul.mubr.f32.gmra.mxu0 %v5886
        %v5954 = vpop.f32.mrf.mxu0
        %v5955 = vadd.f32 0.0, %v5954
        %v5956 = vpop.f32.mrf.mxu0
        %v5957 = vadd.f32 0.0, %v5956
        %5958 = vdwg.mxu0
        %5959 = vmatprep.subr.mxu0 0.0
        %5960 = vmatpush1.msra.mxu0 0.0
        %5961 = vmatprep.subr.mxu0 0.0
        %5962 = vmatpush1.msra.mxu0 0.0
        %5963 = vmatprep.subr.mxu0 0.0
        %5964 = vmatpush1.msra.mxu0 0.0
        %5965 = vmatprep.subr.mxu0 0.0
        %5966 = vmatpush1.msra.mxu0 0.0
        %5967 = vmatprep.subr.mxu0 0.0
        %5968 = vmatpush1.msra.mxu0 0.0
        %5969 = vmatprep.subr.mxu0 0.0
        %5970 = vmatpush1.msra.mxu0 0.0
        %5971 = vmatprep.subr.mxu0 0.0
        %5972 = vmatpush1.msra.mxu0 0.0
        %5973 = vmatprep.subr.mxu0 0.0
        %5974 = vmatpush1.msra.mxu0 0.0
        %5975 = vmatprep.subr.mxu0 0.0
        %5976 = vmatpush1.msra.mxu0 0.0
        %5977 = vmatprep.subr.mxu0 0.0
        %5978 = vmatpush1.msra.mxu0 0.0
        %5979 = vmatprep.subr.mxu0 0.0
        %5980 = vmatpush1.msra.mxu0 0.0
        %5981 = vmatprep.subr.mxu0 0.0
        %5982 = vmatpush1.msra.mxu0 0.0
        %5983 = vmatprep.subr.mxu0 0.0
        %5984 = vmatpush1.msra.mxu0 0.0
        %5985 = vmatprep.subr.mxu0 0.0
        %5986 = vmatpush1.msra.mxu0 0.0
        %5987 = vmatprep.subr.mxu0 0.0
        %5988 = vmatpush1.msra.mxu0 0.0
        %5989 = vmatprep.subr.mxu0 0.0
        %5990 = vmatpush1.msra.mxu0 %v5879
        %5991 = vmatprep.subr.mxu0 0.0
        %5992 = vmatpush2.msra.mxu0 0.0
        %5993 = vmatprep.subr.mxu0 0.0
        %5994 = vmatpush2.msra.mxu0 0.0
        %5995 = vmatprep.subr.mxu0 0.0
        %5996 = vmatpush2.msra.mxu0 0.0
        %5997 = vmatprep.subr.mxu0 0.0
        %5998 = vmatpush2.msra.mxu0 0.0
        %5999 = vmatprep.subr.mxu0 0.0
        %6000 = vmatpush2.msra.mxu0 0.0
        %6001 = vmatprep.subr.mxu0 0.0
        %6002 = vmatpush2.msra.mxu0 0.0
        %6003 = vmatprep.subr.mxu0 0.0
        %6004 = vmatpush2.msra.mxu0 0.0
        %6005 = vmatprep.subr.mxu0 0.0
        %6006 = vmatpush2.msra.mxu0 0.0
        %6007 = vmatprep.subr.mxu0 0.0
        %6008 = vmatpush2.msra.mxu0 0.0
        %6009 = vmatprep.subr.mxu0 0.0
        %6010 = vmatpush2.msra.mxu0 0.0
        %6011 = vmatprep.subr.mxu0 0.0
        %6012 = vmatpush2.msra.mxu0 0.0
        %6013 = vmatprep.subr.mxu0 0.0
        %6014 = vmatpush2.msra.mxu0 0.0
        %6015 = vmatprep.subr.mxu0 0.0
        %6016 = vmatpush2.msra.mxu0 0.0
        %6017 = vmatprep.subr.mxu0 0.0
        %6018 = vmatpush2.msra.mxu0 0.0
        %6019 = vmatprep.subr.mxu0 0.0
        %6020 = vmatpush2.msra.mxu0 0.0
        %6021 = vmatprep.subr.mxu0 0.0
        %6022 = vmatpush2.msra.mxu0 0.0
        %6023 = vmatprep.mubr.f32.mxu0 0.0
        %6024 = vmatmul.mubr.f32.gmra.mxu0 %v5886
        %v6025 = vpop.f32.mrf.mxu0
        %v6026 = vadd.f32 0.0, %v6025
        %v6027 = vpop.f32.mrf.mxu0
        %6028 = vdwg.mxu0
        %6030 = vset.pattern.permute.xlu0 0
        %6031 = vperm.xlu0 %6030, %v5866
        %v6032 = vpop.permute.xlu0 %6031
        %v6034 = vadd.f32 %v6032, %v5955
        %v6035 = vadd.f32 %v6032, %v5957
        %v6036 = vadd.f32 %v6032, %v6026
        %6037 = vrot.lane.b32.xlu0 %v5870, 120
        %v6038 = vpop.permute.xlu0 %6037
        %6039 = vrot.lane.b32.xlu0 %v5867, 106
        %v6040 = vpop.permute.xlu0 %6039
        %6041 = vrot.lane.b32.xlu0 %v5868, 106
        %v6042 = vpop.permute.xlu0 %6041
        %6043 = vrot.lane.b32.xlu0 %v5869, 106
        %v6044 = vpop.permute.xlu0 %6043
        %v6045 = vsel %vm323, %v6040, %v6042
        %v6046 = vsel %vm323, %v6042, %v6044
        %v6050 = vsel %vm356, %v6038, 0
        %6052 = vmatprep.subr.mxu0 0.0
        %6053 = vmatpush1.msra.mxu0 0.0
        %6054 = vmatprep.subr.mxu0 0.0
        %6055 = vmatpush1.msra.mxu0 0.0
        %6056 = vmatprep.subr.mxu0 0.0
        %6057 = vmatpush1.msra.mxu0 0.0
        %6058 = vmatprep.subr.mxu0 0.0
        %6059 = vmatpush1.msra.mxu0 0.0
        %6060 = vmatprep.subr.mxu0 0.0
        %6061 = vmatpush1.msra.mxu0 0.0
        %6062 = vmatprep.subr.mxu0 0.0
        %6063 = vmatpush1.msra.mxu0 0.0
        %6064 = vmatprep.subr.mxu0 0.0
        %6065 = vmatpush1.msra.mxu0 0.0
        %6066 = vmatprep.subr.mxu0 0.0
        %6067 = vmatpush1.msra.mxu0 0.0
        %6068 = vmatprep.subr.mxu0 0.0
        %6069 = vmatpush1.msra.mxu0 0.0
        %6070 = vmatprep.subr.mxu0 0.0
        %6071 = vmatpush1.msra.mxu0 0.0
        %6072 = vmatprep.subr.mxu0 0.0
        %6073 = vmatpush1.msra.mxu0 0.0
        %6074 = vmatprep.subr.mxu0 0.0
        %6075 = vmatpush1.msra.mxu0 0.0
        %6076 = vmatprep.subr.mxu0 0.0
        %6077 = vmatpush1.msra.mxu0 0.0
        %6078 = vmatprep.subr.mxu0 0.0
        %6079 = vmatpush1.msra.mxu0 0.0
        %6080 = vmatprep.subr.mxu0 0.0
        %6081 = vmatpush1.msra.mxu0 0.0
        %6082 = vmatprep.subr.mxu0 %v6046
        %6083 = vmatpush1.msra.mxu0 %v6045
        %6084 = vmatprep.subr.mxu0 0.0
        %6085 = vmatpush2.msra.mxu0 0.0
        %6086 = vmatprep.subr.mxu0 0.0
        %6087 = vmatpush2.msra.mxu0 0.0
        %6088 = vmatprep.subr.mxu0 0.0
        %6089 = vmatpush2.msra.mxu0 0.0
        %6090 = vmatprep.subr.mxu0 0.0
        %6091 = vmatpush2.msra.mxu0 0.0
        %6092 = vmatprep.subr.mxu0 0.0
        %6093 = vmatpush2.msra.mxu0 0.0
        %6094 = vmatprep.subr.mxu0 0.0
        %6095 = vmatpush2.msra.mxu0 0.0
        %6096 = vmatprep.subr.mxu0 0.0
        %6097 = vmatpush2.msra.mxu0 0.0
        %6098 = vmatprep.subr.mxu0 0.0
        %6099 = vmatpush2.msra.mxu0 0.0
        %6100 = vmatprep.subr.mxu0 0.0
        %6101 = vmatpush2.msra.mxu0 0.0
        %6102 = vmatprep.subr.mxu0 0.0
        %6103 = vmatpush2.msra.mxu0 0.0
        %6104 = vmatprep.subr.mxu0 0.0
        %6105 = vmatpush2.msra.mxu0 0.0
        %6106 = vmatprep.subr.mxu0 0.0
        %6107 = vmatpush2.msra.mxu0 0.0
        %6108 = vmatprep.subr.mxu0 0.0
        %6109 = vmatpush2.msra.mxu0 0.0
        %6110 = vmatprep.subr.mxu0 0.0
        %6111 = vmatpush2.msra.mxu0 0.0
        %6112 = vmatprep.subr.mxu0 0.0
        %6113 = vmatpush2.msra.mxu0 0.0
        %6114 = vmatprep.subr.mxu0 0.0
        %6115 = vmatpush2.msra.mxu0 0.0
        %6116 = vmatprep.mubr.f32.mxu0 0.0
        %6117 = vmatmul.mubr.f32.gmra.mxu0 %v6050
        %v6118 = vpop.f32.mrf.mxu0
        %v6119 = vadd.f32 0.0, %v6118
        %v6120 = vpop.f32.mrf.mxu0
        %v6121 = vadd.f32 0.0, %v6120
        %6122 = vdwg.mxu0
        %6123 = vmatprep.subr.mxu0 0.0
        %6124 = vmatpush1.msra.mxu0 0.0
        %6125 = vmatprep.subr.mxu0 0.0
        %6126 = vmatpush1.msra.mxu0 0.0
        %6127 = vmatprep.subr.mxu0 0.0
        %6128 = vmatpush1.msra.mxu0 0.0
        %6129 = vmatprep.subr.mxu0 0.0
        %6130 = vmatpush1.msra.mxu0 0.0
        %6131 = vmatprep.subr.mxu0 0.0
        %6132 = vmatpush1.msra.mxu0 0.0
        %6133 = vmatprep.subr.mxu0 0.0
        %6134 = vmatpush1.msra.mxu0 0.0
        %6135 = vmatprep.subr.mxu0 0.0
        %6136 = vmatpush1.msra.mxu0 0.0
        %6137 = vmatprep.subr.mxu0 0.0
        %6138 = vmatpush1.msra.mxu0 0.0
        %6139 = vmatprep.subr.mxu0 0.0
        %6140 = vmatpush1.msra.mxu0 0.0
        %6141 = vmatprep.subr.mxu0 0.0
        %6142 = vmatpush1.msra.mxu0 0.0
        %6143 = vmatprep.subr.mxu0 0.0
        %6144 = vmatpush1.msra.mxu0 0.0
        %6145 = vmatprep.subr.mxu0 0.0
        %6146 = vmatpush1.msra.mxu0 0.0
        %6147 = vmatprep.subr.mxu0 0.0
        %6148 = vmatpush1.msra.mxu0 0.0
        %6149 = vmatprep.subr.mxu0 0.0
        %6150 = vmatpush1.msra.mxu0 0.0
        %6151 = vmatprep.subr.mxu0 0.0
        %6152 = vmatpush1.msra.mxu0 0.0
        %6153 = vmatprep.subr.mxu0 0.0
        %6154 = vmatpush1.msra.mxu0 %v6044
        %6155 = vmatprep.subr.mxu0 0.0
        %6156 = vmatpush2.msra.mxu0 0.0
        %6157 = vmatprep.subr.mxu0 0.0
        %6158 = vmatpush2.msra.mxu0 0.0
        %6159 = vmatprep.subr.mxu0 0.0
        %6160 = vmatpush2.msra.mxu0 0.0
        %6161 = vmatprep.subr.mxu0 0.0
        %6162 = vmatpush2.msra.mxu0 0.0
        %6163 = vmatprep.subr.mxu0 0.0
        %6164 = vmatpush2.msra.mxu0 0.0
        %6165 = vmatprep.subr.mxu0 0.0
        %6166 = vmatpush2.msra.mxu0 0.0
        %6167 = vmatprep.subr.mxu0 0.0
        %6168 = vmatpush2.msra.mxu0 0.0
        %6169 = vmatprep.subr.mxu0 0.0
        %6170 = vmatpush2.msra.mxu0 0.0
        %6171 = vmatprep.subr.mxu0 0.0
        %6172 = vmatpush2.msra.mxu0 0.0
        %6173 = vmatprep.subr.mxu0 0.0
        %6174 = vmatpush2.msra.mxu0 0.0
        %6175 = vmatprep.subr.mxu0 0.0
        %6176 = vmatpush2.msra.mxu0 0.0
        %6177 = vmatprep.subr.mxu0 0.0
        %6178 = vmatpush2.msra.mxu0 0.0
        %6179 = vmatprep.subr.mxu0 0.0
        %6180 = vmatpush2.msra.mxu0 0.0
        %6181 = vmatprep.subr.mxu0 0.0
        %6182 = vmatpush2.msra.mxu0 0.0
        %6183 = vmatprep.subr.mxu0 0.0
        %6184 = vmatpush2.msra.mxu0 0.0
        %6185 = vmatprep.subr.mxu0 0.0
        %6186 = vmatpush2.msra.mxu0 0.0
        %6187 = vmatprep.mubr.f32.mxu0 0.0
        %6188 = vmatmul.mubr.f32.gmra.mxu0 %v6050
        %v6189 = vpop.f32.mrf.mxu0
        %v6190 = vadd.f32 0.0, %v6189
        %v6191 = vpop.f32.mrf.mxu0
        %6192 = vdwg.mxu0
        %v6193 = vadd.f32 %v6034, %v6119
        %v6194 = vadd.f32 %v6035, %v6121
        %v6195 = vadd.f32 %v6036, %v6190
        %6196 = vrot.lane.b32.xlu0 %v5870, 112
        %v6197 = vpop.permute.xlu0 %6196
        %6198 = vrot.lane.b32.xlu0 %v5867, 105
        %v6199 = vpop.permute.xlu0 %6198
        %6200 = vrot.lane.b32.xlu0 %v5868, 105
        %v6201 = vpop.permute.xlu0 %6200
        %6202 = vrot.lane.b32.xlu0 %v5869, 105
        %v6203 = vpop.permute.xlu0 %6202
        %v6204 = vsel %vm1639, %v6199, %v6201
        %v6205 = vsel %vm1639, %v6201, %v6203
        %v6209 = vsel %vm356, %v6197, 0
        %6211 = vmatprep.subr.mxu0 0.0
        %6212 = vmatpush1.msra.mxu0 0.0
        %6213 = vmatprep.subr.mxu0 0.0
        %6214 = vmatpush1.msra.mxu0 0.0
        %6215 = vmatprep.subr.mxu0 0.0
        %6216 = vmatpush1.msra.mxu0 0.0
        %6217 = vmatprep.subr.mxu0 0.0
        %6218 = vmatpush1.msra.mxu0 0.0
        %6219 = vmatprep.subr.mxu0 0.0
        %6220 = vmatpush1.msra.mxu0 0.0
        %6221 = vmatprep.subr.mxu0 0.0
        %6222 = vmatpush1.msra.mxu0 0.0
        %6223 = vmatprep.subr.mxu0 0.0
        %6224 = vmatpush1.msra.mxu0 0.0
        %6225 = vmatprep.subr.mxu0 0.0
        %6226 = vmatpush1.msra.mxu0 0.0
        %6227 = vmatprep.subr.mxu0 0.0
        %6228 = vmatpush1.msra.mxu0 0.0
        %6229 = vmatprep.subr.mxu0 0.0
        %6230 = vmatpush1.msra.mxu0 0.0
        %6231 = vmatprep.subr.mxu0 0.0
        %6232 = vmatpush1.msra.mxu0 0.0
        %6233 = vmatprep.subr.mxu0 0.0
        %6234 = vmatpush1.msra.mxu0 0.0
        %6235 = vmatprep.subr.mxu0 0.0
        %6236 = vmatpush1.msra.mxu0 0.0
        %6237 = vmatprep.subr.mxu0 0.0
        %6238 = vmatpush1.msra.mxu0 0.0
        %6239 = vmatprep.subr.mxu0 0.0
        %6240 = vmatpush1.msra.mxu0 0.0
        %6241 = vmatprep.subr.mxu0 %v6205
        %6242 = vmatpush1.msra.mxu0 %v6204
        %6243 = vmatprep.subr.mxu0 0.0
        %6244 = vmatpush2.msra.mxu0 0.0
        %6245 = vmatprep.subr.mxu0 0.0
        %6246 = vmatpush2.msra.mxu0 0.0
        %6247 = vmatprep.subr.mxu0 0.0
        %6248 = vmatpush2.msra.mxu0 0.0
        %6249 = vmatprep.subr.mxu0 0.0
        %6250 = vmatpush2.msra.mxu0 0.0
        %6251 = vmatprep.subr.mxu0 0.0
        %6252 = vmatpush2.msra.mxu0 0.0
        %6253 = vmatprep.subr.mxu0 0.0
        %6254 = vmatpush2.msra.mxu0 0.0
        %6255 = vmatprep.subr.mxu0 0.0
        %6256 = vmatpush2.msra.mxu0 0.0
        %6257 = vmatprep.subr.mxu0 0.0
        %6258 = vmatpush2.msra.mxu0 0.0
        %6259 = vmatprep.subr.mxu0 0.0
        %6260 = vmatpush2.msra.mxu0 0.0
        %6261 = vmatprep.subr.mxu0 0.0
        %6262 = vmatpush2.msra.mxu0 0.0
        %6263 = vmatprep.subr.mxu0 0.0
        %6264 = vmatpush2.msra.mxu0 0.0
        %6265 = vmatprep.subr.mxu0 0.0
        %6266 = vmatpush2.msra.mxu0 0.0
        %6267 = vmatprep.subr.mxu0 0.0
        %6268 = vmatpush2.msra.mxu0 0.0
        %6269 = vmatprep.subr.mxu0 0.0
        %6270 = vmatpush2.msra.mxu0 0.0
        %6271 = vmatprep.subr.mxu0 0.0
        %6272 = vmatpush2.msra.mxu0 0.0
        %6273 = vmatprep.subr.mxu0 0.0
        %6274 = vmatpush2.msra.mxu0 0.0
        %6275 = vmatprep.mubr.f32.mxu0 0.0
        %6276 = vmatmul.mubr.f32.gmra.mxu0 %v6209
        %v6277 = vpop.f32.mrf.mxu0
        %v6278 = vadd.f32 0.0, %v6277
        %v6279 = vpop.f32.mrf.mxu0
        %v6280 = vadd.f32 0.0, %v6279
        %6281 = vdwg.mxu0
        %6282 = vmatprep.subr.mxu0 0.0
        %6283 = vmatpush1.msra.mxu0 0.0
        %6284 = vmatprep.subr.mxu0 0.0
        %6285 = vmatpush1.msra.mxu0 0.0
        %6286 = vmatprep.subr.mxu0 0.0
        %6287 = vmatpush1.msra.mxu0 0.0
        %6288 = vmatprep.subr.mxu0 0.0
        %6289 = vmatpush1.msra.mxu0 0.0
        %6290 = vmatprep.subr.mxu0 0.0
        %6291 = vmatpush1.msra.mxu0 0.0
        %6292 = vmatprep.subr.mxu0 0.0
        %6293 = vmatpush1.msra.mxu0 0.0
        %6294 = vmatprep.subr.mxu0 0.0
        %6295 = vmatpush1.msra.mxu0 0.0
        %6296 = vmatprep.subr.mxu0 0.0
        %6297 = vmatpush1.msra.mxu0 0.0
        %6298 = vmatprep.subr.mxu0 0.0
        %6299 = vmatpush1.msra.mxu0 0.0
        %6300 = vmatprep.subr.mxu0 0.0
        %6301 = vmatpush1.msra.mxu0 0.0
        %6302 = vmatprep.subr.mxu0 0.0
        %6303 = vmatpush1.msra.mxu0 0.0
        %6304 = vmatprep.subr.mxu0 0.0
        %6305 = vmatpush1.msra.mxu0 0.0
        %6306 = vmatprep.subr.mxu0 0.0
        %6307 = vmatpush1.msra.mxu0 0.0
        %6308 = vmatprep.subr.mxu0 0.0
        %6309 = vmatpush1.msra.mxu0 0.0
        %6310 = vmatprep.subr.mxu0 0.0
        %6311 = vmatpush1.msra.mxu0 0.0
        %6312 = vmatprep.subr.mxu0 0.0
        %6313 = vmatpush1.msra.mxu0 %v6203
        %6314 = vmatprep.subr.mxu0 0.0
        %6315 = vmatpush2.msra.mxu0 0.0
        %6316 = vmatprep.subr.mxu0 0.0
        %6317 = vmatpush2.msra.mxu0 0.0
        %6318 = vmatprep.subr.mxu0 0.0
        %6319 = vmatpush2.msra.mxu0 0.0
        %6320 = vmatprep.subr.mxu0 0.0
        %6321 = vmatpush2.msra.mxu0 0.0
        %6322 = vmatprep.subr.mxu0 0.0
        %6323 = vmatpush2.msra.mxu0 0.0
        %6324 = vmatprep.subr.mxu0 0.0
        %6325 = vmatpush2.msra.mxu0 0.0
        %6326 = vmatprep.subr.mxu0 0.0
        %6327 = vmatpush2.msra.mxu0 0.0
        %6328 = vmatprep.subr.mxu0 0.0
        %6329 = vmatpush2.msra.mxu0 0.0
        %6330 = vmatprep.subr.mxu0 0.0
        %6331 = vmatpush2.msra.mxu0 0.0
        %6332 = vmatprep.subr.mxu0 0.0
        %6333 = vmatpush2.msra.mxu0 0.0
        %6334 = vmatprep.subr.mxu0 0.0
        %6335 = vmatpush2.msra.mxu0 0.0
        %6336 = vmatprep.subr.mxu0 0.0
        %6337 = vmatpush2.msra.mxu0 0.0
        %6338 = vmatprep.subr.mxu0 0.0
        %6339 = vmatpush2.msra.mxu0 0.0
        %6340 = vmatprep.subr.mxu0 0.0
        %6341 = vmatpush2.msra.mxu0 0.0
        %6342 = vmatprep.subr.mxu0 0.0
        %6343 = vmatpush2.msra.mxu0 0.0
        %6344 = vmatprep.subr.mxu0 0.0
        %6345 = vmatpush2.msra.mxu0 0.0
        %6346 = vmatprep.mubr.f32.mxu0 0.0
        %6347 = vmatmul.mubr.f32.gmra.mxu0 %v6209
        %v6348 = vpop.f32.mrf.mxu0
        %v6349 = vadd.f32 0.0, %v6348
        %v6350 = vpop.f32.mrf.mxu0
        %6351 = vdwg.mxu0
        %v6352 = vadd.f32 %v6193, %v6278
        %v6353 = vadd.f32 %v6194, %v6280
        %v6354 = vadd.f32 %v6195, %v6349
        %6355 = vrot.lane.b32.xlu0 %v5870, 104
        %v6356 = vpop.permute.xlu0 %6355
        %6357 = vrot.lane.b32.xlu0 %v5867, 87
        %v6358 = vpop.permute.xlu0 %6357
        %6359 = vrot.lane.b32.xlu0 %v5868, 87
        %v6360 = vpop.permute.xlu0 %6359
        %6361 = vrot.lane.b32.xlu0 %v5869, 87
        %v6362 = vpop.permute.xlu0 %6361
        %v6363 = vsel %vm2119, %v6358, %v6360
        %v6364 = vsel %vm2119, %v6360, %v6362
        %v6368 = vsel %vm356, %v6356, 0
        %6370 = vmatprep.subr.mxu0 0.0
        %6371 = vmatpush1.msra.mxu0 0.0
        %6372 = vmatprep.subr.mxu0 0.0
        %6373 = vmatpush1.msra.mxu0 0.0
        %6374 = vmatprep.subr.mxu0 0.0
        %6375 = vmatpush1.msra.mxu0 0.0
        %6376 = vmatprep.subr.mxu0 0.0
        %6377 = vmatpush1.msra.mxu0 0.0
        %6378 = vmatprep.subr.mxu0 0.0
        %6379 = vmatpush1.msra.mxu0 0.0
        %6380 = vmatprep.subr.mxu0 0.0
        %6381 = vmatpush1.msra.mxu0 0.0
        %6382 = vmatprep.subr.mxu0 0.0
        %6383 = vmatpush1.msra.mxu0 0.0
        %6384 = vmatprep.subr.mxu0 0.0
        %6385 = vmatpush1.msra.mxu0 0.0
        %6386 = vmatprep.subr.mxu0 0.0
        %6387 = vmatpush1.msra.mxu0 0.0
        %6388 = vmatprep.subr.mxu0 0.0
        %6389 = vmatpush1.msra.mxu0 0.0
        %6390 = vmatprep.subr.mxu0 0.0
        %6391 = vmatpush1.msra.mxu0 0.0
        %6392 = vmatprep.subr.mxu0 0.0
        %6393 = vmatpush1.msra.mxu0 0.0
        %6394 = vmatprep.subr.mxu0 0.0
        %6395 = vmatpush1.msra.mxu0 0.0
        %6396 = vmatprep.subr.mxu0 0.0
        %6397 = vmatpush1.msra.mxu0 0.0
        %6398 = vmatprep.subr.mxu0 0.0
        %6399 = vmatpush1.msra.mxu0 0.0
        %6400 = vmatprep.subr.mxu0 %v6364
        %6401 = vmatpush1.msra.mxu0 %v6363
        %6402 = vmatprep.subr.mxu0 0.0
        %6403 = vmatpush2.msra.mxu0 0.0
        %6404 = vmatprep.subr.mxu0 0.0
        %6405 = vmatpush2.msra.mxu0 0.0
        %6406 = vmatprep.subr.mxu0 0.0
        %6407 = vmatpush2.msra.mxu0 0.0
        %6408 = vmatprep.subr.mxu0 0.0
        %6409 = vmatpush2.msra.mxu0 0.0
        %6410 = vmatprep.subr.mxu0 0.0
        %6411 = vmatpush2.msra.mxu0 0.0
        %6412 = vmatprep.subr.mxu0 0.0
        %6413 = vmatpush2.msra.mxu0 0.0
        %6414 = vmatprep.subr.mxu0 0.0
        %6415 = vmatpush2.msra.mxu0 0.0
        %6416 = vmatprep.subr.mxu0 0.0
        %6417 = vmatpush2.msra.mxu0 0.0
        %6418 = vmatprep.subr.mxu0 0.0
        %6419 = vmatpush2.msra.mxu0 0.0
        %6420 = vmatprep.subr.mxu0 0.0
        %6421 = vmatpush2.msra.mxu0 0.0
        %6422 = vmatprep.subr.mxu0 0.0
        %6423 = vmatpush2.msra.mxu0 0.0
        %6424 = vmatprep.subr.mxu0 0.0
        %6425 = vmatpush2.msra.mxu0 0.0
        %6426 = vmatprep.subr.mxu0 0.0
        %6427 = vmatpush2.msra.mxu0 0.0
        %6428 = vmatprep.subr.mxu0 0.0
        %6429 = vmatpush2.msra.mxu0 0.0
        %6430 = vmatprep.subr.mxu0 0.0
        %6431 = vmatpush2.msra.mxu0 0.0
        %6432 = vmatprep.subr.mxu0 0.0
        %6433 = vmatpush2.msra.mxu0 0.0
        %6434 = vmatprep.mubr.f32.mxu0 0.0
        %6435 = vmatmul.mubr.f32.gmra.mxu0 %v6368
        %v6436 = vpop.f32.mrf.mxu0
        %v6437 = vadd.f32 0.0, %v6436
        %v6438 = vpop.f32.mrf.mxu0
        %v6439 = vadd.f32 0.0, %v6438
        %6440 = vdwg.mxu0
        %6441 = vmatprep.subr.mxu0 0.0
        %6442 = vmatpush1.msra.mxu0 0.0
        %6443 = vmatprep.subr.mxu0 0.0
        %6444 = vmatpush1.msra.mxu0 0.0
        %6445 = vmatprep.subr.mxu0 0.0
        %6446 = vmatpush1.msra.mxu0 0.0
        %6447 = vmatprep.subr.mxu0 0.0
        %6448 = vmatpush1.msra.mxu0 0.0
        %6449 = vmatprep.subr.mxu0 0.0
        %6450 = vmatpush1.msra.mxu0 0.0
        %6451 = vmatprep.subr.mxu0 0.0
        %6452 = vmatpush1.msra.mxu0 0.0
        %6453 = vmatprep.subr.mxu0 0.0
        %6454 = vmatpush1.msra.mxu0 0.0
        %6455 = vmatprep.subr.mxu0 0.0
        %6456 = vmatpush1.msra.mxu0 0.0
        %6457 = vmatprep.subr.mxu0 0.0
        %6458 = vmatpush1.msra.mxu0 0.0
        %6459 = vmatprep.subr.mxu0 0.0
        %6460 = vmatpush1.msra.mxu0 0.0
        %6461 = vmatprep.subr.mxu0 0.0
        %6462 = vmatpush1.msra.mxu0 0.0
        %6463 = vmatprep.subr.mxu0 0.0
        %6464 = vmatpush1.msra.mxu0 0.0
        %6465 = vmatprep.subr.mxu0 0.0
        %6466 = vmatpush1.msra.mxu0 0.0
        %6467 = vmatprep.subr.mxu0 0.0
        %6468 = vmatpush1.msra.mxu0 0.0
        %6469 = vmatprep.subr.mxu0 0.0
        %6470 = vmatpush1.msra.mxu0 0.0
        %6471 = vmatprep.subr.mxu0 0.0
        %6472 = vmatpush1.msra.mxu0 %v6362
        %6473 = vmatprep.subr.mxu0 0.0
        %6474 = vmatpush2.msra.mxu0 0.0
        %6475 = vmatprep.subr.mxu0 0.0
        %6476 = vmatpush2.msra.mxu0 0.0
        %6477 = vmatprep.subr.mxu0 0.0
        %6478 = vmatpush2.msra.mxu0 0.0
        %6479 = vmatprep.subr.mxu0 0.0
        %6480 = vmatpush2.msra.mxu0 0.0
        %6481 = vmatprep.subr.mxu0 0.0
        %6482 = vmatpush2.msra.mxu0 0.0
        %6483 = vmatprep.subr.mxu0 0.0
        %6484 = vmatpush2.msra.mxu0 0.0
        %6485 = vmatprep.subr.mxu0 0.0
        %6486 = vmatpush2.msra.mxu0 0.0
        %6487 = vmatprep.subr.mxu0 0.0
        %6488 = vmatpush2.msra.mxu0 0.0
        %6489 = vmatprep.subr.mxu0 0.0
        %6490 = vmatpush2.msra.mxu0 0.0
        %6491 = vmatprep.subr.mxu0 0.0
        %6492 = vmatpush2.msra.mxu0 0.0
        %6493 = vmatprep.subr.mxu0 0.0
        %6494 = vmatpush2.msra.mxu0 0.0
        %6495 = vmatprep.subr.mxu0 0.0
        %6496 = vmatpush2.msra.mxu0 0.0
        %6497 = vmatprep.subr.mxu0 0.0
        %6498 = vmatpush2.msra.mxu0 0.0
        %6499 = vmatprep.subr.mxu0 0.0
        %6500 = vmatpush2.msra.mxu0 0.0
        %6501 = vmatprep.subr.mxu0 0.0
        %6502 = vmatpush2.msra.mxu0 0.0
        %6503 = vmatprep.subr.mxu0 0.0
        %6504 = vmatpush2.msra.mxu0 0.0
        %6505 = vmatprep.mubr.f32.mxu0 0.0
        %6506 = vmatmul.mubr.f32.gmra.mxu0 %v6368
        %v6507 = vpop.f32.mrf.mxu0
        %v6508 = vadd.f32 0.0, %v6507
        %v6509 = vpop.f32.mrf.mxu0
        %6510 = vdwg.mxu0
        %v6511 = vadd.f32 %v6352, %v6437
        %v6512 = vadd.f32 %v6353, %v6439
        %v6513 = vadd.f32 %v6354, %v6508
        %6514 = vrot.lane.b32.xlu0 %v5870, 96
        %v6515 = vpop.permute.xlu0 %6514
        %6516 = vrot.lane.b32.xlu0 %v5867, 86
        %v6517 = vpop.permute.xlu0 %6516
        %6518 = vrot.lane.b32.xlu0 %v5868, 86
        %v6519 = vpop.permute.xlu0 %6518
        %6520 = vrot.lane.b32.xlu0 %v5869, 86
        %v6521 = vpop.permute.xlu0 %6520
        %v6522 = vsel %vm2279, %v6517, %v6519
        %v6523 = vsel %vm2279, %v6519, %v6521
        %v6527 = vsel %vm356, %v6515, 0
        %6529 = vmatprep.subr.mxu0 0.0
        %6530 = vmatpush1.msra.mxu0 0.0
        %6531 = vmatprep.subr.mxu0 0.0
        %6532 = vmatpush1.msra.mxu0 0.0
        %6533 = vmatprep.subr.mxu0 0.0
        %6534 = vmatpush1.msra.mxu0 0.0
        %6535 = vmatprep.subr.mxu0 0.0
        %6536 = vmatpush1.msra.mxu0 0.0
        %6537 = vmatprep.subr.mxu0 0.0
        %6538 = vmatpush1.msra.mxu0 0.0
        %6539 = vmatprep.subr.mxu0 0.0
        %6540 = vmatpush1.msra.mxu0 0.0
        %6541 = vmatprep.subr.mxu0 0.0
        %6542 = vmatpush1.msra.mxu0 0.0
        %6543 = vmatprep.subr.mxu0 0.0
        %6544 = vmatpush1.msra.mxu0 0.0
        %6545 = vmatprep.subr.mxu0 0.0
        %6546 = vmatpush1.msra.mxu0 0.0
        %6547 = vmatprep.subr.mxu0 0.0
        %6548 = vmatpush1.msra.mxu0 0.0
        %6549 = vmatprep.subr.mxu0 0.0
        %6550 = vmatpush1.msra.mxu0 0.0
        %6551 = vmatprep.subr.mxu0 0.0
        %6552 = vmatpush1.msra.mxu0 0.0
        %6553 = vmatprep.subr.mxu0 0.0
        %6554 = vmatpush1.msra.mxu0 0.0
        %6555 = vmatprep.subr.mxu0 0.0
        %6556 = vmatpush1.msra.mxu0 0.0
        %6557 = vmatprep.subr.mxu0 0.0
        %6558 = vmatpush1.msra.mxu0 0.0
        %6559 = vmatprep.subr.mxu0 %v6523
        %6560 = vmatpush1.msra.mxu0 %v6522
        %6561 = vmatprep.subr.mxu0 0.0
        %6562 = vmatpush2.msra.mxu0 0.0
        %6563 = vmatprep.subr.mxu0 0.0
        %6564 = vmatpush2.msra.mxu0 0.0
        %6565 = vmatprep.subr.mxu0 0.0
        %6566 = vmatpush2.msra.mxu0 0.0
        %6567 = vmatprep.subr.mxu0 0.0
        %6568 = vmatpush2.msra.mxu0 0.0
        %6569 = vmatprep.subr.mxu0 0.0
        %6570 = vmatpush2.msra.mxu0 0.0
        %6571 = vmatprep.subr.mxu0 0.0
        %6572 = vmatpush2.msra.mxu0 0.0
        %6573 = vmatprep.subr.mxu0 0.0
        %6574 = vmatpush2.msra.mxu0 0.0
        %6575 = vmatprep.subr.mxu0 0.0
        %6576 = vmatpush2.msra.mxu0 0.0
        %6577 = vmatprep.subr.mxu0 0.0
        %6578 = vmatpush2.msra.mxu0 0.0
        %6579 = vmatprep.subr.mxu0 0.0
        %6580 = vmatpush2.msra.mxu0 0.0
        %6581 = vmatprep.subr.mxu0 0.0
        %6582 = vmatpush2.msra.mxu0 0.0
        %6583 = vmatprep.subr.mxu0 0.0
        %6584 = vmatpush2.msra.mxu0 0.0
        %6585 = vmatprep.subr.mxu0 0.0
        %6586 = vmatpush2.msra.mxu0 0.0
        %6587 = vmatprep.subr.mxu0 0.0
        %6588 = vmatpush2.msra.mxu0 0.0
        %6589 = vmatprep.subr.mxu0 0.0
        %6590 = vmatpush2.msra.mxu0 0.0
        %6591 = vmatprep.subr.mxu0 0.0
        %6592 = vmatpush2.msra.mxu0 0.0
        %6593 = vmatprep.mubr.f32.mxu0 0.0
        %6594 = vmatmul.mubr.f32.gmra.mxu0 %v6527
        %v6595 = vpop.f32.mrf.mxu0
        %v6596 = vadd.f32 0.0, %v6595
        %v6597 = vpop.f32.mrf.mxu0
        %v6598 = vadd.f32 0.0, %v6597
        %6599 = vdwg.mxu0
        %6600 = vmatprep.subr.mxu0 0.0
        %6601 = vmatpush1.msra.mxu0 0.0
        %6602 = vmatprep.subr.mxu0 0.0
        %6603 = vmatpush1.msra.mxu0 0.0
        %6604 = vmatprep.subr.mxu0 0.0
        %6605 = vmatpush1.msra.mxu0 0.0
        %6606 = vmatprep.subr.mxu0 0.0
        %6607 = vmatpush1.msra.mxu0 0.0
        %6608 = vmatprep.subr.mxu0 0.0
        %6609 = vmatpush1.msra.mxu0 0.0
        %6610 = vmatprep.subr.mxu0 0.0
        %6611 = vmatpush1.msra.mxu0 0.0
        %6612 = vmatprep.subr.mxu0 0.0
        %6613 = vmatpush1.msra.mxu0 0.0
        %6614 = vmatprep.subr.mxu0 0.0
        %6615 = vmatpush1.msra.mxu0 0.0
        %6616 = vmatprep.subr.mxu0 0.0
        %6617 = vmatpush1.msra.mxu0 0.0
        %6618 = vmatprep.subr.mxu0 0.0
        %6619 = vmatpush1.msra.mxu0 0.0
        %6620 = vmatprep.subr.mxu0 0.0
        %6621 = vmatpush1.msra.mxu0 0.0
        %6622 = vmatprep.subr.mxu0 0.0
        %6623 = vmatpush1.msra.mxu0 0.0
        %6624 = vmatprep.subr.mxu0 0.0
        %6625 = vmatpush1.msra.mxu0 0.0
        %6626 = vmatprep.subr.mxu0 0.0
        %6627 = vmatpush1.msra.mxu0 0.0
        %6628 = vmatprep.subr.mxu0 0.0
        %6629 = vmatpush1.msra.mxu0 0.0
        %6630 = vmatprep.subr.mxu0 0.0
        %6631 = vmatpush1.msra.mxu0 %v6521
        %6632 = vmatprep.subr.mxu0 0.0
        %6633 = vmatpush2.msra.mxu0 0.0
        %6634 = vmatprep.subr.mxu0 0.0
        %6635 = vmatpush2.msra.mxu0 0.0
        %6636 = vmatprep.subr.mxu0 0.0
        %6637 = vmatpush2.msra.mxu0 0.0
        %6638 = vmatprep.subr.mxu0 0.0
        %6639 = vmatpush2.msra.mxu0 0.0
        %6640 = vmatprep.subr.mxu0 0.0
        %6641 = vmatpush2.msra.mxu0 0.0
        %6642 = vmatprep.subr.mxu0 0.0
        %6643 = vmatpush2.msra.mxu0 0.0
        %6644 = vmatprep.subr.mxu0 0.0
        %6645 = vmatpush2.msra.mxu0 0.0
        %6646 = vmatprep.subr.mxu0 0.0
        %6647 = vmatpush2.msra.mxu0 0.0
        %6648 = vmatprep.subr.mxu0 0.0
        %6649 = vmatpush2.msra.mxu0 0.0
        %6650 = vmatprep.subr.mxu0 0.0
        %6651 = vmatpush2.msra.mxu0 0.0
        %6652 = vmatprep.subr.mxu0 0.0
        %6653 = vmatpush2.msra.mxu0 0.0
        %6654 = vmatprep.subr.mxu0 0.0
        %6655 = vmatpush2.msra.mxu0 0.0
        %6656 = vmatprep.subr.mxu0 0.0
        %6657 = vmatpush2.msra.mxu0 0.0
        %6658 = vmatprep.subr.mxu0 0.0
        %6659 = vmatpush2.msra.mxu0 0.0
        %6660 = vmatprep.subr.mxu0 0.0
        %6661 = vmatpush2.msra.mxu0 0.0
        %6662 = vmatprep.subr.mxu0 0.0
        %6663 = vmatpush2.msra.mxu0 0.0
        %6664 = vmatprep.mubr.f32.mxu0 0.0
        %6665 = vmatmul.mubr.f32.gmra.mxu0 %v6527
        %v6666 = vpop.f32.mrf.mxu0
        %v6667 = vadd.f32 0.0, %v6666
        %v6668 = vpop.f32.mrf.mxu0
        %6669 = vdwg.mxu0
        %v6670 = vadd.f32 %v6511, %v6596
        %v6671 = vadd.f32 %v6512, %v6598
        %v6672 = vadd.f32 %v6513, %v6667
        %6673 = vrot.lane.b32.xlu0 %v5870, 88
        %v6674 = vpop.permute.xlu0 %6673
        %6675 = vrot.lane.b32.xlu0 %v5867, 85
        %v6676 = vpop.permute.xlu0 %6675
        %6677 = vrot.lane.b32.xlu0 %v5868, 85
        %v6678 = vpop.permute.xlu0 %6677
        %6679 = vrot.lane.b32.xlu0 %v5869, 85
        %v6680 = vpop.permute.xlu0 %6679
        %v6681 = vsel %vm2439, %v6676, %v6678
        %v6682 = vsel %vm2439, %v6678, %v6680
        %v6686 = vsel %vm356, %v6674, 0
        %6688 = vmatprep.subr.mxu0 0.0
        %6689 = vmatpush1.msra.mxu0 0.0
        %6690 = vmatprep.subr.mxu0 0.0
        %6691 = vmatpush1.msra.mxu0 0.0
        %6692 = vmatprep.subr.mxu0 0.0
        %6693 = vmatpush1.msra.mxu0 0.0
        %6694 = vmatprep.subr.mxu0 0.0
        %6695 = vmatpush1.msra.mxu0 0.0
        %6696 = vmatprep.subr.mxu0 0.0
        %6697 = vmatpush1.msra.mxu0 0.0
        %6698 = vmatprep.subr.mxu0 0.0
        %6699 = vmatpush1.msra.mxu0 0.0
        %6700 = vmatprep.subr.mxu0 0.0
        %6701 = vmatpush1.msra.mxu0 0.0
        %6702 = vmatprep.subr.mxu0 0.0
        %6703 = vmatpush1.msra.mxu0 0.0
        %6704 = vmatprep.subr.mxu0 0.0
        %6705 = vmatpush1.msra.mxu0 0.0
        %6706 = vmatprep.subr.mxu0 0.0
        %6707 = vmatpush1.msra.mxu0 0.0
        %6708 = vmatprep.subr.mxu0 0.0
        %6709 = vmatpush1.msra.mxu0 0.0
        %6710 = vmatprep.subr.mxu0 0.0
        %6711 = vmatpush1.msra.mxu0 0.0
        %6712 = vmatprep.subr.mxu0 0.0
        %6713 = vmatpush1.msra.mxu0 0.0
        %6714 = vmatprep.subr.mxu0 0.0
        %6715 = vmatpush1.msra.mxu0 0.0
        %6716 = vmatprep.subr.mxu0 0.0
        %6717 = vmatpush1.msra.mxu0 0.0
        %6718 = vmatprep.subr.mxu0 %v6682
        %6719 = vmatpush1.msra.mxu0 %v6681
        %6720 = vmatprep.subr.mxu0 0.0
        %6721 = vmatpush2.msra.mxu0 0.0
        %6722 = vmatprep.subr.mxu0 0.0
        %6723 = vmatpush2.msra.mxu0 0.0
        %6724 = vmatprep.subr.mxu0 0.0
        %6725 = vmatpush2.msra.mxu0 0.0
        %6726 = vmatprep.subr.mxu0 0.0
        %6727 = vmatpush2.msra.mxu0 0.0
        %6728 = vmatprep.subr.mxu0 0.0
        %6729 = vmatpush2.msra.mxu0 0.0
        %6730 = vmatprep.subr.mxu0 0.0
        %6731 = vmatpush2.msra.mxu0 0.0
        %6732 = vmatprep.subr.mxu0 0.0
        %6733 = vmatpush2.msra.mxu0 0.0
        %6734 = vmatprep.subr.mxu0 0.0
        %6735 = vmatpush2.msra.mxu0 0.0
        %6736 = vmatprep.subr.mxu0 0.0
        %6737 = vmatpush2.msra.mxu0 0.0
        %6738 = vmatprep.subr.mxu0 0.0
        %6739 = vmatpush2.msra.mxu0 0.0
        %6740 = vmatprep.subr.mxu0 0.0
        %6741 = vmatpush2.msra.mxu0 0.0
        %6742 = vmatprep.subr.mxu0 0.0
        %6743 = vmatpush2.msra.mxu0 0.0
        %6744 = vmatprep.subr.mxu0 0.0
        %6745 = vmatpush2.msra.mxu0 0.0
        %6746 = vmatprep.subr.mxu0 0.0
        %6747 = vmatpush2.msra.mxu0 0.0
        %6748 = vmatprep.subr.mxu0 0.0
        %6749 = vmatpush2.msra.mxu0 0.0
        %6750 = vmatprep.subr.mxu0 0.0
        %6751 = vmatpush2.msra.mxu0 0.0
        %6752 = vmatprep.mubr.f32.mxu0 0.0
        %6753 = vmatmul.mubr.f32.gmra.mxu0 %v6686
        %v6754 = vpop.f32.mrf.mxu0
        %v6755 = vadd.f32 0.0, %v6754
        %v6756 = vpop.f32.mrf.mxu0
        %v6757 = vadd.f32 0.0, %v6756
        %6758 = vdwg.mxu0
        %6759 = vmatprep.subr.mxu0 0.0
        %6760 = vmatpush1.msra.mxu0 0.0
        %6761 = vmatprep.subr.mxu0 0.0
        %6762 = vmatpush1.msra.mxu0 0.0
        %6763 = vmatprep.subr.mxu0 0.0
        %6764 = vmatpush1.msra.mxu0 0.0
        %6765 = vmatprep.subr.mxu0 0.0
        %6766 = vmatpush1.msra.mxu0 0.0
        %6767 = vmatprep.subr.mxu0 0.0
        %6768 = vmatpush1.msra.mxu0 0.0
        %6769 = vmatprep.subr.mxu0 0.0
        %6770 = vmatpush1.msra.mxu0 0.0
        %6771 = vmatprep.subr.mxu0 0.0
        %6772 = vmatpush1.msra.mxu0 0.0
        %6773 = vmatprep.subr.mxu0 0.0
        %6774 = vmatpush1.msra.mxu0 0.0
        %6775 = vmatprep.subr.mxu0 0.0
        %6776 = vmatpush1.msra.mxu0 0.0
        %6777 = vmatprep.subr.mxu0 0.0
        %6778 = vmatpush1.msra.mxu0 0.0
        %6779 = vmatprep.subr.mxu0 0.0
        %6780 = vmatpush1.msra.mxu0 0.0
        %6781 = vmatprep.subr.mxu0 0.0
        %6782 = vmatpush1.msra.mxu0 0.0
        %6783 = vmatprep.subr.mxu0 0.0
        %6784 = vmatpush1.msra.mxu0 0.0
        %6785 = vmatprep.subr.mxu0 0.0
        %6786 = vmatpush1.msra.mxu0 0.0
        %6787 = vmatprep.subr.mxu0 0.0
        %6788 = vmatpush1.msra.mxu0 0.0
        %6789 = vmatprep.subr.mxu0 0.0
        %6790 = vmatpush1.msra.mxu0 %v6680
        %6791 = vmatprep.subr.mxu0 0.0
        %6792 = vmatpush2.msra.mxu0 0.0
        %6793 = vmatprep.subr.mxu0 0.0
        %6794 = vmatpush2.msra.mxu0 0.0
        %6795 = vmatprep.subr.mxu0 0.0
        %6796 = vmatpush2.msra.mxu0 0.0
        %6797 = vmatprep.subr.mxu0 0.0
        %6798 = vmatpush2.msra.mxu0 0.0
        %6799 = vmatprep.subr.mxu0 0.0
        %6800 = vmatpush2.msra.mxu0 0.0
        %6801 = vmatprep.subr.mxu0 0.0
        %6802 = vmatpush2.msra.mxu0 0.0
        %6803 = vmatprep.subr.mxu0 0.0
        %6804 = vmatpush2.msra.mxu0 0.0
        %6805 = vmatprep.subr.mxu0 0.0
        %6806 = vmatpush2.msra.mxu0 0.0
        %6807 = vmatprep.subr.mxu0 0.0
        %6808 = vmatpush2.msra.mxu0 0.0
        %6809 = vmatprep.subr.mxu0 0.0
        %6810 = vmatpush2.msra.mxu0 0.0
        %6811 = vmatprep.subr.mxu0 0.0
        %6812 = vmatpush2.msra.mxu0 0.0
        %6813 = vmatprep.subr.mxu0 0.0
        %6814 = vmatpush2.msra.mxu0 0.0
        %6815 = vmatprep.subr.mxu0 0.0
        %6816 = vmatpush2.msra.mxu0 0.0
        %6817 = vmatprep.subr.mxu0 0.0
        %6818 = vmatpush2.msra.mxu0 0.0
        %6819 = vmatprep.subr.mxu0 0.0
        %6820 = vmatpush2.msra.mxu0 0.0
        %6821 = vmatprep.subr.mxu0 0.0
        %6822 = vmatpush2.msra.mxu0 0.0
        %6823 = vmatprep.mubr.f32.mxu0 0.0
        %6824 = vmatmul.mubr.f32.gmra.mxu0 %v6686
        %v6825 = vpop.f32.mrf.mxu0
        %v6826 = vadd.f32 0.0, %v6825
        %v6827 = vpop.f32.mrf.mxu0
        %6828 = vdwg.mxu0
        %v6829 = vadd.f32 %v6670, %v6755
        %v6830 = vadd.f32 %v6671, %v6757
        %v6831 = vadd.f32 %v6672, %v6826
        %6832 = vrot.lane.b32.xlu0 %v5870, 80
        %v6833 = vpop.permute.xlu0 %6832
        %6834 = vrot.lane.b32.xlu0 %v5867, 67
        %v6835 = vpop.permute.xlu0 %6834
        %6836 = vrot.lane.b32.xlu0 %v5868, 67
        %v6837 = vpop.permute.xlu0 %6836
        %6838 = vrot.lane.b32.xlu0 %v5869, 67
        %v6839 = vpop.permute.xlu0 %6838
        %v6840 = vsel %vm2918, %v6835, %v6837
        %v6841 = vsel %vm2918, %v6837, %v6839
        %v6845 = vsel %vm356, %v6833, 0
        %6847 = vmatprep.subr.mxu0 0.0
        %6848 = vmatpush1.msra.mxu0 0.0
        %6849 = vmatprep.subr.mxu0 0.0
        %6850 = vmatpush1.msra.mxu0 0.0
        %6851 = vmatprep.subr.mxu0 0.0
        %6852 = vmatpush1.msra.mxu0 0.0
        %6853 = vmatprep.subr.mxu0 0.0
        %6854 = vmatpush1.msra.mxu0 0.0
        %6855 = vmatprep.subr.mxu0 0.0
        %6856 = vmatpush1.msra.mxu0 0.0
        %6857 = vmatprep.subr.mxu0 0.0
        %6858 = vmatpush1.msra.mxu0 0.0
        %6859 = vmatprep.subr.mxu0 0.0
        %6860 = vmatpush1.msra.mxu0 0.0
        %6861 = vmatprep.subr.mxu0 0.0
        %6862 = vmatpush1.msra.mxu0 0.0
        %6863 = vmatprep.subr.mxu0 0.0
        %6864 = vmatpush1.msra.mxu0 0.0
        %6865 = vmatprep.subr.mxu0 0.0
        %6866 = vmatpush1.msra.mxu0 0.0
        %6867 = vmatprep.subr.mxu0 0.0
        %6868 = vmatpush1.msra.mxu0 0.0
        %6869 = vmatprep.subr.mxu0 0.0
        %6870 = vmatpush1.msra.mxu0 0.0
        %6871 = vmatprep.subr.mxu0 0.0
        %6872 = vmatpush1.msra.mxu0 0.0
        %6873 = vmatprep.subr.mxu0 0.0
        %6874 = vmatpush1.msra.mxu0 0.0
        %6875 = vmatprep.subr.mxu0 0.0
        %6876 = vmatpush1.msra.mxu0 0.0
        %6877 = vmatprep.subr.mxu0 %v6841
        %6878 = vmatpush1.msra.mxu0 %v6840
        %6879 = vmatprep.subr.mxu0 0.0
        %6880 = vmatpush2.msra.mxu0 0.0
        %6881 = vmatprep.subr.mxu0 0.0
        %6882 = vmatpush2.msra.mxu0 0.0
        %6883 = vmatprep.subr.mxu0 0.0
        %6884 = vmatpush2.msra.mxu0 0.0
        %6885 = vmatprep.subr.mxu0 0.0
        %6886 = vmatpush2.msra.mxu0 0.0
        %6887 = vmatprep.subr.mxu0 0.0
        %6888 = vmatpush2.msra.mxu0 0.0
        %6889 = vmatprep.subr.mxu0 0.0
        %6890 = vmatpush2.msra.mxu0 0.0
        %6891 = vmatprep.subr.mxu0 0.0
        %6892 = vmatpush2.msra.mxu0 0.0
        %6893 = vmatprep.subr.mxu0 0.0
        %6894 = vmatpush2.msra.mxu0 0.0
        %6895 = vmatprep.subr.mxu0 0.0
        %6896 = vmatpush2.msra.mxu0 0.0
        %6897 = vmatprep.subr.mxu0 0.0
        %6898 = vmatpush2.msra.mxu0 0.0
        %6899 = vmatprep.subr.mxu0 0.0
        %6900 = vmatpush2.msra.mxu0 0.0
        %6901 = vmatprep.subr.mxu0 0.0
        %6902 = vmatpush2.msra.mxu0 0.0
        %6903 = vmatprep.subr.mxu0 0.0
        %6904 = vmatpush2.msra.mxu0 0.0
        %6905 = vmatprep.subr.mxu0 0.0
        %6906 = vmatpush2.msra.mxu0 0.0
        %6907 = vmatprep.subr.mxu0 0.0
        %6908 = vmatpush2.msra.mxu0 0.0
        %6909 = vmatprep.subr.mxu0 0.0
        %6910 = vmatpush2.msra.mxu0 0.0
        %6911 = vmatprep.mubr.f32.mxu0 0.0
        %6912 = vmatmul.mubr.f32.gmra.mxu0 %v6845
        %v6913 = vpop.f32.mrf.mxu0
        %v6914 = vadd.f32 0.0, %v6913
        %v6915 = vpop.f32.mrf.mxu0
        %v6916 = vadd.f32 0.0, %v6915
        %6917 = vdwg.mxu0
        %6918 = vmatprep.subr.mxu0 0.0
        %6919 = vmatpush1.msra.mxu0 0.0
        %6920 = vmatprep.subr.mxu0 0.0
        %6921 = vmatpush1.msra.mxu0 0.0
        %6922 = vmatprep.subr.mxu0 0.0
        %6923 = vmatpush1.msra.mxu0 0.0
        %6924 = vmatprep.subr.mxu0 0.0
        %6925 = vmatpush1.msra.mxu0 0.0
        %6926 = vmatprep.subr.mxu0 0.0
        %6927 = vmatpush1.msra.mxu0 0.0
        %6928 = vmatprep.subr.mxu0 0.0
        %6929 = vmatpush1.msra.mxu0 0.0
        %6930 = vmatprep.subr.mxu0 0.0
        %6931 = vmatpush1.msra.mxu0 0.0
        %6932 = vmatprep.subr.mxu0 0.0
        %6933 = vmatpush1.msra.mxu0 0.0
        %6934 = vmatprep.subr.mxu0 0.0
        %6935 = vmatpush1.msra.mxu0 0.0
        %6936 = vmatprep.subr.mxu0 0.0
        %6937 = vmatpush1.msra.mxu0 0.0
        %6938 = vmatprep.subr.mxu0 0.0
        %6939 = vmatpush1.msra.mxu0 0.0
        %6940 = vmatprep.subr.mxu0 0.0
        %6941 = vmatpush1.msra.mxu0 0.0
        %6942 = vmatprep.subr.mxu0 0.0
        %6943 = vmatpush1.msra.mxu0 0.0
        %6944 = vmatprep.subr.mxu0 0.0
        %6945 = vmatpush1.msra.mxu0 0.0
        %6946 = vmatprep.subr.mxu0 0.0
        %6947 = vmatpush1.msra.mxu0 0.0
        %6948 = vmatprep.subr.mxu0 0.0
        %6949 = vmatpush1.msra.mxu0 %v6839
        %6950 = vmatprep.subr.mxu0 0.0
        %6951 = vmatpush2.msra.mxu0 0.0
        %6952 = vmatprep.subr.mxu0 0.0
        %6953 = vmatpush2.msra.mxu0 0.0
        %6954 = vmatprep.subr.mxu0 0.0
        %6955 = vmatpush2.msra.mxu0 0.0
        %6956 = vmatprep.subr.mxu0 0.0
        %6957 = vmatpush2.msra.mxu0 0.0
        %6958 = vmatprep.subr.mxu0 0.0
        %6959 = vmatpush2.msra.mxu0 0.0
        %6960 = vmatprep.subr.mxu0 0.0
        %6961 = vmatpush2.msra.mxu0 0.0
        %6962 = vmatprep.subr.mxu0 0.0
        %6963 = vmatpush2.msra.mxu0 0.0
        %6964 = vmatprep.subr.mxu0 0.0
        %6965 = vmatpush2.msra.mxu0 0.0
        %6966 = vmatprep.subr.mxu0 0.0
        %6967 = vmatpush2.msra.mxu0 0.0
        %6968 = vmatprep.subr.mxu0 0.0
        %6969 = vmatpush2.msra.mxu0 0.0
        %6970 = vmatprep.subr.mxu0 0.0
        %6971 = vmatpush2.msra.mxu0 0.0
        %6972 = vmatprep.subr.mxu0 0.0
        %6973 = vmatpush2.msra.mxu0 0.0
        %6974 = vmatprep.subr.mxu0 0.0
        %6975 = vmatpush2.msra.mxu0 0.0
        %6976 = vmatprep.subr.mxu0 0.0
        %6977 = vmatpush2.msra.mxu0 0.0
        %6978 = vmatprep.subr.mxu0 0.0
        %6979 = vmatpush2.msra.mxu0 0.0
        %6980 = vmatprep.subr.mxu0 0.0
        %6981 = vmatpush2.msra.mxu0 0.0
        %6982 = vmatprep.mubr.f32.mxu0 0.0
        %6983 = vmatmul.mubr.f32.gmra.mxu0 %v6845
        %v6984 = vpop.f32.mrf.mxu0
        %v6985 = vadd.f32 0.0, %v6984
        %v6986 = vpop.f32.mrf.mxu0
        %6987 = vdwg.mxu0
        %v6988 = vadd.f32 %v6829, %v6914
        %v6989 = vadd.f32 %v6830, %v6916
        %v6990 = vadd.f32 %v6831, %v6985
        %6991 = vrot.lane.b32.xlu0 %v5870, 72
        %v6992 = vpop.permute.xlu0 %6991
        %6993 = vrot.lane.b32.xlu0 %v5867, 66
        %v6994 = vpop.permute.xlu0 %6993
        %6995 = vrot.lane.b32.xlu0 %v5868, 66
        %v6996 = vpop.permute.xlu0 %6995
        %6997 = vrot.lane.b32.xlu0 %v5869, 66
        %v6998 = vpop.permute.xlu0 %6997
        %v6999 = vsel %vm3079, %v6994, %v6996
        %v7000 = vsel %vm3079, %v6996, %v6998
        %v7004 = vsel %vm356, %v6992, 0
        %7006 = vmatprep.subr.mxu0 0.0
        %7007 = vmatpush1.msra.mxu0 0.0
        %7008 = vmatprep.subr.mxu0 0.0
        %7009 = vmatpush1.msra.mxu0 0.0
        %7010 = vmatprep.subr.mxu0 0.0
        %7011 = vmatpush1.msra.mxu0 0.0
        %7012 = vmatprep.subr.mxu0 0.0
        %7013 = vmatpush1.msra.mxu0 0.0
        %7014 = vmatprep.subr.mxu0 0.0
        %7015 = vmatpush1.msra.mxu0 0.0
        %7016 = vmatprep.subr.mxu0 0.0
        %7017 = vmatpush1.msra.mxu0 0.0
        %7018 = vmatprep.subr.mxu0 0.0
        %7019 = vmatpush1.msra.mxu0 0.0
        %7020 = vmatprep.subr.mxu0 0.0
        %7021 = vmatpush1.msra.mxu0 0.0
        %7022 = vmatprep.subr.mxu0 0.0
        %7023 = vmatpush1.msra.mxu0 0.0
        %7024 = vmatprep.subr.mxu0 0.0
        %7025 = vmatpush1.msra.mxu0 0.0
        %7026 = vmatprep.subr.mxu0 0.0
        %7027 = vmatpush1.msra.mxu0 0.0
        %7028 = vmatprep.subr.mxu0 0.0
        %7029 = vmatpush1.msra.mxu0 0.0
        %7030 = vmatprep.subr.mxu0 0.0
        %7031 = vmatpush1.msra.mxu0 0.0
        %7032 = vmatprep.subr.mxu0 0.0
        %7033 = vmatpush1.msra.mxu0 0.0
        %7034 = vmatprep.subr.mxu0 0.0
        %7035 = vmatpush1.msra.mxu0 0.0
        %7036 = vmatprep.subr.mxu0 %v7000
        %7037 = vmatpush1.msra.mxu0 %v6999
        %7038 = vmatprep.subr.mxu0 0.0
        %7039 = vmatpush2.msra.mxu0 0.0
        %7040 = vmatprep.subr.mxu0 0.0
        %7041 = vmatpush2.msra.mxu0 0.0
        %7042 = vmatprep.subr.mxu0 0.0
        %7043 = vmatpush2.msra.mxu0 0.0
        %7044 = vmatprep.subr.mxu0 0.0
        %7045 = vmatpush2.msra.mxu0 0.0
        %7046 = vmatprep.subr.mxu0 0.0
        %7047 = vmatpush2.msra.mxu0 0.0
        %7048 = vmatprep.subr.mxu0 0.0
        %7049 = vmatpush2.msra.mxu0 0.0
        %7050 = vmatprep.subr.mxu0 0.0
        %7051 = vmatpush2.msra.mxu0 0.0
        %7052 = vmatprep.subr.mxu0 0.0
        %7053 = vmatpush2.msra.mxu0 0.0
        %7054 = vmatprep.subr.mxu0 0.0
        %7055 = vmatpush2.msra.mxu0 0.0
        %7056 = vmatprep.subr.mxu0 0.0
        %7057 = vmatpush2.msra.mxu0 0.0
        %7058 = vmatprep.subr.mxu0 0.0
        %7059 = vmatpush2.msra.mxu0 0.0
        %7060 = vmatprep.subr.mxu0 0.0
        %7061 = vmatpush2.msra.mxu0 0.0
        %7062 = vmatprep.subr.mxu0 0.0
        %7063 = vmatpush2.msra.mxu0 0.0
        %7064 = vmatprep.subr.mxu0 0.0
        %7065 = vmatpush2.msra.mxu0 0.0
        %7066 = vmatprep.subr.mxu0 0.0
        %7067 = vmatpush2.msra.mxu0 0.0
        %7068 = vmatprep.subr.mxu0 0.0
        %7069 = vmatpush2.msra.mxu0 0.0
        %7070 = vmatprep.mubr.f32.mxu0 0.0
        %7071 = vmatmul.mubr.f32.gmra.mxu0 %v7004
        %v7072 = vpop.f32.mrf.mxu0
        %v7073 = vadd.f32 0.0, %v7072
        %v7074 = vpop.f32.mrf.mxu0
        %v7075 = vadd.f32 0.0, %v7074
        %7076 = vdwg.mxu0
        %7077 = vmatprep.subr.mxu0 0.0
        %7078 = vmatpush1.msra.mxu0 0.0
        %7079 = vmatprep.subr.mxu0 0.0
        %7080 = vmatpush1.msra.mxu0 0.0
        %7081 = vmatprep.subr.mxu0 0.0
        %7082 = vmatpush1.msra.mxu0 0.0
        %7083 = vmatprep.subr.mxu0 0.0
        %7084 = vmatpush1.msra.mxu0 0.0
        %7085 = vmatprep.subr.mxu0 0.0
        %7086 = vmatpush1.msra.mxu0 0.0
        %7087 = vmatprep.subr.mxu0 0.0
        %7088 = vmatpush1.msra.mxu0 0.0
        %7089 = vmatprep.subr.mxu0 0.0
        %7090 = vmatpush1.msra.mxu0 0.0
        %7091 = vmatprep.subr.mxu0 0.0
        %7092 = vmatpush1.msra.mxu0 0.0
        %7093 = vmatprep.subr.mxu0 0.0
        %7094 = vmatpush1.msra.mxu0 0.0
        %7095 = vmatprep.subr.mxu0 0.0
        %7096 = vmatpush1.msra.mxu0 0.0
        %7097 = vmatprep.subr.mxu0 0.0
        %7098 = vmatpush1.msra.mxu0 0.0
        %7099 = vmatprep.subr.mxu0 0.0
        %7100 = vmatpush1.msra.mxu0 0.0
        %7101 = vmatprep.subr.mxu0 0.0
        %7102 = vmatpush1.msra.mxu0 0.0
        %7103 = vmatprep.subr.mxu0 0.0
        %7104 = vmatpush1.msra.mxu0 0.0
        %7105 = vmatprep.subr.mxu0 0.0
        %7106 = vmatpush1.msra.mxu0 0.0
        %7107 = vmatprep.subr.mxu0 0.0
        %7108 = vmatpush1.msra.mxu0 %v6998
        %7109 = vmatprep.subr.mxu0 0.0
        %7110 = vmatpush2.msra.mxu0 0.0
        %7111 = vmatprep.subr.mxu0 0.0
        %7112 = vmatpush2.msra.mxu0 0.0
        %7113 = vmatprep.subr.mxu0 0.0
        %7114 = vmatpush2.msra.mxu0 0.0
        %7115 = vmatprep.subr.mxu0 0.0
        %7116 = vmatpush2.msra.mxu0 0.0
        %7117 = vmatprep.subr.mxu0 0.0
        %7118 = vmatpush2.msra.mxu0 0.0
        %7119 = vmatprep.subr.mxu0 0.0
        %7120 = vmatpush2.msra.mxu0 0.0
        %7121 = vmatprep.subr.mxu0 0.0
        %7122 = vmatpush2.msra.mxu0 0.0
        %7123 = vmatprep.subr.mxu0 0.0
        %7124 = vmatpush2.msra.mxu0 0.0
        %7125 = vmatprep.subr.mxu0 0.0
        %7126 = vmatpush2.msra.mxu0 0.0
        %7127 = vmatprep.subr.mxu0 0.0
        %7128 = vmatpush2.msra.mxu0 0.0
        %7129 = vmatprep.subr.mxu0 0.0
        %7130 = vmatpush2.msra.mxu0 0.0
        %7131 = vmatprep.subr.mxu0 0.0
        %7132 = vmatpush2.msra.mxu0 0.0
        %7133 = vmatprep.subr.mxu0 0.0
        %7134 = vmatpush2.msra.mxu0 0.0
        %7135 = vmatprep.subr.mxu0 0.0
        %7136 = vmatpush2.msra.mxu0 0.0
        %7137 = vmatprep.subr.mxu0 0.0
        %7138 = vmatpush2.msra.mxu0 0.0
        %7139 = vmatprep.subr.mxu0 0.0
        %7140 = vmatpush2.msra.mxu0 0.0
        %7141 = vmatprep.mubr.f32.mxu0 0.0
        %7142 = vmatmul.mubr.f32.gmra.mxu0 %v7004
        %v7143 = vpop.f32.mrf.mxu0
        %v7144 = vadd.f32 0.0, %v7143
        %v7145 = vpop.f32.mrf.mxu0
        %7146 = vdwg.mxu0
        %v7147 = vadd.f32 %v6988, %v7073
        %v7148 = vadd.f32 %v6989, %v7075
        %v7149 = vadd.f32 %v6990, %v7144
        %7150 = vrot.lane.b32.xlu0 %v5870, 64
        %v7151 = vpop.permute.xlu0 %7150
        %7152 = vrot.lane.b32.xlu0 %v5867, 65
        %v7153 = vpop.permute.xlu0 %7152
        %7154 = vrot.lane.b32.xlu0 %v5868, 65
        %v7155 = vpop.permute.xlu0 %7154
        %7156 = vrot.lane.b32.xlu0 %v5869, 65
        %v7157 = vpop.permute.xlu0 %7156
        %v7158 = vsel %vm3239, %v7153, %v7155
        %v7159 = vsel %vm3239, %v7155, %v7157
        %v7163 = vsel %vm356, %v7151, 0
        %7165 = vmatprep.subr.mxu0 0.0
        %7166 = vmatpush1.msra.mxu0 0.0
        %7167 = vmatprep.subr.mxu0 0.0
        %7168 = vmatpush1.msra.mxu0 0.0
        %7169 = vmatprep.subr.mxu0 0.0
        %7170 = vmatpush1.msra.mxu0 0.0
        %7171 = vmatprep.subr.mxu0 0.0
        %7172 = vmatpush1.msra.mxu0 0.0
        %7173 = vmatprep.subr.mxu0 0.0
        %7174 = vmatpush1.msra.mxu0 0.0
        %7175 = vmatprep.subr.mxu0 0.0
        %7176 = vmatpush1.msra.mxu0 0.0
        %7177 = vmatprep.subr.mxu0 0.0
        %7178 = vmatpush1.msra.mxu0 0.0
        %7179 = vmatprep.subr.mxu0 0.0
        %7180 = vmatpush1.msra.mxu0 0.0
        %7181 = vmatprep.subr.mxu0 0.0
        %7182 = vmatpush1.msra.mxu0 0.0
        %7183 = vmatprep.subr.mxu0 0.0
        %7184 = vmatpush1.msra.mxu0 0.0
        %7185 = vmatprep.subr.mxu0 0.0
        %7186 = vmatpush1.msra.mxu0 0.0
        %7187 = vmatprep.subr.mxu0 0.0
        %7188 = vmatpush1.msra.mxu0 0.0
        %7189 = vmatprep.subr.mxu0 0.0
        %7190 = vmatpush1.msra.mxu0 0.0
        %7191 = vmatprep.subr.mxu0 0.0
        %7192 = vmatpush1.msra.mxu0 0.0
        %7193 = vmatprep.subr.mxu0 0.0
        %7194 = vmatpush1.msra.mxu0 0.0
        %7195 = vmatprep.subr.mxu0 %v7159
        %7196 = vmatpush1.msra.mxu0 %v7158
        %7197 = vmatprep.subr.mxu0 0.0
        %7198 = vmatpush2.msra.mxu0 0.0
        %7199 = vmatprep.subr.mxu0 0.0
        %7200 = vmatpush2.msra.mxu0 0.0
        %7201 = vmatprep.subr.mxu0 0.0
        %7202 = vmatpush2.msra.mxu0 0.0
        %7203 = vmatprep.subr.mxu0 0.0
        %7204 = vmatpush2.msra.mxu0 0.0
        %7205 = vmatprep.subr.mxu0 0.0
        %7206 = vmatpush2.msra.mxu0 0.0
        %7207 = vmatprep.subr.mxu0 0.0
        %7208 = vmatpush2.msra.mxu0 0.0
        %7209 = vmatprep.subr.mxu0 0.0
        %7210 = vmatpush2.msra.mxu0 0.0
        %7211 = vmatprep.subr.mxu0 0.0
        %7212 = vmatpush2.msra.mxu0 0.0
        %7213 = vmatprep.subr.mxu0 0.0
        %7214 = vmatpush2.msra.mxu0 0.0
        %7215 = vmatprep.subr.mxu0 0.0
        %7216 = vmatpush2.msra.mxu0 0.0
        %7217 = vmatprep.subr.mxu0 0.0
        %7218 = vmatpush2.msra.mxu0 0.0
        %7219 = vmatprep.subr.mxu0 0.0
        %7220 = vmatpush2.msra.mxu0 0.0
        %7221 = vmatprep.subr.mxu0 0.0
        %7222 = vmatpush2.msra.mxu0 0.0
        %7223 = vmatprep.subr.mxu0 0.0
        %7224 = vmatpush2.msra.mxu0 0.0
        %7225 = vmatprep.subr.mxu0 0.0
        %7226 = vmatpush2.msra.mxu0 0.0
        %7227 = vmatprep.subr.mxu0 0.0
        %7228 = vmatpush2.msra.mxu0 0.0
        %7229 = vmatprep.mubr.f32.mxu0 0.0
        %7230 = vmatmul.mubr.f32.gmra.mxu0 %v7163
        %v7231 = vpop.f32.mrf.mxu0
        %v7232 = vadd.f32 0.0, %v7231
        %v7233 = vpop.f32.mrf.mxu0
        %v7234 = vadd.f32 0.0, %v7233
        %7235 = vdwg.mxu0
        %7236 = vmatprep.subr.mxu0 0.0
        %7237 = vmatpush1.msra.mxu0 0.0
        %7238 = vmatprep.subr.mxu0 0.0
        %7239 = vmatpush1.msra.mxu0 0.0
        %7240 = vmatprep.subr.mxu0 0.0
        %7241 = vmatpush1.msra.mxu0 0.0
        %7242 = vmatprep.subr.mxu0 0.0
        %7243 = vmatpush1.msra.mxu0 0.0
        %7244 = vmatprep.subr.mxu0 0.0
        %7245 = vmatpush1.msra.mxu0 0.0
        %7246 = vmatprep.subr.mxu0 0.0
        %7247 = vmatpush1.msra.mxu0 0.0
        %7248 = vmatprep.subr.mxu0 0.0
        %7249 = vmatpush1.msra.mxu0 0.0
        %7250 = vmatprep.subr.mxu0 0.0
        %7251 = vmatpush1.msra.mxu0 0.0
        %7252 = vmatprep.subr.mxu0 0.0
        %7253 = vmatpush1.msra.mxu0 0.0
        %7254 = vmatprep.subr.mxu0 0.0
        %7255 = vmatpush1.msra.mxu0 0.0
        %7256 = vmatprep.subr.mxu0 0.0
        %7257 = vmatpush1.msra.mxu0 0.0
        %7258 = vmatprep.subr.mxu0 0.0
        %7259 = vmatpush1.msra.mxu0 0.0
        %7260 = vmatprep.subr.mxu0 0.0
        %7261 = vmatpush1.msra.mxu0 0.0
        %7262 = vmatprep.subr.mxu0 0.0
        %7263 = vmatpush1.msra.mxu0 0.0
        %7264 = vmatprep.subr.mxu0 0.0
        %7265 = vmatpush1.msra.mxu0 0.0
        %7266 = vmatprep.subr.mxu0 0.0
        %7267 = vmatpush1.msra.mxu0 %v7157
        %7268 = vmatprep.subr.mxu0 0.0
        %7269 = vmatpush2.msra.mxu0 0.0
        %7270 = vmatprep.subr.mxu0 0.0
        %7271 = vmatpush2.msra.mxu0 0.0
        %7272 = vmatprep.subr.mxu0 0.0
        %7273 = vmatpush2.msra.mxu0 0.0
        %7274 = vmatprep.subr.mxu0 0.0
        %7275 = vmatpush2.msra.mxu0 0.0
        %7276 = vmatprep.subr.mxu0 0.0
        %7277 = vmatpush2.msra.mxu0 0.0
        %7278 = vmatprep.subr.mxu0 0.0
        %7279 = vmatpush2.msra.mxu0 0.0
        %7280 = vmatprep.subr.mxu0 0.0
        %7281 = vmatpush2.msra.mxu0 0.0
        %7282 = vmatprep.subr.mxu0 0.0
        %7283 = vmatpush2.msra.mxu0 0.0
        %7284 = vmatprep.subr.mxu0 0.0
        %7285 = vmatpush2.msra.mxu0 0.0
        %7286 = vmatprep.subr.mxu0 0.0
        %7287 = vmatpush2.msra.mxu0 0.0
        %7288 = vmatprep.subr.mxu0 0.0
        %7289 = vmatpush2.msra.mxu0 0.0
        %7290 = vmatprep.subr.mxu0 0.0
        %7291 = vmatpush2.msra.mxu0 0.0
        %7292 = vmatprep.subr.mxu0 0.0
        %7293 = vmatpush2.msra.mxu0 0.0
        %7294 = vmatprep.subr.mxu0 0.0
        %7295 = vmatpush2.msra.mxu0 0.0
        %7296 = vmatprep.subr.mxu0 0.0
        %7297 = vmatpush2.msra.mxu0 0.0
        %7298 = vmatprep.subr.mxu0 0.0
        %7299 = vmatpush2.msra.mxu0 0.0
        %7300 = vmatprep.mubr.f32.mxu0 0.0
        %7301 = vmatmul.mubr.f32.gmra.mxu0 %v7163
        %v7302 = vpop.f32.mrf.mxu0
        %v7303 = vadd.f32 0.0, %v7302
        %v7304 = vpop.f32.mrf.mxu0
        %7305 = vdwg.mxu0
        %v7306 = vadd.f32 %v7147, %v7232
        %v7307 = vadd.f32 %v7148, %v7234
        %v7308 = vadd.f32 %v7149, %v7303
        %v7311 = vcombine.low %v7306, %v7307
        %7313 = vst [vmem:[%s296] sm:$0x77] %v7311
        %vm7314 = vcmask 518144
        %7315 = vst.msk [vmem:[%s296 + $0x8] sm:$0x7] %vm7314, %v7308
        %p7316 = scmp.lt.s32.totalorder %s21, 1
        %s7317 = scalar_select %p7316, %s21, 1
        %s7318 = smul.addr %s7317, 3
        %s7319 = smul.addr %s7318, 4
        %s7320 = scalar_lea.vmem %s7, %s7319
        // Predicated region
        $region53: #{tpu_custom_call.1} parent=47 // pred_check
          %p7321 = pneg %p191
        $region54: #{tpu_custom_call.1} parent=47 // pred_check_branch
          %7323 = sbr.rel (%p7321) target = $region56
        $region55: #{tpu_custom_call.1} parent=47 // pred_region
          _
        $region56: #{tpu_custom_call.1} parent=47 // pred_fallthru
          _
      $region48: #{tpu_custom_call.1} parent=5 // pred_fallthru
        _
      %p7324 = scmp.le.s32.totalorder 2, %s16
      // Predicated region
      $region57: #{tpu_custom_call.1} parent=5 // pred_check
        %p7325 = pneg %p7324
      $region58: #{tpu_custom_call.1} parent=5 // pred_check_branch
        %7327 = sbr.rel (%p7325) target = $region60
      $region59: #{tpu_custom_call.1} parent=5 // pred_region
        %s7328 = ssub.s32 %s16, 2
        // Predicated region
        $region61: #{tpu_custom_call.1} parent=59 // pred_check
          %p7329 = pneg %p197
        $region62: #{tpu_custom_call.1} parent=59 // pred_check_branch
          %7331 = sbr.rel (%p7329) target = $region64
        $region63: #{tpu_custom_call.1} parent=59 // pred_region
          %p7332 = scmp.lt.s32.totalorder %s22, 1
          %s7333 = scalar_select %p7332, %s22, 1
          %s7334 = smul.addr %s7333, 3
          %s7335 = smul.addr %s7334, 4
          %s7336 = scalar_lea.vmem %s7, %s7335
        $region64: #{tpu_custom_call.1} parent=59 // pred_fallthru
          _
      $region60: #{tpu_custom_call.1} parent=5 // pred_fallthru
        _
    $region6: #{tpu_custom_call.1} parent=1 // loop_footer
      %s20 = sadd.s32 1, %s16
    $region7: #{tpu_custom_call.1} parent=1 // loop_footer_branch
      %15 = sbr.rel target = $region3
    $region8: #{tpu_custom_call.1} parent=1 // loop_exit
      _
    %7337 = vsyncpa [#allocation4], 1
    %s7338 = scalar_lea.sflag [#allocation4], 1
    %7339 = vsyncpa %s7338, 1

</llo_original>
